<compile_context>
chip_gen: v7x
topology: tpu7x:2x2x1
jax: 0.10.0
libtpu: 0.0.40
codegen_flags: <defaults>
</compile_context>

<pallas_src>
import jax
import jax.numpy as jnp
from jax.experimental import pallas as pl
from jax.experimental.pallas import tpu as pltpu

NEG_SLOPE = 0.01  # PyTorch nn.LeakyReLU default negative_slope


def _round_up(n, m):
    return -(-n // m) * m


def _pick_batch_tile(B):
    """Batch tile: big enough to fill MXU rows / amortize ~0.35us grid steps,
    but >= 2 tiles for large batches so v7x's two TCs split the parallel axis."""
    if B < 256:
        return B                                   # single full-extent tile
    tb = min(512, _round_up(pl.cdiv(B, 2), 8))     # ~Bp//2, capped at 512
    return max(128, tb)


def _vmem_limit_bytes():
    """~87% of physical VMEM; conservative 56 MiB fallback (< v7x's 64 MiB)."""
    try:
        phys = pltpu.get_tpu_info().vmem_capacity_bytes
    except Exception:
        phys = 64 * 1024 * 1024
    return int(phys * 0.875)


# ------------------------------ fused kernel -------------------------------

def prule_fused_kernel(xy_ref, *refs):
    """Whole PRule forward for one batch tile.  refs = 34 weight refs + o_ref."""
    o_ref = refs[-1]
    w = refs[:-1]

    def leaky(v):
        # max(v, a*v) == LeakyReLU(v) since a < 1; 2 VPU ops instead of 3.
        return jnp.maximum(v, NEG_SLOPE * v)

    def linear(h, w_ref, b_ref):
        # bf16 MXU operands, f32 accumulation, f32 bias add.
        return jnp.dot(h.astype(jnp.bfloat16), w_ref[...],
                       preferred_element_type=jnp.float32) + b_ref[...]

    def resblock(h, p):  # p: (w1, b1, w2, b2, w3, b3, w4, b4) refs
        r = h
        for j in range(4):
            r = leaky(linear(r, p[2 * j], p[2 * j + 1]))
        return r + h

    t = xy_ref[...]               # (tb, 2R) f32, concatenated in the wrapper
    t = resblock(t, w[0:8])       # b1
    t = resblock(t, w[8:16])      # b11
    t = linear(t, w[16], w[17])   # bt
    t = resblock(t, w[18:26])     # b2
    t = resblock(t, w[26:34])     # b22
    o_ref[...] = t


# --------------------------------- wrappers ---------------------------------

def _flatten_params(params):
    return [*params["b1"], *params["b11"], *params["bt"],
            *params["b2"], *params["b22"]]


@jax.jit
def prule_forward_batched(params, x, y):
    """x, y: (B, rule_count) f32 -> (B, rule_count) f32 (one fused kernel)."""
    B, R = x.shape
    w_list = _flatten_params(params)
    Rp = params["bt"][1].shape[-1]          # padded output width (mult. of 128)

    # Wrapper-side concat -> one lane-dense (B, 2R) activation input; avoids
    # in-kernel masked 64-lane loads and the XLU lane-offset concat per tile.
    xy = jnp.concatenate([x, y], axis=-1)

    tb = _pick_batch_tile(B)
    Bp = _round_up(B, tb)
    if Bp != B:                             # pad batch so the grid is exact
        xy = jnp.pad(xy, ((0, Bp - B), (0, 0)))

    act_spec = pl.BlockSpec((tb, 2 * R), lambda i: (i, 0))
    # Weights: grid-invariant blocks, single-buffered (no second pipeline
    # buffer needed) -> loaded to VMEM once and reused across all batch tiles.
    weight_specs = [
        pl.BlockSpec(w.shape, lambda i: (0, 0), pipeline_mode=pl.Buffered(1))
        for w in w_list
    ]

    # Advisory cost so XLA schedules neighbouring CYK-parser ops around us.
    macs = sum(int(w.size) for w in w_list[0::2])          # weight matrices
    wbytes = sum(int(w.size) * w.dtype.itemsize for w in w_list)
    cost = pl.CostEstimate(
        flops=2 * Bp * macs,
        transcendentals=0,
        bytes_accessed=wbytes + int(xy.size) * 4 + Bp * Rp * 4,
    )

    # TODO(synk): for rule_count >~500 the resident bf16 weight set overflows
    # v7x's 64 MiB per-core VMEM; add a K grid axis ("arbitrary") over the
    # 2Rx6R linears with an f32 VMEM accumulator and stream weight K-slabs.
    out = pl.pallas_call(
        prule_fused_kernel,
        out_shape=jax.ShapeDtypeStruct((Bp, Rp), jnp.float32),
        grid=(Bp // tb,),
        in_specs=[act_spec] + weight_specs,
        out_specs=pl.BlockSpec((tb, Rp), lambda i: (i, 0)),
        compiler_params=pltpu.CompilerParams(
            dimension_semantics=("parallel",),
            vmem_limit_bytes=_vmem_limit_bytes()),
        cost_estimate=cost,
    )(xy, *w_list)
    return out[:B, :R]


def prule_forward(params, x, y):
    """1-D x, y of size rule_count -> 1-D output (PyTorch forward signature).
    Avoid in hot loops: batch spans/cells and call prule_forward_batched."""
    out = prule_forward_batched(params, x[None, :], y[None, :])
    return out[0]


# Pure-JAX reference with the same numerical recipe (bf16 matmul operands,
# f32 accumulate) for a sanity check of the Pallas lowering.
def prule_reference(params, x, y):
    def leaky(v):
        return jnp.maximum(v, NEG_SLOPE * v)

    def linear(h, w, b):
        return jnp.dot(h.astype(jnp.bfloat16), w,
                       preferred_element_type=jnp.float32) + b

    def resblock(h, p):
        r = h
        for j in range(4):
            r = leaky(linear(r, p[2 * j], p[2 * j + 1]))
        return r + h

    t = jnp.concatenate([x, y], axis=-1)
    t = resblock(t, params["b1"])
    t = resblock(t, params["b11"])
    t = linear(t, *params["bt"])
    t = resblock(t, params["b2"])
    t = resblock(t, params["b22"])
    return t[:, : x.shape[-1]]


# --------------------------- parameter construction ------------------------

def init_linear(key, in_dim, out_dim, in_pad=None, out_pad=None):
    """PyTorch-default uniform init, zero-padded to (in_pad, out_pad).
    Weight matrix stored bf16 (MXU-native); bias stays f32 (post-matmul add)."""
    in_pad = in_dim if in_pad is None else in_pad
    out_pad = out_dim if out_pad is None else out_pad
    kw, kb = jax.random.split(key)
    bound = 1.0 / (in_dim ** 0.5)
    w = jax.random.uniform(kw, (in_dim, out_dim), jnp.float32, -bound, bound)
    b = jax.random.uniform(kb, (1, out_dim), jnp.float32, -bound, bound)
    w = jnp.zeros((in_pad, out_pad), jnp.float32).at[:in_dim, :out_dim].set(w)
    b = jnp.zeros((1, out_pad), jnp.float32).at[:, :out_dim].set(b)
    return w.astype(jnp.bfloat16), b


def init_resblock(key, dim, dim_pad, scale_pad):
    scale = 3 * dim
    shapes = [(dim, scale, dim_pad, scale_pad),
              (scale, dim, scale_pad, dim_pad),
              (dim, scale, dim_pad, scale_pad),
              (scale, dim, scale_pad, dim_pad)]
    keys = jax.random.split(key, len(shapes))
    params = []
    for k, (i, o, ip, op) in zip(keys, shapes):
        w, b = init_linear(k, i, o, ip, op)
        params.extend([w, b])
    return tuple(params)


def init_prule(key, rule_count):
    R = rule_count
    R2 = 2 * R                      # concat dim: kept exact (residual structure)
    Rp = _round_up(R, 128)          # padded R (bt output, b2/b22, final store)
    S2p = _round_up(3 * R2, 128)    # padded hidden dim of the 2R resblocks
    Sp = _round_up(3 * R, 128)      # padded hidden dim of the R resblocks
    k1, k11, kt, k2, k22 = jax.random.split(key, 5)
    return {
        "b1": init_resblock(k1, R2, R2, S2p),
        "b11": init_resblock(k11, R2, R2, S2p),
        "bt": init_linear(kt, R2, R, R2, Rp),
        "b2": init_resblock(k2, R, Rp, Sp),
        "b22": init_resblock(k22, R, Rp, Sp),
    }

# NOTE: PRule.norm() is defined in the PyTorch module but never used in
# forward(), so it is intentionally not implemented.


if __name__ == "__main__":
    rule_count = 64
    batch = 256

    key = jax.random.PRNGKey(0)
    kp, kx, ky = jax.random.split(key, 3)
    params = init_prule(kp, rule_count)
    x = jax.random.normal(kx, (batch, rule_count), jnp.float32)
    y = jax.random.normal(ky, (batch, rule_count), jnp.float32)

    # Batched path: one fused kernel over many (x, y) pairs (how the CYK
    # parser should call it).
    out = prule_forward_batched(params, x, y)
    jax.block_until_ready(out)
    assert out.shape == (batch, rule_count) and out.dtype == jnp.float32

    # Single-sample path matching the PyTorch forward(x, y) signature.
    out1 = prule_forward(params, x[0], y[0])
    jax.block_until_ready(out1)
    assert out1.shape == (rule_count,) and out1.dtype == jnp.float32

    # Numerical sanity check vs pure-JAX reference with the same bf16-operand /
    # f32-accumulate recipe (scale-relative tolerance for MXU vs XLA ordering).
    ref = jax.jit(prule_reference)(params, x, y)
    jax.block_until_ready(ref)
    assert bool(jnp.all(jnp.isfinite(out)))
    err = float(jnp.max(jnp.abs(out - ref)))
    scale = float(jnp.max(jnp.abs(ref))) + 1.0
    assert err <= 5e-2 * scale, f"kernel/reference mismatch: max_err={err}"

    print("KERNEL_OK")
</pallas_src>

<mosaic_0001>
module attributes {stable_mosaic.version = 11 : i64} {
  func.func @prule_fused_kernel(%arg0: i32, %arg1: memref<128x128xf32, #tpu.memory_space<vmem>>, %arg2: memref<128x384xbf16, #tpu.memory_space<vmem>>, %arg3: memref<1x384xf32, #tpu.memory_space<vmem>>, %arg4: memref<384x128xbf16, #tpu.memory_space<vmem>>, %arg5: memref<1x128xf32, #tpu.memory_space<vmem>>, %arg6: memref<128x384xbf16, #tpu.memory_space<vmem>>, %arg7: memref<1x384xf32, #tpu.memory_space<vmem>>, %arg8: memref<384x128xbf16, #tpu.memory_space<vmem>>, %arg9: memref<1x128xf32, #tpu.memory_space<vmem>>, %arg10: memref<128x384xbf16, #tpu.memory_space<vmem>>, %arg11: memref<1x384xf32, #tpu.memory_space<vmem>>, %arg12: memref<384x128xbf16, #tpu.memory_space<vmem>>, %arg13: memref<1x128xf32, #tpu.memory_space<vmem>>, %arg14: memref<128x384xbf16, #tpu.memory_space<vmem>>, %arg15: memref<1x384xf32, #tpu.memory_space<vmem>>, %arg16: memref<384x128xbf16, #tpu.memory_space<vmem>>, %arg17: memref<1x128xf32, #tpu.memory_space<vmem>>, %arg18: memref<128x128xbf16, #tpu.memory_space<vmem>>, %arg19: memref<1x128xf32, #tpu.memory_space<vmem>>, %arg20: memref<128x256xbf16, #tpu.memory_space<vmem>>, %arg21: memref<1x256xf32, #tpu.memory_space<vmem>>, %arg22: memref<256x128xbf16, #tpu.memory_space<vmem>>, %arg23: memref<1x128xf32, #tpu.memory_space<vmem>>, %arg24: memref<128x256xbf16, #tpu.memory_space<vmem>>, %arg25: memref<1x256xf32, #tpu.memory_space<vmem>>, %arg26: memref<256x128xbf16, #tpu.memory_space<vmem>>, %arg27: memref<1x128xf32, #tpu.memory_space<vmem>>, %arg28: memref<128x256xbf16, #tpu.memory_space<vmem>>, %arg29: memref<1x256xf32, #tpu.memory_space<vmem>>, %arg30: memref<256x128xbf16, #tpu.memory_space<vmem>>, %arg31: memref<1x128xf32, #tpu.memory_space<vmem>>, %arg32: memref<128x256xbf16, #tpu.memory_space<vmem>>, %arg33: memref<1x256xf32, #tpu.memory_space<vmem>>, %arg34: memref<256x128xbf16, #tpu.memory_space<vmem>>, %arg35: memref<1x128xf32, #tpu.memory_space<vmem>>, %arg36: memref<128x128xf32, #tpu.memory_space<vmem>>) attributes {dimension_semantics = [#tpu.dimension_semantics<parallel>], iteration_bounds = array<i64: 2>, scalar_prefetch = 0 : i64, scratch_operands = 0 : i64, tpu.core_type = #tpu.core_type<tc>, window_params = [{transform_indices = @transform_0, window_bounds = array<i64: 128, 128>}, {pipeline_mode = #tpu.pipeline_mode<synchronous>, transform_indices = @transform_1, window_bounds = array<i64: 128, 384>}, {pipeline_mode = #tpu.pipeline_mode<synchronous>, transform_indices = @transform_2, window_bounds = array<i64: 1, 384>}, {pipeline_mode = #tpu.pipeline_mode<synchronous>, transform_indices = @transform_3, window_bounds = array<i64: 384, 128>}, {pipeline_mode = #tpu.pipeline_mode<synchronous>, transform_indices = @transform_4, window_bounds = array<i64: 1, 128>}, {pipeline_mode = #tpu.pipeline_mode<synchronous>, transform_indices = @transform_5, window_bounds = array<i64: 128, 384>}, {pipeline_mode = #tpu.pipeline_mode<synchronous>, transform_indices = @transform_6, window_bounds = array<i64: 1, 384>}, {pipeline_mode = #tpu.pipeline_mode<synchronous>, transform_indices = @transform_7, window_bounds = array<i64: 384, 128>}, {pipeline_mode = #tpu.pipeline_mode<synchronous>, transform_indices = @transform_8, window_bounds = array<i64: 1, 128>}, {pipeline_mode = #tpu.pipeline_mode<synchronous>, transform_indices = @transform_9, window_bounds = array<i64: 128, 384>}, {pipeline_mode = #tpu.pipeline_mode<synchronous>, transform_indices = @transform_10, window_bounds = array<i64: 1, 384>}, {pipeline_mode = #tpu.pipeline_mode<synchronous>, transform_indices = @transform_11, window_bounds = array<i64: 384, 128>}, {pipeline_mode = #tpu.pipeline_mode<synchronous>, transform_indices = @transform_12, window_bounds = array<i64: 1, 128>}, {pipeline_mode = #tpu.pipeline_mode<synchronous>, transform_indices = @transform_13, window_bounds = array<i64: 128, 384>}, {pipeline_mode = #tpu.pipeline_mode<synchronous>, transform_indices = @transform_14, window_bounds = array<i64: 1, 384>}, {pipeline_mode = #tpu.pipeline_mode<synchronous>, transform_indices = @transform_15, window_bounds = array<i64: 384, 128>}, {pipeline_mode = #tpu.pipeline_mode<synchronous>, transform_indices = @transform_16, window_bounds = array<i64: 1, 128>}, {pipeline_mode = #tpu.pipeline_mode<synchronous>, transform_indices = @transform_17, window_bounds = array<i64: 128, 128>}, {pipeline_mode = #tpu.pipeline_mode<synchronous>, transform_indices = @transform_18, window_bounds = array<i64: 1, 128>}, {pipeline_mode = #tpu.pipeline_mode<synchronous>, transform_indices = @transform_19, window_bounds = array<i64: 128, 256>}, {pipeline_mode = #tpu.pipeline_mode<synchronous>, transform_indices = @transform_20, window_bounds = array<i64: 1, 256>}, {pipeline_mode = #tpu.pipeline_mode<synchronous>, transform_indices = @transform_21, window_bounds = array<i64: 256, 128>}, {pipeline_mode = #tpu.pipeline_mode<synchronous>, transform_indices = @transform_22, window_bounds = array<i64: 1, 128>}, {pipeline_mode = #tpu.pipeline_mode<synchronous>, transform_indices = @transform_23, window_bounds = array<i64: 128, 256>}, {pipeline_mode = #tpu.pipeline_mode<synchronous>, transform_indices = @transform_24, window_bounds = array<i64: 1, 256>}, {pipeline_mode = #tpu.pipeline_mode<synchronous>, transform_indices = @transform_25, window_bounds = array<i64: 256, 128>}, {pipeline_mode = #tpu.pipeline_mode<synchronous>, transform_indices = @transform_26, window_bounds = array<i64: 1, 128>}, {pipeline_mode = #tpu.pipeline_mode<synchronous>, transform_indices = @transform_27, window_bounds = array<i64: 128, 256>}, {pipeline_mode = #tpu.pipeline_mode<synchronous>, transform_indices = @transform_28, window_bounds = array<i64: 1, 256>}, {pipeline_mode = #tpu.pipeline_mode<synchronous>, transform_indices = @transform_29, window_bounds = array<i64: 256, 128>}, {pipeline_mode = #tpu.pipeline_mode<synchronous>, transform_indices = @transform_30, window_bounds = array<i64: 1, 128>}, {pipeline_mode = #tpu.pipeline_mode<synchronous>, transform_indices = @transform_31, window_bounds = array<i64: 128, 256>}, {pipeline_mode = #tpu.pipeline_mode<synchronous>, transform_indices = @transform_32, window_bounds = array<i64: 1, 256>}, {pipeline_mode = #tpu.pipeline_mode<synchronous>, transform_indices = @transform_33, window_bounds = array<i64: 256, 128>}, {pipeline_mode = #tpu.pipeline_mode<synchronous>, transform_indices = @transform_34, window_bounds = array<i64: 1, 128>}, {transform_indices = @transform_35, window_bounds = array<i64: 128, 128>}]} {
    %c0 = arith.constant 0 : index
    %c0_0 = arith.constant 0 : index
    %0 = vector.load %arg1[%c0, %c0_0] : memref<128x128xf32, #tpu.memory_space<vmem>>, vector<128x128xf32>
    %1 = arith.truncf %0 : vector<128x128xf32> to vector<128x128xbf16>
    %c0_1 = arith.constant 0 : index
    %c0_2 = arith.constant 0 : index
    %2 = vector.load %arg2[%c0_1, %c0_2] : memref<128x384xbf16, #tpu.memory_space<vmem>>, vector<128x384xbf16>
    %cst = arith.constant dense<0.000000e+00> : vector<128x384xf32>
    %3 = tpu.matmul %1, %2, %cst {dimension_numbers = #tpu.dot_dimension_numbers<[1], [0], [0], [1], [0, 0, 1, 1], [], []>} : vector<128x128xbf16>, vector<128x384xbf16>, vector<128x384xf32> -> vector<128x384xf32>
    %c0_3 = arith.constant 0 : index
    %c0_4 = arith.constant 0 : index
    %4 = vector.load %arg3[%c0_3, %c0_4] : memref<1x384xf32, #tpu.memory_space<vmem>>, vector<1x384xf32>
    %5 = vector.broadcast %4 : vector<1x384xf32> to vector<128x384xf32>
    %6 = arith.addf %3, %5 : vector<128x384xf32>
    %cst_5 = arith.constant 0.00999999977 : f32
    %7 = vector.broadcast %cst_5 : f32 to vector<128x384xf32>
    %8 = arith.mulf %7, %6 : vector<128x384xf32>
    %9 = arith.maximumf %6, %8 : vector<128x384xf32>
    %10 = arith.truncf %9 : vector<128x384xf32> to vector<128x384xbf16>
    %c0_6 = arith.constant 0 : index
    %c0_7 = arith.constant 0 : index
    %11 = vector.load %arg4[%c0_6, %c0_7] : memref<384x128xbf16, #tpu.memory_space<vmem>>, vector<384x128xbf16>
    %cst_8 = arith.constant dense<0.000000e+00> : vector<128x128xf32>
    %12 = tpu.matmul %10, %11, %cst_8 {dimension_numbers = #tpu.dot_dimension_numbers<[1], [0], [0], [1], [0, 0, 1, 1], [], []>} : vector<128x384xbf16>, vector<384x128xbf16>, vector<128x128xf32> -> vector<128x128xf32>
    %c0_9 = arith.constant 0 : index
    %c0_10 = arith.constant 0 : index
    %13 = vector.load %arg5[%c0_9, %c0_10] : memref<1x128xf32, #tpu.memory_space<vmem>>, vector<1x128xf32>
    %14 = vector.broadcast %13 : vector<1x128xf32> to vector<128x128xf32>
    %15 = arith.addf %12, %14 : vector<128x128xf32>
    %cst_11 = arith.constant 0.00999999977 : f32
    %16 = vector.broadcast %cst_11 : f32 to vector<128x128xf32>
    %17 = arith.mulf %16, %15 : vector<128x128xf32>
    %18 = arith.maximumf %15, %17 : vector<128x128xf32>
    %19 = arith.truncf %18 : vector<128x128xf32> to vector<128x128xbf16>
    %c0_12 = arith.constant 0 : index
    %c0_13 = arith.constant 0 : index
    %20 = vector.load %arg6[%c0_12, %c0_13] : memref<128x384xbf16, #tpu.memory_space<vmem>>, vector<128x384xbf16>
    %cst_14 = arith.constant dense<0.000000e+00> : vector<128x384xf32>
    %21 = tpu.matmul %19, %20, %cst_14 {dimension_numbers = #tpu.dot_dimension_numbers<[1], [0], [0], [1], [0, 0, 1, 1], [], []>} : vector<128x128xbf16>, vector<128x384xbf16>, vector<128x384xf32> -> vector<128x384xf32>
    %c0_15 = arith.constant 0 : index
    %c0_16 = arith.constant 0 : index
    %22 = vector.load %arg7[%c0_15, %c0_16] : memref<1x384xf32, #tpu.memory_space<vmem>>, vector<1x384xf32>
    %23 = vector.broadcast %22 : vector<1x384xf32> to vector<128x384xf32>
    %24 = arith.addf %21, %23 : vector<128x384xf32>
    %cst_17 = arith.constant 0.00999999977 : f32
    %25 = vector.broadcast %cst_17 : f32 to vector<128x384xf32>
    %26 = arith.mulf %25, %24 : vector<128x384xf32>
    %27 = arith.maximumf %24, %26 : vector<128x384xf32>
    %28 = arith.truncf %27 : vector<128x384xf32> to vector<128x384xbf16>
    %c0_18 = arith.constant 0 : index
    %c0_19 = arith.constant 0 : index
    %29 = vector.load %arg8[%c0_18, %c0_19] : memref<384x128xbf16, #tpu.memory_space<vmem>>, vector<384x128xbf16>
    %cst_20 = arith.constant dense<0.000000e+00> : vector<128x128xf32>
    %30 = tpu.matmul %28, %29, %cst_20 {dimension_numbers = #tpu.dot_dimension_numbers<[1], [0], [0], [1], [0, 0, 1, 1], [], []>} : vector<128x384xbf16>, vector<384x128xbf16>, vector<128x128xf32> -> vector<128x128xf32>
    %c0_21 = arith.constant 0 : index
    %c0_22 = arith.constant 0 : index
    %31 = vector.load %arg9[%c0_21, %c0_22] : memref<1x128xf32, #tpu.memory_space<vmem>>, vector<1x128xf32>
    %32 = vector.broadcast %31 : vector<1x128xf32> to vector<128x128xf32>
    %33 = arith.addf %30, %32 : vector<128x128xf32>
    %cst_23 = arith.constant 0.00999999977 : f32
    %34 = vector.broadcast %cst_23 : f32 to vector<128x128xf32>
    %35 = arith.mulf %34, %33 : vector<128x128xf32>
    %36 = arith.maximumf %33, %35 : vector<128x128xf32>
    %37 = arith.addf %36, %0 : vector<128x128xf32>
    %38 = arith.truncf %37 : vector<128x128xf32> to vector<128x128xbf16>
    %c0_24 = arith.constant 0 : index
    %c0_25 = arith.constant 0 : index
    %39 = vector.load %arg10[%c0_24, %c0_25] : memref<128x384xbf16, #tpu.memory_space<vmem>>, vector<128x384xbf16>
    %cst_26 = arith.constant dense<0.000000e+00> : vector<128x384xf32>
    %40 = tpu.matmul %38, %39, %cst_26 {dimension_numbers = #tpu.dot_dimension_numbers<[1], [0], [0], [1], [0, 0, 1, 1], [], []>} : vector<128x128xbf16>, vector<128x384xbf16>, vector<128x384xf32> -> vector<128x384xf32>
    %c0_27 = arith.constant 0 : index
    %c0_28 = arith.constant 0 : index
    %41 = vector.load %arg11[%c0_27, %c0_28] : memref<1x384xf32, #tpu.memory_space<vmem>>, vector<1x384xf32>
    %42 = vector.broadcast %41 : vector<1x384xf32> to vector<128x384xf32>
    %43 = arith.addf %40, %42 : vector<128x384xf32>
    %cst_29 = arith.constant 0.00999999977 : f32
    %44 = vector.broadcast %cst_29 : f32 to vector<128x384xf32>
    %45 = arith.mulf %44, %43 : vector<128x384xf32>
    %46 = arith.maximumf %43, %45 : vector<128x384xf32>
    %47 = arith.truncf %46 : vector<128x384xf32> to vector<128x384xbf16>
    %c0_30 = arith.constant 0 : index
    %c0_31 = arith.constant 0 : index
    %48 = vector.load %arg12[%c0_30, %c0_31] : memref<384x128xbf16, #tpu.memory_space<vmem>>, vector<384x128xbf16>
    %cst_32 = arith.constant dense<0.000000e+00> : vector<128x128xf32>
    %49 = tpu.matmul %47, %48, %cst_32 {dimension_numbers = #tpu.dot_dimension_numbers<[1], [0], [0], [1], [0, 0, 1, 1], [], []>} : vector<128x384xbf16>, vector<384x128xbf16>, vector<128x128xf32> -> vector<128x128xf32>
    %c0_33 = arith.constant 0 : index
    %c0_34 = arith.constant 0 : index
    %50 = vector.load %arg13[%c0_33, %c0_34] : memref<1x128xf32, #tpu.memory_space<vmem>>, vector<1x128xf32>
    %51 = vector.broadcast %50 : vector<1x128xf32> to vector<128x128xf32>
    %52 = arith.addf %49, %51 : vector<128x128xf32>
    %cst_35 = arith.constant 0.00999999977 : f32
    %53 = vector.broadcast %cst_35 : f32 to vector<128x128xf32>
    %54 = arith.mulf %53, %52 : vector<128x128xf32>
    %55 = arith.maximumf %52, %54 : vector<128x128xf32>
    %56 = arith.truncf %55 : vector<128x128xf32> to vector<128x128xbf16>
    %c0_36 = arith.constant 0 : index
    %c0_37 = arith.constant 0 : index
    %57 = vector.load %arg14[%c0_36, %c0_37] : memref<128x384xbf16, #tpu.memory_space<vmem>>, vector<128x384xbf16>
    %cst_38 = arith.constant dense<0.000000e+00> : vector<128x384xf32>
    %58 = tpu.matmul %56, %57, %cst_38 {dimension_numbers = #tpu.dot_dimension_numbers<[1], [0], [0], [1], [0, 0, 1, 1], [], []>} : vector<128x128xbf16>, vector<128x384xbf16>, vector<128x384xf32> -> vector<128x384xf32>
    %c0_39 = arith.constant 0 : index
    %c0_40 = arith.constant 0 : index
    %59 = vector.load %arg15[%c0_39, %c0_40] : memref<1x384xf32, #tpu.memory_space<vmem>>, vector<1x384xf32>
    %60 = vector.broadcast %59 : vector<1x384xf32> to vector<128x384xf32>
    %61 = arith.addf %58, %60 : vector<128x384xf32>
    %cst_41 = arith.constant 0.00999999977 : f32
    %62 = vector.broadcast %cst_41 : f32 to vector<128x384xf32>
    %63 = arith.mulf %62, %61 : vector<128x384xf32>
    %64 = arith.maximumf %61, %63 : vector<128x384xf32>
    %65 = arith.truncf %64 : vector<128x384xf32> to vector<128x384xbf16>
    %c0_42 = arith.constant 0 : index
    %c0_43 = arith.constant 0 : index
    %66 = vector.load %arg16[%c0_42, %c0_43] : memref<384x128xbf16, #tpu.memory_space<vmem>>, vector<384x128xbf16>
    %cst_44 = arith.constant dense<0.000000e+00> : vector<128x128xf32>
    %67 = tpu.matmul %65, %66, %cst_44 {dimension_numbers = #tpu.dot_dimension_numbers<[1], [0], [0], [1], [0, 0, 1, 1], [], []>} : vector<128x384xbf16>, vector<384x128xbf16>, vector<128x128xf32> -> vector<128x128xf32>
    %c0_45 = arith.constant 0 : index
    %c0_46 = arith.constant 0 : index
    %68 = vector.load %arg17[%c0_45, %c0_46] : memref<1x128xf32, #tpu.memory_space<vmem>>, vector<1x128xf32>
    %69 = vector.broadcast %68 : vector<1x128xf32> to vector<128x128xf32>
    %70 = arith.addf %67, %69 : vector<128x128xf32>
    %cst_47 = arith.constant 0.00999999977 : f32
    %71 = vector.broadcast %cst_47 : f32 to vector<128x128xf32>
    %72 = arith.mulf %71, %70 : vector<128x128xf32>
    %73 = arith.maximumf %70, %72 : vector<128x128xf32>
    %74 = arith.addf %73, %37 : vector<128x128xf32>
    %75 = arith.truncf %74 : vector<128x128xf32> to vector<128x128xbf16>
    %c0_48 = arith.constant 0 : index
    %c0_49 = arith.constant 0 : index
    %76 = vector.load %arg18[%c0_48, %c0_49] : memref<128x128xbf16, #tpu.memory_space<vmem>>, vector<128x128xbf16>
    %cst_50 = arith.constant dense<0.000000e+00> : vector<128x128xf32>
    %77 = tpu.matmul %75, %76, %cst_50 {dimension_numbers = #tpu.dot_dimension_numbers<[1], [0], [0], [1], [0, 0, 1, 1], [], []>} : vector<128x128xbf16>, vector<128x128xbf16>, vector<128x128xf32> -> vector<128x128xf32>
    %c0_51 = arith.constant 0 : index
    %c0_52 = arith.constant 0 : index
    %78 = vector.load %arg19[%c0_51, %c0_52] : memref<1x128xf32, #tpu.memory_space<vmem>>, vector<1x128xf32>
    %79 = vector.broadcast %78 : vector<1x128xf32> to vector<128x128xf32>
    %80 = arith.addf %77, %79 : vector<128x128xf32>
    %81 = arith.truncf %80 : vector<128x128xf32> to vector<128x128xbf16>
    %c0_53 = arith.constant 0 : index
    %c0_54 = arith.constant 0 : index
    %82 = vector.load %arg20[%c0_53, %c0_54] : memref<128x256xbf16, #tpu.memory_space<vmem>>, vector<128x256xbf16>
    %cst_55 = arith.constant dense<0.000000e+00> : vector<128x256xf32>
    %83 = tpu.matmul %81, %82, %cst_55 {dimension_numbers = #tpu.dot_dimension_numbers<[1], [0], [0], [1], [0, 0, 1, 1], [], []>} : vector<128x128xbf16>, vector<128x256xbf16>, vector<128x256xf32> -> vector<128x256xf32>
    %c0_56 = arith.constant 0 : index
    %c0_57 = arith.constant 0 : index
    %84 = vector.load %arg21[%c0_56, %c0_57] : memref<1x256xf32, #tpu.memory_space<vmem>>, vector<1x256xf32>
    %85 = vector.broadcast %84 : vector<1x256xf32> to vector<128x256xf32>
    %86 = arith.addf %83, %85 : vector<128x256xf32>
    %cst_58 = arith.constant 0.00999999977 : f32
    %87 = vector.broadcast %cst_58 : f32 to vector<128x256xf32>
    %88 = arith.mulf %87, %86 : vector<128x256xf32>
    %89 = arith.maximumf %86, %88 : vector<128x256xf32>
    %90 = arith.truncf %89 : vector<128x256xf32> to vector<128x256xbf16>
    %c0_59 = arith.constant 0 : index
    %c0_60 = arith.constant 0 : index
    %91 = vector.load %arg22[%c0_59, %c0_60] : memref<256x128xbf16, #tpu.memory_space<vmem>>, vector<256x128xbf16>
    %cst_61 = arith.constant dense<0.000000e+00> : vector<128x128xf32>
    %92 = tpu.matmul %90, %91, %cst_61 {dimension_numbers = #tpu.dot_dimension_numbers<[1], [0], [0], [1], [0, 0, 1, 1], [], []>} : vector<128x256xbf16>, vector<256x128xbf16>, vector<128x128xf32> -> vector<128x128xf32>
    %c0_62 = arith.constant 0 : index
    %c0_63 = arith.constant 0 : index
    %93 = vector.load %arg23[%c0_62, %c0_63] : memref<1x128xf32, #tpu.memory_space<vmem>>, vector<1x128xf32>
    %94 = vector.broadcast %93 : vector<1x128xf32> to vector<128x128xf32>
    %95 = arith.addf %92, %94 : vector<128x128xf32>
    %cst_64 = arith.constant 0.00999999977 : f32
    %96 = vector.broadcast %cst_64 : f32 to vector<128x128xf32>
    %97 = arith.mulf %96, %95 : vector<128x128xf32>
    %98 = arith.maximumf %95, %97 : vector<128x128xf32>
    %99 = arith.truncf %98 : vector<128x128xf32> to vector<128x128xbf16>
    %c0_65 = arith.constant 0 : index
    %c0_66 = arith.constant 0 : index
    %100 = vector.load %arg24[%c0_65, %c0_66] : memref<128x256xbf16, #tpu.memory_space<vmem>>, vector<128x256xbf16>
    %cst_67 = arith.constant dense<0.000000e+00> : vector<128x256xf32>
    %101 = tpu.matmul %99, %100, %cst_67 {dimension_numbers = #tpu.dot_dimension_numbers<[1], [0], [0], [1], [0, 0, 1, 1], [], []>} : vector<128x128xbf16>, vector<128x256xbf16>, vector<128x256xf32> -> vector<128x256xf32>
    %c0_68 = arith.constant 0 : index
    %c0_69 = arith.constant 0 : index
    %102 = vector.load %arg25[%c0_68, %c0_69] : memref<1x256xf32, #tpu.memory_space<vmem>>, vector<1x256xf32>
    %103 = vector.broadcast %102 : vector<1x256xf32> to vector<128x256xf32>
    %104 = arith.addf %101, %103 : vector<128x256xf32>
    %cst_70 = arith.constant 0.00999999977 : f32
    %105 = vector.broadcast %cst_70 : f32 to vector<128x256xf32>
    %106 = arith.mulf %105, %104 : vector<128x256xf32>
    %107 = arith.maximumf %104, %106 : vector<128x256xf32>
    %108 = arith.truncf %107 : vector<128x256xf32> to vector<128x256xbf16>
    %c0_71 = arith.constant 0 : index
    %c0_72 = arith.constant 0 : index
    %109 = vector.load %arg26[%c0_71, %c0_72] : memref<256x128xbf16, #tpu.memory_space<vmem>>, vector<256x128xbf16>
    %cst_73 = arith.constant dense<0.000000e+00> : vector<128x128xf32>
    %110 = tpu.matmul %108, %109, %cst_73 {dimension_numbers = #tpu.dot_dimension_numbers<[1], [0], [0], [1], [0, 0, 1, 1], [], []>} : vector<128x256xbf16>, vector<256x128xbf16>, vector<128x128xf32> -> vector<128x128xf32>
    %c0_74 = arith.constant 0 : index
    %c0_75 = arith.constant 0 : index
    %111 = vector.load %arg27[%c0_74, %c0_75] : memref<1x128xf32, #tpu.memory_space<vmem>>, vector<1x128xf32>
    %112 = vector.broadcast %111 : vector<1x128xf32> to vector<128x128xf32>
    %113 = arith.addf %110, %112 : vector<128x128xf32>
    %cst_76 = arith.constant 0.00999999977 : f32
    %114 = vector.broadcast %cst_76 : f32 to vector<128x128xf32>
    %115 = arith.mulf %114, %113 : vector<128x128xf32>
    %116 = arith.maximumf %113, %115 : vector<128x128xf32>
    %117 = arith.addf %116, %80 : vector<128x128xf32>
    %118 = arith.truncf %117 : vector<128x128xf32> to vector<128x128xbf16>
    %c0_77 = arith.constant 0 : index
    %c0_78 = arith.constant 0 : index
    %119 = vector.load %arg28[%c0_77, %c0_78] : memref<128x256xbf16, #tpu.memory_space<vmem>>, vector<128x256xbf16>
    %cst_79 = arith.constant dense<0.000000e+00> : vector<128x256xf32>
    %120 = tpu.matmul %118, %119, %cst_79 {dimension_numbers = #tpu.dot_dimension_numbers<[1], [0], [0], [1], [0, 0, 1, 1], [], []>} : vector<128x128xbf16>, vector<128x256xbf16>, vector<128x256xf32> -> vector<128x256xf32>
    %c0_80 = arith.constant 0 : index
    %c0_81 = arith.constant 0 : index
    %121 = vector.load %arg29[%c0_80, %c0_81] : memref<1x256xf32, #tpu.memory_space<vmem>>, vector<1x256xf32>
    %122 = vector.broadcast %121 : vector<1x256xf32> to vector<128x256xf32>
    %123 = arith.addf %120, %122 : vector<128x256xf32>
    %cst_82 = arith.constant 0.00999999977 : f32
    %124 = vector.broadcast %cst_82 : f32 to vector<128x256xf32>
    %125 = arith.mulf %124, %123 : vector<128x256xf32>
    %126 = arith.maximumf %123, %125 : vector<128x256xf32>
    %127 = arith.truncf %126 : vector<128x256xf32> to vector<128x256xbf16>
    %c0_83 = arith.constant 0 : index
    %c0_84 = arith.constant 0 : index
    %128 = vector.load %arg30[%c0_83, %c0_84] : memref<256x128xbf16, #tpu.memory_space<vmem>>, vector<256x128xbf16>
    %cst_85 = arith.constant dense<0.000000e+00> : vector<128x128xf32>
    %129 = tpu.matmul %127, %128, %cst_85 {dimension_numbers = #tpu.dot_dimension_numbers<[1], [0], [0], [1], [0, 0, 1, 1], [], []>} : vector<128x256xbf16>, vector<256x128xbf16>, vector<128x128xf32> -> vector<128x128xf32>
    %c0_86 = arith.constant 0 : index
    %c0_87 = arith.constant 0 : index
    %130 = vector.load %arg31[%c0_86, %c0_87] : memref<1x128xf32, #tpu.memory_space<vmem>>, vector<1x128xf32>
    %131 = vector.broadcast %130 : vector<1x128xf32> to vector<128x128xf32>
    %132 = arith.addf %129, %131 : vector<128x128xf32>
    %cst_88 = arith.constant 0.00999999977 : f32
    %133 = vector.broadcast %cst_88 : f32 to vector<128x128xf32>
    %134 = arith.mulf %133, %132 : vector<128x128xf32>
    %135 = arith.maximumf %132, %134 : vector<128x128xf32>
    %136 = arith.truncf %135 : vector<128x128xf32> to vector<128x128xbf16>
    %c0_89 = arith.constant 0 : index
    %c0_90 = arith.constant 0 : index
    %137 = vector.load %arg32[%c0_89, %c0_90] : memref<128x256xbf16, #tpu.memory_space<vmem>>, vector<128x256xbf16>
    %cst_91 = arith.constant dense<0.000000e+00> : vector<128x256xf32>
    %138 = tpu.matmul %136, %137, %cst_91 {dimension_numbers = #tpu.dot_dimension_numbers<[1], [0], [0], [1], [0, 0, 1, 1], [], []>} : vector<128x128xbf16>, vector<128x256xbf16>, vector<128x256xf32> -> vector<128x256xf32>
    %c0_92 = arith.constant 0 : index
    %c0_93 = arith.constant 0 : index
    %139 = vector.load %arg33[%c0_92, %c0_93] : memref<1x256xf32, #tpu.memory_space<vmem>>, vector<1x256xf32>
    %140 = vector.broadcast %139 : vector<1x256xf32> to vector<128x256xf32>
    %141 = arith.addf %138, %140 : vector<128x256xf32>
    %cst_94 = arith.constant 0.00999999977 : f32
    %142 = vector.broadcast %cst_94 : f32 to vector<128x256xf32>
    %143 = arith.mulf %142, %141 : vector<128x256xf32>
    %144 = arith.maximumf %141, %143 : vector<128x256xf32>
    %145 = arith.truncf %144 : vector<128x256xf32> to vector<128x256xbf16>
    %c0_95 = arith.constant 0 : index
    %c0_96 = arith.constant 0 : index
    %146 = vector.load %arg34[%c0_95, %c0_96] : memref<256x128xbf16, #tpu.memory_space<vmem>>, vector<256x128xbf16>
    %cst_97 = arith.constant dense<0.000000e+00> : vector<128x128xf32>
    %147 = tpu.matmul %145, %146, %cst_97 {dimension_numbers = #tpu.dot_dimension_numbers<[1], [0], [0], [1], [0, 0, 1, 1], [], []>} : vector<128x256xbf16>, vector<256x128xbf16>, vector<128x128xf32> -> vector<128x128xf32>
    %c0_98 = arith.constant 0 : index
    %c0_99 = arith.constant 0 : index
    %148 = vector.load %arg35[%c0_98, %c0_99] : memref<1x128xf32, #tpu.memory_space<vmem>>, vector<1x128xf32>
    %149 = vector.broadcast %148 : vector<1x128xf32> to vector<128x128xf32>
    %150 = arith.addf %147, %149 : vector<128x128xf32>
    %cst_100 = arith.constant 0.00999999977 : f32
    %151 = vector.broadcast %cst_100 : f32 to vector<128x128xf32>
    %152 = arith.mulf %151, %150 : vector<128x128xf32>
    %153 = arith.maximumf %150, %152 : vector<128x128xf32>
    %154 = arith.addf %153, %117 : vector<128x128xf32>
    %c0_101 = arith.constant 0 : index
    %c0_102 = arith.constant 0 : index
    %155 = vector.load %arg36[%c0_101, %c0_102] : memref<128x128xf32, #tpu.memory_space<vmem>>, vector<128x128xf32>
    tpu.vector_store %arg36[%c0_101, %c0_102], %154 {strides = array<i32>} : memref<128x128xf32, #tpu.memory_space<vmem>>, vector<128x128xf32>,
    return
  }
  func.func @transform_0(%arg0: i32) -> (i32, i32) {
    %c0_i32 = arith.constant 0 : i32
    %c0_i32_0 = arith.constant 0 : i32
    return %arg0, %c0_i32 : i32, i32
  }
  func.func @transform_1(%arg0: i32) -> (i32, i32) {
    %c0_i32 = arith.constant 0 : i32
    %c0_i32_0 = arith.constant 0 : i32
    %c0_i32_1 = arith.constant 0 : i32
    return %c0_i32, %c0_i32_0 : i32, i32
  }
  func.func @transform_2(%arg0: i32) -> (i32, i32) {
    %c0_i32 = arith.constant 0 : i32
    %c0_i32_0 = arith.constant 0 : i32
    %c0_i32_1 = arith.constant 0 : i32
    return %c0_i32, %c0_i32_0 : i32, i32
  }
  func.func @transform_3(%arg0: i32) -> (i32, i32) {
    %c0_i32 = arith.constant 0 : i32
    %c0_i32_0 = arith.constant 0 : i32
    %c0_i32_1 = arith.constant 0 : i32
    return %c0_i32, %c0_i32_0 : i32, i32
  }
  func.func @transform_4(%arg0: i32) -> (i32, i32) {
    %c0_i32 = arith.constant 0 : i32
    %c0_i32_0 = arith.constant 0 : i32
    %c0_i32_1 = arith.constant 0 : i32
    return %c0_i32, %c0_i32_0 : i32, i32
  }
  func.func @transform_5(%arg0: i32) -> (i32, i32) {
    %c0_i32 = arith.constant 0 : i32
    %c0_i32_0 = arith.constant 0 : i32
    %c0_i32_1 = arith.constant 0 : i32
    return %c0_i32, %c0_i32_0 : i32, i32
  }
  func.func @transform_6(%arg0: i32) -> (i32, i32) {
    %c0_i32 = arith.constant 0 : i32
    %c0_i32_0 = arith.constant 0 : i32
    %c0_i32_1 = arith.constant 0 : i32
    return %c0_i32, %c0_i32_0 : i32, i32
  }
  func.func @transform_7(%arg0: i32) -> (i32, i32) {
    %c0_i32 = arith.constant 0 : i32
    %c0_i32_0 = arith.constant 0 : i32
    %c0_i32_1 = arith.constant 0 : i32
    return %c0_i32, %c0_i32_0 : i32, i32
  }
  func.func @transform_8(%arg0: i32) -> (i32, i32) {
    %c0_i32 = arith.constant 0 : i32
    %c0_i32_0 = arith.constant 0 : i32
    %c0_i32_1 = arith.constant 0 : i32
    return %c0_i32, %c0_i32_0 : i32, i32
  }
  func.func @transform_9(%arg0: i32) -> (i32, i32) {
    %c0_i32 = arith.constant 0 : i32
    %c0_i32_0 = arith.constant 0 : i32
    %c0_i32_1 = arith.constant 0 : i32
    return %c0_i32, %c0_i32_0 : i32, i32
  }
  func.func @transform_10(%arg0: i32) -> (i32, i32) {
    %c0_i32 = arith.constant 0 : i32
    %c0_i32_0 = arith.constant 0 : i32
    %c0_i32_1 = arith.constant 0 : i32
    return %c0_i32, %c0_i32_0 : i32, i32
  }
  func.func @transform_11(%arg0: i32) -> (i32, i32) {
    %c0_i32 = arith.constant 0 : i32
    %c0_i32_0 = arith.constant 0 : i32
    %c0_i32_1 = arith.constant 0 : i32
    return %c0_i32, %c0_i32_0 : i32, i32
  }
  func.func @transform_12(%arg0: i32) -> (i32, i32) {
    %c0_i32 = arith.constant 0 : i32
    %c0_i32_0 = arith.constant 0 : i32
    %c0_i32_1 = arith.constant 0 : i32
    return %c0_i32, %c0_i32_0 : i32, i32
  }
  func.func @transform_13(%arg0: i32) -> (i32, i32) {
    %c0_i32 = arith.constant 0 : i32
    %c0_i32_0 = arith.constant 0 : i32
    %c0_i32_1 = arith.constant 0 : i32
    return %c0_i32, %c0_i32_0 : i32, i32
  }
  func.func @transform_14(%arg0: i32) -> (i32, i32) {
    %c0_i32 = arith.constant 0 : i32
    %c0_i32_0 = arith.constant 0 : i32
    %c0_i32_1 = arith.constant 0 : i32
    return %c0_i32, %c0_i32_0 : i32, i32
  }
  func.func @transform_15(%arg0: i32) -> (i32, i32) {
    %c0_i32 = arith.constant 0 : i32
    %c0_i32_0 = arith.constant 0 : i32
    %c0_i32_1 = arith.constant 0 : i32
    return %c0_i32, %c0_i32_0 : i32, i32
  }
  func.func @transform_16(%arg0: i32) -> (i32, i32) {
    %c0_i32 = arith.constant 0 : i32
    %c0_i32_0 = arith.constant 0 : i32
    %c0_i32_1 = arith.constant 0 : i32
    return %c0_i32, %c0_i32_0 : i32, i32
  }
  func.func @transform_17(%arg0: i32) -> (i32, i32) {
    %c0_i32 = arith.constant 0 : i32
    %c0_i32_0 = arith.constant 0 : i32
    %c0_i32_1 = arith.constant 0 : i32
    return %c0_i32, %c0_i32_0 : i32, i32
  }
  func.func @transform_18(%arg0: i32) -> (i32, i32) {
    %c0_i32 = arith.constant 0 : i32
    %c0_i32_0 = arith.constant 0 : i32
    %c0_i32_1 = arith.constant 0 : i32
    return %c0_i32, %c0_i32_0 : i32, i32
  }
  func.func @transform_19(%arg0: i32) -> (i32, i32) {
    %c0_i32 = arith.constant 0 : i32
    %c0_i32_0 = arith.constant 0 : i32
    %c0_i32_1 = arith.constant 0 : i32
    return %c0_i32, %c0_i32_0 : i32, i32
  }
  func.func @transform_20(%arg0: i32) -> (i32, i32) {
    %c0_i32 = arith.constant 0 : i32
    %c0_i32_0 = arith.constant 0 : i32
    %c0_i32_1 = arith.constant 0 : i32
    return %c0_i32, %c0_i32_0 : i32, i32
  }
  func.func @transform_21(%arg0: i32) -> (i32, i32) {
    %c0_i32 = arith.constant 0 : i32
    %c0_i32_0 = arith.constant 0 : i32
    %c0_i32_1 = arith.constant 0 : i32
    return %c0_i32, %c0_i32_0 : i32, i32
  }
  func.func @transform_22(%arg0: i32) -> (i32, i32) {
    %c0_i32 = arith.constant 0 : i32
    %c0_i32_0 = arith.constant 0 : i32
    %c0_i32_1 = arith.constant 0 : i32
    return %c0_i32, %c0_i32_0 : i32, i32
  }
  func.func @transform_23(%arg0: i32) -> (i32, i32) {
    %c0_i32 = arith.constant 0 : i32
    %c0_i32_0 = arith.constant 0 : i32
    %c0_i32_1 = arith.constant 0 : i32
    return %c0_i32, %c0_i32_0 : i32, i32
  }
  func.func @transform_24(%arg0: i32) -> (i32, i32) {
    %c0_i32 = arith.constant 0 : i32
    %c0_i32_0 = arith.constant 0 : i32
    %c0_i32_1 = arith.constant 0 : i32
    return %c0_i32, %c0_i32_0 : i32, i32
  }
  func.func @transform_25(%arg0: i32) -> (i32, i32) {
    %c0_i32 = arith.constant 0 : i32
    %c0_i32_0 = arith.constant 0 : i32
    %c0_i32_1 = arith.constant 0 : i32
    return %c0_i32, %c0_i32_0 : i32, i32
  }
  func.func @transform_26(%arg0: i32) -> (i32, i32) {
    %c0_i32 = arith.constant 0 : i32
    %c0_i32_0 = arith.constant 0 : i32
    %c0_i32_1 = arith.constant 0 : i32
    return %c0_i32, %c0_i32_0 : i32, i32
  }
  func.func @transform_27(%arg0: i32) -> (i32, i32) {
    %c0_i32 = arith.constant 0 : i32
    %c0_i32_0 = arith.constant 0 : i32
    %c0_i32_1 = arith.constant 0 : i32
    return %c0_i32, %c0_i32_0 : i32, i32
  }
  func.func @transform_28(%arg0: i32) -> (i32, i32) {
    %c0_i32 = arith.constant 0 : i32
    %c0_i32_0 = arith.constant 0 : i32
    %c0_i32_1 = arith.constant 0 : i32
    return %c0_i32, %c0_i32_0 : i32, i32
  }
  func.func @transform_29(%arg0: i32) -> (i32, i32) {
    %c0_i32 = arith.constant 0 : i32
    %c0_i32_0 = arith.constant 0 : i32
    %c0_i32_1 = arith.constant 0 : i32
    return %c0_i32, %c0_i32_0 : i32, i32
  }
  func.func @transform_30(%arg0: i32) -> (i32, i32) {
    %c0_i32 = arith.constant 0 : i32
    %c0_i32_0 = arith.constant 0 : i32
    %c0_i32_1 = arith.constant 0 : i32
    return %c0_i32, %c0_i32_0 : i32, i32
  }
  func.func @transform_31(%arg0: i32) -> (i32, i32) {
    %c0_i32 = arith.constant 0 : i32
    %c0_i32_0 = arith.constant 0 : i32
    %c0_i32_1 = arith.constant 0 : i32
    return %c0_i32, %c0_i32_0 : i32, i32
  }
  func.func @transform_32(%arg0: i32) -> (i32, i32) {
    %c0_i32 = arith.constant 0 : i32
    %c0_i32_0 = arith.constant 0 : i32
    %c0_i32_1 = arith.constant 0 : i32
    return %c0_i32, %c0_i32_0 : i32, i32
  }
  func.func @transform_33(%arg0: i32) -> (i32, i32) {
    %c0_i32 = arith.constant 0 : i32
    %c0_i32_0 = arith.constant 0 : i32
    %c0_i32_1 = arith.constant 0 : i32
    return %c0_i32, %c0_i32_0 : i32, i32
  }
  func.func @transform_34(%arg0: i32) -> (i32, i32) {
    %c0_i32 = arith.constant 0 : i32
    %c0_i32_0 = arith.constant 0 : i32
    %c0_i32_1 = arith.constant 0 : i32
    return %c0_i32, %c0_i32_0 : i32, i32
  }
  func.func @transform_35(%arg0: i32) -> (i32, i32) {
    %c0_i32 = arith.constant 0 : i32
    %c0_i32_0 = arith.constant 0 : i32
    return %arg0, %c0_i32 : i32, i32
  }
}

</mosaic_0001>

<llo_original>
// kernel: prule_forward_batched.1
$region0: #{prule_forward_batched.1}
  #allocation0 [shape = 'u32[]', space=smem, size = 0x4, offset = 0x4, fixed_abs, tag = 'smem constant byte address 0x4 - core index']
  #allocation1 [shape = 'u32[144,128]{1,0:T(1,128)}', space=vmem, size = 0x12000, scoped, tag = 'internal scratch']
  %s0 = inlined_call_operand.smem [shape: u32[36], index: -1, kind: input, shape index: {}]
  %s1 = sld [smem:[%s0]]
  %s2 = scalar_lea.smem %s0, 1
  %s3 = sld [smem:[%s2]]
  %s4 = scalar_lea.smem %s0, 2
  %s5 = sld [smem:[%s4]]
  %s6 = scalar_lea.smem %s0, 3
  %s7 = sld [smem:[%s6]]
  %s8 = scalar_lea.smem %s0, 4
  %s9 = sld [smem:[%s8]]
  %s10 = scalar_lea.smem %s0, 5
  %s11 = sld [smem:[%s10]]
  %s12 = scalar_lea.smem %s0, 6
  %s13 = sld [smem:[%s12]]
  %s14 = scalar_lea.smem %s0, 7
  %s15 = sld [smem:[%s14]]
  %s16 = scalar_lea.smem %s0, 8
  %s17 = sld [smem:[%s16]]
  %s18 = scalar_lea.smem %s0, 9
  %s19 = sld [smem:[%s18]]
  %s20 = scalar_lea.smem %s0, 10
  %s21 = sld [smem:[%s20]]
  %s22 = scalar_lea.smem %s0, 11
  %s23 = sld [smem:[%s22]]
  %s24 = scalar_lea.smem %s0, 12
  %s25 = sld [smem:[%s24]]
  %s26 = scalar_lea.smem %s0, 13
  %s27 = sld [smem:[%s26]]
  %s28 = scalar_lea.smem %s0, 14
  %s29 = sld [smem:[%s28]]
  %s30 = scalar_lea.smem %s0, 15
  %s31 = sld [smem:[%s30]]
  %s32 = scalar_lea.smem %s0, 16
  %s33 = sld [smem:[%s32]]
  %s34 = scalar_lea.smem %s0, 17
  %s35 = sld [smem:[%s34]]
  %s36 = scalar_lea.smem %s0, 18
  %s37 = sld [smem:[%s36]]
  %s38 = scalar_lea.smem %s0, 19
  %s39 = sld [smem:[%s38]]
  %s40 = scalar_lea.smem %s0, 20
  %s41 = sld [smem:[%s40]]
  %s42 = scalar_lea.smem %s0, 21
  %s43 = sld [smem:[%s42]]
  %s44 = scalar_lea.smem %s0, 22
  %s45 = sld [smem:[%s44]]
  %s46 = scalar_lea.smem %s0, 23
  %s47 = sld [smem:[%s46]]
  %s48 = scalar_lea.smem %s0, 24
  %s49 = sld [smem:[%s48]]
  %s50 = scalar_lea.smem %s0, 25
  %s51 = sld [smem:[%s50]]
  %s52 = scalar_lea.smem %s0, 26
  %s53 = sld [smem:[%s52]]
  %s54 = scalar_lea.smem %s0, 27
  %s55 = sld [smem:[%s54]]
  %s56 = scalar_lea.smem %s0, 28
  %s57 = sld [smem:[%s56]]
  %s58 = scalar_lea.smem %s0, 29
  %s59 = sld [smem:[%s58]]
  %s60 = scalar_lea.smem %s0, 30
  %s61 = sld [smem:[%s60]]
  %s62 = scalar_lea.smem %s0, 31
  %s63 = sld [smem:[%s62]]
  %s64 = scalar_lea.smem %s0, 32
  %s65 = sld [smem:[%s64]]
  %s66 = scalar_lea.smem %s0, 33
  %s67 = sld [smem:[%s66]]
  %s68 = scalar_lea.smem %s0, 34
  %s69 = sld [smem:[%s68]]
  %s70 = scalar_lea.smem %s0, 35
  %s71 = sld [smem:[%s70]]
  %s72 = sld [smem:[#allocation0]]
  $region277: #{prule_forward_batched.1} parent=0
    _
  %s74 = ssub.s32 1, %s72
  %s75 = scalar_select 0, %s74, %s72
  $region1: #{prule_forward_batched.1} parent=0
    #allocation2 [shape = 'u8[1536]{0}', space=vmem, size = 0x800, scoped, tag = 'input window, operand 2, single buffered']
    #allocation3 [shape = 's32[2]{0}', space=sflag, size = 0x8, scoped, tag = 'scoped memory for prule_forward_batched.1']
    #allocation4 [shape = 'u8[512]{0}', space=vmem, size = 0x400, scoped, tag = 'input window, operand 4, single buffered']
    #allocation5 [shape = 's32[1]{0}', space=sflag, size = 0x4, scoped, tag = 'scoped memory for prule_forward_batched.1']
    #allocation6 [shape = 'u8[1536]{0}', space=vmem, size = 0x800, scoped, tag = 'input window, operand 6, single buffered']
    #allocation7 [shape = 'u8[512]{0}', space=vmem, size = 0x400, scoped, tag = 'input window, operand 8, single buffered']
    #allocation8 [shape = 's32[1]{0}', space=sflag, size = 0x4, scoped, tag = 'scoped memory for prule_forward_batched.1']
    #allocation9 [shape = 'u8[1536]{0}', space=vmem, size = 0x800, scoped, tag = 'input window, operand 10, single buffered']
    #allocation10 [shape = 'u8[512]{0}', space=vmem, size = 0x400, scoped, tag = 'input window, operand 12, single buffered']
    #allocation11 [shape = 's32[1]{0}', space=sflag, size = 0x4, scoped, tag = 'scoped memory for prule_forward_batched.1']
    #allocation12 [shape = 'u8[1536]{0}', space=vmem, size = 0x800, scoped, tag = 'input window, operand 14, single buffered']
    #allocation13 [shape = 'u8[512]{0}', space=vmem, size = 0x400, scoped, tag = 'input window, operand 16, single buffered']
    #allocation14 [shape = 's32[1]{0}', space=sflag, size = 0x4, scoped, tag = 'scoped memory for prule_forward_batched.1']
    #allocation15 [shape = 'u8[32768]{0}', space=vmem, size = 0x8000, scoped, tag = 'input window, operand 17, single buffered']
    #allocation16 [shape = 'u8[512]{0}', space=vmem, size = 0x400, scoped, tag = 'input window, operand 18, single buffered']
    #allocation17 [shape = 's32[1]{0}', space=sflag, size = 0x4, scoped, tag = 'scoped memory for prule_forward_batched.1']
    #allocation18 [shape = 'u8[65536]{0}', space=vmem, size = 0x10000, scoped, tag = 'input window, operand 19, single buffered']
    #allocation19 [shape = 'u8[1024]{0}', space=vmem, size = 0x400, scoped, tag = 'input window, operand 20, single buffered']
    #allocation20 [shape = 's32[1]{0}', space=sflag, size = 0x4, scoped, tag = 'scoped memory for prule_forward_batched.1']
    #allocation21 [shape = 'u8[65536]{0}', space=vmem, size = 0x10000, scoped, tag = 'input window, operand 21, single buffered']
    #allocation22 [shape = 'u8[512]{0}', space=vmem, size = 0x400, scoped, tag = 'input window, operand 22, single buffered']
    #allocation23 [shape = 's32[1]{0}', space=sflag, size = 0x4, scoped, tag = 'scoped memory for prule_forward_batched.1']
    #allocation24 [shape = 'u8[65536]{0}', space=vmem, size = 0x10000, scoped, tag = 'input window, operand 23, single buffered']
    #allocation25 [shape = 'u8[1024]{0}', space=vmem, size = 0x400, scoped, tag = 'input window, operand 24, single buffered']
    #allocation26 [shape = 's32[1]{0}', space=sflag, size = 0x4, scoped, tag = 'scoped memory for prule_forward_batched.1']
    #allocation27 [shape = 'u8[65536]{0}', space=vmem, size = 0x10000, scoped, tag = 'input window, operand 25, single buffered']
    #allocation28 [shape = 'u8[512]{0}', space=vmem, size = 0x400, scoped, tag = 'input window, operand 26, single buffered']
    #allocation29 [shape = 's32[1]{0}', space=sflag, size = 0x4, scoped, tag = 'scoped memory for prule_forward_batched.1']
    #allocation30 [shape = 'u8[65536]{0}', space=vmem, size = 0x10000, scoped, tag = 'input window, operand 27, single buffered']
    #allocation31 [shape = 'u8[1024]{0}', space=vmem, size = 0x400, scoped, tag = 'input window, operand 28, single buffered']
    #allocation32 [shape = 's32[1]{0}', space=sflag, size = 0x4, scoped, tag = 'scoped memory for prule_forward_batched.1']
    #allocation33 [shape = 'u8[65536]{0}', space=vmem, size = 0x10000, scoped, tag = 'input window, operand 29, single buffered']
    #allocation34 [shape = 'u8[512]{0}', space=vmem, size = 0x400, scoped, tag = 'input window, operand 30, single buffered']
    #allocation35 [shape = 's32[1]{0}', space=sflag, size = 0x4, scoped, tag = 'scoped memory for prule_forward_batched.1']
    #allocation36 [shape = 'u8[65536]{0}', space=vmem, size = 0x10000, scoped, tag = 'input window, operand 31, single buffered']
    #allocation37 [shape = 'u8[1024]{0}', space=vmem, size = 0x400, scoped, tag = 'input window, operand 32, single buffered']
    #allocation38 [shape = 's32[1]{0}', space=sflag, size = 0x4, scoped, tag = 'scoped memory for prule_forward_batched.1']
    #allocation39 [shape = 'u8[65536]{0}', space=vmem, size = 0x10000, scoped, tag = 'input window, operand 33, single buffered']
    #allocation40 [shape = 'u8[512]{0}', space=vmem, size = 0x400, scoped, tag = 'input window, operand 34, single buffered']
    #allocation41 [shape = 's32[1]{0}', space=sflag, size = 0x4, scoped, tag = 'scoped memory for prule_forward_batched.1']
    %76 = vsyncpa [#allocation3], 0
    %77 = vsyncpa [#allocation5], 0
    %78 = vsyncpa [#allocation8], 0
    %79 = vsyncpa [#allocation11], 0
    %80 = vsyncpa [#allocation14], 0
    %81 = vsyncpa [#allocation17], 0
    %82 = vsyncpa [#allocation20], 0
    %83 = vsyncpa [#allocation23], 0
    %84 = vsyncpa [#allocation26], 0
    %85 = vsyncpa [#allocation29], 0
    %86 = vsyncpa [#allocation32], 0
    %87 = vsyncpa [#allocation35], 0
    %88 = vsyncpa [#allocation38], 0
    %89 = vsyncpa [#allocation41], 0
    loop: start=0, step=1, limit=4
    $region2: #{prule_forward_batched.1} parent=1 // loop_pre_header
      _
    $region3: #{prule_forward_batched.1} parent=1 // loop_header
      %s91 = sphi 0, %s95
      %p92 = scmp.ge.s32.totalorder %s91, 4
      %s101 = sphi 0, %s103
      %s104 = sphi 0, %s101
      %s105 = sphi 0, %s104
      %s121 = sphi 0, %s105
      %s125 = sphi 0, %s125
      %s127 = sphi 0, %s125
      %s128 = sphi 0, %s127
      %s142 = sphi 0, %s128
      %s146 = sphi 0, %s146
      %s148 = sphi 0, %s146
      %s149 = sphi 0, %s148
      %s163 = sphi 0, %s149
      %s167 = sphi 0, %s167
      %s169 = sphi 0, %s167
      %s170 = sphi 0, %s169
      %s184 = sphi 0, %s170
      %s188 = sphi 0, %s188
      %s190 = sphi 0, %s188
      %s191 = sphi 0, %s190
      %s205 = sphi 0, %s191
      %s209 = sphi 0, %s209
      %s211 = sphi 0, %s209
      %s212 = sphi 0, %s211
      %s226 = sphi 0, %s212
      %s230 = sphi 0, %s230
      %s232 = sphi 0, %s230
      %s233 = sphi 0, %s232
      %s247 = sphi 0, %s233
      %s251 = sphi 0, %s251
      %s253 = sphi 0, %s251
      %s254 = sphi 0, %s253
      %s268 = sphi 0, %s254
      %s272 = sphi 0, %s272
      %s274 = sphi 0, %s272
      %s275 = sphi 0, %s274
      %s289 = sphi 0, %s275
      %s293 = sphi 0, %s293
      %s295 = sphi 0, %s293
      %s296 = sphi 0, %s295
      %s310 = sphi 0, %s296
      %s314 = sphi 0, %s314
      %s316 = sphi 0, %s314
      %s317 = sphi 0, %s316
      %s331 = sphi 0, %s317
      %s335 = sphi 0, %s335
      %s337 = sphi 0, %s335
      %s338 = sphi 0, %s337
      %s352 = sphi 0, %s338
      %s356 = sphi 0, %s356
      %s358 = sphi 0, %s356
      %s359 = sphi 0, %s358
      %s373 = sphi 0, %s359
      %s377 = sphi 0, %s377
      %s379 = sphi 0, %s377
      %s380 = sphi 0, %s379
      %s394 = sphi 0, %s380
      %s398 = sphi 0, %s398
      %s400 = sphi 0, %s398
      %s401 = sphi 0, %s400
      %s415 = sphi 0, %s401
      %s419 = sphi 0, %s419
      %s421 = sphi 0, %s419
      %s422 = sphi 0, %s421
      %s436 = sphi 0, %s422
      %s440 = sphi 0, %s440
      %s442 = sphi 0, %s440
      %s443 = sphi 0, %s442
      %s457 = sphi 0, %s443
      %s461 = sphi 0, %s461
      %s463 = sphi 0, %s461
      %s464 = sphi 0, %s463
      %s478 = sphi 0, %s464
      %s482 = sphi 0, %s482
      %s484 = sphi 0, %s482
      %s485 = sphi 0, %s484
      %s499 = sphi 0, %s485
      %s503 = sphi 0, %s503
      %s505 = sphi 0, %s503
      %s506 = sphi 0, %s505
      %s520 = sphi 0, %s506
      %s524 = sphi 0, %s524
      %s526 = sphi 0, %s524
      %s527 = sphi 0, %s526
      %s541 = sphi 0, %s527
      %s545 = sphi 0, %s545
      %s547 = sphi 0, %s545
      %s548 = sphi 0, %s547
      %s562 = sphi 0, %s548
      %s566 = sphi 0, %s566
      %s568 = sphi 0, %s566
      %s569 = sphi 0, %s568
      %s583 = sphi 0, %s569
      %s587 = sphi 0, %s587
      %s589 = sphi 0, %s587
      %s590 = sphi 0, %s589
      %s604 = sphi 0, %s590
      %s608 = sphi 0, %s608
      %s610 = sphi 0, %s608
      %s611 = sphi 0, %s610
      %s625 = sphi 0, %s611
      %s629 = sphi 0, %s629
      %s631 = sphi 0, %s629
      %s632 = sphi 0, %s631
      %s646 = sphi 0, %s632
      %s650 = sphi 0, %s650
      %s652 = sphi 0, %s650
      %s653 = sphi 0, %s652
      %s667 = sphi 0, %s653
      %s671 = sphi 0, %s671
      %s673 = sphi 0, %s671
      %s674 = sphi 0, %s673
      %s688 = sphi 0, %s674
      %s692 = sphi 0, %s692
      %s694 = sphi 0, %s692
      %s695 = sphi 0, %s694
      %s709 = sphi 0, %s695
      %s713 = sphi 0, %s713
      %s715 = sphi 0, %s713
      %s716 = sphi 0, %s715
      %s730 = sphi 0, %s716
      %s734 = sphi 0, %s734
      %s736 = sphi 0, %s734
      %s737 = sphi 0, %s736
      %s751 = sphi 0, %s737
      %s755 = sphi 0, %s755
      %s757 = sphi 0, %s755
      %s758 = sphi 0, %s757
      %s772 = sphi 0, %s758
      %s776 = sphi 0, %s776
      %s778 = sphi 0, %s776
      %s779 = sphi 0, %s778
      %s793 = sphi 0, %s779
      %s797 = sphi 0, %s797
      %s799 = sphi 0, %s797
      %s800 = sphi 0, %s799
      %s814 = sphi 0, %s800
      %s818 = sphi 0, %s818
      %s820 = sphi 0, %s818
      %s821 = sphi 0, %s820
      %s835 = sphi 0, %s821
      %s841 = sphi 0, %s843
      %s844 = sphi 0, %s841
      %s845 = sphi 0, %s844
      %s861 = sphi 0, %s845
    $region4: #{prule_forward_batched.1} parent=1 // loop_header_branch
      %94 = sbr.rel (%p92) target = $region8
    $region5: #{prule_forward_batched.1} parent=1 // loop_body
      %s96 = ssub.s32 %s91, 1
      %s97 = ssub.s32 %s91, 2
      %s98 = sadd.s32 %s91, 1
      %s99 = ssub.s32 %s91, %s98
      %p100 = scmp.eq.s32.totalorder %s99, 0
      %s102 = sadd.s32 %s101, 1
      %s103 = scalar_select %p100, %s101, %s102
      %p106 = pneg %p100
      %p107 = scmp.eq.s32.totalorder %s91, 1
      %p108 = por %p106, %p107
      %p109 = scmp.ne.s32.totalorder %s101, %s104
      %p110 = scmp.eq.s32.totalorder %s91, 0
      %p111 = por %p109, %p110
      %p112 = scmp.ne.s32.totalorder %s101, %s104
      %p113 = scmp.eq.s32.totalorder %s96, 1
      %p114 = por %p112, %p113
      %p115 = scmp.ne.s32.totalorder %s104, %s105
      %p116 = scmp.eq.s32.totalorder %s96, 0
      %p117 = por %p115, %p116
      %p118 = scmp.ne.s32.totalorder %s104, %s105
      %p119 = scmp.eq.s32.totalorder %s97, 1
      %p120 = por %p118, %p119
      %p122 = scmp.ne.s32.totalorder %s105, %s121
      %p123 = scmp.eq.s32.totalorder %s97, 0
      %p124 = por %p122, %p123
      %s126 = sadd.s32 %s125, 1
      %p129 = scmp.eq.s32.totalorder %s91, 1
      %p130 = scmp.ne.s32.totalorder %s125, %s127
      %p131 = scmp.eq.s32.totalorder %s91, 0
      %p132 = por %p130, %p131
      %p133 = scmp.ne.s32.totalorder %s125, %s127
      %p134 = scmp.eq.s32.totalorder %s96, 1
      %p135 = por %p133, %p134
      %p136 = scmp.ne.s32.totalorder %s127, %s128
      %p137 = scmp.eq.s32.totalorder %s96, 0
      %p138 = por %p136, %p137
      %p139 = scmp.ne.s32.totalorder %s127, %s128
      %p140 = scmp.eq.s32.totalorder %s97, 1
      %p141 = por %p139, %p140
      %p143 = scmp.ne.s32.totalorder %s128, %s142
      %p144 = scmp.eq.s32.totalorder %s97, 0
      %p145 = por %p143, %p144
      %s147 = sadd.s32 %s146, 1
      %p150 = scmp.eq.s32.totalorder %s91, 1
      %p151 = scmp.ne.s32.totalorder %s146, %s148
      %p152 = scmp.eq.s32.totalorder %s91, 0
      %p153 = por %p151, %p152
      %p154 = scmp.ne.s32.totalorder %s146, %s148
      %p155 = scmp.eq.s32.totalorder %s96, 1
      %p156 = por %p154, %p155
      %p157 = scmp.ne.s32.totalorder %s148, %s149
      %p158 = scmp.eq.s32.totalorder %s96, 0
      %p159 = por %p157, %p158
      %p160 = scmp.ne.s32.totalorder %s148, %s149
      %p161 = scmp.eq.s32.totalorder %s97, 1
      %p162 = por %p160, %p161
      %p164 = scmp.ne.s32.totalorder %s149, %s163
      %p165 = scmp.eq.s32.totalorder %s97, 0
      %p166 = por %p164, %p165
      %s168 = sadd.s32 %s167, 1
      %p171 = scmp.eq.s32.totalorder %s91, 1
      %p172 = scmp.ne.s32.totalorder %s167, %s169
      %p173 = scmp.eq.s32.totalorder %s91, 0
      %p174 = por %p172, %p173
      %p175 = scmp.ne.s32.totalorder %s167, %s169
      %p176 = scmp.eq.s32.totalorder %s96, 1
      %p177 = por %p175, %p176
      %p178 = scmp.ne.s32.totalorder %s169, %s170
      %p179 = scmp.eq.s32.totalorder %s96, 0
      %p180 = por %p178, %p179
      %p181 = scmp.ne.s32.totalorder %s169, %s170
      %p182 = scmp.eq.s32.totalorder %s97, 1
      %p183 = por %p181, %p182
      %p185 = scmp.ne.s32.totalorder %s170, %s184
      %p186 = scmp.eq.s32.totalorder %s97, 0
      %p187 = por %p185, %p186
      %s189 = sadd.s32 %s188, 1
      %p192 = scmp.eq.s32.totalorder %s91, 1
      %p193 = scmp.ne.s32.totalorder %s188, %s190
      %p194 = scmp.eq.s32.totalorder %s91, 0
      %p195 = por %p193, %p194
      %p196 = scmp.ne.s32.totalorder %s188, %s190
      %p197 = scmp.eq.s32.totalorder %s96, 1
      %p198 = por %p196, %p197
      %p199 = scmp.ne.s32.totalorder %s190, %s191
      %p200 = scmp.eq.s32.totalorder %s96, 0
      %p201 = por %p199, %p200
      %p202 = scmp.ne.s32.totalorder %s190, %s191
      %p203 = scmp.eq.s32.totalorder %s97, 1
      %p204 = por %p202, %p203
      %p206 = scmp.ne.s32.totalorder %s191, %s205
      %p207 = scmp.eq.s32.totalorder %s97, 0
      %p208 = por %p206, %p207
      %s210 = sadd.s32 %s209, 1
      %p213 = scmp.eq.s32.totalorder %s91, 1
      %p214 = scmp.ne.s32.totalorder %s209, %s211
      %p215 = scmp.eq.s32.totalorder %s91, 0
      %p216 = por %p214, %p215
      %p217 = scmp.ne.s32.totalorder %s209, %s211
      %p218 = scmp.eq.s32.totalorder %s96, 1
      %p219 = por %p217, %p218
      %p220 = scmp.ne.s32.totalorder %s211, %s212
      %p221 = scmp.eq.s32.totalorder %s96, 0
      %p222 = por %p220, %p221
      %p223 = scmp.ne.s32.totalorder %s211, %s212
      %p224 = scmp.eq.s32.totalorder %s97, 1
      %p225 = por %p223, %p224
      %p227 = scmp.ne.s32.totalorder %s212, %s226
      %p228 = scmp.eq.s32.totalorder %s97, 0
      %p229 = por %p227, %p228
      %s231 = sadd.s32 %s230, 1
      %p234 = scmp.eq.s32.totalorder %s91, 1
      %p235 = scmp.ne.s32.totalorder %s230, %s232
      %p236 = scmp.eq.s32.totalorder %s91, 0
      %p237 = por %p235, %p236
      %p238 = scmp.ne.s32.totalorder %s230, %s232
      %p239 = scmp.eq.s32.totalorder %s96, 1
      %p240 = por %p238, %p239
      %p241 = scmp.ne.s32.totalorder %s232, %s233
      %p242 = scmp.eq.s32.totalorder %s96, 0
      %p243 = por %p241, %p242
      %p244 = scmp.ne.s32.totalorder %s232, %s233
      %p245 = scmp.eq.s32.totalorder %s97, 1
      %p246 = por %p244, %p245
      %p248 = scmp.ne.s32.totalorder %s233, %s247
      %p249 = scmp.eq.s32.totalorder %s97, 0
      %p250 = por %p248, %p249
      %s252 = sadd.s32 %s251, 1
      %p255 = scmp.eq.s32.totalorder %s91, 1
      %p256 = scmp.ne.s32.totalorder %s251, %s253
      %p257 = scmp.eq.s32.totalorder %s91, 0
      %p258 = por %p256, %p257
      %p259 = scmp.ne.s32.totalorder %s251, %s253
      %p260 = scmp.eq.s32.totalorder %s96, 1
      %p261 = por %p259, %p260
      %p262 = scmp.ne.s32.totalorder %s253, %s254
      %p263 = scmp.eq.s32.totalorder %s96, 0
      %p264 = por %p262, %p263
      %p265 = scmp.ne.s32.totalorder %s253, %s254
      %p266 = scmp.eq.s32.totalorder %s97, 1
      %p267 = por %p265, %p266
      %p269 = scmp.ne.s32.totalorder %s254, %s268
      %p270 = scmp.eq.s32.totalorder %s97, 0
      %p271 = por %p269, %p270
      %s273 = sadd.s32 %s272, 1
      %p276 = scmp.eq.s32.totalorder %s91, 1
      %p277 = scmp.ne.s32.totalorder %s272, %s274
      %p278 = scmp.eq.s32.totalorder %s91, 0
      %p279 = por %p277, %p278
      %p280 = scmp.ne.s32.totalorder %s272, %s274
      %p281 = scmp.eq.s32.totalorder %s96, 1
      %p282 = por %p280, %p281
      %p283 = scmp.ne.s32.totalorder %s274, %s275
      %p284 = scmp.eq.s32.totalorder %s96, 0
      %p285 = por %p283, %p284
      %p286 = scmp.ne.s32.totalorder %s274, %s275
      %p287 = scmp.eq.s32.totalorder %s97, 1
      %p288 = por %p286, %p287
      %p290 = scmp.ne.s32.totalorder %s275, %s289
      %p291 = scmp.eq.s32.totalorder %s97, 0
      %p292 = por %p290, %p291
      %s294 = sadd.s32 %s293, 1
      %p297 = scmp.eq.s32.totalorder %s91, 1
      %p298 = scmp.ne.s32.totalorder %s293, %s295
      %p299 = scmp.eq.s32.totalorder %s91, 0
      %p300 = por %p298, %p299
      %p301 = scmp.ne.s32.totalorder %s293, %s295
      %p302 = scmp.eq.s32.totalorder %s96, 1
      %p303 = por %p301, %p302
      %p304 = scmp.ne.s32.totalorder %s295, %s296
      %p305 = scmp.eq.s32.totalorder %s96, 0
      %p306 = por %p304, %p305
      %p307 = scmp.ne.s32.totalorder %s295, %s296
      %p308 = scmp.eq.s32.totalorder %s97, 1
      %p309 = por %p307, %p308
      %p311 = scmp.ne.s32.totalorder %s296, %s310
      %p312 = scmp.eq.s32.totalorder %s97, 0
      %p313 = por %p311, %p312
      %s315 = sadd.s32 %s314, 1
      %p318 = scmp.eq.s32.totalorder %s91, 1
      %p319 = scmp.ne.s32.totalorder %s314, %s316
      %p320 = scmp.eq.s32.totalorder %s91, 0
      %p321 = por %p319, %p320
      %p322 = scmp.ne.s32.totalorder %s314, %s316
      %p323 = scmp.eq.s32.totalorder %s96, 1
      %p324 = por %p322, %p323
      %p325 = scmp.ne.s32.totalorder %s316, %s317
      %p326 = scmp.eq.s32.totalorder %s96, 0
      %p327 = por %p325, %p326
      %p328 = scmp.ne.s32.totalorder %s316, %s317
      %p329 = scmp.eq.s32.totalorder %s97, 1
      %p330 = por %p328, %p329
      %p332 = scmp.ne.s32.totalorder %s317, %s331
      %p333 = scmp.eq.s32.totalorder %s97, 0
      %p334 = por %p332, %p333
      %s336 = sadd.s32 %s335, 1
      %p339 = scmp.eq.s32.totalorder %s91, 1
      %p340 = scmp.ne.s32.totalorder %s335, %s337
      %p341 = scmp.eq.s32.totalorder %s91, 0
      %p342 = por %p340, %p341
      %p343 = scmp.ne.s32.totalorder %s335, %s337
      %p344 = scmp.eq.s32.totalorder %s96, 1
      %p345 = por %p343, %p344
      %p346 = scmp.ne.s32.totalorder %s337, %s338
      %p347 = scmp.eq.s32.totalorder %s96, 0
      %p348 = por %p346, %p347
      %p349 = scmp.ne.s32.totalorder %s337, %s338
      %p350 = scmp.eq.s32.totalorder %s97, 1
      %p351 = por %p349, %p350
      %p353 = scmp.ne.s32.totalorder %s338, %s352
      %p354 = scmp.eq.s32.totalorder %s97, 0
      %p355 = por %p353, %p354
      %s357 = sadd.s32 %s356, 1
      %p360 = scmp.eq.s32.totalorder %s91, 1
      %p361 = scmp.ne.s32.totalorder %s356, %s358
      %p362 = scmp.eq.s32.totalorder %s91, 0
      %p363 = por %p361, %p362
      %p364 = scmp.ne.s32.totalorder %s356, %s358
      %p365 = scmp.eq.s32.totalorder %s96, 1
      %p366 = por %p364, %p365
      %p367 = scmp.ne.s32.totalorder %s358, %s359
      %p368 = scmp.eq.s32.totalorder %s96, 0
      %p369 = por %p367, %p368
      %p370 = scmp.ne.s32.totalorder %s358, %s359
      %p371 = scmp.eq.s32.totalorder %s97, 1
      %p372 = por %p370, %p371
      %p374 = scmp.ne.s32.totalorder %s359, %s373
      %p375 = scmp.eq.s32.totalorder %s97, 0
      %p376 = por %p374, %p375
      %s378 = sadd.s32 %s377, 1
      %p381 = scmp.eq.s32.totalorder %s91, 1
      %p382 = scmp.ne.s32.totalorder %s377, %s379
      %p383 = scmp.eq.s32.totalorder %s91, 0
      %p384 = por %p382, %p383
      %p385 = scmp.ne.s32.totalorder %s377, %s379
      %p386 = scmp.eq.s32.totalorder %s96, 1
      %p387 = por %p385, %p386
      %p388 = scmp.ne.s32.totalorder %s379, %s380
      %p389 = scmp.eq.s32.totalorder %s96, 0
      %p390 = por %p388, %p389
      %p391 = scmp.ne.s32.totalorder %s379, %s380
      %p392 = scmp.eq.s32.totalorder %s97, 1
      %p393 = por %p391, %p392
      %p395 = scmp.ne.s32.totalorder %s380, %s394
      %p396 = scmp.eq.s32.totalorder %s97, 0
      %p397 = por %p395, %p396
      %s399 = sadd.s32 %s398, 1
      %p402 = scmp.eq.s32.totalorder %s91, 1
      %p403 = scmp.ne.s32.totalorder %s398, %s400
      %p404 = scmp.eq.s32.totalorder %s91, 0
      %p405 = por %p403, %p404
      %p406 = scmp.ne.s32.totalorder %s398, %s400
      %p407 = scmp.eq.s32.totalorder %s96, 1
      %p408 = por %p406, %p407
      %p409 = scmp.ne.s32.totalorder %s400, %s401
      %p410 = scmp.eq.s32.totalorder %s96, 0
      %p411 = por %p409, %p410
      %p412 = scmp.ne.s32.totalorder %s400, %s401
      %p413 = scmp.eq.s32.totalorder %s97, 1
      %p414 = por %p412, %p413
      %p416 = scmp.ne.s32.totalorder %s401, %s415
      %p417 = scmp.eq.s32.totalorder %s97, 0
      %p418 = por %p416, %p417
      %s420 = sadd.s32 %s419, 1
      %p423 = scmp.eq.s32.totalorder %s91, 1
      %p424 = scmp.ne.s32.totalorder %s419, %s421
      %p425 = scmp.eq.s32.totalorder %s91, 0
      %p426 = por %p424, %p425
      %p427 = scmp.ne.s32.totalorder %s419, %s421
      %p428 = scmp.eq.s32.totalorder %s96, 1
      %p429 = por %p427, %p428
      %p430 = scmp.ne.s32.totalorder %s421, %s422
      %p431 = scmp.eq.s32.totalorder %s96, 0
      %p432 = por %p430, %p431
      %p433 = scmp.ne.s32.totalorder %s421, %s422
      %p434 = scmp.eq.s32.totalorder %s97, 1
      %p435 = por %p433, %p434
      %p437 = scmp.ne.s32.totalorder %s422, %s436
      %p438 = scmp.eq.s32.totalorder %s97, 0
      %p439 = por %p437, %p438
      %s441 = sadd.s32 %s440, 1
      %p444 = scmp.eq.s32.totalorder %s91, 1
      %p445 = scmp.ne.s32.totalorder %s440, %s442
      %p446 = scmp.eq.s32.totalorder %s91, 0
      %p447 = por %p445, %p446
      %p448 = scmp.ne.s32.totalorder %s440, %s442
      %p449 = scmp.eq.s32.totalorder %s96, 1
      %p450 = por %p448, %p449
      %p451 = scmp.ne.s32.totalorder %s442, %s443
      %p452 = scmp.eq.s32.totalorder %s96, 0
      %p453 = por %p451, %p452
      %p454 = scmp.ne.s32.totalorder %s442, %s443
      %p455 = scmp.eq.s32.totalorder %s97, 1
      %p456 = por %p454, %p455
      %p458 = scmp.ne.s32.totalorder %s443, %s457
      %p459 = scmp.eq.s32.totalorder %s97, 0
      %p460 = por %p458, %p459
      %s462 = sadd.s32 %s461, 1
      %p465 = scmp.eq.s32.totalorder %s91, 1
      %p466 = scmp.ne.s32.totalorder %s461, %s463
      %p467 = scmp.eq.s32.totalorder %s91, 0
      %p468 = por %p466, %p467
      %p469 = scmp.ne.s32.totalorder %s461, %s463
      %p470 = scmp.eq.s32.totalorder %s96, 1
      %p471 = por %p469, %p470
      %p472 = scmp.ne.s32.totalorder %s463, %s464
      %p473 = scmp.eq.s32.totalorder %s96, 0
      %p474 = por %p472, %p473
      %p475 = scmp.ne.s32.totalorder %s463, %s464
      %p476 = scmp.eq.s32.totalorder %s97, 1
      %p477 = por %p475, %p476
      %p479 = scmp.ne.s32.totalorder %s464, %s478
      %p480 = scmp.eq.s32.totalorder %s97, 0
      %p481 = por %p479, %p480
      %s483 = sadd.s32 %s482, 1
      %p486 = scmp.eq.s32.totalorder %s91, 1
      %p487 = scmp.ne.s32.totalorder %s482, %s484
      %p488 = scmp.eq.s32.totalorder %s91, 0
      %p489 = por %p487, %p488
      %p490 = scmp.ne.s32.totalorder %s482, %s484
      %p491 = scmp.eq.s32.totalorder %s96, 1
      %p492 = por %p490, %p491
      %p493 = scmp.ne.s32.totalorder %s484, %s485
      %p494 = scmp.eq.s32.totalorder %s96, 0
      %p495 = por %p493, %p494
      %p496 = scmp.ne.s32.totalorder %s484, %s485
      %p497 = scmp.eq.s32.totalorder %s97, 1
      %p498 = por %p496, %p497
      %p500 = scmp.ne.s32.totalorder %s485, %s499
      %p501 = scmp.eq.s32.totalorder %s97, 0
      %p502 = por %p500, %p501
      %s504 = sadd.s32 %s503, 1
      %p507 = scmp.eq.s32.totalorder %s91, 1
      %p508 = scmp.ne.s32.totalorder %s503, %s505
      %p509 = scmp.eq.s32.totalorder %s91, 0
      %p510 = por %p508, %p509
      %p511 = scmp.ne.s32.totalorder %s503, %s505
      %p512 = scmp.eq.s32.totalorder %s96, 1
      %p513 = por %p511, %p512
      %p514 = scmp.ne.s32.totalorder %s505, %s506
      %p515 = scmp.eq.s32.totalorder %s96, 0
      %p516 = por %p514, %p515
      %p517 = scmp.ne.s32.totalorder %s505, %s506
      %p518 = scmp.eq.s32.totalorder %s97, 1
      %p519 = por %p517, %p518
      %p521 = scmp.ne.s32.totalorder %s506, %s520
      %p522 = scmp.eq.s32.totalorder %s97, 0
      %p523 = por %p521, %p522
      %s525 = sadd.s32 %s524, 1
      %p528 = scmp.eq.s32.totalorder %s91, 1
      %p529 = scmp.ne.s32.totalorder %s524, %s526
      %p530 = scmp.eq.s32.totalorder %s91, 0
      %p531 = por %p529, %p530
      %p532 = scmp.ne.s32.totalorder %s524, %s526
      %p533 = scmp.eq.s32.totalorder %s96, 1
      %p534 = por %p532, %p533
      %p535 = scmp.ne.s32.totalorder %s526, %s527
      %p536 = scmp.eq.s32.totalorder %s96, 0
      %p537 = por %p535, %p536
      %p538 = scmp.ne.s32.totalorder %s526, %s527
      %p539 = scmp.eq.s32.totalorder %s97, 1
      %p540 = por %p538, %p539
      %p542 = scmp.ne.s32.totalorder %s527, %s541
      %p543 = scmp.eq.s32.totalorder %s97, 0
      %p544 = por %p542, %p543
      %s546 = sadd.s32 %s545, 1
      %p549 = scmp.eq.s32.totalorder %s91, 1
      %p550 = scmp.ne.s32.totalorder %s545, %s547
      %p551 = scmp.eq.s32.totalorder %s91, 0
      %p552 = por %p550, %p551
      %p553 = scmp.ne.s32.totalorder %s545, %s547
      %p554 = scmp.eq.s32.totalorder %s96, 1
      %p555 = por %p553, %p554
      %p556 = scmp.ne.s32.totalorder %s547, %s548
      %p557 = scmp.eq.s32.totalorder %s96, 0
      %p558 = por %p556, %p557
      %p559 = scmp.ne.s32.totalorder %s547, %s548
      %p560 = scmp.eq.s32.totalorder %s97, 1
      %p561 = por %p559, %p560
      %p563 = scmp.ne.s32.totalorder %s548, %s562
      %p564 = scmp.eq.s32.totalorder %s97, 0
      %p565 = por %p563, %p564
      %s567 = sadd.s32 %s566, 1
      %p570 = scmp.eq.s32.totalorder %s91, 1
      %p571 = scmp.ne.s32.totalorder %s566, %s568
      %p572 = scmp.eq.s32.totalorder %s91, 0
      %p573 = por %p571, %p572
      %p574 = scmp.ne.s32.totalorder %s566, %s568
      %p575 = scmp.eq.s32.totalorder %s96, 1
      %p576 = por %p574, %p575
      %p577 = scmp.ne.s32.totalorder %s568, %s569
      %p578 = scmp.eq.s32.totalorder %s96, 0
      %p579 = por %p577, %p578
      %p580 = scmp.ne.s32.totalorder %s568, %s569
      %p581 = scmp.eq.s32.totalorder %s97, 1
      %p582 = por %p580, %p581
      %p584 = scmp.ne.s32.totalorder %s569, %s583
      %p585 = scmp.eq.s32.totalorder %s97, 0
      %p586 = por %p584, %p585
      %s588 = sadd.s32 %s587, 1
      %p591 = scmp.eq.s32.totalorder %s91, 1
      %p592 = scmp.ne.s32.totalorder %s587, %s589
      %p593 = scmp.eq.s32.totalorder %s91, 0
      %p594 = por %p592, %p593
      %p595 = scmp.ne.s32.totalorder %s587, %s589
      %p596 = scmp.eq.s32.totalorder %s96, 1
      %p597 = por %p595, %p596
      %p598 = scmp.ne.s32.totalorder %s589, %s590
      %p599 = scmp.eq.s32.totalorder %s96, 0
      %p600 = por %p598, %p599
      %p601 = scmp.ne.s32.totalorder %s589, %s590
      %p602 = scmp.eq.s32.totalorder %s97, 1
      %p603 = por %p601, %p602
      %p605 = scmp.ne.s32.totalorder %s590, %s604
      %p606 = scmp.eq.s32.totalorder %s97, 0
      %p607 = por %p605, %p606
      %s609 = sadd.s32 %s608, 1
      %p612 = scmp.eq.s32.totalorder %s91, 1
      %p613 = scmp.ne.s32.totalorder %s608, %s610
      %p614 = scmp.eq.s32.totalorder %s91, 0
      %p615 = por %p613, %p614
      %p616 = scmp.ne.s32.totalorder %s608, %s610
      %p617 = scmp.eq.s32.totalorder %s96, 1
      %p618 = por %p616, %p617
      %p619 = scmp.ne.s32.totalorder %s610, %s611
      %p620 = scmp.eq.s32.totalorder %s96, 0
      %p621 = por %p619, %p620
      %p622 = scmp.ne.s32.totalorder %s610, %s611
      %p623 = scmp.eq.s32.totalorder %s97, 1
      %p624 = por %p622, %p623
      %p626 = scmp.ne.s32.totalorder %s611, %s625
      %p627 = scmp.eq.s32.totalorder %s97, 0
      %p628 = por %p626, %p627
      %s630 = sadd.s32 %s629, 1
      %p633 = scmp.eq.s32.totalorder %s91, 1
      %p634 = scmp.ne.s32.totalorder %s629, %s631
      %p635 = scmp.eq.s32.totalorder %s91, 0
      %p636 = por %p634, %p635
      %p637 = scmp.ne.s32.totalorder %s629, %s631
      %p638 = scmp.eq.s32.totalorder %s96, 1
      %p639 = por %p637, %p638
      %p640 = scmp.ne.s32.totalorder %s631, %s632
      %p641 = scmp.eq.s32.totalorder %s96, 0
      %p642 = por %p640, %p641
      %p643 = scmp.ne.s32.totalorder %s631, %s632
      %p644 = scmp.eq.s32.totalorder %s97, 1
      %p645 = por %p643, %p644
      %p647 = scmp.ne.s32.totalorder %s632, %s646
      %p648 = scmp.eq.s32.totalorder %s97, 0
      %p649 = por %p647, %p648
      %s651 = sadd.s32 %s650, 1
      %p654 = scmp.eq.s32.totalorder %s91, 1
      %p655 = scmp.ne.s32.totalorder %s650, %s652
      %p656 = scmp.eq.s32.totalorder %s91, 0
      %p657 = por %p655, %p656
      %p658 = scmp.ne.s32.totalorder %s650, %s652
      %p659 = scmp.eq.s32.totalorder %s96, 1
      %p660 = por %p658, %p659
      %p661 = scmp.ne.s32.totalorder %s652, %s653
      %p662 = scmp.eq.s32.totalorder %s96, 0
      %p663 = por %p661, %p662
      %p664 = scmp.ne.s32.totalorder %s652, %s653
      %p665 = scmp.eq.s32.totalorder %s97, 1
      %p666 = por %p664, %p665
      %p668 = scmp.ne.s32.totalorder %s653, %s667
      %p669 = scmp.eq.s32.totalorder %s97, 0
      %p670 = por %p668, %p669
      %s672 = sadd.s32 %s671, 1
      %p675 = scmp.eq.s32.totalorder %s91, 1
      %p676 = scmp.ne.s32.totalorder %s671, %s673
      %p677 = scmp.eq.s32.totalorder %s91, 0
      %p678 = por %p676, %p677
      %p679 = scmp.ne.s32.totalorder %s671, %s673
      %p680 = scmp.eq.s32.totalorder %s96, 1
      %p681 = por %p679, %p680
      %p682 = scmp.ne.s32.totalorder %s673, %s674
      %p683 = scmp.eq.s32.totalorder %s96, 0
      %p684 = por %p682, %p683
      %p685 = scmp.ne.s32.totalorder %s673, %s674
      %p686 = scmp.eq.s32.totalorder %s97, 1
      %p687 = por %p685, %p686
      %p689 = scmp.ne.s32.totalorder %s674, %s688
      %p690 = scmp.eq.s32.totalorder %s97, 0
      %p691 = por %p689, %p690
      %s693 = sadd.s32 %s692, 1
      %p696 = scmp.eq.s32.totalorder %s91, 1
      %p697 = scmp.ne.s32.totalorder %s692, %s694
      %p698 = scmp.eq.s32.totalorder %s91, 0
      %p699 = por %p697, %p698
      %p700 = scmp.ne.s32.totalorder %s692, %s694
      %p701 = scmp.eq.s32.totalorder %s96, 1
      %p702 = por %p700, %p701
      %p703 = scmp.ne.s32.totalorder %s694, %s695
      %p704 = scmp.eq.s32.totalorder %s96, 0
      %p705 = por %p703, %p704
      %p706 = scmp.ne.s32.totalorder %s694, %s695
      %p707 = scmp.eq.s32.totalorder %s97, 1
      %p708 = por %p706, %p707
      %p710 = scmp.ne.s32.totalorder %s695, %s709
      %p711 = scmp.eq.s32.totalorder %s97, 0
      %p712 = por %p710, %p711
      %s714 = sadd.s32 %s713, 1
      %p717 = scmp.eq.s32.totalorder %s91, 1
      %p718 = scmp.ne.s32.totalorder %s713, %s715
      %p719 = scmp.eq.s32.totalorder %s91, 0
      %p720 = por %p718, %p719
      %p721 = scmp.ne.s32.totalorder %s713, %s715
      %p722 = scmp.eq.s32.totalorder %s96, 1
      %p723 = por %p721, %p722
      %p724 = scmp.ne.s32.totalorder %s715, %s716
      %p725 = scmp.eq.s32.totalorder %s96, 0
      %p726 = por %p724, %p725
      %p727 = scmp.ne.s32.totalorder %s715, %s716
      %p728 = scmp.eq.s32.totalorder %s97, 1
      %p729 = por %p727, %p728
      %p731 = scmp.ne.s32.totalorder %s716, %s730
      %p732 = scmp.eq.s32.totalorder %s97, 0
      %p733 = por %p731, %p732
      %s735 = sadd.s32 %s734, 1
      %p738 = scmp.eq.s32.totalorder %s91, 1
      %p739 = scmp.ne.s32.totalorder %s734, %s736
      %p740 = scmp.eq.s32.totalorder %s91, 0
      %p741 = por %p739, %p740
      %p742 = scmp.ne.s32.totalorder %s734, %s736
      %p743 = scmp.eq.s32.totalorder %s96, 1
      %p744 = por %p742, %p743
      %p745 = scmp.ne.s32.totalorder %s736, %s737
      %p746 = scmp.eq.s32.totalorder %s96, 0
      %p747 = por %p745, %p746
      %p748 = scmp.ne.s32.totalorder %s736, %s737
      %p749 = scmp.eq.s32.totalorder %s97, 1
      %p750 = por %p748, %p749
      %p752 = scmp.ne.s32.totalorder %s737, %s751
      %p753 = scmp.eq.s32.totalorder %s97, 0
      %p754 = por %p752, %p753
      %s756 = sadd.s32 %s755, 1
      %p759 = scmp.eq.s32.totalorder %s91, 1
      %p760 = scmp.ne.s32.totalorder %s755, %s757
      %p761 = scmp.eq.s32.totalorder %s91, 0
      %p762 = por %p760, %p761
      %p763 = scmp.ne.s32.totalorder %s755, %s757
      %p764 = scmp.eq.s32.totalorder %s96, 1
      %p765 = por %p763, %p764
      %p766 = scmp.ne.s32.totalorder %s757, %s758
      %p767 = scmp.eq.s32.totalorder %s96, 0
      %p768 = por %p766, %p767
      %p769 = scmp.ne.s32.totalorder %s757, %s758
      %p770 = scmp.eq.s32.totalorder %s97, 1
      %p771 = por %p769, %p770
      %p773 = scmp.ne.s32.totalorder %s758, %s772
      %p774 = scmp.eq.s32.totalorder %s97, 0
      %p775 = por %p773, %p774
      %s777 = sadd.s32 %s776, 1
      %p780 = scmp.eq.s32.totalorder %s91, 1
      %p781 = scmp.ne.s32.totalorder %s776, %s778
      %p782 = scmp.eq.s32.totalorder %s91, 0
      %p783 = por %p781, %p782
      %p784 = scmp.ne.s32.totalorder %s776, %s778
      %p785 = scmp.eq.s32.totalorder %s96, 1
      %p786 = por %p784, %p785
      %p787 = scmp.ne.s32.totalorder %s778, %s779
      %p788 = scmp.eq.s32.totalorder %s96, 0
      %p789 = por %p787, %p788
      %p790 = scmp.ne.s32.totalorder %s778, %s779
      %p791 = scmp.eq.s32.totalorder %s97, 1
      %p792 = por %p790, %p791
      %p794 = scmp.ne.s32.totalorder %s779, %s793
      %p795 = scmp.eq.s32.totalorder %s97, 0
      %p796 = por %p794, %p795
      %s798 = sadd.s32 %s797, 1
      %p801 = scmp.eq.s32.totalorder %s91, 1
      %p802 = scmp.ne.s32.totalorder %s797, %s799
      %p803 = scmp.eq.s32.totalorder %s91, 0
      %p804 = por %p802, %p803
      %p805 = scmp.ne.s32.totalorder %s797, %s799
      %p806 = scmp.eq.s32.totalorder %s96, 1
      %p807 = por %p805, %p806
      %p808 = scmp.ne.s32.totalorder %s799, %s800
      %p809 = scmp.eq.s32.totalorder %s96, 0
      %p810 = por %p808, %p809
      %p811 = scmp.ne.s32.totalorder %s799, %s800
      %p812 = scmp.eq.s32.totalorder %s97, 1
      %p813 = por %p811, %p812
      %p815 = scmp.ne.s32.totalorder %s800, %s814
      %p816 = scmp.eq.s32.totalorder %s97, 0
      %p817 = por %p815, %p816
      %s819 = sadd.s32 %s818, 1
      %p822 = scmp.eq.s32.totalorder %s91, 1
      %p823 = scmp.ne.s32.totalorder %s818, %s820
      %p824 = scmp.eq.s32.totalorder %s91, 0
      %p825 = por %p823, %p824
      %p826 = scmp.ne.s32.totalorder %s818, %s820
      %p827 = scmp.eq.s32.totalorder %s96, 1
      %p828 = por %p826, %p827
      %p829 = scmp.ne.s32.totalorder %s820, %s821
      %p830 = scmp.eq.s32.totalorder %s96, 0
      %p831 = por %p829, %p830
      %p832 = scmp.ne.s32.totalorder %s820, %s821
      %p833 = scmp.eq.s32.totalorder %s97, 1
      %p834 = por %p832, %p833
      %p836 = scmp.ne.s32.totalorder %s821, %s835
      %p837 = scmp.eq.s32.totalorder %s97, 0
      %p838 = por %p836, %p837
      %s839 = ssub.s32 %s91, %s98
      %p840 = scmp.eq.s32.totalorder %s839, 0
      %s842 = sadd.s32 %s841, 1
      %s843 = scalar_select %p840, %s841, %s842
      %p846 = pneg %p840
      %p847 = scmp.eq.s32.totalorder %s91, 1
      %p848 = por %p846, %p847
      %p849 = scmp.ne.s32.totalorder %s841, %s844
      %p850 = scmp.eq.s32.totalorder %s91, 0
      %p851 = por %p849, %p850
      %p852 = scmp.ne.s32.totalorder %s841, %s844
      %p853 = scmp.eq.s32.totalorder %s96, 1
      %p854 = por %p852, %p853
      %p855 = scmp.ne.s32.totalorder %s844, %s845
      %p856 = scmp.eq.s32.totalorder %s96, 0
      %p857 = por %p855, %p856
      %p858 = scmp.ne.s32.totalorder %s844, %s845
      %p859 = scmp.eq.s32.totalorder %s97, 1
      %p860 = por %p858, %p859
      %p862 = scmp.ne.s32.totalorder %s845, %s861
      %p863 = scmp.eq.s32.totalorder %s97, 0
      %p864 = por %p862, %p863
      %p865 = scmp.le.s32.totalorder 1, %s91
      %p866 = scmp.lt.s32.totalorder %s91, 3
      %p867 = pnand %p865, %p866
      %p868 = pneg %p867
      // Predicated region
      $region9: #{prule_forward_batched.1} parent=5 // pred_check
        _
      $region10: #{prule_forward_batched.1} parent=5 // pred_check_branch
        %870 = sbr.rel (%p867) target = $region12
      $region11: #{prule_forward_batched.1} parent=5 // pred_region
        %s871 = ssub.s32 %s91, 1
        // Predicated region
        $region13: #{prule_forward_batched.1} parent=11 // pred_check
          %p872 = pneg %p138
        $region14: #{prule_forward_batched.1} parent=11 // pred_check_branch
          %874 = sbr.rel (%p872) target = $region16
        $region15: #{prule_forward_batched.1} parent=11 // pred_region
          _
        $region16: #{prule_forward_batched.1} parent=11 // pred_fallthru
          _
        // Predicated region
        $region17: #{prule_forward_batched.1} parent=11 // pred_check
          %p875 = pneg %p159
        $region18: #{prule_forward_batched.1} parent=11 // pred_check_branch
          %877 = sbr.rel (%p875) target = $region20
        $region19: #{prule_forward_batched.1} parent=11 // pred_region
          %s879 = ssub.s32 48, 48
          %880 = vsyncadd [#allocation3], %s879
          %s882 = sshll.u32 [#allocation2], 4
          %s883 = int_to_ptr.vmem [resolvable:$true] %s882
          %885 = dma.hbm_to_vmem [thread:$0]  %s5, 48, %s883, [#allocation3]
        $region20: #{prule_forward_batched.1} parent=11 // pred_fallthru
          _
        // Predicated region
        $region21: #{prule_forward_batched.1} parent=11 // pred_check
          %p886 = pneg %p180
        $region22: #{prule_forward_batched.1} parent=11 // pred_check_branch
          %888 = sbr.rel (%p886) target = $region24
        $region23: #{prule_forward_batched.1} parent=11 // pred_region
          _
        $region24: #{prule_forward_batched.1} parent=11 // pred_fallthru
          _
        // Predicated region
        $region25: #{prule_forward_batched.1} parent=11 // pred_check
          %p889 = pneg %p201
        $region26: #{prule_forward_batched.1} parent=11 // pred_check_branch
          %891 = sbr.rel (%p889) target = $region28
        $region27: #{prule_forward_batched.1} parent=11 // pred_region
          %s893 = ssub.s32 16, 16
          %894 = vsyncadd [#allocation5], %s893
          %s896 = sshll.u32 [#allocation4], 4
          %s897 = int_to_ptr.vmem [resolvable:$true] %s896
          %899 = dma.hbm_to_vmem [thread:$0]  %s9, 16, %s897, [#allocation5]
        $region28: #{prule_forward_batched.1} parent=11 // pred_fallthru
          _
        // Predicated region
        $region29: #{prule_forward_batched.1} parent=11 // pred_check
          %p900 = pneg %p222
        $region30: #{prule_forward_batched.1} parent=11 // pred_check_branch
          %902 = sbr.rel (%p900) target = $region32
        $region31: #{prule_forward_batched.1} parent=11 // pred_region
          _
        $region32: #{prule_forward_batched.1} parent=11 // pred_fallthru
          _
        // Predicated region
        $region33: #{prule_forward_batched.1} parent=11 // pred_check
          %p903 = pneg %p243
        $region34: #{prule_forward_batched.1} parent=11 // pred_check_branch
          %905 = sbr.rel (%p903) target = $region36
        $region35: #{prule_forward_batched.1} parent=11 // pred_region
          %s907 = ssub.s32 48, 48
          %908 = vsyncadd [#allocation5], %s907
          %s910 = sshll.u32 [#allocation6], 4
          %s911 = int_to_ptr.vmem [resolvable:$true] %s910
          %913 = dma.hbm_to_vmem [thread:$0]  %s13, 48, %s911, [#allocation5]
        $region36: #{prule_forward_batched.1} parent=11 // pred_fallthru
          _
        // Predicated region
        $region37: #{prule_forward_batched.1} parent=11 // pred_check
          %p914 = pneg %p264
        $region38: #{prule_forward_batched.1} parent=11 // pred_check_branch
          %916 = sbr.rel (%p914) target = $region40
        $region39: #{prule_forward_batched.1} parent=11 // pred_region
          _
        $region40: #{prule_forward_batched.1} parent=11 // pred_fallthru
          _
        // Predicated region
        $region41: #{prule_forward_batched.1} parent=11 // pred_check
          %p917 = pneg %p285
        $region42: #{prule_forward_batched.1} parent=11 // pred_check_branch
          %919 = sbr.rel (%p917) target = $region44
        $region43: #{prule_forward_batched.1} parent=11 // pred_region
          %s921 = ssub.s32 16, 16
          %922 = vsyncadd [#allocation8], %s921
          %s924 = sshll.u32 [#allocation7], 4
          %s925 = int_to_ptr.vmem [resolvable:$true] %s924
          %927 = dma.hbm_to_vmem [thread:$0]  %s17, 16, %s925, [#allocation8]
        $region44: #{prule_forward_batched.1} parent=11 // pred_fallthru
          _
        // Predicated region
        $region45: #{prule_forward_batched.1} parent=11 // pred_check
          %p928 = pneg %p306
        $region46: #{prule_forward_batched.1} parent=11 // pred_check_branch
          %930 = sbr.rel (%p928) target = $region48
        $region47: #{prule_forward_batched.1} parent=11 // pred_region
          _
        $region48: #{prule_forward_batched.1} parent=11 // pred_fallthru
          _
        // Predicated region
        $region49: #{prule_forward_batched.1} parent=11 // pred_check
          %p931 = pneg %p327
        $region50: #{prule_forward_batched.1} parent=11 // pred_check_branch
          %933 = sbr.rel (%p931) target = $region52
        $region51: #{prule_forward_batched.1} parent=11 // pred_region
          %s935 = ssub.s32 48, 48
          %936 = vsyncadd [#allocation8], %s935
          %s938 = sshll.u32 [#allocation9], 4
          %s939 = int_to_ptr.vmem [resolvable:$true] %s938
          %941 = dma.hbm_to_vmem [thread:$0]  %s21, 48, %s939, [#allocation8]
        $region52: #{prule_forward_batched.1} parent=11 // pred_fallthru
          _
        // Predicated region
        $region53: #{prule_forward_batched.1} parent=11 // pred_check
          %p942 = pneg %p348
        $region54: #{prule_forward_batched.1} parent=11 // pred_check_branch
          %944 = sbr.rel (%p942) target = $region56
        $region55: #{prule_forward_batched.1} parent=11 // pred_region
          _
        $region56: #{prule_forward_batched.1} parent=11 // pred_fallthru
          _
        // Predicated region
        $region57: #{prule_forward_batched.1} parent=11 // pred_check
          %p945 = pneg %p369
        $region58: #{prule_forward_batched.1} parent=11 // pred_check_branch
          %947 = sbr.rel (%p945) target = $region60
        $region59: #{prule_forward_batched.1} parent=11 // pred_region
          %s949 = ssub.s32 16, 16
          %950 = vsyncadd [#allocation11], %s949
          %s952 = sshll.u32 [#allocation10], 4
          %s953 = int_to_ptr.vmem [resolvable:$true] %s952
          %955 = dma.hbm_to_vmem [thread:$0]  %s25, 16, %s953, [#allocation11]
        $region60: #{prule_forward_batched.1} parent=11 // pred_fallthru
          _
        // Predicated region
        $region61: #{prule_forward_batched.1} parent=11 // pred_check
          %p956 = pneg %p390
        $region62: #{prule_forward_batched.1} parent=11 // pred_check_branch
          %958 = sbr.rel (%p956) target = $region64
        $region63: #{prule_forward_batched.1} parent=11 // pred_region
          _
        $region64: #{prule_forward_batched.1} parent=11 // pred_fallthru
          _
        // Predicated region
        $region65: #{prule_forward_batched.1} parent=11 // pred_check
          %p959 = pneg %p411
        $region66: #{prule_forward_batched.1} parent=11 // pred_check_branch
          %961 = sbr.rel (%p959) target = $region68
        $region67: #{prule_forward_batched.1} parent=11 // pred_region
          %s963 = ssub.s32 48, 48
          %964 = vsyncadd [#allocation11], %s963
          %s966 = sshll.u32 [#allocation12], 4
          %s967 = int_to_ptr.vmem [resolvable:$true] %s966
          %969 = dma.hbm_to_vmem [thread:$0]  %s29, 48, %s967, [#allocation11]
        $region68: #{prule_forward_batched.1} parent=11 // pred_fallthru
          _
        // Predicated region
        $region69: #{prule_forward_batched.1} parent=11 // pred_check
          %p970 = pneg %p432
        $region70: #{prule_forward_batched.1} parent=11 // pred_check_branch
          %972 = sbr.rel (%p970) target = $region72
        $region71: #{prule_forward_batched.1} parent=11 // pred_region
          _
        $region72: #{prule_forward_batched.1} parent=11 // pred_fallthru
          _
        // Predicated region
        $region73: #{prule_forward_batched.1} parent=11 // pred_check
          %p973 = pneg %p453
        $region74: #{prule_forward_batched.1} parent=11 // pred_check_branch
          %975 = sbr.rel (%p973) target = $region76
        $region75: #{prule_forward_batched.1} parent=11 // pred_region
          %s977 = ssub.s32 16, 16
          %978 = vsyncadd [#allocation14], %s977
          %s980 = sshll.u32 [#allocation13], 4
          %s981 = int_to_ptr.vmem [resolvable:$true] %s980
          %983 = dma.hbm_to_vmem [thread:$0]  %s33, 16, %s981, [#allocation14]
        $region76: #{prule_forward_batched.1} parent=11 // pred_fallthru
          _
        // Predicated region
        $region77: #{prule_forward_batched.1} parent=11 // pred_check
          %p984 = pneg %p474
        $region78: #{prule_forward_batched.1} parent=11 // pred_check_branch
          %986 = sbr.rel (%p984) target = $region80
        $region79: #{prule_forward_batched.1} parent=11 // pred_region
          %s988 = ssub.s32 1024, 1024
          %989 = vsyncadd [#allocation14], %s988
          %s990 = sshll.u32 [#allocation15], 4
          %s991 = int_to_ptr.vmem [resolvable:$true] %s990
          %996 = dma.hbm_to_vmem [thread:$0]  %s35, 1024, %s991, [#allocation14], 64, 64, 4
        $region80: #{prule_forward_batched.1} parent=11 // pred_fallthru
          _
        // Predicated region
        $region81: #{prule_forward_batched.1} parent=11 // pred_check
          %p997 = pneg %p495
        $region82: #{prule_forward_batched.1} parent=11 // pred_check_branch
          %999 = sbr.rel (%p997) target = $region84
        $region83: #{prule_forward_batched.1} parent=11 // pred_region
          %s1001 = ssub.s32 16, 16
          %1002 = vsyncadd [#allocation17], %s1001
          %s1004 = sshll.u32 [#allocation16], 4
          %s1005 = int_to_ptr.vmem [resolvable:$true] %s1004
          %1007 = dma.hbm_to_vmem [thread:$0]  %s37, 16, %s1005, [#allocation17]
        $region84: #{prule_forward_batched.1} parent=11 // pred_fallthru
          _
        // Predicated region
        $region85: #{prule_forward_batched.1} parent=11 // pred_check
          %p1008 = pneg %p516
        $region86: #{prule_forward_batched.1} parent=11 // pred_check_branch
          %1010 = sbr.rel (%p1008) target = $region88
        $region87: #{prule_forward_batched.1} parent=11 // pred_region
          %s1012 = ssub.s32 2048, 2048
          %1013 = vsyncadd [#allocation17], %s1012
          %s1014 = sshll.u32 [#allocation18], 4
          %s1015 = int_to_ptr.vmem [resolvable:$true] %s1014
          %1020 = dma.hbm_to_vmem [thread:$0]  %s39, 2048, %s1015, [#allocation17], 128, 128, 8
        $region88: #{prule_forward_batched.1} parent=11 // pred_fallthru
          _
        // Predicated region
        $region89: #{prule_forward_batched.1} parent=11 // pred_check
          %p1021 = pneg %p537
        $region90: #{prule_forward_batched.1} parent=11 // pred_check_branch
          %1023 = sbr.rel (%p1021) target = $region92
        $region91: #{prule_forward_batched.1} parent=11 // pred_region
          %s1025 = ssub.s32 32, 32
          %1026 = vsyncadd [#allocation20], %s1025
          %s1028 = sshll.u32 [#allocation19], 4
          %s1029 = int_to_ptr.vmem [resolvable:$true] %s1028
          %1031 = dma.hbm_to_vmem [thread:$0]  %s41, 32, %s1029, [#allocation20]
        $region92: #{prule_forward_batched.1} parent=11 // pred_fallthru
          _
        // Predicated region
        $region93: #{prule_forward_batched.1} parent=11 // pred_check
          %p1032 = pneg %p558
        $region94: #{prule_forward_batched.1} parent=11 // pred_check_branch
          %1034 = sbr.rel (%p1032) target = $region96
        $region95: #{prule_forward_batched.1} parent=11 // pred_region
          %s1036 = ssub.s32 2048, 2048
          %1037 = vsyncadd [#allocation20], %s1036
          %s1038 = sshll.u32 [#allocation21], 4
          %s1039 = int_to_ptr.vmem [resolvable:$true] %s1038
          %1044 = dma.hbm_to_vmem [thread:$0]  %s43, 2048, %s1039, [#allocation20], 64, 64, 4
        $region96: #{prule_forward_batched.1} parent=11 // pred_fallthru
          _
        // Predicated region
        $region97: #{prule_forward_batched.1} parent=11 // pred_check
          %p1045 = pneg %p579
        $region98: #{prule_forward_batched.1} parent=11 // pred_check_branch
          %1047 = sbr.rel (%p1045) target = $region100
        $region99: #{prule_forward_batched.1} parent=11 // pred_region
          %s1049 = ssub.s32 16, 16
          %1050 = vsyncadd [#allocation23], %s1049
          %s1052 = sshll.u32 [#allocation22], 4
          %s1053 = int_to_ptr.vmem [resolvable:$true] %s1052
          %1055 = dma.hbm_to_vmem [thread:$0]  %s45, 16, %s1053, [#allocation23]
        $region100: #{prule_forward_batched.1} parent=11 // pred_fallthru
          _
        // Predicated region
        $region101: #{prule_forward_batched.1} parent=11 // pred_check
          %p1056 = pneg %p600
        $region102: #{prule_forward_batched.1} parent=11 // pred_check_branch
          %1058 = sbr.rel (%p1056) target = $region104
        $region103: #{prule_forward_batched.1} parent=11 // pred_region
          %s1060 = ssub.s32 2048, 2048
          %1061 = vsyncadd [#allocation23], %s1060
          %s1062 = sshll.u32 [#allocation24], 4
          %s1063 = int_to_ptr.vmem [resolvable:$true] %s1062
          %1068 = dma.hbm_to_vmem [thread:$0]  %s47, 2048, %s1063, [#allocation23], 128, 128, 8
        $region104: #{prule_forward_batched.1} parent=11 // pred_fallthru
          _
        // Predicated region
        $region105: #{prule_forward_batched.1} parent=11 // pred_check
          %p1069 = pneg %p621
        $region106: #{prule_forward_batched.1} parent=11 // pred_check_branch
          %1071 = sbr.rel (%p1069) target = $region108
        $region107: #{prule_forward_batched.1} parent=11 // pred_region
          %s1073 = ssub.s32 32, 32
          %1074 = vsyncadd [#allocation26], %s1073
          %s1076 = sshll.u32 [#allocation25], 4
          %s1077 = int_to_ptr.vmem [resolvable:$true] %s1076
          %1079 = dma.hbm_to_vmem [thread:$0]  %s49, 32, %s1077, [#allocation26]
        $region108: #{prule_forward_batched.1} parent=11 // pred_fallthru
          _
        // Predicated region
        $region109: #{prule_forward_batched.1} parent=11 // pred_check
          %p1080 = pneg %p642
        $region110: #{prule_forward_batched.1} parent=11 // pred_check_branch
          %1082 = sbr.rel (%p1080) target = $region112
        $region111: #{prule_forward_batched.1} parent=11 // pred_region
          %s1084 = ssub.s32 2048, 2048
          %1085 = vsyncadd [#allocation26], %s1084
          %s1086 = sshll.u32 [#allocation27], 4
          %s1087 = int_to_ptr.vmem [resolvable:$true] %s1086
          %1092 = dma.hbm_to_vmem [thread:$0]  %s51, 2048, %s1087, [#allocation26], 64, 64, 4
        $region112: #{prule_forward_batched.1} parent=11 // pred_fallthru
          _
        // Predicated region
        $region113: #{prule_forward_batched.1} parent=11 // pred_check
          %p1093 = pneg %p663
        $region114: #{prule_forward_batched.1} parent=11 // pred_check_branch
          %1095 = sbr.rel (%p1093) target = $region116
        $region115: #{prule_forward_batched.1} parent=11 // pred_region
          %s1097 = ssub.s32 16, 16
          %1098 = vsyncadd [#allocation29], %s1097
          %s1100 = sshll.u32 [#allocation28], 4
          %s1101 = int_to_ptr.vmem [resolvable:$true] %s1100
          %1103 = dma.hbm_to_vmem [thread:$0]  %s53, 16, %s1101, [#allocation29]
        $region116: #{prule_forward_batched.1} parent=11 // pred_fallthru
          _
        // Predicated region
        $region117: #{prule_forward_batched.1} parent=11 // pred_check
          %p1104 = pneg %p684
        $region118: #{prule_forward_batched.1} parent=11 // pred_check_branch
          %1106 = sbr.rel (%p1104) target = $region120
        $region119: #{prule_forward_batched.1} parent=11 // pred_region
          %s1108 = ssub.s32 2048, 2048
          %1109 = vsyncadd [#allocation29], %s1108
          %s1110 = sshll.u32 [#allocation30], 4
          %s1111 = int_to_ptr.vmem [resolvable:$true] %s1110
          %1116 = dma.hbm_to_vmem [thread:$0]  %s55, 2048, %s1111, [#allocation29], 128, 128, 8
        $region120: #{prule_forward_batched.1} parent=11 // pred_fallthru
          _
        // Predicated region
        $region121: #{prule_forward_batched.1} parent=11 // pred_check
          %p1117 = pneg %p705
        $region122: #{prule_forward_batched.1} parent=11 // pred_check_branch
          %1119 = sbr.rel (%p1117) target = $region124
        $region123: #{prule_forward_batched.1} parent=11 // pred_region
          %s1121 = ssub.s32 32, 32
          %1122 = vsyncadd [#allocation32], %s1121
          %s1124 = sshll.u32 [#allocation31], 4
          %s1125 = int_to_ptr.vmem [resolvable:$true] %s1124
          %1127 = dma.hbm_to_vmem [thread:$0]  %s57, 32, %s1125, [#allocation32]
        $region124: #{prule_forward_batched.1} parent=11 // pred_fallthru
          _
        // Predicated region
        $region125: #{prule_forward_batched.1} parent=11 // pred_check
          %p1128 = pneg %p726
        $region126: #{prule_forward_batched.1} parent=11 // pred_check_branch
          %1130 = sbr.rel (%p1128) target = $region128
        $region127: #{prule_forward_batched.1} parent=11 // pred_region
          %s1132 = ssub.s32 2048, 2048
          %1133 = vsyncadd [#allocation32], %s1132
          %s1134 = sshll.u32 [#allocation33], 4
          %s1135 = int_to_ptr.vmem [resolvable:$true] %s1134
          %1140 = dma.hbm_to_vmem [thread:$0]  %s59, 2048, %s1135, [#allocation32], 64, 64, 4
        $region128: #{prule_forward_batched.1} parent=11 // pred_fallthru
          _
        // Predicated region
        $region129: #{prule_forward_batched.1} parent=11 // pred_check
          %p1141 = pneg %p747
        $region130: #{prule_forward_batched.1} parent=11 // pred_check_branch
          %1143 = sbr.rel (%p1141) target = $region132
        $region131: #{prule_forward_batched.1} parent=11 // pred_region
          %s1145 = ssub.s32 16, 16
          %1146 = vsyncadd [#allocation35], %s1145
          %s1148 = sshll.u32 [#allocation34], 4
          %s1149 = int_to_ptr.vmem [resolvable:$true] %s1148
          %1151 = dma.hbm_to_vmem [thread:$0]  %s61, 16, %s1149, [#allocation35]
        $region132: #{prule_forward_batched.1} parent=11 // pred_fallthru
          _
        // Predicated region
        $region133: #{prule_forward_batched.1} parent=11 // pred_check
          %p1152 = pneg %p768
        $region134: #{prule_forward_batched.1} parent=11 // pred_check_branch
          %1154 = sbr.rel (%p1152) target = $region136
        $region135: #{prule_forward_batched.1} parent=11 // pred_region
          %s1156 = ssub.s32 2048, 2048
          %1157 = vsyncadd [#allocation35], %s1156
          %s1158 = sshll.u32 [#allocation36], 4
          %s1159 = int_to_ptr.vmem [resolvable:$true] %s1158
          %1164 = dma.hbm_to_vmem [thread:$0]  %s63, 2048, %s1159, [#allocation35], 128, 128, 8
        $region136: #{prule_forward_batched.1} parent=11 // pred_fallthru
          _
        // Predicated region
        $region137: #{prule_forward_batched.1} parent=11 // pred_check
          %p1165 = pneg %p789
        $region138: #{prule_forward_batched.1} parent=11 // pred_check_branch
          %1167 = sbr.rel (%p1165) target = $region140
        $region139: #{prule_forward_batched.1} parent=11 // pred_region
          %s1169 = ssub.s32 32, 32
          %1170 = vsyncadd [#allocation38], %s1169
          %s1172 = sshll.u32 [#allocation37], 4
          %s1173 = int_to_ptr.vmem [resolvable:$true] %s1172
          %1175 = dma.hbm_to_vmem [thread:$0]  %s65, 32, %s1173, [#allocation38]
        $region140: #{prule_forward_batched.1} parent=11 // pred_fallthru
          _
        // Predicated region
        $region141: #{prule_forward_batched.1} parent=11 // pred_check
          %p1176 = pneg %p810
        $region142: #{prule_forward_batched.1} parent=11 // pred_check_branch
          %1178 = sbr.rel (%p1176) target = $region144
        $region143: #{prule_forward_batched.1} parent=11 // pred_region
          %s1180 = ssub.s32 2048, 2048
          %1181 = vsyncadd [#allocation38], %s1180
          %s1182 = sshll.u32 [#allocation39], 4
          %s1183 = int_to_ptr.vmem [resolvable:$true] %s1182
          %1188 = dma.hbm_to_vmem [thread:$0]  %s67, 2048, %s1183, [#allocation38], 64, 64, 4
        $region144: #{prule_forward_batched.1} parent=11 // pred_fallthru
          _
        // Predicated region
        $region145: #{prule_forward_batched.1} parent=11 // pred_check
          %p1189 = pneg %p831
        $region146: #{prule_forward_batched.1} parent=11 // pred_check_branch
          %1191 = sbr.rel (%p1189) target = $region148
        $region147: #{prule_forward_batched.1} parent=11 // pred_region
          %s1193 = ssub.s32 16, 16
          %1194 = vsyncadd [#allocation41], %s1193
          %s1196 = sshll.u32 [#allocation40], 4
          %s1197 = int_to_ptr.vmem [resolvable:$true] %s1196
          %1199 = dma.hbm_to_vmem [thread:$0]  %s69, 16, %s1197, [#allocation41]
        $region148: #{prule_forward_batched.1} parent=11 // pred_fallthru
          _
      $region12: #{prule_forward_batched.1} parent=5 // pred_fallthru
        _
      %p1200 = scmp.lt.s32.totalorder %s91, 2
      // Predicated region
      $region149: #{prule_forward_batched.1} parent=5 // pred_check
        %p1201 = pneg %p1200
      $region150: #{prule_forward_batched.1} parent=5 // pred_check_branch
        %1203 = sbr.rel (%p1201) target = $region152
      $region151: #{prule_forward_batched.1} parent=5 // pred_region
        // Predicated region
        $region153: #{prule_forward_batched.1} parent=151 // pred_check
          %p1204 = pneg %p111
        $region154: #{prule_forward_batched.1} parent=151 // pred_check_branch
          %1206 = sbr.rel (%p1204) target = $region156
        $region155: #{prule_forward_batched.1} parent=151 // pred_region
          %s1207 = smul.u32 16, %s91
          %p1208 = scmp.lt.s32.totalorder %s1207, 31
          %s1209 = scalar_select %p1208, %s1207, 31
          %s1210 = smul.addr %s1209, 8
          %s1211 = scalar_lea.vmem %s1, %s1210
          %s1212 = smul.u32 16, %s91
        $region156: #{prule_forward_batched.1} parent=151 // pred_fallthru
          _
      $region152: #{prule_forward_batched.1} parent=5 // pred_fallthru
        _
      %p1213 = scmp.le.s32.totalorder 1, %s91
      %p1214 = scmp.lt.s32.totalorder %s91, 3
      %p1215 = pnand %p1213, %p1214
      %p1216 = pneg %p1215
      // Predicated region
      $region157: #{prule_forward_batched.1} parent=5 // pred_check
        _
      $region158: #{prule_forward_batched.1} parent=5 // pred_check_branch
        %1218 = sbr.rel (%p1215) target = $region160
      $region159: #{prule_forward_batched.1} parent=5 // pred_region
        %s1219 = ssub.s32 %s91, 1
        // Predicated region
        $region161: #{prule_forward_batched.1} parent=159 // pred_check
          %p1220 = pneg %p159
        $region162: #{prule_forward_batched.1} parent=159 // pred_check_branch
          %1222 = sbr.rel (%p1220) target = $region164
        $region163: #{prule_forward_batched.1} parent=159 // pred_region
          %1223 = dma.done [#allocation3], 48
        $region164: #{prule_forward_batched.1} parent=159 // pred_fallthru
          _
        // Predicated region
        $region165: #{prule_forward_batched.1} parent=159 // pred_check
          %p1224 = pneg %p201
        $region166: #{prule_forward_batched.1} parent=159 // pred_check_branch
          %1226 = sbr.rel (%p1224) target = $region168
        $region167: #{prule_forward_batched.1} parent=159 // pred_region
          %1227 = dma.done [#allocation5], 16
        $region168: #{prule_forward_batched.1} parent=159 // pred_fallthru
          _
        // Predicated region
        $region169: #{prule_forward_batched.1} parent=159 // pred_check
          %p1228 = pneg %p243
        $region170: #{prule_forward_batched.1} parent=159 // pred_check_branch
          %1230 = sbr.rel (%p1228) target = $region172
        $region171: #{prule_forward_batched.1} parent=159 // pred_region
          %1231 = dma.done [#allocation5], 48
        $region172: #{prule_forward_batched.1} parent=159 // pred_fallthru
          _
        // Predicated region
        $region173: #{prule_forward_batched.1} parent=159 // pred_check
          %p1232 = pneg %p285
        $region174: #{prule_forward_batched.1} parent=159 // pred_check_branch
          %1234 = sbr.rel (%p1232) target = $region176
        $region175: #{prule_forward_batched.1} parent=159 // pred_region
          %1235 = dma.done [#allocation8], 16
        $region176: #{prule_forward_batched.1} parent=159 // pred_fallthru
          _
        // Predicated region
        $region177: #{prule_forward_batched.1} parent=159 // pred_check
          %p1236 = pneg %p327
        $region178: #{prule_forward_batched.1} parent=159 // pred_check_branch
          %1238 = sbr.rel (%p1236) target = $region180
        $region179: #{prule_forward_batched.1} parent=159 // pred_region
          %1239 = dma.done [#allocation8], 48
        $region180: #{prule_forward_batched.1} parent=159 // pred_fallthru
          _
        // Predicated region
        $region181: #{prule_forward_batched.1} parent=159 // pred_check
          %p1240 = pneg %p369
        $region182: #{prule_forward_batched.1} parent=159 // pred_check_branch
          %1242 = sbr.rel (%p1240) target = $region184
        $region183: #{prule_forward_batched.1} parent=159 // pred_region
          %1243 = dma.done [#allocation11], 16
        $region184: #{prule_forward_batched.1} parent=159 // pred_fallthru
          _
        // Predicated region
        $region185: #{prule_forward_batched.1} parent=159 // pred_check
          %p1244 = pneg %p411
        $region186: #{prule_forward_batched.1} parent=159 // pred_check_branch
          %1246 = sbr.rel (%p1244) target = $region188
        $region187: #{prule_forward_batched.1} parent=159 // pred_region
          %1247 = dma.done [#allocation11], 48
        $region188: #{prule_forward_batched.1} parent=159 // pred_fallthru
          _
        // Predicated region
        $region189: #{prule_forward_batched.1} parent=159 // pred_check
          %p1248 = pneg %p453
        $region190: #{prule_forward_batched.1} parent=159 // pred_check_branch
          %1250 = sbr.rel (%p1248) target = $region192
        $region191: #{prule_forward_batched.1} parent=159 // pred_region
          %1251 = dma.done [#allocation14], 16
        $region192: #{prule_forward_batched.1} parent=159 // pred_fallthru
          _
        // Predicated region
        $region193: #{prule_forward_batched.1} parent=159 // pred_check
          %p1252 = pneg %p474
        $region194: #{prule_forward_batched.1} parent=159 // pred_check_branch
          %1254 = sbr.rel (%p1252) target = $region196
        $region195: #{prule_forward_batched.1} parent=159 // pred_region
          %1255 = dma.done [#allocation14], 1024
        $region196: #{prule_forward_batched.1} parent=159 // pred_fallthru
          _
        // Predicated region
        $region197: #{prule_forward_batched.1} parent=159 // pred_check
          %p1256 = pneg %p495
        $region198: #{prule_forward_batched.1} parent=159 // pred_check_branch
          %1258 = sbr.rel (%p1256) target = $region200
        $region199: #{prule_forward_batched.1} parent=159 // pred_region
          %1259 = dma.done [#allocation17], 16
        $region200: #{prule_forward_batched.1} parent=159 // pred_fallthru
          _
        // Predicated region
        $region201: #{prule_forward_batched.1} parent=159 // pred_check
          %p1260 = pneg %p516
        $region202: #{prule_forward_batched.1} parent=159 // pred_check_branch
          %1262 = sbr.rel (%p1260) target = $region204
        $region203: #{prule_forward_batched.1} parent=159 // pred_region
          %1263 = dma.done [#allocation17], 2048
        $region204: #{prule_forward_batched.1} parent=159 // pred_fallthru
          _
        // Predicated region
        $region205: #{prule_forward_batched.1} parent=159 // pred_check
          %p1264 = pneg %p537
        $region206: #{prule_forward_batched.1} parent=159 // pred_check_branch
          %1266 = sbr.rel (%p1264) target = $region208
        $region207: #{prule_forward_batched.1} parent=159 // pred_region
          %1267 = dma.done [#allocation20], 32
        $region208: #{prule_forward_batched.1} parent=159 // pred_fallthru
          _
        // Predicated region
        $region209: #{prule_forward_batched.1} parent=159 // pred_check
          %p1268 = pneg %p558
        $region210: #{prule_forward_batched.1} parent=159 // pred_check_branch
          %1270 = sbr.rel (%p1268) target = $region212
        $region211: #{prule_forward_batched.1} parent=159 // pred_region
          %1271 = dma.done [#allocation20], 2048
        $region212: #{prule_forward_batched.1} parent=159 // pred_fallthru
          _
        // Predicated region
        $region213: #{prule_forward_batched.1} parent=159 // pred_check
          %p1272 = pneg %p579
        $region214: #{prule_forward_batched.1} parent=159 // pred_check_branch
          %1274 = sbr.rel (%p1272) target = $region216
        $region215: #{prule_forward_batched.1} parent=159 // pred_region
          %1275 = dma.done [#allocation23], 16
        $region216: #{prule_forward_batched.1} parent=159 // pred_fallthru
          _
        // Predicated region
        $region217: #{prule_forward_batched.1} parent=159 // pred_check
          %p1276 = pneg %p600
        $region218: #{prule_forward_batched.1} parent=159 // pred_check_branch
          %1278 = sbr.rel (%p1276) target = $region220
        $region219: #{prule_forward_batched.1} parent=159 // pred_region
          %1279 = dma.done [#allocation23], 2048
        $region220: #{prule_forward_batched.1} parent=159 // pred_fallthru
          _
        // Predicated region
        $region221: #{prule_forward_batched.1} parent=159 // pred_check
          %p1280 = pneg %p621
        $region222: #{prule_forward_batched.1} parent=159 // pred_check_branch
          %1282 = sbr.rel (%p1280) target = $region224
        $region223: #{prule_forward_batched.1} parent=159 // pred_region
          %1283 = dma.done [#allocation26], 32
        $region224: #{prule_forward_batched.1} parent=159 // pred_fallthru
          _
        // Predicated region
        $region225: #{prule_forward_batched.1} parent=159 // pred_check
          %p1284 = pneg %p642
        $region226: #{prule_forward_batched.1} parent=159 // pred_check_branch
          %1286 = sbr.rel (%p1284) target = $region228
        $region227: #{prule_forward_batched.1} parent=159 // pred_region
          %1287 = dma.done [#allocation26], 2048
        $region228: #{prule_forward_batched.1} parent=159 // pred_fallthru
          _
        // Predicated region
        $region229: #{prule_forward_batched.1} parent=159 // pred_check
          %p1288 = pneg %p663
        $region230: #{prule_forward_batched.1} parent=159 // pred_check_branch
          %1290 = sbr.rel (%p1288) target = $region232
        $region231: #{prule_forward_batched.1} parent=159 // pred_region
          %1291 = dma.done [#allocation29], 16
        $region232: #{prule_forward_batched.1} parent=159 // pred_fallthru
          _
        // Predicated region
        $region233: #{prule_forward_batched.1} parent=159 // pred_check
          %p1292 = pneg %p684
        $region234: #{prule_forward_batched.1} parent=159 // pred_check_branch
          %1294 = sbr.rel (%p1292) target = $region236
        $region235: #{prule_forward_batched.1} parent=159 // pred_region
          %1295 = dma.done [#allocation29], 2048
        $region236: #{prule_forward_batched.1} parent=159 // pred_fallthru
          _
        // Predicated region
        $region237: #{prule_forward_batched.1} parent=159 // pred_check
          %p1296 = pneg %p705
        $region238: #{prule_forward_batched.1} parent=159 // pred_check_branch
          %1298 = sbr.rel (%p1296) target = $region240
        $region239: #{prule_forward_batched.1} parent=159 // pred_region
          %1299 = dma.done [#allocation32], 32
        $region240: #{prule_forward_batched.1} parent=159 // pred_fallthru
          _
        // Predicated region
        $region241: #{prule_forward_batched.1} parent=159 // pred_check
          %p1300 = pneg %p726
        $region242: #{prule_forward_batched.1} parent=159 // pred_check_branch
          %1302 = sbr.rel (%p1300) target = $region244
        $region243: #{prule_forward_batched.1} parent=159 // pred_region
          %1303 = dma.done [#allocation32], 2048
        $region244: #{prule_forward_batched.1} parent=159 // pred_fallthru
          _
        // Predicated region
        $region245: #{prule_forward_batched.1} parent=159 // pred_check
          %p1304 = pneg %p747
        $region246: #{prule_forward_batched.1} parent=159 // pred_check_branch
          %1306 = sbr.rel (%p1304) target = $region248
        $region247: #{prule_forward_batched.1} parent=159 // pred_region
          %1307 = dma.done [#allocation35], 16
        $region248: #{prule_forward_batched.1} parent=159 // pred_fallthru
          _
        // Predicated region
        $region249: #{prule_forward_batched.1} parent=159 // pred_check
          %p1308 = pneg %p768
        $region250: #{prule_forward_batched.1} parent=159 // pred_check_branch
          %1310 = sbr.rel (%p1308) target = $region252
        $region251: #{prule_forward_batched.1} parent=159 // pred_region
          %1311 = dma.done [#allocation35], 2048
        $region252: #{prule_forward_batched.1} parent=159 // pred_fallthru
          _
        // Predicated region
        $region253: #{prule_forward_batched.1} parent=159 // pred_check
          %p1312 = pneg %p789
        $region254: #{prule_forward_batched.1} parent=159 // pred_check_branch
          %1314 = sbr.rel (%p1312) target = $region256
        $region255: #{prule_forward_batched.1} parent=159 // pred_region
          %1315 = dma.done [#allocation38], 32
        $region256: #{prule_forward_batched.1} parent=159 // pred_fallthru
          _
        // Predicated region
        $region257: #{prule_forward_batched.1} parent=159 // pred_check
          %p1316 = pneg %p810
        $region258: #{prule_forward_batched.1} parent=159 // pred_check_branch
          %1318 = sbr.rel (%p1316) target = $region260
        $region259: #{prule_forward_batched.1} parent=159 // pred_region
          %1319 = dma.done [#allocation38], 2048
        $region260: #{prule_forward_batched.1} parent=159 // pred_fallthru
          _
        // Predicated region
        $region261: #{prule_forward_batched.1} parent=159 // pred_check
          %p1320 = pneg %p831
        $region262: #{prule_forward_batched.1} parent=159 // pred_check_branch
          %1322 = sbr.rel (%p1320) target = $region264
        $region263: #{prule_forward_batched.1} parent=159 // pred_region
          %1323 = dma.done [#allocation41], 16
        $region264: #{prule_forward_batched.1} parent=159 // pred_fallthru
          _
        %s1324 = smul.u32 16, %s96
        %p1325 = scmp.lt.s32.totalorder %s1324, 31
        %s1326 = scalar_select %p1325, %s1324, 31
        %s1327 = smul.addr %s1326, 8
        %s1328 = scalar_lea.vmem %s1, %s1327
        %p1329 = pneg %p117
        %p1330 = pneg %p114
        %p1331 = pneg %p138
        %p1332 = pneg %p135
        %p1333 = pneg %p159
        %p1334 = pneg %p156
        %p1335 = pneg %p180
        %p1336 = pneg %p177
        %p1337 = pneg %p201
        %p1338 = pneg %p198
        %p1339 = pneg %p222
        %p1340 = pneg %p219
        %p1341 = pneg %p243
        %p1342 = pneg %p240
        %p1343 = pneg %p264
        %p1344 = pneg %p261
        %p1345 = pneg %p285
        %p1346 = pneg %p282
        %p1347 = pneg %p306
        %p1348 = pneg %p303
        %p1349 = pneg %p327
        %p1350 = pneg %p324
        %p1351 = pneg %p348
        %p1352 = pneg %p345
        %p1353 = pneg %p369
        %p1354 = pneg %p366
        %p1355 = pneg %p390
        %p1356 = pneg %p387
        %p1357 = pneg %p411
        %p1358 = pneg %p408
        %p1359 = pneg %p432
        %p1360 = pneg %p429
        %p1361 = pneg %p453
        %p1362 = pneg %p450
        %p1363 = pneg %p474
        %p1364 = pneg %p471
        %p1365 = pneg %p495
        %p1366 = pneg %p492
        %p1367 = pneg %p516
        %p1368 = pneg %p513
        %p1369 = pneg %p537
        %p1370 = pneg %p534
        %p1371 = pneg %p558
        %p1372 = pneg %p555
        %p1373 = pneg %p579
        %p1374 = pneg %p576
        %p1375 = pneg %p600
        %p1376 = pneg %p597
        %p1377 = pneg %p621
        %p1378 = pneg %p618
        %p1379 = pneg %p642
        %p1380 = pneg %p639
        %p1381 = pneg %p663
        %p1382 = pneg %p660
        %p1383 = pneg %p684
        %p1384 = pneg %p681
        %p1385 = pneg %p705
        %p1386 = pneg %p702
        %p1387 = pneg %p726
        %p1388 = pneg %p723
        %p1389 = pneg %p747
        %p1390 = pneg %p744
        %p1391 = pneg %p768
        %p1392 = pneg %p765
        %p1393 = pneg %p789
        %p1394 = pneg %p786
        %p1395 = pneg %p810
        %p1396 = pneg %p807
        %p1397 = pneg %p831
        %p1398 = pneg %p828
        %p1399 = pneg %p857
        %p1400 = pneg %p854
        %s1401 = smul.u32 16, %s96
        %p1402 = scmp.lt.s32.totalorder %s1401, 31
        %s1403 = scalar_select %p1402, %s1401, 31
        %s1404 = smul.addr %s1403, 8
        %s1405 = scalar_lea.vmem %s71, %s1404
        %s1406 = smul.u32 16, %s96
        %p1407 = scmp.lt.s32.totalorder %s1406, 31
        %s1408 = scalar_select %p1407, %s1406, 31
        %s1409 = smul.addr %s1408, 8
        %s1410 = scalar_lea.vmem %s1, %s1409
        %s1411 = smul.u32 16, %s96
        %s1412 = smul.u32 16, %s96
        %p1413 = scmp.lt.s32.totalorder %s1412, 31
        %s1414 = scalar_select %p1413, %s1412, 31
        %s1415 = smul.addr %s1414, 8
        %s1416 = scalar_lea.vmem %s71, %s1415
        %s1417 = smul.u32 16, %s96
        %v1419 = vld [vmem:[%s1410] sm:$0xff]
        %v1420 = vld [vmem:[%s1410 + $0x8] sm:$0xff]
        %v1421 = vld [vmem:[%s1410 + $0x10] sm:$0xff]
        %v1422 = vld [vmem:[%s1410 + $0x18] sm:$0xff]
        %v1423 = vld [vmem:[%s1410 + $0x20] sm:$0xff]
        %v1424 = vld [vmem:[%s1410 + $0x28] sm:$0xff]
        %v1425 = vld [vmem:[%s1410 + $0x30] sm:$0xff]
        %v1426 = vld [vmem:[%s1410 + $0x38] sm:$0xff]
        %v1427 = vld [vmem:[%s1410 + $0x40] sm:$0xff]
        %v1428 = vld [vmem:[%s1410 + $0x48] sm:$0xff]
        %v1429 = vld [vmem:[%s1410 + $0x50] sm:$0xff]
        %v1430 = vld [vmem:[%s1410 + $0x58] sm:$0xff]
        %v1431 = vld [vmem:[%s1410 + $0x60] sm:$0xff]
        %v1432 = vld [vmem:[%s1410 + $0x68] sm:$0xff]
        %v1433 = vld [vmem:[%s1410 + $0x70] sm:$0xff]
        %v1434 = vld [vmem:[%s1410 + $0x78] sm:$0xff]
        %v1435 = vpack.c.bf16 %v1420, %v1419
        %v1436 = vpack.c.bf16 %v1422, %v1421
        %v1437 = vpack.c.bf16 %v1424, %v1423
        %v1438 = vpack.c.bf16 %v1426, %v1425
        %v1439 = vpack.c.bf16 %v1428, %v1427
        %v1440 = vpack.c.bf16 %v1430, %v1429
        %v1441 = vpack.c.bf16 %v1432, %v1431
        %v1442 = vpack.c.bf16 %v1434, %v1433
        %v1443 = vld [vmem:[%s3] sm:$0xff]
        %v1444 = vld [vmem:[%s3 + $0x8] sm:$0xf]
        %v1445 = vld [vmem:[%s3 + $0xc] sm:$0xff]
        %v1446 = vld [vmem:[%s3 + $0x14] sm:$0xf]
        %v1447 = vld [vmem:[%s3 + $0x18] sm:$0xff]
        %v1448 = vld [vmem:[%s3 + $0x20] sm:$0xf]
        %v1449 = vld [vmem:[%s3 + $0x24] sm:$0xff]
        %v1450 = vld [vmem:[%s3 + $0x2c] sm:$0xf]
        %v1451 = vld [vmem:[%s3 + $0x30] sm:$0xff]
        %v1452 = vld [vmem:[%s3 + $0x38] sm:$0xf]
        %v1453 = vld [vmem:[%s3 + $0x3c] sm:$0xff]
        %v1454 = vld [vmem:[%s3 + $0x44] sm:$0xf]
        %v1455 = vld [vmem:[%s3 + $0x48] sm:$0xff]
        %v1456 = vld [vmem:[%s3 + $0x50] sm:$0xf]
        %v1457 = vld [vmem:[%s3 + $0x54] sm:$0xff]
        %v1458 = vld [vmem:[%s3 + $0x5c] sm:$0xf]
        %v1459 = vld [vmem:[%s3 + $0x60] sm:$0xff]
        %v1460 = vld [vmem:[%s3 + $0x68] sm:$0xf]
        %v1461 = vld [vmem:[%s3 + $0x6c] sm:$0xff]
        %v1462 = vld [vmem:[%s3 + $0x74] sm:$0xf]
        %v1463 = vld [vmem:[%s3 + $0x78] sm:$0xff]
        %v1464 = vld [vmem:[%s3 + $0x80] sm:$0xf]
        %v1465 = vld [vmem:[%s3 + $0x84] sm:$0xff]
        %v1466 = vld [vmem:[%s3 + $0x8c] sm:$0xf]
        %v1467 = vld [vmem:[%s3 + $0x90] sm:$0xff]
        %v1468 = vld [vmem:[%s3 + $0x98] sm:$0xf]
        %v1469 = vld [vmem:[%s3 + $0x9c] sm:$0xff]
        %v1470 = vld [vmem:[%s3 + $0xa4] sm:$0xf]
        %v1471 = vld [vmem:[%s3 + $0xa8] sm:$0xff]
        %v1472 = vld [vmem:[%s3 + $0xb0] sm:$0xf]
        %v1473 = vld [vmem:[%s3 + $0xb4] sm:$0xff]
        %v1474 = vld [vmem:[%s3 + $0xbc] sm:$0xf]
        %v1475 = vld [vmem:[#allocation2] sm:$0x7]
        %v1477 = vlaneseq
        %v1478 = vshrl.u32 %v1477, 7
        %v1479 = vsub.s32 0, %v1478
        %v1480 = vrot.slane %v1475, %v1479
        %v1481 = vlaneseq
        %v1482 = vshrl.u32 %v1481, 7
        %v1483 = vsub.s32 1, %v1482
        %v1484 = vrot.slane %v1475, %v1483
        %v1485 = vlaneseq
        %v1486 = vshrl.u32 %v1485, 7
        %v1487 = vsub.s32 2, %v1486
        %v1488 = vrot.slane %v1475, %v1487
        %v1524 = vunpack.c.l.b16 %v1443
        %v1525 = vunpack.c.h.b16 %v1443
        %v1526 = vunpack.c.l.b16 %v1444
        %v1527 = vunpack.c.l.b16 %v1445
        %v1528 = vunpack.c.h.b16 %v1445
        %v1529 = vunpack.c.l.b16 %v1446
        %v1530 = vunpack.c.l.b16 %v1447
        %v1531 = vunpack.c.h.b16 %v1447
        %v1532 = vunpack.c.l.b16 %v1448
        %v1533 = vunpack.c.l.b16 %v1449
        %v1534 = vunpack.c.h.b16 %v1449
        %v1535 = vunpack.c.l.b16 %v1450
        %v1536 = vunpack.c.l.b16 %v1451
        %v1537 = vunpack.c.h.b16 %v1451
        %v1538 = vunpack.c.l.b16 %v1452
        %v1539 = vunpack.c.l.b16 %v1453
        %v1540 = vunpack.c.h.b16 %v1453
        %v1541 = vunpack.c.l.b16 %v1454
        %v1542 = vunpack.c.l.b16 %v1455
        %v1543 = vunpack.c.h.b16 %v1455
        %v1544 = vunpack.c.l.b16 %v1456
        %v1545 = vunpack.c.l.b16 %v1457
        %v1546 = vunpack.c.h.b16 %v1457
        %v1547 = vunpack.c.l.b16 %v1458
        %v1548 = vunpack.c.l.b16 %v1459
        %v1549 = vunpack.c.h.b16 %v1459
        %v1550 = vunpack.c.l.b16 %v1460
        %v1551 = vunpack.c.l.b16 %v1461
        %v1552 = vunpack.c.h.b16 %v1461
        %v1553 = vunpack.c.l.b16 %v1462
        %v1554 = vunpack.c.l.b16 %v1463
        %v1555 = vunpack.c.h.b16 %v1463
        %v1556 = vunpack.c.l.b16 %v1464
        %v1557 = vunpack.c.l.b16 %v1465
        %v1558 = vunpack.c.h.b16 %v1465
        %v1559 = vunpack.c.l.b16 %v1466
        %v1560 = vunpack.c.l.b16 %v1467
        %v1561 = vunpack.c.h.b16 %v1467
        %v1562 = vunpack.c.l.b16 %v1468
        %v1563 = vunpack.c.l.b16 %v1469
        %v1564 = vunpack.c.h.b16 %v1469
        %v1565 = vunpack.c.l.b16 %v1470
        %v1566 = vunpack.c.l.b16 %v1471
        %v1567 = vunpack.c.h.b16 %v1471
        %v1568 = vunpack.c.l.b16 %v1472
        %v1569 = vunpack.c.l.b16 %v1473
        %v1570 = vunpack.c.h.b16 %v1473
        %v1571 = vunpack.c.l.b16 %v1474
        %v1572 = vpack.c.b16 %v1527, %v1524
        %v1573 = vpack.c.b16 %v1528, %v1525
        %v1574 = vpack.c.b16 %v1529, %v1526
        %v1575 = vpack.c.b16 %v1533, %v1530
        %v1576 = vpack.c.b16 %v1534, %v1531
        %v1577 = vpack.c.b16 %v1535, %v1532
        %v1578 = vpack.c.b16 %v1539, %v1536
        %v1579 = vpack.c.b16 %v1540, %v1537
        %v1580 = vpack.c.b16 %v1541, %v1538
        %v1581 = vpack.c.b16 %v1545, %v1542
        %v1582 = vpack.c.b16 %v1546, %v1543
        %v1583 = vpack.c.b16 %v1547, %v1544
        %v1584 = vpack.c.b16 %v1551, %v1548
        %v1585 = vpack.c.b16 %v1552, %v1549
        %v1586 = vpack.c.b16 %v1553, %v1550
        %v1587 = vpack.c.b16 %v1557, %v1554
        %v1588 = vpack.c.b16 %v1558, %v1555
        %v1589 = vpack.c.b16 %v1559, %v1556
        %v1590 = vpack.c.b16 %v1563, %v1560
        %v1591 = vpack.c.b16 %v1564, %v1561
        %v1592 = vpack.c.b16 %v1565, %v1562
        %v1593 = vpack.c.b16 %v1569, %v1566
        %v1594 = vpack.c.b16 %v1570, %v1567
        %v1595 = vpack.c.b16 %v1571, %v1568
        %1620 = vmatprep.subr.bf16.mxu0 %v1573
        %1621 = vmatpush1.bf16.msra.mxu0 %v1572
        %1622 = vmatprep.subr.bf16.mxu0 %v1576
        %1623 = vmatpush1.bf16.msra.mxu0 %v1575
        %1624 = vmatprep.subr.bf16.mxu0 %v1579
        %1625 = vmatpush1.bf16.msra.mxu0 %v1578
        %1626 = vmatprep.subr.bf16.mxu0 %v1582
        %1627 = vmatpush1.bf16.msra.mxu0 %v1581
        %1628 = vmatprep.subr.bf16.mxu0 %v1585
        %1629 = vmatpush1.bf16.msra.mxu0 %v1584
        %1630 = vmatprep.subr.bf16.mxu0 %v1588
        %1631 = vmatpush1.bf16.msra.mxu0 %v1587
        %1632 = vmatprep.subr.bf16.mxu0 %v1591
        %1633 = vmatpush1.bf16.msra.mxu0 %v1590
        %1634 = vmatprep.subr.bf16.mxu0 %v1594
        %1635 = vmatpush1.bf16.msra.mxu0 %v1593
        %1636 = vmatprep.subr.bf16.mxu0 0
        %1637 = vmatpush1.bf16.msra.mxu0 0
        %1638 = vmatprep.subr.bf16.mxu0 0
        %1639 = vmatpush1.bf16.msra.mxu0 0
        %1640 = vmatprep.subr.bf16.mxu0 0
        %1641 = vmatpush1.bf16.msra.mxu0 0
        %1642 = vmatprep.subr.bf16.mxu0 0
        %1643 = vmatpush1.bf16.msra.mxu0 0
        %1644 = vmatprep.subr.bf16.mxu0 0
        %1645 = vmatpush1.bf16.msra.mxu0 0
        %1646 = vmatprep.subr.bf16.mxu0 0
        %1647 = vmatpush1.bf16.msra.mxu0 0
        %1648 = vmatprep.subr.bf16.mxu0 0
        %1649 = vmatpush1.bf16.msra.mxu0 0
        %1650 = vmatprep.subr.bf16.mxu0 0
        %1651 = vmatpush1.bf16.msra.mxu0 0
        %1652 = vmatprep.mubr.bf16.mxu0 0
        %1653 = vmatmul.mubr.bf16.gmra.mrb[0].mxu0 %v1435
        %v1654 = vpop.f32.mrb[0].mxu0
        %v1655 = vadd.f32 %v1480, %v1654
        %v1656 = vpop.f32.mrb[0].mxu0
        %v1657 = vadd.f32 %v1484, %v1656
        %v1658 = vpop.f32.mrb[0].mxu0
        %v1659 = vadd.f32 %v1480, %v1658
        %v1660 = vpop.f32.mrb[0].mxu0
        %v1661 = vadd.f32 %v1484, %v1660
        %1662 = vmatprep.mubr.bf16.mxu0 0
        %1663 = vmatmul.mubr.bf16.gmra.mrb[0].mxu0 %v1436
        %v1664 = vpop.f32.mrb[0].mxu0
        %v1665 = vadd.f32 %v1480, %v1664
        %v1666 = vpop.f32.mrb[0].mxu0
        %v1667 = vadd.f32 %v1484, %v1666
        %v1668 = vpop.f32.mrb[0].mxu0
        %v1669 = vadd.f32 %v1480, %v1668
        %v1670 = vpop.f32.mrb[0].mxu0
        %v1671 = vadd.f32 %v1484, %v1670
        %1672 = vmatprep.mubr.bf16.mxu0 0
        %1673 = vmatmul.mubr.bf16.gmra.mrb[0].mxu0 %v1437
        %v1674 = vpop.f32.mrb[0].mxu0
        %v1675 = vadd.f32 %v1480, %v1674
        %v1676 = vpop.f32.mrb[0].mxu0
        %v1677 = vadd.f32 %v1484, %v1676
        %v1678 = vpop.f32.mrb[0].mxu0
        %v1679 = vadd.f32 %v1480, %v1678
        %v1680 = vpop.f32.mrb[0].mxu0
        %v1681 = vadd.f32 %v1484, %v1680
        %1682 = vmatprep.mubr.bf16.mxu0 0
        %1683 = vmatmul.mubr.bf16.gmra.mrb[0].mxu0 %v1438
        %v1684 = vpop.f32.mrb[0].mxu0
        %v1685 = vadd.f32 %v1480, %v1684
        %v1686 = vpop.f32.mrb[0].mxu0
        %v1687 = vadd.f32 %v1484, %v1686
        %v1688 = vpop.f32.mrb[0].mxu0
        %v1689 = vadd.f32 %v1480, %v1688
        %v1690 = vpop.f32.mrb[0].mxu0
        %v1691 = vadd.f32 %v1484, %v1690
        %1692 = vmatprep.mubr.bf16.mxu0 0
        %1693 = vmatmul.mubr.bf16.gmra.mrb[0].mxu0 %v1439
        %v1694 = vpop.f32.mrb[0].mxu0
        %v1695 = vadd.f32 %v1480, %v1694
        %v1696 = vpop.f32.mrb[0].mxu0
        %v1697 = vadd.f32 %v1484, %v1696
        %v1698 = vpop.f32.mrb[0].mxu0
        %v1699 = vadd.f32 %v1480, %v1698
        %v1700 = vpop.f32.mrb[0].mxu0
        %v1701 = vadd.f32 %v1484, %v1700
        %1702 = vmatprep.mubr.bf16.mxu0 0
        %1703 = vmatmul.mubr.bf16.gmra.mrb[0].mxu0 %v1440
        %v1704 = vpop.f32.mrb[0].mxu0
        %v1705 = vadd.f32 %v1480, %v1704
        %v1706 = vpop.f32.mrb[0].mxu0
        %v1707 = vadd.f32 %v1484, %v1706
        %v1708 = vpop.f32.mrb[0].mxu0
        %v1709 = vadd.f32 %v1480, %v1708
        %v1710 = vpop.f32.mrb[0].mxu0
        %v1711 = vadd.f32 %v1484, %v1710
        %1712 = vmatprep.mubr.bf16.mxu0 0
        %1713 = vmatmul.mubr.bf16.gmra.mrb[0].mxu0 %v1441
        %v1714 = vpop.f32.mrb[0].mxu0
        %v1715 = vadd.f32 %v1480, %v1714
        %v1716 = vpop.f32.mrb[0].mxu0
        %v1717 = vadd.f32 %v1484, %v1716
        %v1718 = vpop.f32.mrb[0].mxu0
        %v1719 = vadd.f32 %v1480, %v1718
        %v1720 = vpop.f32.mrb[0].mxu0
        %v1721 = vadd.f32 %v1484, %v1720
        %1722 = vmatprep.mubr.bf16.mxu0 0
        %1723 = vmatmul.mubr.bf16.gmra.mrb[0].mxu0 %v1442
        %v1724 = vpop.f32.mrb[0].mxu0
        %v1725 = vadd.f32 %v1480, %v1724
        %v1726 = vpop.f32.mrb[0].mxu0
        %v1727 = vadd.f32 %v1484, %v1726
        %v1728 = vpop.f32.mrb[0].mxu0
        %v1729 = vadd.f32 %v1480, %v1728
        %v1730 = vpop.f32.mrb[0].mxu0
        %v1731 = vadd.f32 %v1484, %v1730
        %1732 = vdwg.mxu0
        %1733 = vmatprep.subr.bf16.mxu0 0
        %1734 = vmatpush1.bf16.msra.mxu0 %v1574
        %1735 = vmatprep.subr.bf16.mxu0 0
        %1736 = vmatpush1.bf16.msra.mxu0 %v1577
        %1737 = vmatprep.subr.bf16.mxu0 0
        %1738 = vmatpush1.bf16.msra.mxu0 %v1580
        %1739 = vmatprep.subr.bf16.mxu0 0
        %1740 = vmatpush1.bf16.msra.mxu0 %v1583
        %1741 = vmatprep.subr.bf16.mxu0 0
        %1742 = vmatpush1.bf16.msra.mxu0 %v1586
        %1743 = vmatprep.subr.bf16.mxu0 0
        %1744 = vmatpush1.bf16.msra.mxu0 %v1589
        %1745 = vmatprep.subr.bf16.mxu0 0
        %1746 = vmatpush1.bf16.msra.mxu0 %v1592
        %1747 = vmatprep.subr.bf16.mxu0 0
        %1748 = vmatpush1.bf16.msra.mxu0 %v1595
        %1749 = vmatprep.subr.bf16.mxu0 0
        %1750 = vmatpush1.bf16.msra.mxu0 0
        %1751 = vmatprep.subr.bf16.mxu0 0
        %1752 = vmatpush1.bf16.msra.mxu0 0
        %1753 = vmatprep.subr.bf16.mxu0 0
        %1754 = vmatpush1.bf16.msra.mxu0 0
        %1755 = vmatprep.subr.bf16.mxu0 0
        %1756 = vmatpush1.bf16.msra.mxu0 0
        %1757 = vmatprep.subr.bf16.mxu0 0
        %1758 = vmatpush1.bf16.msra.mxu0 0
        %1759 = vmatprep.subr.bf16.mxu0 0
        %1760 = vmatpush1.bf16.msra.mxu0 0
        %1761 = vmatprep.subr.bf16.mxu0 0
        %1762 = vmatpush1.bf16.msra.mxu0 0
        %1763 = vmatprep.subr.bf16.mxu0 0
        %1764 = vmatpush1.bf16.msra.mxu0 0
        %1765 = vmatprep.mubr.bf16.mxu0 0
        %1766 = vmatmul.mubr.bf16.gmra.mrb[0].mxu0 %v1435
        %v1767 = vpop.f32.mrb[0].mxu0
        %v1768 = vadd.f32 %v1488, %v1767
        %v1769 = vpop.f32.mrb[0].mxu0
        %v1770 = vpop.f32.mrb[0].mxu0
        %v1771 = vadd.f32 %v1488, %v1770
        %v1772 = vpop.f32.mrb[0].mxu0
        %1773 = vmatprep.mubr.bf16.mxu0 0
        %1774 = vmatmul.mubr.bf16.gmra.mrb[0].mxu0 %v1436
        %v1775 = vpop.f32.mrb[0].mxu0
        %v1776 = vadd.f32 %v1488, %v1775
        %v1777 = vpop.f32.mrb[0].mxu0
        %v1778 = vpop.f32.mrb[0].mxu0
        %v1779 = vadd.f32 %v1488, %v1778
        %v1780 = vpop.f32.mrb[0].mxu0
        %1781 = vmatprep.mubr.bf16.mxu0 0
        %1782 = vmatmul.mubr.bf16.gmra.mrb[0].mxu0 %v1437
        %v1783 = vpop.f32.mrb[0].mxu0
        %v1784 = vadd.f32 %v1488, %v1783
        %v1785 = vpop.f32.mrb[0].mxu0
        %v1786 = vpop.f32.mrb[0].mxu0
        %v1787 = vadd.f32 %v1488, %v1786
        %v1788 = vpop.f32.mrb[0].mxu0
        %1789 = vmatprep.mubr.bf16.mxu0 0
        %1790 = vmatmul.mubr.bf16.gmra.mrb[0].mxu0 %v1438
        %v1791 = vpop.f32.mrb[0].mxu0
        %v1792 = vadd.f32 %v1488, %v1791
        %v1793 = vpop.f32.mrb[0].mxu0
        %v1794 = vpop.f32.mrb[0].mxu0
        %v1795 = vadd.f32 %v1488, %v1794
        %v1796 = vpop.f32.mrb[0].mxu0
        %1797 = vmatprep.mubr.bf16.mxu0 0
        %1798 = vmatmul.mubr.bf16.gmra.mrb[0].mxu0 %v1439
        %v1799 = vpop.f32.mrb[0].mxu0
        %v1800 = vadd.f32 %v1488, %v1799
        %v1801 = vpop.f32.mrb[0].mxu0
        %v1802 = vpop.f32.mrb[0].mxu0
        %v1803 = vadd.f32 %v1488, %v1802
        %v1804 = vpop.f32.mrb[0].mxu0
        %1805 = vmatprep.mubr.bf16.mxu0 0
        %1806 = vmatmul.mubr.bf16.gmra.mrb[0].mxu0 %v1440
        %v1807 = vpop.f32.mrb[0].mxu0
        %v1808 = vadd.f32 %v1488, %v1807
        %v1809 = vpop.f32.mrb[0].mxu0
        %v1810 = vpop.f32.mrb[0].mxu0
        %v1811 = vadd.f32 %v1488, %v1810
        %v1812 = vpop.f32.mrb[0].mxu0
        %1813 = vmatprep.mubr.bf16.mxu0 0
        %1814 = vmatmul.mubr.bf16.gmra.mrb[0].mxu0 %v1441
        %v1815 = vpop.f32.mrb[0].mxu0
        %v1816 = vadd.f32 %v1488, %v1815
        %v1817 = vpop.f32.mrb[0].mxu0
        %v1818 = vpop.f32.mrb[0].mxu0
        %v1819 = vadd.f32 %v1488, %v1818
        %v1820 = vpop.f32.mrb[0].mxu0
        %1821 = vmatprep.mubr.bf16.mxu0 0
        %1822 = vmatmul.mubr.bf16.gmra.mrb[0].mxu0 %v1442
        %v1823 = vpop.f32.mrb[0].mxu0
        %v1824 = vadd.f32 %v1488, %v1823
        %v1825 = vpop.f32.mrb[0].mxu0
        %v1826 = vpop.f32.mrb[0].mxu0
        %v1827 = vadd.f32 %v1488, %v1826
        %v1828 = vpop.f32.mrb[0].mxu0
        %1829 = vdwg.mxu0
        %v1830 = vmul.f32 %v1655, 0.01
        %v1831 = vmul.f32 %v1657, 0.01
        %v1832 = vmul.f32 %v1768, 0.01
        %v1833 = vmul.f32 %v1659, 0.01
        %v1834 = vmul.f32 %v1661, 0.01
        %v1835 = vmul.f32 %v1771, 0.01
        %v1836 = vmul.f32 %v1665, 0.01
        %v1837 = vmul.f32 %v1667, 0.01
        %v1838 = vmul.f32 %v1776, 0.01
        %v1839 = vmul.f32 %v1669, 0.01
        %v1840 = vmul.f32 %v1671, 0.01
        %v1841 = vmul.f32 %v1779, 0.01
        %v1842 = vmul.f32 %v1675, 0.01
        %v1843 = vmul.f32 %v1677, 0.01
        %v1844 = vmul.f32 %v1784, 0.01
        %v1845 = vmul.f32 %v1679, 0.01
        %v1846 = vmul.f32 %v1681, 0.01
        %v1847 = vmul.f32 %v1787, 0.01
        %v1848 = vmul.f32 %v1685, 0.01
        %v1849 = vmul.f32 %v1687, 0.01
        %v1850 = vmul.f32 %v1792, 0.01
        %v1851 = vmul.f32 %v1689, 0.01
        %v1852 = vmul.f32 %v1691, 0.01
        %v1853 = vmul.f32 %v1795, 0.01
        %v1854 = vmul.f32 %v1695, 0.01
        %v1855 = vmul.f32 %v1697, 0.01
        %v1856 = vmul.f32 %v1800, 0.01
        %v1857 = vmul.f32 %v1699, 0.01
        %v1858 = vmul.f32 %v1701, 0.01
        %v1859 = vmul.f32 %v1803, 0.01
        %v1860 = vmul.f32 %v1705, 0.01
        %v1861 = vmul.f32 %v1707, 0.01
        %v1862 = vmul.f32 %v1808, 0.01
        %v1863 = vmul.f32 %v1709, 0.01
        %v1864 = vmul.f32 %v1711, 0.01
        %v1865 = vmul.f32 %v1811, 0.01
        %v1866 = vmul.f32 %v1715, 0.01
        %v1867 = vmul.f32 %v1717, 0.01
        %v1868 = vmul.f32 %v1816, 0.01
        %v1869 = vmul.f32 %v1719, 0.01
        %v1870 = vmul.f32 %v1721, 0.01
        %v1871 = vmul.f32 %v1819, 0.01
        %v1872 = vmul.f32 %v1725, 0.01
        %v1873 = vmul.f32 %v1727, 0.01
        %v1874 = vmul.f32 %v1824, 0.01
        %v1875 = vmul.f32 %v1729, 0.01
        %v1876 = vmul.f32 %v1731, 0.01
        %v1877 = vmul.f32 %v1827, 0.01
        %v1878 = vmax.f32 %v1655, %v1830
        %v1879 = vmax.f32 %v1657, %v1831
        %v1880 = vmax.f32 %v1768, %v1832
        %v1881 = vmax.f32 %v1659, %v1833
        %v1882 = vmax.f32 %v1661, %v1834
        %v1883 = vmax.f32 %v1771, %v1835
        %v1884 = vmax.f32 %v1665, %v1836
        %v1885 = vmax.f32 %v1667, %v1837
        %v1886 = vmax.f32 %v1776, %v1838
        %v1887 = vmax.f32 %v1669, %v1839
        %v1888 = vmax.f32 %v1671, %v1840
        %v1889 = vmax.f32 %v1779, %v1841
        %v1890 = vmax.f32 %v1675, %v1842
        %v1891 = vmax.f32 %v1677, %v1843
        %v1892 = vmax.f32 %v1784, %v1844
        %v1893 = vmax.f32 %v1679, %v1845
        %v1894 = vmax.f32 %v1681, %v1846
        %v1895 = vmax.f32 %v1787, %v1847
        %v1896 = vmax.f32 %v1685, %v1848
        %v1897 = vmax.f32 %v1687, %v1849
        %v1898 = vmax.f32 %v1792, %v1850
        %v1899 = vmax.f32 %v1689, %v1851
        %v1900 = vmax.f32 %v1691, %v1852
        %v1901 = vmax.f32 %v1795, %v1853
        %v1902 = vmax.f32 %v1695, %v1854
        %v1903 = vmax.f32 %v1697, %v1855
        %v1904 = vmax.f32 %v1800, %v1856
        %v1905 = vmax.f32 %v1699, %v1857
        %v1906 = vmax.f32 %v1701, %v1858
        %v1907 = vmax.f32 %v1803, %v1859
        %v1908 = vmax.f32 %v1705, %v1860
        %v1909 = vmax.f32 %v1707, %v1861
        %v1910 = vmax.f32 %v1808, %v1862
        %v1911 = vmax.f32 %v1709, %v1863
        %v1912 = vmax.f32 %v1711, %v1864
        %v1913 = vmax.f32 %v1811, %v1865
        %v1914 = vmax.f32 %v1715, %v1866
        %v1915 = vmax.f32 %v1717, %v1867
        %v1916 = vmax.f32 %v1816, %v1868
        %v1917 = vmax.f32 %v1719, %v1869
        %v1918 = vmax.f32 %v1721, %v1870
        %v1919 = vmax.f32 %v1819, %v1871
        %v1920 = vmax.f32 %v1725, %v1872
        %v1921 = vmax.f32 %v1727, %v1873
        %v1922 = vmax.f32 %v1824, %v1874
        %v1923 = vmax.f32 %v1729, %v1875
        %v1924 = vmax.f32 %v1731, %v1876
        %v1925 = vmax.f32 %v1827, %v1877
        %v1926 = vpack.c.bf16 %v1881, %v1878
        %v1927 = vpack.c.bf16 %v1882, %v1879
        %v1928 = vpack.c.bf16 %v1883, %v1880
        %v1929 = vpack.c.bf16 %v1887, %v1884
        %v1930 = vpack.c.bf16 %v1888, %v1885
        %v1931 = vpack.c.bf16 %v1889, %v1886
        %v1932 = vpack.c.bf16 %v1893, %v1890
        %v1933 = vpack.c.bf16 %v1894, %v1891
        %v1934 = vpack.c.bf16 %v1895, %v1892
        %v1935 = vpack.c.bf16 %v1899, %v1896
        %v1936 = vpack.c.bf16 %v1900, %v1897
        %v1937 = vpack.c.bf16 %v1901, %v1898
        %v1938 = vpack.c.bf16 %v1905, %v1902
        %v1939 = vpack.c.bf16 %v1906, %v1903
        %v1940 = vpack.c.bf16 %v1907, %v1904
        %v1941 = vpack.c.bf16 %v1911, %v1908
        %v1942 = vpack.c.bf16 %v1912, %v1909
        %v1943 = vpack.c.bf16 %v1913, %v1910
        %v1944 = vpack.c.bf16 %v1917, %v1914
        %v1945 = vpack.c.bf16 %v1918, %v1915
        %v1946 = vpack.c.bf16 %v1919, %v1916
        %v1947 = vpack.c.bf16 %v1923, %v1920
        %v1948 = vpack.c.bf16 %v1924, %v1921
        %v1949 = vpack.c.bf16 %v1925, %v1922
        %v1950 = vld [vmem:[%s7] sm:$0xf]
        %v1951 = vld [vmem:[%s7 + $0x4] sm:$0xf]
        %v1952 = vld [vmem:[%s7 + $0x8] sm:$0xf]
        %v1953 = vld [vmem:[%s7 + $0xc] sm:$0xf]
        %v1954 = vld [vmem:[%s7 + $0x10] sm:$0xf]
        %v1955 = vld [vmem:[%s7 + $0x14] sm:$0xf]
        %v1956 = vld [vmem:[%s7 + $0x18] sm:$0xf]
        %v1957 = vld [vmem:[%s7 + $0x1c] sm:$0xf]
        %v1958 = vld [vmem:[%s7 + $0x20] sm:$0xf]
        %v1959 = vld [vmem:[%s7 + $0x24] sm:$0xf]
        %v1960 = vld [vmem:[%s7 + $0x28] sm:$0xf]
        %v1961 = vld [vmem:[%s7 + $0x2c] sm:$0xf]
        %v1962 = vld [vmem:[%s7 + $0x30] sm:$0xf]
        %v1963 = vld [vmem:[%s7 + $0x34] sm:$0xf]
        %v1964 = vld [vmem:[%s7 + $0x38] sm:$0xf]
        %v1965 = vld [vmem:[%s7 + $0x3c] sm:$0xf]
        %v1966 = vld [vmem:[%s7 + $0x40] sm:$0xf]
        %v1967 = vld [vmem:[%s7 + $0x44] sm:$0xf]
        %v1968 = vld [vmem:[%s7 + $0x48] sm:$0xf]
        %v1969 = vld [vmem:[%s7 + $0x4c] sm:$0xf]
        %v1970 = vld [vmem:[%s7 + $0x50] sm:$0xf]
        %v1971 = vld [vmem:[%s7 + $0x54] sm:$0xf]
        %v1972 = vld [vmem:[%s7 + $0x58] sm:$0xf]
        %v1973 = vld [vmem:[%s7 + $0x5c] sm:$0xf]
        %v1974 = vld [vmem:[%s7 + $0x60] sm:$0xf]
        %v1975 = vld [vmem:[%s7 + $0x64] sm:$0xf]
        %v1976 = vld [vmem:[%s7 + $0x68] sm:$0xf]
        %v1977 = vld [vmem:[%s7 + $0x6c] sm:$0xf]
        %v1978 = vld [vmem:[%s7 + $0x70] sm:$0xf]
        %v1979 = vld [vmem:[%s7 + $0x74] sm:$0xf]
        %v1980 = vld [vmem:[%s7 + $0x78] sm:$0xf]
        %v1981 = vld [vmem:[%s7 + $0x7c] sm:$0xf]
        %v1982 = vld [vmem:[%s7 + $0x80] sm:$0xf]
        %v1983 = vld [vmem:[%s7 + $0x84] sm:$0xf]
        %v1984 = vld [vmem:[%s7 + $0x88] sm:$0xf]
        %v1985 = vld [vmem:[%s7 + $0x8c] sm:$0xf]
        %v1986 = vld [vmem:[%s7 + $0x90] sm:$0xf]
        %v1987 = vld [vmem:[%s7 + $0x94] sm:$0xf]
        %v1988 = vld [vmem:[%s7 + $0x98] sm:$0xf]
        %v1989 = vld [vmem:[%s7 + $0x9c] sm:$0xf]
        %v1990 = vld [vmem:[%s7 + $0xa0] sm:$0xf]
        %v1991 = vld [vmem:[%s7 + $0xa4] sm:$0xf]
        %v1992 = vld [vmem:[%s7 + $0xa8] sm:$0xf]
        %v1993 = vld [vmem:[%s7 + $0xac] sm:$0xf]
        %v1994 = vld [vmem:[%s7 + $0xb0] sm:$0xf]
        %v1995 = vld [vmem:[%s7 + $0xb4] sm:$0xf]
        %v1996 = vld [vmem:[%s7 + $0xb8] sm:$0xf]
        %v1997 = vld [vmem:[%s7 + $0xbc] sm:$0xf]
        %v1998 = vld [vmem:[#allocation4] sm:$0x1]
        %v2000 = vlaneseq
        %v2001 = vshrl.u32 %v2000, 7
        %v2002 = vsub.s32 0, %v2001
        %v2003 = vrot.slane %v1998, %v2002
        %v2053 = vunpack.c.l.b16 %v1950
        %v2054 = vunpack.c.l.b16 %v1951
        %v2055 = vunpack.c.l.b16 %v1952
        %v2056 = vunpack.c.l.b16 %v1953
        %v2057 = vunpack.c.l.b16 %v1954
        %v2058 = vunpack.c.l.b16 %v1955
        %v2059 = vunpack.c.l.b16 %v1956
        %v2060 = vunpack.c.l.b16 %v1957
        %v2061 = vunpack.c.l.b16 %v1958
        %v2062 = vunpack.c.l.b16 %v1959
        %v2063 = vunpack.c.l.b16 %v1960
        %v2064 = vunpack.c.l.b16 %v1961
        %v2065 = vunpack.c.l.b16 %v1962
        %v2066 = vunpack.c.l.b16 %v1963
        %v2067 = vunpack.c.l.b16 %v1964
        %v2068 = vunpack.c.l.b16 %v1965
        %v2069 = vunpack.c.l.b16 %v1966
        %v2070 = vunpack.c.l.b16 %v1967
        %v2071 = vunpack.c.l.b16 %v1968
        %v2072 = vunpack.c.l.b16 %v1969
        %v2073 = vunpack.c.l.b16 %v1970
        %v2074 = vunpack.c.l.b16 %v1971
        %v2075 = vunpack.c.l.b16 %v1972
        %v2076 = vunpack.c.l.b16 %v1973
        %v2077 = vunpack.c.l.b16 %v1974
        %v2078 = vunpack.c.l.b16 %v1975
        %v2079 = vunpack.c.l.b16 %v1976
        %v2080 = vunpack.c.l.b16 %v1977
        %v2081 = vunpack.c.l.b16 %v1978
        %v2082 = vunpack.c.l.b16 %v1979
        %v2083 = vunpack.c.l.b16 %v1980
        %v2084 = vunpack.c.l.b16 %v1981
        %v2085 = vunpack.c.l.b16 %v1982
        %v2086 = vunpack.c.l.b16 %v1983
        %v2087 = vunpack.c.l.b16 %v1984
        %v2088 = vunpack.c.l.b16 %v1985
        %v2089 = vunpack.c.l.b16 %v1986
        %v2090 = vunpack.c.l.b16 %v1987
        %v2091 = vunpack.c.l.b16 %v1988
        %v2092 = vunpack.c.l.b16 %v1989
        %v2093 = vunpack.c.l.b16 %v1990
        %v2094 = vunpack.c.l.b16 %v1991
        %v2095 = vunpack.c.l.b16 %v1992
        %v2096 = vunpack.c.l.b16 %v1993
        %v2097 = vunpack.c.l.b16 %v1994
        %v2098 = vunpack.c.l.b16 %v1995
        %v2099 = vunpack.c.l.b16 %v1996
        %v2100 = vunpack.c.l.b16 %v1997
        %v2101 = vpack.c.b16 %v2054, %v2053
        %v2102 = vpack.c.b16 %v2056, %v2055
        %v2103 = vpack.c.b16 %v2058, %v2057
        %v2104 = vpack.c.b16 %v2060, %v2059
        %v2105 = vpack.c.b16 %v2062, %v2061
        %v2106 = vpack.c.b16 %v2064, %v2063
        %v2107 = vpack.c.b16 %v2066, %v2065
        %v2108 = vpack.c.b16 %v2068, %v2067
        %v2109 = vpack.c.b16 %v2070, %v2069
        %v2110 = vpack.c.b16 %v2072, %v2071
        %v2111 = vpack.c.b16 %v2074, %v2073
        %v2112 = vpack.c.b16 %v2076, %v2075
        %v2113 = vpack.c.b16 %v2078, %v2077
        %v2114 = vpack.c.b16 %v2080, %v2079
        %v2115 = vpack.c.b16 %v2082, %v2081
        %v2116 = vpack.c.b16 %v2084, %v2083
        %v2117 = vpack.c.b16 %v2086, %v2085
        %v2118 = vpack.c.b16 %v2088, %v2087
        %v2119 = vpack.c.b16 %v2090, %v2089
        %v2120 = vpack.c.b16 %v2092, %v2091
        %v2121 = vpack.c.b16 %v2094, %v2093
        %v2122 = vpack.c.b16 %v2096, %v2095
        %v2123 = vpack.c.b16 %v2098, %v2097
        %v2124 = vpack.c.b16 %v2100, %v2099
        %2149 = vmatprep.subr.bf16.mxu0 0
        %2150 = vmatpush1.bf16.msra.mxu0 %v2101
        %2151 = vmatprep.subr.bf16.mxu0 0
        %2152 = vmatpush1.bf16.msra.mxu0 %v2102
        %2153 = vmatprep.subr.bf16.mxu0 0
        %2154 = vmatpush1.bf16.msra.mxu0 %v2103
        %2155 = vmatprep.subr.bf16.mxu0 0
        %2156 = vmatpush1.bf16.msra.mxu0 %v2104
        %2157 = vmatprep.subr.bf16.mxu0 0
        %2158 = vmatpush1.bf16.msra.mxu0 %v2105
        %2159 = vmatprep.subr.bf16.mxu0 0
        %2160 = vmatpush1.bf16.msra.mxu0 %v2106
        %2161 = vmatprep.subr.bf16.mxu0 0
        %2162 = vmatpush1.bf16.msra.mxu0 %v2107
        %2163 = vmatprep.subr.bf16.mxu0 0
        %2164 = vmatpush1.bf16.msra.mxu0 %v2108
        %2165 = vmatprep.subr.bf16.mxu0 0
        %2166 = vmatpush1.bf16.msra.mxu0 %v2109
        %2167 = vmatprep.subr.bf16.mxu0 0
        %2168 = vmatpush1.bf16.msra.mxu0 %v2110
        %2169 = vmatprep.subr.bf16.mxu0 0
        %2170 = vmatpush1.bf16.msra.mxu0 %v2111
        %2171 = vmatprep.subr.bf16.mxu0 0
        %2172 = vmatpush1.bf16.msra.mxu0 %v2112
        %2173 = vmatprep.subr.bf16.mxu0 0
        %2174 = vmatpush1.bf16.msra.mxu0 %v2113
        %2175 = vmatprep.subr.bf16.mxu0 0
        %2176 = vmatpush1.bf16.msra.mxu0 %v2114
        %2177 = vmatprep.subr.bf16.mxu0 0
        %2178 = vmatpush1.bf16.msra.mxu0 %v2115
        %2179 = vmatprep.subr.bf16.mxu0 0
        %2180 = vmatpush1.bf16.msra.mxu0 %v2116
        %2181 = vmatprep.mubr.bf16.mxu0 %v1927
        %2182 = vmatmul.mubr.bf16.gmra.mrb[0].mxu0 %v1926
        %v2183 = vpop.f32.mrb[0].mxu0
        %v2184 = vadd.f32 %v2003, %v2183
        %v2185 = vpop.f32.mrb[0].mxu0
        %v2186 = vpop.f32.mrb[0].mxu0
        %v2187 = vadd.f32 %v2003, %v2186
        %v2188 = vpop.f32.mrb[0].mxu0
        %2189 = vmatprep.mubr.bf16.mxu0 %v1930
        %2190 = vmatmul.mubr.bf16.gmra.mrb[0].mxu0 %v1929
        %v2191 = vpop.f32.mrb[0].mxu0
        %v2192 = vadd.f32 %v2003, %v2191
        %v2193 = vpop.f32.mrb[0].mxu0
        %v2194 = vpop.f32.mrb[0].mxu0
        %v2195 = vadd.f32 %v2003, %v2194
        %v2196 = vpop.f32.mrb[0].mxu0
        %2197 = vmatprep.mubr.bf16.mxu0 %v1933
        %2198 = vmatmul.mubr.bf16.gmra.mrb[0].mxu0 %v1932
        %v2199 = vpop.f32.mrb[0].mxu0
        %v2200 = vadd.f32 %v2003, %v2199
        %v2201 = vpop.f32.mrb[0].mxu0
        %v2202 = vpop.f32.mrb[0].mxu0
        %v2203 = vadd.f32 %v2003, %v2202
        %v2204 = vpop.f32.mrb[0].mxu0
        %2205 = vmatprep.mubr.bf16.mxu0 %v1936
        %2206 = vmatmul.mubr.bf16.gmra.mrb[0].mxu0 %v1935
        %v2207 = vpop.f32.mrb[0].mxu0
        %v2208 = vadd.f32 %v2003, %v2207
        %v2209 = vpop.f32.mrb[0].mxu0
        %v2210 = vpop.f32.mrb[0].mxu0
        %v2211 = vadd.f32 %v2003, %v2210
        %v2212 = vpop.f32.mrb[0].mxu0
        %2213 = vmatprep.mubr.bf16.mxu0 %v1939
        %2214 = vmatmul.mubr.bf16.gmra.mrb[0].mxu0 %v1938
        %v2215 = vpop.f32.mrb[0].mxu0
        %v2216 = vadd.f32 %v2003, %v2215
        %v2217 = vpop.f32.mrb[0].mxu0
        %v2218 = vpop.f32.mrb[0].mxu0
        %v2219 = vadd.f32 %v2003, %v2218
        %v2220 = vpop.f32.mrb[0].mxu0
        %2221 = vmatprep.mubr.bf16.mxu0 %v1942
        %2222 = vmatmul.mubr.bf16.gmra.mrb[0].mxu0 %v1941
        %v2223 = vpop.f32.mrb[0].mxu0
        %v2224 = vadd.f32 %v2003, %v2223
        %v2225 = vpop.f32.mrb[0].mxu0
        %v2226 = vpop.f32.mrb[0].mxu0
        %v2227 = vadd.f32 %v2003, %v2226
        %v2228 = vpop.f32.mrb[0].mxu0
        %2229 = vmatprep.mubr.bf16.mxu0 %v1945
        %2230 = vmatmul.mubr.bf16.gmra.mrb[0].mxu0 %v1944
        %v2231 = vpop.f32.mrb[0].mxu0
        %v2232 = vadd.f32 %v2003, %v2231
        %v2233 = vpop.f32.mrb[0].mxu0
        %v2234 = vpop.f32.mrb[0].mxu0
        %v2235 = vadd.f32 %v2003, %v2234
        %v2236 = vpop.f32.mrb[0].mxu0
        %2237 = vmatprep.mubr.bf16.mxu0 %v1948
        %2238 = vmatmul.mubr.bf16.gmra.mrb[0].mxu0 %v1947
        %v2239 = vpop.f32.mrb[0].mxu0
        %v2240 = vadd.f32 %v2003, %v2239
        %v2241 = vpop.f32.mrb[0].mxu0
        %v2242 = vpop.f32.mrb[0].mxu0
        %v2243 = vadd.f32 %v2003, %v2242
        %v2244 = vpop.f32.mrb[0].mxu0
        %2245 = vdwg.mxu0
        %2246 = vmatprep.subr.bf16.mxu0 0
        %2247 = vmatpush1.bf16.msra.mxu0 %v2117
        %2248 = vmatprep.subr.bf16.mxu0 0
        %2249 = vmatpush1.bf16.msra.mxu0 %v2118
        %2250 = vmatprep.subr.bf16.mxu0 0
        %2251 = vmatpush1.bf16.msra.mxu0 %v2119
        %2252 = vmatprep.subr.bf16.mxu0 0
        %2253 = vmatpush1.bf16.msra.mxu0 %v2120
        %2254 = vmatprep.subr.bf16.mxu0 0
        %2255 = vmatpush1.bf16.msra.mxu0 %v2121
        %2256 = vmatprep.subr.bf16.mxu0 0
        %2257 = vmatpush1.bf16.msra.mxu0 %v2122
        %2258 = vmatprep.subr.bf16.mxu0 0
        %2259 = vmatpush1.bf16.msra.mxu0 %v2123
        %2260 = vmatprep.subr.bf16.mxu0 0
        %2261 = vmatpush1.bf16.msra.mxu0 %v2124
        %2262 = vmatprep.subr.bf16.mxu0 0
        %2263 = vmatpush1.bf16.msra.mxu0 0
        %2264 = vmatprep.subr.bf16.mxu0 0
        %2265 = vmatpush1.bf16.msra.mxu0 0
        %2266 = vmatprep.subr.bf16.mxu0 0
        %2267 = vmatpush1.bf16.msra.mxu0 0
        %2268 = vmatprep.subr.bf16.mxu0 0
        %2269 = vmatpush1.bf16.msra.mxu0 0
        %2270 = vmatprep.subr.bf16.mxu0 0
        %2271 = vmatpush1.bf16.msra.mxu0 0
        %2272 = vmatprep.subr.bf16.mxu0 0
        %2273 = vmatpush1.bf16.msra.mxu0 0
        %2274 = vmatprep.subr.bf16.mxu0 0
        %2275 = vmatpush1.bf16.msra.mxu0 0
        %2276 = vmatprep.subr.bf16.mxu0 0
        %2277 = vmatpush1.bf16.msra.mxu0 0
        %2278 = vmatprep.mubr.bf16.mxu0 0
        %2279 = vmatmul.mubr.bf16.gmra.mrb[0].mxu0 %v1928
        %v2280 = vpop.f32.mrb[0].mxu0
        %v2281 = vadd.f32 %v2184, %v2280
        %v2282 = vpop.f32.mrb[0].mxu0
        %v2283 = vpop.f32.mrb[0].mxu0
        %v2284 = vadd.f32 %v2187, %v2283
        %v2285 = vpop.f32.mrb[0].mxu0
        %2286 = vmatprep.mubr.bf16.mxu0 0
        %2287 = vmatmul.mubr.bf16.gmra.mrb[0].mxu0 %v1931
        %v2288 = vpop.f32.mrb[0].mxu0
        %v2289 = vadd.f32 %v2192, %v2288
        %v2290 = vpop.f32.mrb[0].mxu0
        %v2291 = vpop.f32.mrb[0].mxu0
        %v2292 = vadd.f32 %v2195, %v2291
        %v2293 = vpop.f32.mrb[0].mxu0
        %2294 = vmatprep.mubr.bf16.mxu0 0
        %2295 = vmatmul.mubr.bf16.gmra.mrb[0].mxu0 %v1934
        %v2296 = vpop.f32.mrb[0].mxu0
        %v2297 = vadd.f32 %v2200, %v2296
        %v2298 = vpop.f32.mrb[0].mxu0
        %v2299 = vpop.f32.mrb[0].mxu0
        %v2300 = vadd.f32 %v2203, %v2299
        %v2301 = vpop.f32.mrb[0].mxu0
        %2302 = vmatprep.mubr.bf16.mxu0 0
        %2303 = vmatmul.mubr.bf16.gmra.mrb[0].mxu0 %v1937
        %v2304 = vpop.f32.mrb[0].mxu0
        %v2305 = vadd.f32 %v2208, %v2304
        %v2306 = vpop.f32.mrb[0].mxu0
        %v2307 = vpop.f32.mrb[0].mxu0
        %v2308 = vadd.f32 %v2211, %v2307
        %v2309 = vpop.f32.mrb[0].mxu0
        %2310 = vmatprep.mubr.bf16.mxu0 0
        %2311 = vmatmul.mubr.bf16.gmra.mrb[0].mxu0 %v1940
        %v2312 = vpop.f32.mrb[0].mxu0
        %v2313 = vadd.f32 %v2216, %v2312
        %v2314 = vpop.f32.mrb[0].mxu0
        %v2315 = vpop.f32.mrb[0].mxu0
        %v2316 = vadd.f32 %v2219, %v2315
        %v2317 = vpop.f32.mrb[0].mxu0
        %2318 = vmatprep.mubr.bf16.mxu0 0
        %2319 = vmatmul.mubr.bf16.gmra.mrb[0].mxu0 %v1943
        %v2320 = vpop.f32.mrb[0].mxu0
        %v2321 = vadd.f32 %v2224, %v2320
        %v2322 = vpop.f32.mrb[0].mxu0
        %v2323 = vpop.f32.mrb[0].mxu0
        %v2324 = vadd.f32 %v2227, %v2323
        %v2325 = vpop.f32.mrb[0].mxu0
        %2326 = vmatprep.mubr.bf16.mxu0 0
        %2327 = vmatmul.mubr.bf16.gmra.mrb[0].mxu0 %v1946
        %v2328 = vpop.f32.mrb[0].mxu0
        %v2329 = vadd.f32 %v2232, %v2328
        %v2330 = vpop.f32.mrb[0].mxu0
        %v2331 = vpop.f32.mrb[0].mxu0
        %v2332 = vadd.f32 %v2235, %v2331
        %v2333 = vpop.f32.mrb[0].mxu0
        %2334 = vmatprep.mubr.bf16.mxu0 0
        %2335 = vmatmul.mubr.bf16.gmra.mrb[0].mxu0 %v1949
        %v2336 = vpop.f32.mrb[0].mxu0
        %v2337 = vadd.f32 %v2240, %v2336
        %v2338 = vpop.f32.mrb[0].mxu0
        %v2339 = vpop.f32.mrb[0].mxu0
        %v2340 = vadd.f32 %v2243, %v2339
        %v2341 = vpop.f32.mrb[0].mxu0
        %2342 = vdwg.mxu0
        %v2343 = vmul.f32 %v2281, 0.01
        %v2344 = vmul.f32 %v2284, 0.01
        %v2345 = vmul.f32 %v2289, 0.01
        %v2346 = vmul.f32 %v2292, 0.01
        %v2347 = vmul.f32 %v2297, 0.01
        %v2348 = vmul.f32 %v2300, 0.01
        %v2349 = vmul.f32 %v2305, 0.01
        %v2350 = vmul.f32 %v2308, 0.01
        %v2351 = vmul.f32 %v2313, 0.01
        %v2352 = vmul.f32 %v2316, 0.01
        %v2353 = vmul.f32 %v2321, 0.01
        %v2354 = vmul.f32 %v2324, 0.01
        %v2355 = vmul.f32 %v2329, 0.01
        %v2356 = vmul.f32 %v2332, 0.01
        %v2357 = vmul.f32 %v2337, 0.01
        %v2358 = vmul.f32 %v2340, 0.01
        %v2359 = vmax.f32 %v2281, %v2343
        %v2360 = vmax.f32 %v2284, %v2344
        %v2361 = vmax.f32 %v2289, %v2345
        %v2362 = vmax.f32 %v2292, %v2346
        %v2363 = vmax.f32 %v2297, %v2347
        %v2364 = vmax.f32 %v2300, %v2348
        %v2365 = vmax.f32 %v2305, %v2349
        %v2366 = vmax.f32 %v2308, %v2350
        %v2367 = vmax.f32 %v2313, %v2351
        %v2368 = vmax.f32 %v2316, %v2352
        %v2369 = vmax.f32 %v2321, %v2353
        %v2370 = vmax.f32 %v2324, %v2354
        %v2371 = vmax.f32 %v2329, %v2355
        %v2372 = vmax.f32 %v2332, %v2356
        %v2373 = vmax.f32 %v2337, %v2357
        %v2374 = vmax.f32 %v2340, %v2358
        %v2375 = vpack.c.bf16 %v2360, %v2359
        %v2376 = vpack.c.bf16 %v2362, %v2361
        %v2377 = vpack.c.bf16 %v2364, %v2363
        %v2378 = vpack.c.bf16 %v2366, %v2365
        %v2379 = vpack.c.bf16 %v2368, %v2367
        %v2380 = vpack.c.bf16 %v2370, %v2369
        %v2381 = vpack.c.bf16 %v2372, %v2371
        %v2382 = vpack.c.bf16 %v2374, %v2373
        %v2383 = vld [vmem:[%s11] sm:$0xff]
        %v2384 = vld [vmem:[%s11 + $0x8] sm:$0xf]
        %v2385 = vld [vmem:[%s11 + $0xc] sm:$0xff]
        %v2386 = vld [vmem:[%s11 + $0x14] sm:$0xf]
        %v2387 = vld [vmem:[%s11 + $0x18] sm:$0xff]
        %v2388 = vld [vmem:[%s11 + $0x20] sm:$0xf]
        %v2389 = vld [vmem:[%s11 + $0x24] sm:$0xff]
        %v2390 = vld [vmem:[%s11 + $0x2c] sm:$0xf]
        %v2391 = vld [vmem:[%s11 + $0x30] sm:$0xff]
        %v2392 = vld [vmem:[%s11 + $0x38] sm:$0xf]
        %v2393 = vld [vmem:[%s11 + $0x3c] sm:$0xff]
        %v2394 = vld [vmem:[%s11 + $0x44] sm:$0xf]
        %v2395 = vld [vmem:[%s11 + $0x48] sm:$0xff]
        %v2396 = vld [vmem:[%s11 + $0x50] sm:$0xf]
        %v2397 = vld [vmem:[%s11 + $0x54] sm:$0xff]
        %v2398 = vld [vmem:[%s11 + $0x5c] sm:$0xf]
        %v2399 = vld [vmem:[%s11 + $0x60] sm:$0xff]
        %v2400 = vld [vmem:[%s11 + $0x68] sm:$0xf]
        %v2401 = vld [vmem:[%s11 + $0x6c] sm:$0xff]
        %v2402 = vld [vmem:[%s11 + $0x74] sm:$0xf]
        %v2403 = vld [vmem:[%s11 + $0x78] sm:$0xff]
        %v2404 = vld [vmem:[%s11 + $0x80] sm:$0xf]
        %v2405 = vld [vmem:[%s11 + $0x84] sm:$0xff]
        %v2406 = vld [vmem:[%s11 + $0x8c] sm:$0xf]
        %v2407 = vld [vmem:[%s11 + $0x90] sm:$0xff]
        %v2408 = vld [vmem:[%s11 + $0x98] sm:$0xf]
        %v2409 = vld [vmem:[%s11 + $0x9c] sm:$0xff]
        %v2410 = vld [vmem:[%s11 + $0xa4] sm:$0xf]
        %v2411 = vld [vmem:[%s11 + $0xa8] sm:$0xff]
        %v2412 = vld [vmem:[%s11 + $0xb0] sm:$0xf]
        %v2413 = vld [vmem:[%s11 + $0xb4] sm:$0xff]
        %v2414 = vld [vmem:[%s11 + $0xbc] sm:$0xf]
        %v2415 = vld [vmem:[#allocation6] sm:$0x7]
        %v2417 = vlaneseq
        %v2418 = vshrl.u32 %v2417, 7
        %v2419 = vsub.s32 0, %v2418
        %v2420 = vrot.slane %v2415, %v2419
        %v2421 = vlaneseq
        %v2422 = vshrl.u32 %v2421, 7
        %v2423 = vsub.s32 1, %v2422
        %v2424 = vrot.slane %v2415, %v2423
        %v2425 = vlaneseq
        %v2426 = vshrl.u32 %v2425, 7
        %v2427 = vsub.s32 2, %v2426
        %v2428 = vrot.slane %v2415, %v2427
        %v2464 = vunpack.c.l.b16 %v2383
        %v2465 = vunpack.c.h.b16 %v2383
        %v2466 = vunpack.c.l.b16 %v2384
        %v2467 = vunpack.c.l.b16 %v2385
        %v2468 = vunpack.c.h.b16 %v2385
        %v2469 = vunpack.c.l.b16 %v2386
        %v2470 = vunpack.c.l.b16 %v2387
        %v2471 = vunpack.c.h.b16 %v2387
        %v2472 = vunpack.c.l.b16 %v2388
        %v2473 = vunpack.c.l.b16 %v2389
        %v2474 = vunpack.c.h.b16 %v2389
        %v2475 = vunpack.c.l.b16 %v2390
        %v2476 = vunpack.c.l.b16 %v2391
        %v2477 = vunpack.c.h.b16 %v2391
        %v2478 = vunpack.c.l.b16 %v2392
        %v2479 = vunpack.c.l.b16 %v2393
        %v2480 = vunpack.c.h.b16 %v2393
        %v2481 = vunpack.c.l.b16 %v2394
        %v2482 = vunpack.c.l.b16 %v2395
        %v2483 = vunpack.c.h.b16 %v2395
        %v2484 = vunpack.c.l.b16 %v2396
        %v2485 = vunpack.c.l.b16 %v2397
        %v2486 = vunpack.c.h.b16 %v2397
        %v2487 = vunpack.c.l.b16 %v2398
        %v2488 = vunpack.c.l.b16 %v2399
        %v2489 = vunpack.c.h.b16 %v2399
        %v2490 = vunpack.c.l.b16 %v2400
        %v2491 = vunpack.c.l.b16 %v2401
        %v2492 = vunpack.c.h.b16 %v2401
        %v2493 = vunpack.c.l.b16 %v2402
        %v2494 = vunpack.c.l.b16 %v2403
        %v2495 = vunpack.c.h.b16 %v2403
        %v2496 = vunpack.c.l.b16 %v2404
        %v2497 = vunpack.c.l.b16 %v2405
        %v2498 = vunpack.c.h.b16 %v2405
        %v2499 = vunpack.c.l.b16 %v2406
        %v2500 = vunpack.c.l.b16 %v2407
        %v2501 = vunpack.c.h.b16 %v2407
        %v2502 = vunpack.c.l.b16 %v2408
        %v2503 = vunpack.c.l.b16 %v2409
        %v2504 = vunpack.c.h.b16 %v2409
        %v2505 = vunpack.c.l.b16 %v2410
        %v2506 = vunpack.c.l.b16 %v2411
        %v2507 = vunpack.c.h.b16 %v2411
        %v2508 = vunpack.c.l.b16 %v2412
        %v2509 = vunpack.c.l.b16 %v2413
        %v2510 = vunpack.c.h.b16 %v2413
        %v2511 = vunpack.c.l.b16 %v2414
        %v2512 = vpack.c.b16 %v2467, %v2464
        %v2513 = vpack.c.b16 %v2468, %v2465
        %v2514 = vpack.c.b16 %v2469, %v2466
        %v2515 = vpack.c.b16 %v2473, %v2470
        %v2516 = vpack.c.b16 %v2474, %v2471
        %v2517 = vpack.c.b16 %v2475, %v2472
        %v2518 = vpack.c.b16 %v2479, %v2476
        %v2519 = vpack.c.b16 %v2480, %v2477
        %v2520 = vpack.c.b16 %v2481, %v2478
        %v2521 = vpack.c.b16 %v2485, %v2482
        %v2522 = vpack.c.b16 %v2486, %v2483
        %v2523 = vpack.c.b16 %v2487, %v2484
        %v2524 = vpack.c.b16 %v2491, %v2488
        %v2525 = vpack.c.b16 %v2492, %v2489
        %v2526 = vpack.c.b16 %v2493, %v2490
        %v2527 = vpack.c.b16 %v2497, %v2494
        %v2528 = vpack.c.b16 %v2498, %v2495
        %v2529 = vpack.c.b16 %v2499, %v2496
        %v2530 = vpack.c.b16 %v2503, %v2500
        %v2531 = vpack.c.b16 %v2504, %v2501
        %v2532 = vpack.c.b16 %v2505, %v2502
        %v2533 = vpack.c.b16 %v2509, %v2506
        %v2534 = vpack.c.b16 %v2510, %v2507
        %v2535 = vpack.c.b16 %v2511, %v2508
        %2560 = vmatprep.subr.bf16.mxu0 %v2513
        %2561 = vmatpush1.bf16.msra.mxu0 %v2512
        %2562 = vmatprep.subr.bf16.mxu0 %v2516
        %2563 = vmatpush1.bf16.msra.mxu0 %v2515
        %2564 = vmatprep.subr.bf16.mxu0 %v2519
        %2565 = vmatpush1.bf16.msra.mxu0 %v2518
        %2566 = vmatprep.subr.bf16.mxu0 %v2522
        %2567 = vmatpush1.bf16.msra.mxu0 %v2521
        %2568 = vmatprep.subr.bf16.mxu0 %v2525
        %2569 = vmatpush1.bf16.msra.mxu0 %v2524
        %2570 = vmatprep.subr.bf16.mxu0 %v2528
        %2571 = vmatpush1.bf16.msra.mxu0 %v2527
        %2572 = vmatprep.subr.bf16.mxu0 %v2531
        %2573 = vmatpush1.bf16.msra.mxu0 %v2530
        %2574 = vmatprep.subr.bf16.mxu0 %v2534
        %2575 = vmatpush1.bf16.msra.mxu0 %v2533
        %2576 = vmatprep.subr.bf16.mxu0 0
        %2577 = vmatpush1.bf16.msra.mxu0 0
        %2578 = vmatprep.subr.bf16.mxu0 0
        %2579 = vmatpush1.bf16.msra.mxu0 0
        %2580 = vmatprep.subr.bf16.mxu0 0
        %2581 = vmatpush1.bf16.msra.mxu0 0
        %2582 = vmatprep.subr.bf16.mxu0 0
        %2583 = vmatpush1.bf16.msra.mxu0 0
        %2584 = vmatprep.subr.bf16.mxu0 0
        %2585 = vmatpush1.bf16.msra.mxu0 0
        %2586 = vmatprep.subr.bf16.mxu0 0
        %2587 = vmatpush1.bf16.msra.mxu0 0
        %2588 = vmatprep.subr.bf16.mxu0 0
        %2589 = vmatpush1.bf16.msra.mxu0 0
        %2590 = vmatprep.subr.bf16.mxu0 0
        %2591 = vmatpush1.bf16.msra.mxu0 0
        %2592 = vmatprep.mubr.bf16.mxu0 0
        %2593 = vmatmul.mubr.bf16.gmra.mrb[0].mxu0 %v2375
        %v2594 = vpop.f32.mrb[0].mxu0
        %v2595 = vadd.f32 %v2420, %v2594
        %v2596 = vpop.f32.mrb[0].mxu0
        %v2597 = vadd.f32 %v2424, %v2596
        %v2598 = vpop.f32.mrb[0].mxu0
        %v2599 = vadd.f32 %v2420, %v2598
        %v2600 = vpop.f32.mrb[0].mxu0
        %v2601 = vadd.f32 %v2424, %v2600
        %2602 = vmatprep.mubr.bf16.mxu0 0
        %2603 = vmatmul.mubr.bf16.gmra.mrb[0].mxu0 %v2376
        %v2604 = vpop.f32.mrb[0].mxu0
        %v2605 = vadd.f32 %v2420, %v2604
        %v2606 = vpop.f32.mrb[0].mxu0
        %v2607 = vadd.f32 %v2424, %v2606
        %v2608 = vpop.f32.mrb[0].mxu0
        %v2609 = vadd.f32 %v2420, %v2608
        %v2610 = vpop.f32.mrb[0].mxu0
        %v2611 = vadd.f32 %v2424, %v2610
        %2612 = vmatprep.mubr.bf16.mxu0 0
        %2613 = vmatmul.mubr.bf16.gmra.mrb[0].mxu0 %v2377
        %v2614 = vpop.f32.mrb[0].mxu0
        %v2615 = vadd.f32 %v2420, %v2614
        %v2616 = vpop.f32.mrb[0].mxu0
        %v2617 = vadd.f32 %v2424, %v2616
        %v2618 = vpop.f32.mrb[0].mxu0
        %v2619 = vadd.f32 %v2420, %v2618
        %v2620 = vpop.f32.mrb[0].mxu0
        %v2621 = vadd.f32 %v2424, %v2620
        %2622 = vmatprep.mubr.bf16.mxu0 0
        %2623 = vmatmul.mubr.bf16.gmra.mrb[0].mxu0 %v2378
        %v2624 = vpop.f32.mrb[0].mxu0
        %v2625 = vadd.f32 %v2420, %v2624
        %v2626 = vpop.f32.mrb[0].mxu0
        %v2627 = vadd.f32 %v2424, %v2626
        %v2628 = vpop.f32.mrb[0].mxu0
        %v2629 = vadd.f32 %v2420, %v2628
        %v2630 = vpop.f32.mrb[0].mxu0
        %v2631 = vadd.f32 %v2424, %v2630
        %2632 = vmatprep.mubr.bf16.mxu0 0
        %2633 = vmatmul.mubr.bf16.gmra.mrb[0].mxu0 %v2379
        %v2634 = vpop.f32.mrb[0].mxu0
        %v2635 = vadd.f32 %v2420, %v2634
        %v2636 = vpop.f32.mrb[0].mxu0
        %v2637 = vadd.f32 %v2424, %v2636
        %v2638 = vpop.f32.mrb[0].mxu0
        %v2639 = vadd.f32 %v2420, %v2638
        %v2640 = vpop.f32.mrb[0].mxu0
        %v2641 = vadd.f32 %v2424, %v2640
        %2642 = vmatprep.mubr.bf16.mxu0 0
        %2643 = vmatmul.mubr.bf16.gmra.mrb[0].mxu0 %v2380
        %v2644 = vpop.f32.mrb[0].mxu0
        %v2645 = vadd.f32 %v2420, %v2644
        %v2646 = vpop.f32.mrb[0].mxu0
        %v2647 = vadd.f32 %v2424, %v2646
        %v2648 = vpop.f32.mrb[0].mxu0
        %v2649 = vadd.f32 %v2420, %v2648
        %v2650 = vpop.f32.mrb[0].mxu0
        %v2651 = vadd.f32 %v2424, %v2650
        %2652 = vmatprep.mubr.bf16.mxu0 0
        %2653 = vmatmul.mubr.bf16.gmra.mrb[0].mxu0 %v2381
        %v2654 = vpop.f32.mrb[0].mxu0
        %v2655 = vadd.f32 %v2420, %v2654
        %v2656 = vpop.f32.mrb[0].mxu0
        %v2657 = vadd.f32 %v2424, %v2656
        %v2658 = vpop.f32.mrb[0].mxu0
        %v2659 = vadd.f32 %v2420, %v2658
        %v2660 = vpop.f32.mrb[0].mxu0
        %v2661 = vadd.f32 %v2424, %v2660
        %2662 = vmatprep.mubr.bf16.mxu0 0
        %2663 = vmatmul.mubr.bf16.gmra.mrb[0].mxu0 %v2382
        %v2664 = vpop.f32.mrb[0].mxu0
        %v2665 = vadd.f32 %v2420, %v2664
        %v2666 = vpop.f32.mrb[0].mxu0
        %v2667 = vadd.f32 %v2424, %v2666
        %v2668 = vpop.f32.mrb[0].mxu0
        %v2669 = vadd.f32 %v2420, %v2668
        %v2670 = vpop.f32.mrb[0].mxu0
        %v2671 = vadd.f32 %v2424, %v2670
        %2672 = vdwg.mxu0
        %2673 = vmatprep.subr.bf16.mxu0 0
        %2674 = vmatpush1.bf16.msra.mxu0 %v2514
        %2675 = vmatprep.subr.bf16.mxu0 0
        %2676 = vmatpush1.bf16.msra.mxu0 %v2517
        %2677 = vmatprep.subr.bf16.mxu0 0
        %2678 = vmatpush1.bf16.msra.mxu0 %v2520
        %2679 = vmatprep.subr.bf16.mxu0 0
        %2680 = vmatpush1.bf16.msra.mxu0 %v2523
        %2681 = vmatprep.subr.bf16.mxu0 0
        %2682 = vmatpush1.bf16.msra.mxu0 %v2526
        %2683 = vmatprep.subr.bf16.mxu0 0
        %2684 = vmatpush1.bf16.msra.mxu0 %v2529
        %2685 = vmatprep.subr.bf16.mxu0 0
        %2686 = vmatpush1.bf16.msra.mxu0 %v2532
        %2687 = vmatprep.subr.bf16.mxu0 0
        %2688 = vmatpush1.bf16.msra.mxu0 %v2535
        %2689 = vmatprep.subr.bf16.mxu0 0
        %2690 = vmatpush1.bf16.msra.mxu0 0
        %2691 = vmatprep.subr.bf16.mxu0 0
        %2692 = vmatpush1.bf16.msra.mxu0 0
        %2693 = vmatprep.subr.bf16.mxu0 0
        %2694 = vmatpush1.bf16.msra.mxu0 0
        %2695 = vmatprep.subr.bf16.mxu0 0
        %2696 = vmatpush1.bf16.msra.mxu0 0
        %2697 = vmatprep.subr.bf16.mxu0 0
        %2698 = vmatpush1.bf16.msra.mxu0 0
        %2699 = vmatprep.subr.bf16.mxu0 0
        %2700 = vmatpush1.bf16.msra.mxu0 0
        %2701 = vmatprep.subr.bf16.mxu0 0
        %2702 = vmatpush1.bf16.msra.mxu0 0
        %2703 = vmatprep.subr.bf16.mxu0 0
        %2704 = vmatpush1.bf16.msra.mxu0 0
        %2705 = vmatprep.mubr.bf16.mxu0 0
        %2706 = vmatmul.mubr.bf16.gmra.mrb[0].mxu0 %v2375
        %v2707 = vpop.f32.mrb[0].mxu0
        %v2708 = vadd.f32 %v2428, %v2707
        %v2709 = vpop.f32.mrb[0].mxu0
        %v2710 = vpop.f32.mrb[0].mxu0
        %v2711 = vadd.f32 %v2428, %v2710
        %v2712 = vpop.f32.mrb[0].mxu0
        %2713 = vmatprep.mubr.bf16.mxu0 0
        %2714 = vmatmul.mubr.bf16.gmra.mrb[0].mxu0 %v2376
        %v2715 = vpop.f32.mrb[0].mxu0
        %v2716 = vadd.f32 %v2428, %v2715
        %v2717 = vpop.f32.mrb[0].mxu0
        %v2718 = vpop.f32.mrb[0].mxu0
        %v2719 = vadd.f32 %v2428, %v2718
        %v2720 = vpop.f32.mrb[0].mxu0
        %2721 = vmatprep.mubr.bf16.mxu0 0
        %2722 = vmatmul.mubr.bf16.gmra.mrb[0].mxu0 %v2377
        %v2723 = vpop.f32.mrb[0].mxu0
        %v2724 = vadd.f32 %v2428, %v2723
        %v2725 = vpop.f32.mrb[0].mxu0
        %v2726 = vpop.f32.mrb[0].mxu0
        %v2727 = vadd.f32 %v2428, %v2726
        %v2728 = vpop.f32.mrb[0].mxu0
        %2729 = vmatprep.mubr.bf16.mxu0 0
        %2730 = vmatmul.mubr.bf16.gmra.mrb[0].mxu0 %v2378
        %v2731 = vpop.f32.mrb[0].mxu0
        %v2732 = vadd.f32 %v2428, %v2731
        %v2733 = vpop.f32.mrb[0].mxu0
        %v2734 = vpop.f32.mrb[0].mxu0
        %v2735 = vadd.f32 %v2428, %v2734
        %v2736 = vpop.f32.mrb[0].mxu0
        %2737 = vmatprep.mubr.bf16.mxu0 0
        %2738 = vmatmul.mubr.bf16.gmra.mrb[0].mxu0 %v2379
        %v2739 = vpop.f32.mrb[0].mxu0
        %v2740 = vadd.f32 %v2428, %v2739
        %v2741 = vpop.f32.mrb[0].mxu0
        %v2742 = vpop.f32.mrb[0].mxu0
        %v2743 = vadd.f32 %v2428, %v2742
        %v2744 = vpop.f32.mrb[0].mxu0
        %2745 = vmatprep.mubr.bf16.mxu0 0
        %2746 = vmatmul.mubr.bf16.gmra.mrb[0].mxu0 %v2380
        %v2747 = vpop.f32.mrb[0].mxu0
        %v2748 = vadd.f32 %v2428, %v2747
        %v2749 = vpop.f32.mrb[0].mxu0
        %v2750 = vpop.f32.mrb[0].mxu0
        %v2751 = vadd.f32 %v2428, %v2750
        %v2752 = vpop.f32.mrb[0].mxu0
        %2753 = vmatprep.mubr.bf16.mxu0 0
        %2754 = vmatmul.mubr.bf16.gmra.mrb[0].mxu0 %v2381
        %v2755 = vpop.f32.mrb[0].mxu0
        %v2756 = vadd.f32 %v2428, %v2755
        %v2757 = vpop.f32.mrb[0].mxu0
        %v2758 = vpop.f32.mrb[0].mxu0
        %v2759 = vadd.f32 %v2428, %v2758
        %v2760 = vpop.f32.mrb[0].mxu0
        %2761 = vmatprep.mubr.bf16.mxu0 0
        %2762 = vmatmul.mubr.bf16.gmra.mrb[0].mxu0 %v2382
        %v2763 = vpop.f32.mrb[0].mxu0
        %v2764 = vadd.f32 %v2428, %v2763
        %v2765 = vpop.f32.mrb[0].mxu0
        %v2766 = vpop.f32.mrb[0].mxu0
        %v2767 = vadd.f32 %v2428, %v2766
        %v2768 = vpop.f32.mrb[0].mxu0
        %2769 = vdwg.mxu0
        %v2770 = vmul.f32 %v2595, 0.01
        %v2771 = vmul.f32 %v2597, 0.01
        %v2772 = vmul.f32 %v2708, 0.01
        %v2773 = vmul.f32 %v2599, 0.01
        %v2774 = vmul.f32 %v2601, 0.01
        %v2775 = vmul.f32 %v2711, 0.01
        %v2776 = vmul.f32 %v2605, 0.01
        %v2777 = vmul.f32 %v2607, 0.01
        %v2778 = vmul.f32 %v2716, 0.01
        %v2779 = vmul.f32 %v2609, 0.01
        %v2780 = vmul.f32 %v2611, 0.01
        %v2781 = vmul.f32 %v2719, 0.01
        %v2782 = vmul.f32 %v2615, 0.01
        %v2783 = vmul.f32 %v2617, 0.01
        %v2784 = vmul.f32 %v2724, 0.01
        %v2785 = vmul.f32 %v2619, 0.01
        %v2786 = vmul.f32 %v2621, 0.01
        %v2787 = vmul.f32 %v2727, 0.01
        %v2788 = vmul.f32 %v2625, 0.01
        %v2789 = vmul.f32 %v2627, 0.01
        %v2790 = vmul.f32 %v2732, 0.01
        %v2791 = vmul.f32 %v2629, 0.01
        %v2792 = vmul.f32 %v2631, 0.01
        %v2793 = vmul.f32 %v2735, 0.01
        %v2794 = vmul.f32 %v2635, 0.01
        %v2795 = vmul.f32 %v2637, 0.01
        %v2796 = vmul.f32 %v2740, 0.01
        %v2797 = vmul.f32 %v2639, 0.01
        %v2798 = vmul.f32 %v2641, 0.01
        %v2799 = vmul.f32 %v2743, 0.01
        %v2800 = vmul.f32 %v2645, 0.01
        %v2801 = vmul.f32 %v2647, 0.01
        %v2802 = vmul.f32 %v2748, 0.01
        %v2803 = vmul.f32 %v2649, 0.01
        %v2804 = vmul.f32 %v2651, 0.01
        %v2805 = vmul.f32 %v2751, 0.01
        %v2806 = vmul.f32 %v2655, 0.01
        %v2807 = vmul.f32 %v2657, 0.01
        %v2808 = vmul.f32 %v2756, 0.01
        %v2809 = vmul.f32 %v2659, 0.01
        %v2810 = vmul.f32 %v2661, 0.01
        %v2811 = vmul.f32 %v2759, 0.01
        %v2812 = vmul.f32 %v2665, 0.01
        %v2813 = vmul.f32 %v2667, 0.01
        %v2814 = vmul.f32 %v2764, 0.01
        %v2815 = vmul.f32 %v2669, 0.01
        %v2816 = vmul.f32 %v2671, 0.01
        %v2817 = vmul.f32 %v2767, 0.01
        %v2818 = vmax.f32 %v2595, %v2770
        %v2819 = vmax.f32 %v2597, %v2771
        %v2820 = vmax.f32 %v2708, %v2772
        %v2821 = vmax.f32 %v2599, %v2773
        %v2822 = vmax.f32 %v2601, %v2774
        %v2823 = vmax.f32 %v2711, %v2775
        %v2824 = vmax.f32 %v2605, %v2776
        %v2825 = vmax.f32 %v2607, %v2777
        %v2826 = vmax.f32 %v2716, %v2778
        %v2827 = vmax.f32 %v2609, %v2779
        %v2828 = vmax.f32 %v2611, %v2780
        %v2829 = vmax.f32 %v2719, %v2781
        %v2830 = vmax.f32 %v2615, %v2782
        %v2831 = vmax.f32 %v2617, %v2783
        %v2832 = vmax.f32 %v2724, %v2784
        %v2833 = vmax.f32 %v2619, %v2785
        %v2834 = vmax.f32 %v2621, %v2786
        %v2835 = vmax.f32 %v2727, %v2787
        %v2836 = vmax.f32 %v2625, %v2788
        %v2837 = vmax.f32 %v2627, %v2789
        %v2838 = vmax.f32 %v2732, %v2790
        %v2839 = vmax.f32 %v2629, %v2791
        %v2840 = vmax.f32 %v2631, %v2792
        %v2841 = vmax.f32 %v2735, %v2793
        %v2842 = vmax.f32 %v2635, %v2794
        %v2843 = vmax.f32 %v2637, %v2795
        %v2844 = vmax.f32 %v2740, %v2796
        %v2845 = vmax.f32 %v2639, %v2797
        %v2846 = vmax.f32 %v2641, %v2798
        %v2847 = vmax.f32 %v2743, %v2799
        %v2848 = vmax.f32 %v2645, %v2800
        %v2849 = vmax.f32 %v2647, %v2801
        %v2850 = vmax.f32 %v2748, %v2802
        %v2851 = vmax.f32 %v2649, %v2803
        %v2852 = vmax.f32 %v2651, %v2804
        %v2853 = vmax.f32 %v2751, %v2805
        %v2854 = vmax.f32 %v2655, %v2806
        %v2855 = vmax.f32 %v2657, %v2807
        %v2856 = vmax.f32 %v2756, %v2808
        %v2857 = vmax.f32 %v2659, %v2809
        %v2858 = vmax.f32 %v2661, %v2810
        %v2859 = vmax.f32 %v2759, %v2811
        %v2860 = vmax.f32 %v2665, %v2812
        %v2861 = vmax.f32 %v2667, %v2813
        %v2862 = vmax.f32 %v2764, %v2814
        %v2863 = vmax.f32 %v2669, %v2815
        %v2864 = vmax.f32 %v2671, %v2816
        %v2865 = vmax.f32 %v2767, %v2817
        %v2866 = vpack.c.bf16 %v2821, %v2818
        %v2867 = vpack.c.bf16 %v2822, %v2819
        %v2868 = vpack.c.bf16 %v2823, %v2820
        %v2869 = vpack.c.bf16 %v2827, %v2824
        %v2870 = vpack.c.bf16 %v2828, %v2825
        %v2871 = vpack.c.bf16 %v2829, %v2826
        %v2872 = vpack.c.bf16 %v2833, %v2830
        %v2873 = vpack.c.bf16 %v2834, %v2831
        %v2874 = vpack.c.bf16 %v2835, %v2832
        %v2875 = vpack.c.bf16 %v2839, %v2836
        %v2876 = vpack.c.bf16 %v2840, %v2837
        %v2877 = vpack.c.bf16 %v2841, %v2838
        %v2878 = vpack.c.bf16 %v2845, %v2842
        %v2879 = vpack.c.bf16 %v2846, %v2843
        %v2880 = vpack.c.bf16 %v2847, %v2844
        %v2881 = vpack.c.bf16 %v2851, %v2848
        %v2882 = vpack.c.bf16 %v2852, %v2849
        %v2883 = vpack.c.bf16 %v2853, %v2850
        %v2884 = vpack.c.bf16 %v2857, %v2854
        %v2885 = vpack.c.bf16 %v2858, %v2855
        %v2886 = vpack.c.bf16 %v2859, %v2856
        %v2887 = vpack.c.bf16 %v2863, %v2860
        %v2888 = vpack.c.bf16 %v2864, %v2861
        %v2889 = vpack.c.bf16 %v2865, %v2862
        %v2890 = vld [vmem:[%s15] sm:$0xf]
        %v2891 = vld [vmem:[%s15 + $0x4] sm:$0xf]
        %v2892 = vld [vmem:[%s15 + $0x8] sm:$0xf]
        %v2893 = vld [vmem:[%s15 + $0xc] sm:$0xf]
        %v2894 = vld [vmem:[%s15 + $0x10] sm:$0xf]
        %v2895 = vld [vmem:[%s15 + $0x14] sm:$0xf]
        %v2896 = vld [vmem:[%s15 + $0x18] sm:$0xf]
        %v2897 = vld [vmem:[%s15 + $0x1c] sm:$0xf]
        %v2898 = vld [vmem:[%s15 + $0x20] sm:$0xf]
        %v2899 = vld [vmem:[%s15 + $0x24] sm:$0xf]
        %v2900 = vld [vmem:[%s15 + $0x28] sm:$0xf]
        %v2901 = vld [vmem:[%s15 + $0x2c] sm:$0xf]
        %v2902 = vld [vmem:[%s15 + $0x30] sm:$0xf]
        %v2903 = vld [vmem:[%s15 + $0x34] sm:$0xf]
        %v2904 = vld [vmem:[%s15 + $0x38] sm:$0xf]
        %v2905 = vld [vmem:[%s15 + $0x3c] sm:$0xf]
        %v2906 = vld [vmem:[%s15 + $0x40] sm:$0xf]
        %v2907 = vld [vmem:[%s15 + $0x44] sm:$0xf]
        %v2908 = vld [vmem:[%s15 + $0x48] sm:$0xf]
        %v2909 = vld [vmem:[%s15 + $0x4c] sm:$0xf]
        %v2910 = vld [vmem:[%s15 + $0x50] sm:$0xf]
        %v2911 = vld [vmem:[%s15 + $0x54] sm:$0xf]
        %v2912 = vld [vmem:[%s15 + $0x58] sm:$0xf]
        %v2913 = vld [vmem:[%s15 + $0x5c] sm:$0xf]
        %v2914 = vld [vmem:[%s15 + $0x60] sm:$0xf]
        %v2915 = vld [vmem:[%s15 + $0x64] sm:$0xf]
        %v2916 = vld [vmem:[%s15 + $0x68] sm:$0xf]
        %v2917 = vld [vmem:[%s15 + $0x6c] sm:$0xf]
        %v2918 = vld [vmem:[%s15 + $0x70] sm:$0xf]
        %v2919 = vld [vmem:[%s15 + $0x74] sm:$0xf]
        %v2920 = vld [vmem:[%s15 + $0x78] sm:$0xf]
        %v2921 = vld [vmem:[%s15 + $0x7c] sm:$0xf]
        %v2922 = vld [vmem:[%s15 + $0x80] sm:$0xf]
        %v2923 = vld [vmem:[%s15 + $0x84] sm:$0xf]
        %v2924 = vld [vmem:[%s15 + $0x88] sm:$0xf]
        %v2925 = vld [vmem:[%s15 + $0x8c] sm:$0xf]
        %v2926 = vld [vmem:[%s15 + $0x90] sm:$0xf]
        %v2927 = vld [vmem:[%s15 + $0x94] sm:$0xf]
        %v2928 = vld [vmem:[%s15 + $0x98] sm:$0xf]
        %v2929 = vld [vmem:[%s15 + $0x9c] sm:$0xf]
        %v2930 = vld [vmem:[%s15 + $0xa0] sm:$0xf]
        %v2931 = vld [vmem:[%s15 + $0xa4] sm:$0xf]
        %v2932 = vld [vmem:[%s15 + $0xa8] sm:$0xf]
        %v2933 = vld [vmem:[%s15 + $0xac] sm:$0xf]
        %v2934 = vld [vmem:[%s15 + $0xb0] sm:$0xf]
        %v2935 = vld [vmem:[%s15 + $0xb4] sm:$0xf]
        %v2936 = vld [vmem:[%s15 + $0xb8] sm:$0xf]
        %v2937 = vld [vmem:[%s15 + $0xbc] sm:$0xf]
        %v2938 = vld [vmem:[#allocation7] sm:$0x1]
        %v2940 = vlaneseq
        %v2941 = vshrl.u32 %v2940, 7
        %v2942 = vsub.s32 0, %v2941
        %v2943 = vrot.slane %v2938, %v2942
        %v2993 = vunpack.c.l.b16 %v2890
        %v2994 = vunpack.c.l.b16 %v2891
        %v2995 = vunpack.c.l.b16 %v2892
        %v2996 = vunpack.c.l.b16 %v2893
        %v2997 = vunpack.c.l.b16 %v2894
        %v2998 = vunpack.c.l.b16 %v2895
        %v2999 = vunpack.c.l.b16 %v2896
        %v3000 = vunpack.c.l.b16 %v2897
        %v3001 = vunpack.c.l.b16 %v2898
        %v3002 = vunpack.c.l.b16 %v2899
        %v3003 = vunpack.c.l.b16 %v2900
        %v3004 = vunpack.c.l.b16 %v2901
        %v3005 = vunpack.c.l.b16 %v2902
        %v3006 = vunpack.c.l.b16 %v2903
        %v3007 = vunpack.c.l.b16 %v2904
        %v3008 = vunpack.c.l.b16 %v2905
        %v3009 = vunpack.c.l.b16 %v2906
        %v3010 = vunpack.c.l.b16 %v2907
        %v3011 = vunpack.c.l.b16 %v2908
        %v3012 = vunpack.c.l.b16 %v2909
        %v3013 = vunpack.c.l.b16 %v2910
        %v3014 = vunpack.c.l.b16 %v2911
        %v3015 = vunpack.c.l.b16 %v2912
        %v3016 = vunpack.c.l.b16 %v2913
        %v3017 = vunpack.c.l.b16 %v2914
        %v3018 = vunpack.c.l.b16 %v2915
        %v3019 = vunpack.c.l.b16 %v2916
        %v3020 = vunpack.c.l.b16 %v2917
        %v3021 = vunpack.c.l.b16 %v2918
        %v3022 = vunpack.c.l.b16 %v2919
        %v3023 = vunpack.c.l.b16 %v2920
        %v3024 = vunpack.c.l.b16 %v2921
        %v3025 = vunpack.c.l.b16 %v2922
        %v3026 = vunpack.c.l.b16 %v2923
        %v3027 = vunpack.c.l.b16 %v2924
        %v3028 = vunpack.c.l.b16 %v2925
        %v3029 = vunpack.c.l.b16 %v2926
        %v3030 = vunpack.c.l.b16 %v2927
        %v3031 = vunpack.c.l.b16 %v2928
        %v3032 = vunpack.c.l.b16 %v2929
        %v3033 = vunpack.c.l.b16 %v2930
        %v3034 = vunpack.c.l.b16 %v2931
        %v3035 = vunpack.c.l.b16 %v2932
        %v3036 = vunpack.c.l.b16 %v2933
        %v3037 = vunpack.c.l.b16 %v2934
        %v3038 = vunpack.c.l.b16 %v2935
        %v3039 = vunpack.c.l.b16 %v2936
        %v3040 = vunpack.c.l.b16 %v2937
        %v3041 = vpack.c.b16 %v2994, %v2993
        %v3042 = vpack.c.b16 %v2996, %v2995
        %v3043 = vpack.c.b16 %v2998, %v2997
        %v3044 = vpack.c.b16 %v3000, %v2999
        %v3045 = vpack.c.b16 %v3002, %v3001
        %v3046 = vpack.c.b16 %v3004, %v3003
        %v3047 = vpack.c.b16 %v3006, %v3005
        %v3048 = vpack.c.b16 %v3008, %v3007
        %v3049 = vpack.c.b16 %v3010, %v3009
        %v3050 = vpack.c.b16 %v3012, %v3011
        %v3051 = vpack.c.b16 %v3014, %v3013
        %v3052 = vpack.c.b16 %v3016, %v3015
        %v3053 = vpack.c.b16 %v3018, %v3017
        %v3054 = vpack.c.b16 %v3020, %v3019
        %v3055 = vpack.c.b16 %v3022, %v3021
        %v3056 = vpack.c.b16 %v3024, %v3023
        %v3057 = vpack.c.b16 %v3026, %v3025
        %v3058 = vpack.c.b16 %v3028, %v3027
        %v3059 = vpack.c.b16 %v3030, %v3029
        %v3060 = vpack.c.b16 %v3032, %v3031
        %v3061 = vpack.c.b16 %v3034, %v3033
        %v3062 = vpack.c.b16 %v3036, %v3035
        %v3063 = vpack.c.b16 %v3038, %v3037
        %v3064 = vpack.c.b16 %v3040, %v3039
        %3089 = vmatprep.subr.bf16.mxu0 0
        %3090 = vmatpush1.bf16.msra.mxu0 %v3041
        %3091 = vmatprep.subr.bf16.mxu0 0
        %3092 = vmatpush1.bf16.msra.mxu0 %v3042
        %3093 = vmatprep.subr.bf16.mxu0 0
        %3094 = vmatpush1.bf16.msra.mxu0 %v3043
        %3095 = vmatprep.subr.bf16.mxu0 0
        %3096 = vmatpush1.bf16.msra.mxu0 %v3044
        %3097 = vmatprep.subr.bf16.mxu0 0
        %3098 = vmatpush1.bf16.msra.mxu0 %v3045
        %3099 = vmatprep.subr.bf16.mxu0 0
        %3100 = vmatpush1.bf16.msra.mxu0 %v3046
        %3101 = vmatprep.subr.bf16.mxu0 0
        %3102 = vmatpush1.bf16.msra.mxu0 %v3047
        %3103 = vmatprep.subr.bf16.mxu0 0
        %3104 = vmatpush1.bf16.msra.mxu0 %v3048
        %3105 = vmatprep.subr.bf16.mxu0 0
        %3106 = vmatpush1.bf16.msra.mxu0 %v3049
        %3107 = vmatprep.subr.bf16.mxu0 0
        %3108 = vmatpush1.bf16.msra.mxu0 %v3050
        %3109 = vmatprep.subr.bf16.mxu0 0
        %3110 = vmatpush1.bf16.msra.mxu0 %v3051
        %3111 = vmatprep.subr.bf16.mxu0 0
        %3112 = vmatpush1.bf16.msra.mxu0 %v3052
        %3113 = vmatprep.subr.bf16.mxu0 0
        %3114 = vmatpush1.bf16.msra.mxu0 %v3053
        %3115 = vmatprep.subr.bf16.mxu0 0
        %3116 = vmatpush1.bf16.msra.mxu0 %v3054
        %3117 = vmatprep.subr.bf16.mxu0 0
        %3118 = vmatpush1.bf16.msra.mxu0 %v3055
        %3119 = vmatprep.subr.bf16.mxu0 0
        %3120 = vmatpush1.bf16.msra.mxu0 %v3056
        %3121 = vmatprep.mubr.bf16.mxu0 %v2867
        %3122 = vmatmul.mubr.bf16.gmra.mrb[0].mxu0 %v2866
        %v3123 = vpop.f32.mrb[0].mxu0
        %v3124 = vadd.f32 %v2943, %v3123
        %v3125 = vpop.f32.mrb[0].mxu0
        %v3126 = vpop.f32.mrb[0].mxu0
        %v3127 = vadd.f32 %v2943, %v3126
        %v3128 = vpop.f32.mrb[0].mxu0
        %3129 = vmatprep.mubr.bf16.mxu0 %v2870
        %3130 = vmatmul.mubr.bf16.gmra.mrb[0].mxu0 %v2869
        %v3131 = vpop.f32.mrb[0].mxu0
        %v3132 = vadd.f32 %v2943, %v3131
        %v3133 = vpop.f32.mrb[0].mxu0
        %v3134 = vpop.f32.mrb[0].mxu0
        %v3135 = vadd.f32 %v2943, %v3134
        %v3136 = vpop.f32.mrb[0].mxu0
        %3137 = vmatprep.mubr.bf16.mxu0 %v2873
        %3138 = vmatmul.mubr.bf16.gmra.mrb[0].mxu0 %v2872
        %v3139 = vpop.f32.mrb[0].mxu0
        %v3140 = vadd.f32 %v2943, %v3139
        %v3141 = vpop.f32.mrb[0].mxu0
        %v3142 = vpop.f32.mrb[0].mxu0
        %v3143 = vadd.f32 %v2943, %v3142
        %v3144 = vpop.f32.mrb[0].mxu0
        %3145 = vmatprep.mubr.bf16.mxu0 %v2876
        %3146 = vmatmul.mubr.bf16.gmra.mrb[0].mxu0 %v2875
        %v3147 = vpop.f32.mrb[0].mxu0
        %v3148 = vadd.f32 %v2943, %v3147
        %v3149 = vpop.f32.mrb[0].mxu0
        %v3150 = vpop.f32.mrb[0].mxu0
        %v3151 = vadd.f32 %v2943, %v3150
        %v3152 = vpop.f32.mrb[0].mxu0
        %3153 = vmatprep.mubr.bf16.mxu0 %v2879
        %3154 = vmatmul.mubr.bf16.gmra.mrb[0].mxu0 %v2878
        %v3155 = vpop.f32.mrb[0].mxu0
        %v3156 = vadd.f32 %v2943, %v3155
        %v3157 = vpop.f32.mrb[0].mxu0
        %v3158 = vpop.f32.mrb[0].mxu0
        %v3159 = vadd.f32 %v2943, %v3158
        %v3160 = vpop.f32.mrb[0].mxu0
        %3161 = vmatprep.mubr.bf16.mxu0 %v2882
        %3162 = vmatmul.mubr.bf16.gmra.mrb[0].mxu0 %v2881
        %v3163 = vpop.f32.mrb[0].mxu0
        %v3164 = vadd.f32 %v2943, %v3163
        %v3165 = vpop.f32.mrb[0].mxu0
        %v3166 = vpop.f32.mrb[0].mxu0
        %v3167 = vadd.f32 %v2943, %v3166
        %v3168 = vpop.f32.mrb[0].mxu0
        %3169 = vmatprep.mubr.bf16.mxu0 %v2885
        %3170 = vmatmul.mubr.bf16.gmra.mrb[0].mxu0 %v2884
        %v3171 = vpop.f32.mrb[0].mxu0
        %v3172 = vadd.f32 %v2943, %v3171
        %v3173 = vpop.f32.mrb[0].mxu0
        %v3174 = vpop.f32.mrb[0].mxu0
        %v3175 = vadd.f32 %v2943, %v3174
        %v3176 = vpop.f32.mrb[0].mxu0
        %3177 = vmatprep.mubr.bf16.mxu0 %v2888
        %3178 = vmatmul.mubr.bf16.gmra.mrb[0].mxu0 %v2887
        %v3179 = vpop.f32.mrb[0].mxu0
        %v3180 = vadd.f32 %v2943, %v3179
        %v3181 = vpop.f32.mrb[0].mxu0
        %v3182 = vpop.f32.mrb[0].mxu0
        %v3183 = vadd.f32 %v2943, %v3182
        %v3184 = vpop.f32.mrb[0].mxu0
        %3185 = vdwg.mxu0
        %3186 = vmatprep.subr.bf16.mxu0 0
        %3187 = vmatpush1.bf16.msra.mxu0 %v3057
        %3188 = vmatprep.subr.bf16.mxu0 0
        %3189 = vmatpush1.bf16.msra.mxu0 %v3058
        %3190 = vmatprep.subr.bf16.mxu0 0
        %3191 = vmatpush1.bf16.msra.mxu0 %v3059
        %3192 = vmatprep.subr.bf16.mxu0 0
        %3193 = vmatpush1.bf16.msra.mxu0 %v3060
        %3194 = vmatprep.subr.bf16.mxu0 0
        %3195 = vmatpush1.bf16.msra.mxu0 %v3061
        %3196 = vmatprep.subr.bf16.mxu0 0
        %3197 = vmatpush1.bf16.msra.mxu0 %v3062
        %3198 = vmatprep.subr.bf16.mxu0 0
        %3199 = vmatpush1.bf16.msra.mxu0 %v3063
        %3200 = vmatprep.subr.bf16.mxu0 0
        %3201 = vmatpush1.bf16.msra.mxu0 %v3064
        %3202 = vmatprep.subr.bf16.mxu0 0
        %3203 = vmatpush1.bf16.msra.mxu0 0
        %3204 = vmatprep.subr.bf16.mxu0 0
        %3205 = vmatpush1.bf16.msra.mxu0 0
        %3206 = vmatprep.subr.bf16.mxu0 0
        %3207 = vmatpush1.bf16.msra.mxu0 0
        %3208 = vmatprep.subr.bf16.mxu0 0
        %3209 = vmatpush1.bf16.msra.mxu0 0
        %3210 = vmatprep.subr.bf16.mxu0 0
        %3211 = vmatpush1.bf16.msra.mxu0 0
        %3212 = vmatprep.subr.bf16.mxu0 0
        %3213 = vmatpush1.bf16.msra.mxu0 0
        %3214 = vmatprep.subr.bf16.mxu0 0
        %3215 = vmatpush1.bf16.msra.mxu0 0
        %3216 = vmatprep.subr.bf16.mxu0 0
        %3217 = vmatpush1.bf16.msra.mxu0 0
        %3218 = vmatprep.mubr.bf16.mxu0 0
        %3219 = vmatmul.mubr.bf16.gmra.mrb[0].mxu0 %v2868
        %v3220 = vpop.f32.mrb[0].mxu0
        %v3221 = vadd.f32 %v3124, %v3220
        %v3222 = vpop.f32.mrb[0].mxu0
        %v3223 = vpop.f32.mrb[0].mxu0
        %v3224 = vadd.f32 %v3127, %v3223
        %v3225 = vpop.f32.mrb[0].mxu0
        %3226 = vmatprep.mubr.bf16.mxu0 0
        %3227 = vmatmul.mubr.bf16.gmra.mrb[0].mxu0 %v2871
        %v3228 = vpop.f32.mrb[0].mxu0
        %v3229 = vadd.f32 %v3132, %v3228
        %v3230 = vpop.f32.mrb[0].mxu0
        %v3231 = vpop.f32.mrb[0].mxu0
        %v3232 = vadd.f32 %v3135, %v3231
        %v3233 = vpop.f32.mrb[0].mxu0
        %3234 = vmatprep.mubr.bf16.mxu0 0
        %3235 = vmatmul.mubr.bf16.gmra.mrb[0].mxu0 %v2874
        %v3236 = vpop.f32.mrb[0].mxu0
        %v3237 = vadd.f32 %v3140, %v3236
        %v3238 = vpop.f32.mrb[0].mxu0
        %v3239 = vpop.f32.mrb[0].mxu0
        %v3240 = vadd.f32 %v3143, %v3239
        %v3241 = vpop.f32.mrb[0].mxu0
        %3242 = vmatprep.mubr.bf16.mxu0 0
        %3243 = vmatmul.mubr.bf16.gmra.mrb[0].mxu0 %v2877
        %v3244 = vpop.f32.mrb[0].mxu0
        %v3245 = vadd.f32 %v3148, %v3244
        %v3246 = vpop.f32.mrb[0].mxu0
        %v3247 = vpop.f32.mrb[0].mxu0
        %v3248 = vadd.f32 %v3151, %v3247
        %v3249 = vpop.f32.mrb[0].mxu0
        %3250 = vmatprep.mubr.bf16.mxu0 0
        %3251 = vmatmul.mubr.bf16.gmra.mrb[0].mxu0 %v2880
        %v3252 = vpop.f32.mrb[0].mxu0
        %v3253 = vadd.f32 %v3156, %v3252
        %v3254 = vpop.f32.mrb[0].mxu0
        %v3255 = vpop.f32.mrb[0].mxu0
        %v3256 = vadd.f32 %v3159, %v3255
        %v3257 = vpop.f32.mrb[0].mxu0
        %3258 = vmatprep.mubr.bf16.mxu0 0
        %3259 = vmatmul.mubr.bf16.gmra.mrb[0].mxu0 %v2883
        %v3260 = vpop.f32.mrb[0].mxu0
        %v3261 = vadd.f32 %v3164, %v3260
        %v3262 = vpop.f32.mrb[0].mxu0
        %v3263 = vpop.f32.mrb[0].mxu0
        %v3264 = vadd.f32 %v3167, %v3263
        %v3265 = vpop.f32.mrb[0].mxu0
        %3266 = vmatprep.mubr.bf16.mxu0 0
        %3267 = vmatmul.mubr.bf16.gmra.mrb[0].mxu0 %v2886
        %v3268 = vpop.f32.mrb[0].mxu0
        %v3269 = vadd.f32 %v3172, %v3268
        %v3270 = vpop.f32.mrb[0].mxu0
        %v3271 = vpop.f32.mrb[0].mxu0
        %v3272 = vadd.f32 %v3175, %v3271
        %v3273 = vpop.f32.mrb[0].mxu0
        %3274 = vmatprep.mubr.bf16.mxu0 0
        %3275 = vmatmul.mubr.bf16.gmra.mrb[0].mxu0 %v2889
        %v3276 = vpop.f32.mrb[0].mxu0
        %v3277 = vadd.f32 %v3180, %v3276
        %v3278 = vpop.f32.mrb[0].mxu0
        %v3279 = vpop.f32.mrb[0].mxu0
        %v3280 = vadd.f32 %v3183, %v3279
        %v3281 = vpop.f32.mrb[0].mxu0
        %3282 = vdwg.mxu0
        %v3283 = vmul.f32 %v3221, 0.01
        %v3284 = vmul.f32 %v3224, 0.01
        %v3285 = vmul.f32 %v3229, 0.01
        %v3286 = vmul.f32 %v3232, 0.01
        %v3287 = vmul.f32 %v3237, 0.01
        %v3288 = vmul.f32 %v3240, 0.01
        %v3289 = vmul.f32 %v3245, 0.01
        %v3290 = vmul.f32 %v3248, 0.01
        %v3291 = vmul.f32 %v3253, 0.01
        %v3292 = vmul.f32 %v3256, 0.01
        %v3293 = vmul.f32 %v3261, 0.01
        %v3294 = vmul.f32 %v3264, 0.01
        %v3295 = vmul.f32 %v3269, 0.01
        %v3296 = vmul.f32 %v3272, 0.01
        %v3297 = vmul.f32 %v3277, 0.01
        %v3298 = vmul.f32 %v3280, 0.01
        %v3299 = vmax.f32 %v3221, %v3283
        %v3300 = vmax.f32 %v3224, %v3284
        %v3301 = vmax.f32 %v3229, %v3285
        %v3302 = vmax.f32 %v3232, %v3286
        %v3303 = vmax.f32 %v3237, %v3287
        %v3304 = vmax.f32 %v3240, %v3288
        %v3305 = vmax.f32 %v3245, %v3289
        %v3306 = vmax.f32 %v3248, %v3290
        %v3307 = vmax.f32 %v3253, %v3291
        %v3308 = vmax.f32 %v3256, %v3292
        %v3309 = vmax.f32 %v3261, %v3293
        %v3310 = vmax.f32 %v3264, %v3294
        %v3311 = vmax.f32 %v3269, %v3295
        %v3312 = vmax.f32 %v3272, %v3296
        %v3313 = vmax.f32 %v3277, %v3297
        %v3314 = vmax.f32 %v3280, %v3298
        %v3315 = vadd.f32 %v3299, %v1419
        %v3316 = vadd.f32 %v3300, %v1420
        %v3317 = vadd.f32 %v3301, %v1421
        %v3318 = vadd.f32 %v3302, %v1422
        %v3319 = vadd.f32 %v3303, %v1423
        %v3320 = vadd.f32 %v3304, %v1424
        %v3321 = vadd.f32 %v3305, %v1425
        %v3322 = vadd.f32 %v3306, %v1426
        %v3323 = vadd.f32 %v3307, %v1427
        %v3324 = vadd.f32 %v3308, %v1428
        %v3325 = vadd.f32 %v3309, %v1429
        %v3326 = vadd.f32 %v3310, %v1430
        %v3327 = vadd.f32 %v3311, %v1431
        %v3328 = vadd.f32 %v3312, %v1432
        %v3329 = vadd.f32 %v3313, %v1433
        %v3330 = vadd.f32 %v3314, %v1434
        %v3331 = vpack.c.bf16 %v3316, %v3315
        %v3332 = vpack.c.bf16 %v3318, %v3317
        %v3333 = vpack.c.bf16 %v3320, %v3319
        %v3334 = vpack.c.bf16 %v3322, %v3321
        %v3335 = vpack.c.bf16 %v3324, %v3323
        %v3336 = vpack.c.bf16 %v3326, %v3325
        %v3337 = vpack.c.bf16 %v3328, %v3327
        %v3338 = vpack.c.bf16 %v3330, %v3329
        %v3339 = vld [vmem:[%s19] sm:$0xff]
        %v3340 = vld [vmem:[%s19 + $0x8] sm:$0xf]
        %v3341 = vld [vmem:[%s19 + $0xc] sm:$0xff]
        %v3342 = vld [vmem:[%s19 + $0x14] sm:$0xf]
        %v3343 = vld [vmem:[%s19 + $0x18] sm:$0xff]
        %v3344 = vld [vmem:[%s19 + $0x20] sm:$0xf]
        %v3345 = vld [vmem:[%s19 + $0x24] sm:$0xff]
        %v3346 = vld [vmem:[%s19 + $0x2c] sm:$0xf]
        %v3347 = vld [vmem:[%s19 + $0x30] sm:$0xff]
        %v3348 = vld [vmem:[%s19 + $0x38] sm:$0xf]
        %v3349 = vld [vmem:[%s19 + $0x3c] sm:$0xff]
        %v3350 = vld [vmem:[%s19 + $0x44] sm:$0xf]
        %v3351 = vld [vmem:[%s19 + $0x48] sm:$0xff]
        %v3352 = vld [vmem:[%s19 + $0x50] sm:$0xf]
        %v3353 = vld [vmem:[%s19 + $0x54] sm:$0xff]
        %v3354 = vld [vmem:[%s19 + $0x5c] sm:$0xf]
        %v3355 = vld [vmem:[%s19 + $0x60] sm:$0xff]
        %v3356 = vld [vmem:[%s19 + $0x68] sm:$0xf]
        %v3357 = vld [vmem:[%s19 + $0x6c] sm:$0xff]
        %v3358 = vld [vmem:[%s19 + $0x74] sm:$0xf]
        %v3359 = vld [vmem:[%s19 + $0x78] sm:$0xff]
        %v3360 = vld [vmem:[%s19 + $0x80] sm:$0xf]
        %v3361 = vld [vmem:[%s19 + $0x84] sm:$0xff]
        %v3362 = vld [vmem:[%s19 + $0x8c] sm:$0xf]
        %v3363 = vld [vmem:[%s19 + $0x90] sm:$0xff]
        %v3364 = vld [vmem:[%s19 + $0x98] sm:$0xf]
        %v3365 = vld [vmem:[%s19 + $0x9c] sm:$0xff]
        %v3366 = vld [vmem:[%s19 + $0xa4] sm:$0xf]
        %v3367 = vld [vmem:[%s19 + $0xa8] sm:$0xff]
        %v3368 = vld [vmem:[%s19 + $0xb0] sm:$0xf]
        %v3369 = vld [vmem:[%s19 + $0xb4] sm:$0xff]
        %v3370 = vld [vmem:[%s19 + $0xbc] sm:$0xf]
        %v3371 = vld [vmem:[#allocation9] sm:$0x7]
        %v3373 = vlaneseq
        %v3374 = vshrl.u32 %v3373, 7
        %v3375 = vsub.s32 0, %v3374
        %v3376 = vrot.slane %v3371, %v3375
        %v3377 = vlaneseq
        %v3378 = vshrl.u32 %v3377, 7
        %v3379 = vsub.s32 1, %v3378
        %v3380 = vrot.slane %v3371, %v3379
        %v3381 = vlaneseq
        %v3382 = vshrl.u32 %v3381, 7
        %v3383 = vsub.s32 2, %v3382
        %v3384 = vrot.slane %v3371, %v3383
        %v3420 = vunpack.c.l.b16 %v3339
        %v3421 = vunpack.c.h.b16 %v3339
        %v3422 = vunpack.c.l.b16 %v3340
        %v3423 = vunpack.c.l.b16 %v3341
        %v3424 = vunpack.c.h.b16 %v3341
        %v3425 = vunpack.c.l.b16 %v3342
        %v3426 = vunpack.c.l.b16 %v3343
        %v3427 = vunpack.c.h.b16 %v3343
        %v3428 = vunpack.c.l.b16 %v3344
        %v3429 = vunpack.c.l.b16 %v3345
        %v3430 = vunpack.c.h.b16 %v3345
        %v3431 = vunpack.c.l.b16 %v3346
        %v3432 = vunpack.c.l.b16 %v3347
        %v3433 = vunpack.c.h.b16 %v3347
        %v3434 = vunpack.c.l.b16 %v3348
        %v3435 = vunpack.c.l.b16 %v3349
        %v3436 = vunpack.c.h.b16 %v3349
        %v3437 = vunpack.c.l.b16 %v3350
        %v3438 = vunpack.c.l.b16 %v3351
        %v3439 = vunpack.c.h.b16 %v3351
        %v3440 = vunpack.c.l.b16 %v3352
        %v3441 = vunpack.c.l.b16 %v3353
        %v3442 = vunpack.c.h.b16 %v3353
        %v3443 = vunpack.c.l.b16 %v3354
        %v3444 = vunpack.c.l.b16 %v3355
        %v3445 = vunpack.c.h.b16 %v3355
        %v3446 = vunpack.c.l.b16 %v3356
        %v3447 = vunpack.c.l.b16 %v3357
        %v3448 = vunpack.c.h.b16 %v3357
        %v3449 = vunpack.c.l.b16 %v3358
        %v3450 = vunpack.c.l.b16 %v3359
        %v3451 = vunpack.c.h.b16 %v3359
        %v3452 = vunpack.c.l.b16 %v3360
        %v3453 = vunpack.c.l.b16 %v3361
        %v3454 = vunpack.c.h.b16 %v3361
        %v3455 = vunpack.c.l.b16 %v3362
        %v3456 = vunpack.c.l.b16 %v3363
        %v3457 = vunpack.c.h.b16 %v3363
        %v3458 = vunpack.c.l.b16 %v3364
        %v3459 = vunpack.c.l.b16 %v3365
        %v3460 = vunpack.c.h.b16 %v3365
        %v3461 = vunpack.c.l.b16 %v3366
        %v3462 = vunpack.c.l.b16 %v3367
        %v3463 = vunpack.c.h.b16 %v3367
        %v3464 = vunpack.c.l.b16 %v3368
        %v3465 = vunpack.c.l.b16 %v3369
        %v3466 = vunpack.c.h.b16 %v3369
        %v3467 = vunpack.c.l.b16 %v3370
        %v3468 = vpack.c.b16 %v3423, %v3420
        %v3469 = vpack.c.b16 %v3424, %v3421
        %v3470 = vpack.c.b16 %v3425, %v3422
        %v3471 = vpack.c.b16 %v3429, %v3426
        %v3472 = vpack.c.b16 %v3430, %v3427
        %v3473 = vpack.c.b16 %v3431, %v3428
        %v3474 = vpack.c.b16 %v3435, %v3432
        %v3475 = vpack.c.b16 %v3436, %v3433
        %v3476 = vpack.c.b16 %v3437, %v3434
        %v3477 = vpack.c.b16 %v3441, %v3438
        %v3478 = vpack.c.b16 %v3442, %v3439
        %v3479 = vpack.c.b16 %v3443, %v3440
        %v3480 = vpack.c.b16 %v3447, %v3444
        %v3481 = vpack.c.b16 %v3448, %v3445
        %v3482 = vpack.c.b16 %v3449, %v3446
        %v3483 = vpack.c.b16 %v3453, %v3450
        %v3484 = vpack.c.b16 %v3454, %v3451
        %v3485 = vpack.c.b16 %v3455, %v3452
        %v3486 = vpack.c.b16 %v3459, %v3456
        %v3487 = vpack.c.b16 %v3460, %v3457
        %v3488 = vpack.c.b16 %v3461, %v3458
        %v3489 = vpack.c.b16 %v3465, %v3462
        %v3490 = vpack.c.b16 %v3466, %v3463
        %v3491 = vpack.c.b16 %v3467, %v3464
        %3516 = vmatprep.subr.bf16.mxu0 %v3469
        %3517 = vmatpush1.bf16.msra.mxu0 %v3468
        %3518 = vmatprep.subr.bf16.mxu0 %v3472
        %3519 = vmatpush1.bf16.msra.mxu0 %v3471
        %3520 = vmatprep.subr.bf16.mxu0 %v3475
        %3521 = vmatpush1.bf16.msra.mxu0 %v3474
        %3522 = vmatprep.subr.bf16.mxu0 %v3478
        %3523 = vmatpush1.bf16.msra.mxu0 %v3477
        %3524 = vmatprep.subr.bf16.mxu0 %v3481
        %3525 = vmatpush1.bf16.msra.mxu0 %v3480
        %3526 = vmatprep.subr.bf16.mxu0 %v3484
        %3527 = vmatpush1.bf16.msra.mxu0 %v3483
        %3528 = vmatprep.subr.bf16.mxu0 %v3487
        %3529 = vmatpush1.bf16.msra.mxu0 %v3486
        %3530 = vmatprep.subr.bf16.mxu0 %v3490
        %3531 = vmatpush1.bf16.msra.mxu0 %v3489
        %3532 = vmatprep.subr.bf16.mxu0 0
        %3533 = vmatpush1.bf16.msra.mxu0 0
        %3534 = vmatprep.subr.bf16.mxu0 0
        %3535 = vmatpush1.bf16.msra.mxu0 0
        %3536 = vmatprep.subr.bf16.mxu0 0
        %3537 = vmatpush1.bf16.msra.mxu0 0
        %3538 = vmatprep.subr.bf16.mxu0 0
        %3539 = vmatpush1.bf16.msra.mxu0 0
        %3540 = vmatprep.subr.bf16.mxu0 0
        %3541 = vmatpush1.bf16.msra.mxu0 0
        %3542 = vmatprep.subr.bf16.mxu0 0
        %3543 = vmatpush1.bf16.msra.mxu0 0
        %3544 = vmatprep.subr.bf16.mxu0 0
        %3545 = vmatpush1.bf16.msra.mxu0 0
        %3546 = vmatprep.subr.bf16.mxu0 0
        %3547 = vmatpush1.bf16.msra.mxu0 0
        %3548 = vmatprep.mubr.bf16.mxu0 0
        %3549 = vmatmul.mubr.bf16.gmra.mrb[0].mxu0 %v3331
        %v3550 = vpop.f32.mrb[0].mxu0
        %v3551 = vadd.f32 %v3376, %v3550
        %v3552 = vpop.f32.mrb[0].mxu0
        %v3553 = vadd.f32 %v3380, %v3552
        %v3554 = vpop.f32.mrb[0].mxu0
        %v3555 = vadd.f32 %v3376, %v3554
        %v3556 = vpop.f32.mrb[0].mxu0
        %v3557 = vadd.f32 %v3380, %v3556
        %3558 = vmatprep.mubr.bf16.mxu0 0
        %3559 = vmatmul.mubr.bf16.gmra.mrb[0].mxu0 %v3332
        %v3560 = vpop.f32.mrb[0].mxu0
        %v3561 = vadd.f32 %v3376, %v3560
        %v3562 = vpop.f32.mrb[0].mxu0
        %v3563 = vadd.f32 %v3380, %v3562
        %v3564 = vpop.f32.mrb[0].mxu0
        %v3565 = vadd.f32 %v3376, %v3564
        %v3566 = vpop.f32.mrb[0].mxu0
        %v3567 = vadd.f32 %v3380, %v3566
        %3568 = vmatprep.mubr.bf16.mxu0 0
        %3569 = vmatmul.mubr.bf16.gmra.mrb[0].mxu0 %v3333
        %v3570 = vpop.f32.mrb[0].mxu0
        %v3571 = vadd.f32 %v3376, %v3570
        %v3572 = vpop.f32.mrb[0].mxu0
        %v3573 = vadd.f32 %v3380, %v3572
        %v3574 = vpop.f32.mrb[0].mxu0
        %v3575 = vadd.f32 %v3376, %v3574
        %v3576 = vpop.f32.mrb[0].mxu0
        %v3577 = vadd.f32 %v3380, %v3576
        %3578 = vmatprep.mubr.bf16.mxu0 0
        %3579 = vmatmul.mubr.bf16.gmra.mrb[0].mxu0 %v3334
        %v3580 = vpop.f32.mrb[0].mxu0
        %v3581 = vadd.f32 %v3376, %v3580
        %v3582 = vpop.f32.mrb[0].mxu0
        %v3583 = vadd.f32 %v3380, %v3582
        %v3584 = vpop.f32.mrb[0].mxu0
        %v3585 = vadd.f32 %v3376, %v3584
        %v3586 = vpop.f32.mrb[0].mxu0
        %v3587 = vadd.f32 %v3380, %v3586
        %3588 = vmatprep.mubr.bf16.mxu0 0
        %3589 = vmatmul.mubr.bf16.gmra.mrb[0].mxu0 %v3335
        %v3590 = vpop.f32.mrb[0].mxu0
        %v3591 = vadd.f32 %v3376, %v3590
        %v3592 = vpop.f32.mrb[0].mxu0
        %v3593 = vadd.f32 %v3380, %v3592
        %v3594 = vpop.f32.mrb[0].mxu0
        %v3595 = vadd.f32 %v3376, %v3594
        %v3596 = vpop.f32.mrb[0].mxu0
        %v3597 = vadd.f32 %v3380, %v3596
        %3598 = vmatprep.mubr.bf16.mxu0 0
        %3599 = vmatmul.mubr.bf16.gmra.mrb[0].mxu0 %v3336
        %v3600 = vpop.f32.mrb[0].mxu0
        %v3601 = vadd.f32 %v3376, %v3600
        %v3602 = vpop.f32.mrb[0].mxu0
        %v3603 = vadd.f32 %v3380, %v3602
        %v3604 = vpop.f32.mrb[0].mxu0
        %v3605 = vadd.f32 %v3376, %v3604
        %v3606 = vpop.f32.mrb[0].mxu0
        %v3607 = vadd.f32 %v3380, %v3606
        %3608 = vmatprep.mubr.bf16.mxu0 0
        %3609 = vmatmul.mubr.bf16.gmra.mrb[0].mxu0 %v3337
        %v3610 = vpop.f32.mrb[0].mxu0
        %v3611 = vadd.f32 %v3376, %v3610
        %v3612 = vpop.f32.mrb[0].mxu0
        %v3613 = vadd.f32 %v3380, %v3612
        %v3614 = vpop.f32.mrb[0].mxu0
        %v3615 = vadd.f32 %v3376, %v3614
        %v3616 = vpop.f32.mrb[0].mxu0
        %v3617 = vadd.f32 %v3380, %v3616
        %3618 = vmatprep.mubr.bf16.mxu0 0
        %3619 = vmatmul.mubr.bf16.gmra.mrb[0].mxu0 %v3338
        %v3620 = vpop.f32.mrb[0].mxu0
        %v3621 = vadd.f32 %v3376, %v3620
        %v3622 = vpop.f32.mrb[0].mxu0
        %v3623 = vadd.f32 %v3380, %v3622
        %v3624 = vpop.f32.mrb[0].mxu0
        %v3625 = vadd.f32 %v3376, %v3624
        %v3626 = vpop.f32.mrb[0].mxu0
        %v3627 = vadd.f32 %v3380, %v3626
        %3628 = vdwg.mxu0
        %3629 = vmatprep.subr.bf16.mxu0 0
        %3630 = vmatpush1.bf16.msra.mxu0 %v3470
        %3631 = vmatprep.subr.bf16.mxu0 0
        %3632 = vmatpush1.bf16.msra.mxu0 %v3473
        %3633 = vmatprep.subr.bf16.mxu0 0
        %3634 = vmatpush1.bf16.msra.mxu0 %v3476
        %3635 = vmatprep.subr.bf16.mxu0 0
        %3636 = vmatpush1.bf16.msra.mxu0 %v3479
        %3637 = vmatprep.subr.bf16.mxu0 0
        %3638 = vmatpush1.bf16.msra.mxu0 %v3482
        %3639 = vmatprep.subr.bf16.mxu0 0
        %3640 = vmatpush1.bf16.msra.mxu0 %v3485
        %3641 = vmatprep.subr.bf16.mxu0 0
        %3642 = vmatpush1.bf16.msra.mxu0 %v3488
        %3643 = vmatprep.subr.bf16.mxu0 0
        %3644 = vmatpush1.bf16.msra.mxu0 %v3491
        %3645 = vmatprep.subr.bf16.mxu0 0
        %3646 = vmatpush1.bf16.msra.mxu0 0
        %3647 = vmatprep.subr.bf16.mxu0 0
        %3648 = vmatpush1.bf16.msra.mxu0 0
        %3649 = vmatprep.subr.bf16.mxu0 0
        %3650 = vmatpush1.bf16.msra.mxu0 0
        %3651 = vmatprep.subr.bf16.mxu0 0
        %3652 = vmatpush1.bf16.msra.mxu0 0
        %3653 = vmatprep.subr.bf16.mxu0 0
        %3654 = vmatpush1.bf16.msra.mxu0 0
        %3655 = vmatprep.subr.bf16.mxu0 0
        %3656 = vmatpush1.bf16.msra.mxu0 0
        %3657 = vmatprep.subr.bf16.mxu0 0
        %3658 = vmatpush1.bf16.msra.mxu0 0
        %3659 = vmatprep.subr.bf16.mxu0 0
        %3660 = vmatpush1.bf16.msra.mxu0 0
        %3661 = vmatprep.mubr.bf16.mxu0 0
        %3662 = vmatmul.mubr.bf16.gmra.mrb[0].mxu0 %v3331
        %v3663 = vpop.f32.mrb[0].mxu0
        %v3664 = vadd.f32 %v3384, %v3663
        %v3665 = vpop.f32.mrb[0].mxu0
        %v3666 = vpop.f32.mrb[0].mxu0
        %v3667 = vadd.f32 %v3384, %v3666
        %v3668 = vpop.f32.mrb[0].mxu0
        %3669 = vmatprep.mubr.bf16.mxu0 0
        %3670 = vmatmul.mubr.bf16.gmra.mrb[0].mxu0 %v3332
        %v3671 = vpop.f32.mrb[0].mxu0
        %v3672 = vadd.f32 %v3384, %v3671
        %v3673 = vpop.f32.mrb[0].mxu0
        %v3674 = vpop.f32.mrb[0].mxu0
        %v3675 = vadd.f32 %v3384, %v3674
        %v3676 = vpop.f32.mrb[0].mxu0
        %3677 = vmatprep.mubr.bf16.mxu0 0
        %3678 = vmatmul.mubr.bf16.gmra.mrb[0].mxu0 %v3333
        %v3679 = vpop.f32.mrb[0].mxu0
        %v3680 = vadd.f32 %v3384, %v3679
        %v3681 = vpop.f32.mrb[0].mxu0
        %v3682 = vpop.f32.mrb[0].mxu0
        %v3683 = vadd.f32 %v3384, %v3682
        %v3684 = vpop.f32.mrb[0].mxu0
        %3685 = vmatprep.mubr.bf16.mxu0 0
        %3686 = vmatmul.mubr.bf16.gmra.mrb[0].mxu0 %v3334
        %v3687 = vpop.f32.mrb[0].mxu0
        %v3688 = vadd.f32 %v3384, %v3687
        %v3689 = vpop.f32.mrb[0].mxu0
        %v3690 = vpop.f32.mrb[0].mxu0
        %v3691 = vadd.f32 %v3384, %v3690
        %v3692 = vpop.f32.mrb[0].mxu0
        %3693 = vmatprep.mubr.bf16.mxu0 0
        %3694 = vmatmul.mubr.bf16.gmra.mrb[0].mxu0 %v3335
        %v3695 = vpop.f32.mrb[0].mxu0
        %v3696 = vadd.f32 %v3384, %v3695
        %v3697 = vpop.f32.mrb[0].mxu0
        %v3698 = vpop.f32.mrb[0].mxu0
        %v3699 = vadd.f32 %v3384, %v3698
        %v3700 = vpop.f32.mrb[0].mxu0
        %3701 = vmatprep.mubr.bf16.mxu0 0
        %3702 = vmatmul.mubr.bf16.gmra.mrb[0].mxu0 %v3336
        %v3703 = vpop.f32.mrb[0].mxu0
        %v3704 = vadd.f32 %v3384, %v3703
        %v3705 = vpop.f32.mrb[0].mxu0
        %v3706 = vpop.f32.mrb[0].mxu0
        %v3707 = vadd.f32 %v3384, %v3706
        %v3708 = vpop.f32.mrb[0].mxu0
        %3709 = vmatprep.mubr.bf16.mxu0 0
        %3710 = vmatmul.mubr.bf16.gmra.mrb[0].mxu0 %v3337
        %v3711 = vpop.f32.mrb[0].mxu0
        %v3712 = vadd.f32 %v3384, %v3711
        %v3713 = vpop.f32.mrb[0].mxu0
        %v3714 = vpop.f32.mrb[0].mxu0
        %v3715 = vadd.f32 %v3384, %v3714
        %v3716 = vpop.f32.mrb[0].mxu0
        %3717 = vmatprep.mubr.bf16.mxu0 0
        %3718 = vmatmul.mubr.bf16.gmra.mrb[0].mxu0 %v3338
        %v3719 = vpop.f32.mrb[0].mxu0
        %v3720 = vadd.f32 %v3384, %v3719
        %v3721 = vpop.f32.mrb[0].mxu0
        %v3722 = vpop.f32.mrb[0].mxu0
        %v3723 = vadd.f32 %v3384, %v3722
        %v3724 = vpop.f32.mrb[0].mxu0
        %3725 = vdwg.mxu0
        %v3726 = vmul.f32 %v3551, 0.01
        %v3727 = vmul.f32 %v3553, 0.01
        %v3728 = vmul.f32 %v3664, 0.01
        %v3729 = vmul.f32 %v3555, 0.01
        %v3730 = vmul.f32 %v3557, 0.01
        %v3731 = vmul.f32 %v3667, 0.01
        %v3732 = vmul.f32 %v3561, 0.01
        %v3733 = vmul.f32 %v3563, 0.01
        %v3734 = vmul.f32 %v3672, 0.01
        %v3735 = vmul.f32 %v3565, 0.01
        %v3736 = vmul.f32 %v3567, 0.01
        %v3737 = vmul.f32 %v3675, 0.01
        %v3738 = vmul.f32 %v3571, 0.01
        %v3739 = vmul.f32 %v3573, 0.01
        %v3740 = vmul.f32 %v3680, 0.01
        %v3741 = vmul.f32 %v3575, 0.01
        %v3742 = vmul.f32 %v3577, 0.01
        %v3743 = vmul.f32 %v3683, 0.01
        %v3744 = vmul.f32 %v3581, 0.01
        %v3745 = vmul.f32 %v3583, 0.01
        %v3746 = vmul.f32 %v3688, 0.01
        %v3747 = vmul.f32 %v3585, 0.01
        %v3748 = vmul.f32 %v3587, 0.01
        %v3749 = vmul.f32 %v3691, 0.01
        %v3750 = vmul.f32 %v3591, 0.01
        %v3751 = vmul.f32 %v3593, 0.01
        %v3752 = vmul.f32 %v3696, 0.01
        %v3753 = vmul.f32 %v3595, 0.01
        %v3754 = vmul.f32 %v3597, 0.01
        %v3755 = vmul.f32 %v3699, 0.01
        %v3756 = vmul.f32 %v3601, 0.01
        %v3757 = vmul.f32 %v3603, 0.01
        %v3758 = vmul.f32 %v3704, 0.01
        %v3759 = vmul.f32 %v3605, 0.01
        %v3760 = vmul.f32 %v3607, 0.01
        %v3761 = vmul.f32 %v3707, 0.01
        %v3762 = vmul.f32 %v3611, 0.01
        %v3763 = vmul.f32 %v3613, 0.01
        %v3764 = vmul.f32 %v3712, 0.01
        %v3765 = vmul.f32 %v3615, 0.01
        %v3766 = vmul.f32 %v3617, 0.01
        %v3767 = vmul.f32 %v3715, 0.01
        %v3768 = vmul.f32 %v3621, 0.01
        %v3769 = vmul.f32 %v3623, 0.01
        %v3770 = vmul.f32 %v3720, 0.01
        %v3771 = vmul.f32 %v3625, 0.01
        %v3772 = vmul.f32 %v3627, 0.01
        %v3773 = vmul.f32 %v3723, 0.01
        %v3774 = vmax.f32 %v3551, %v3726
        %v3775 = vmax.f32 %v3553, %v3727
        %v3776 = vmax.f32 %v3664, %v3728
        %v3777 = vmax.f32 %v3555, %v3729
        %v3778 = vmax.f32 %v3557, %v3730
        %v3779 = vmax.f32 %v3667, %v3731
        %v3780 = vmax.f32 %v3561, %v3732
        %v3781 = vmax.f32 %v3563, %v3733
        %v3782 = vmax.f32 %v3672, %v3734
        %v3783 = vmax.f32 %v3565, %v3735
        %v3784 = vmax.f32 %v3567, %v3736
        %v3785 = vmax.f32 %v3675, %v3737
        %v3786 = vmax.f32 %v3571, %v3738
        %v3787 = vmax.f32 %v3573, %v3739
        %v3788 = vmax.f32 %v3680, %v3740
        %v3789 = vmax.f32 %v3575, %v3741
        %v3790 = vmax.f32 %v3577, %v3742
        %v3791 = vmax.f32 %v3683, %v3743
        %v3792 = vmax.f32 %v3581, %v3744
        %v3793 = vmax.f32 %v3583, %v3745
        %v3794 = vmax.f32 %v3688, %v3746
        %v3795 = vmax.f32 %v3585, %v3747
        %v3796 = vmax.f32 %v3587, %v3748
        %v3797 = vmax.f32 %v3691, %v3749
        %v3798 = vmax.f32 %v3591, %v3750
        %v3799 = vmax.f32 %v3593, %v3751
        %v3800 = vmax.f32 %v3696, %v3752
        %v3801 = vmax.f32 %v3595, %v3753
        %v3802 = vmax.f32 %v3597, %v3754
        %v3803 = vmax.f32 %v3699, %v3755
        %v3804 = vmax.f32 %v3601, %v3756
        %v3805 = vmax.f32 %v3603, %v3757
        %v3806 = vmax.f32 %v3704, %v3758
        %v3807 = vmax.f32 %v3605, %v3759
        %v3808 = vmax.f32 %v3607, %v3760
        %v3809 = vmax.f32 %v3707, %v3761
        %v3810 = vmax.f32 %v3611, %v3762
        %v3811 = vmax.f32 %v3613, %v3763
        %v3812 = vmax.f32 %v3712, %v3764
        %v3813 = vmax.f32 %v3615, %v3765
        %v3814 = vmax.f32 %v3617, %v3766
        %v3815 = vmax.f32 %v3715, %v3767
        %v3816 = vmax.f32 %v3621, %v3768
        %v3817 = vmax.f32 %v3623, %v3769
        %v3818 = vmax.f32 %v3720, %v3770
        %v3819 = vmax.f32 %v3625, %v3771
        %v3820 = vmax.f32 %v3627, %v3772
        %v3821 = vmax.f32 %v3723, %v3773
        %v3822 = vpack.c.bf16 %v3777, %v3774
        %v3823 = vpack.c.bf16 %v3778, %v3775
        %v3824 = vpack.c.bf16 %v3779, %v3776
        %v3825 = vpack.c.bf16 %v3783, %v3780
        %v3826 = vpack.c.bf16 %v3784, %v3781
        %v3827 = vpack.c.bf16 %v3785, %v3782
        %v3828 = vpack.c.bf16 %v3789, %v3786
        %v3829 = vpack.c.bf16 %v3790, %v3787
        %v3830 = vpack.c.bf16 %v3791, %v3788
        %v3831 = vpack.c.bf16 %v3795, %v3792
        %v3832 = vpack.c.bf16 %v3796, %v3793
        %v3833 = vpack.c.bf16 %v3797, %v3794
        %v3834 = vpack.c.bf16 %v3801, %v3798
        %v3835 = vpack.c.bf16 %v3802, %v3799
        %v3836 = vpack.c.bf16 %v3803, %v3800
        %v3837 = vpack.c.bf16 %v3807, %v3804
        %v3838 = vpack.c.bf16 %v3808, %v3805
        %v3839 = vpack.c.bf16 %v3809, %v3806
        %v3840 = vpack.c.bf16 %v3813, %v3810
        %v3841 = vpack.c.bf16 %v3814, %v3811
        %v3842 = vpack.c.bf16 %v3815, %v3812
        %v3843 = vpack.c.bf16 %v3819, %v3816
        %v3844 = vpack.c.bf16 %v3820, %v3817
        %v3845 = vpack.c.bf16 %v3821, %v3818
        %v3846 = vld [vmem:[%s23] sm:$0xf]
        %v3847 = vld [vmem:[%s23 + $0x4] sm:$0xf]
        %v3848 = vld [vmem:[%s23 + $0x8] sm:$0xf]
        %v3849 = vld [vmem:[%s23 + $0xc] sm:$0xf]
        %v3850 = vld [vmem:[%s23 + $0x10] sm:$0xf]
        %v3851 = vld [vmem:[%s23 + $0x14] sm:$0xf]
        %v3852 = vld [vmem:[%s23 + $0x18] sm:$0xf]
        %v3853 = vld [vmem:[%s23 + $0x1c] sm:$0xf]
        %v3854 = vld [vmem:[%s23 + $0x20] sm:$0xf]
        %v3855 = vld [vmem:[%s23 + $0x24] sm:$0xf]
        %v3856 = vld [vmem:[%s23 + $0x28] sm:$0xf]
        %v3857 = vld [vmem:[%s23 + $0x2c] sm:$0xf]
        %v3858 = vld [vmem:[%s23 + $0x30] sm:$0xf]
        %v3859 = vld [vmem:[%s23 + $0x34] sm:$0xf]
        %v3860 = vld [vmem:[%s23 + $0x38] sm:$0xf]
        %v3861 = vld [vmem:[%s23 + $0x3c] sm:$0xf]
        %v3862 = vld [vmem:[%s23 + $0x40] sm:$0xf]
        %v3863 = vld [vmem:[%s23 + $0x44] sm:$0xf]
        %v3864 = vld [vmem:[%s23 + $0x48] sm:$0xf]
        %v3865 = vld [vmem:[%s23 + $0x4c] sm:$0xf]
        %v3866 = vld [vmem:[%s23 + $0x50] sm:$0xf]
        %v3867 = vld [vmem:[%s23 + $0x54] sm:$0xf]
        %v3868 = vld [vmem:[%s23 + $0x58] sm:$0xf]
        %v3869 = vld [vmem:[%s23 + $0x5c] sm:$0xf]
        %v3870 = vld [vmem:[%s23 + $0x60] sm:$0xf]
        %v3871 = vld [vmem:[%s23 + $0x64] sm:$0xf]
        %v3872 = vld [vmem:[%s23 + $0x68] sm:$0xf]
        %v3873 = vld [vmem:[%s23 + $0x6c] sm:$0xf]
        %v3874 = vld [vmem:[%s23 + $0x70] sm:$0xf]
        %v3875 = vld [vmem:[%s23 + $0x74] sm:$0xf]
        %v3876 = vld [vmem:[%s23 + $0x78] sm:$0xf]
        %v3877 = vld [vmem:[%s23 + $0x7c] sm:$0xf]
        %v3878 = vld [vmem:[%s23 + $0x80] sm:$0xf]
        %v3879 = vld [vmem:[%s23 + $0x84] sm:$0xf]
        %v3880 = vld [vmem:[%s23 + $0x88] sm:$0xf]
        %v3881 = vld [vmem:[%s23 + $0x8c] sm:$0xf]
        %v3882 = vld [vmem:[%s23 + $0x90] sm:$0xf]
        %v3883 = vld [vmem:[%s23 + $0x94] sm:$0xf]
        %v3884 = vld [vmem:[%s23 + $0x98] sm:$0xf]
        %v3885 = vld [vmem:[%s23 + $0x9c] sm:$0xf]
        %v3886 = vld [vmem:[%s23 + $0xa0] sm:$0xf]
        %v3887 = vld [vmem:[%s23 + $0xa4] sm:$0xf]
        %v3888 = vld [vmem:[%s23 + $0xa8] sm:$0xf]
        %v3889 = vld [vmem:[%s23 + $0xac] sm:$0xf]
        %v3890 = vld [vmem:[%s23 + $0xb0] sm:$0xf]
        %v3891 = vld [vmem:[%s23 + $0xb4] sm:$0xf]
        %v3892 = vld [vmem:[%s23 + $0xb8] sm:$0xf]
        %v3893 = vld [vmem:[%s23 + $0xbc] sm:$0xf]
        %v3894 = vld [vmem:[#allocation10] sm:$0x1]
        %v3896 = vlaneseq
        %v3897 = vshrl.u32 %v3896, 7
        %v3898 = vsub.s32 0, %v3897
        %v3899 = vrot.slane %v3894, %v3898
        %v3949 = vunpack.c.l.b16 %v3846
        %v3950 = vunpack.c.l.b16 %v3847
        %v3951 = vunpack.c.l.b16 %v3848
        %v3952 = vunpack.c.l.b16 %v3849
        %v3953 = vunpack.c.l.b16 %v3850
        %v3954 = vunpack.c.l.b16 %v3851
        %v3955 = vunpack.c.l.b16 %v3852
        %v3956 = vunpack.c.l.b16 %v3853
        %v3957 = vunpack.c.l.b16 %v3854
        %v3958 = vunpack.c.l.b16 %v3855
        %v3959 = vunpack.c.l.b16 %v3856
        %v3960 = vunpack.c.l.b16 %v3857
        %v3961 = vunpack.c.l.b16 %v3858
        %v3962 = vunpack.c.l.b16 %v3859
        %v3963 = vunpack.c.l.b16 %v3860
        %v3964 = vunpack.c.l.b16 %v3861
        %v3965 = vunpack.c.l.b16 %v3862
        %v3966 = vunpack.c.l.b16 %v3863
        %v3967 = vunpack.c.l.b16 %v3864
        %v3968 = vunpack.c.l.b16 %v3865
        %v3969 = vunpack.c.l.b16 %v3866
        %v3970 = vunpack.c.l.b16 %v3867
        %v3971 = vunpack.c.l.b16 %v3868
        %v3972 = vunpack.c.l.b16 %v3869
        %v3973 = vunpack.c.l.b16 %v3870
        %v3974 = vunpack.c.l.b16 %v3871
        %v3975 = vunpack.c.l.b16 %v3872
        %v3976 = vunpack.c.l.b16 %v3873
        %v3977 = vunpack.c.l.b16 %v3874
        %v3978 = vunpack.c.l.b16 %v3875
        %v3979 = vunpack.c.l.b16 %v3876
        %v3980 = vunpack.c.l.b16 %v3877
        %v3981 = vunpack.c.l.b16 %v3878
        %v3982 = vunpack.c.l.b16 %v3879
        %v3983 = vunpack.c.l.b16 %v3880
        %v3984 = vunpack.c.l.b16 %v3881
        %v3985 = vunpack.c.l.b16 %v3882
        %v3986 = vunpack.c.l.b16 %v3883
        %v3987 = vunpack.c.l.b16 %v3884
        %v3988 = vunpack.c.l.b16 %v3885
        %v3989 = vunpack.c.l.b16 %v3886
        %v3990 = vunpack.c.l.b16 %v3887
        %v3991 = vunpack.c.l.b16 %v3888
        %v3992 = vunpack.c.l.b16 %v3889
        %v3993 = vunpack.c.l.b16 %v3890
        %v3994 = vunpack.c.l.b16 %v3891
        %v3995 = vunpack.c.l.b16 %v3892
        %v3996 = vunpack.c.l.b16 %v3893
        %v3997 = vpack.c.b16 %v3950, %v3949
        %v3998 = vpack.c.b16 %v3952, %v3951
        %v3999 = vpack.c.b16 %v3954, %v3953
        %v4000 = vpack.c.b16 %v3956, %v3955
        %v4001 = vpack.c.b16 %v3958, %v3957
        %v4002 = vpack.c.b16 %v3960, %v3959
        %v4003 = vpack.c.b16 %v3962, %v3961
        %v4004 = vpack.c.b16 %v3964, %v3963
        %v4005 = vpack.c.b16 %v3966, %v3965
        %v4006 = vpack.c.b16 %v3968, %v3967
        %v4007 = vpack.c.b16 %v3970, %v3969
        %v4008 = vpack.c.b16 %v3972, %v3971
        %v4009 = vpack.c.b16 %v3974, %v3973
        %v4010 = vpack.c.b16 %v3976, %v3975
        %v4011 = vpack.c.b16 %v3978, %v3977
        %v4012 = vpack.c.b16 %v3980, %v3979
        %v4013 = vpack.c.b16 %v3982, %v3981
        %v4014 = vpack.c.b16 %v3984, %v3983
        %v4015 = vpack.c.b16 %v3986, %v3985
        %v4016 = vpack.c.b16 %v3988, %v3987
        %v4017 = vpack.c.b16 %v3990, %v3989
        %v4018 = vpack.c.b16 %v3992, %v3991
        %v4019 = vpack.c.b16 %v3994, %v3993
        %v4020 = vpack.c.b16 %v3996, %v3995
        %4045 = vmatprep.subr.bf16.mxu0 0
        %4046 = vmatpush1.bf16.msra.mxu0 %v3997
        %4047 = vmatprep.subr.bf16.mxu0 0
        %4048 = vmatpush1.bf16.msra.mxu0 %v3998
        %4049 = vmatprep.subr.bf16.mxu0 0
        %4050 = vmatpush1.bf16.msra.mxu0 %v3999
        %4051 = vmatprep.subr.bf16.mxu0 0
        %4052 = vmatpush1.bf16.msra.mxu0 %v4000
        %4053 = vmatprep.subr.bf16.mxu0 0
        %4054 = vmatpush1.bf16.msra.mxu0 %v4001
        %4055 = vmatprep.subr.bf16.mxu0 0
        %4056 = vmatpush1.bf16.msra.mxu0 %v4002
        %4057 = vmatprep.subr.bf16.mxu0 0
        %4058 = vmatpush1.bf16.msra.mxu0 %v4003
        %4059 = vmatprep.subr.bf16.mxu0 0
        %4060 = vmatpush1.bf16.msra.mxu0 %v4004
        %4061 = vmatprep.subr.bf16.mxu0 0
        %4062 = vmatpush1.bf16.msra.mxu0 %v4005
        %4063 = vmatprep.subr.bf16.mxu0 0
        %4064 = vmatpush1.bf16.msra.mxu0 %v4006
        %4065 = vmatprep.subr.bf16.mxu0 0
        %4066 = vmatpush1.bf16.msra.mxu0 %v4007
        %4067 = vmatprep.subr.bf16.mxu0 0
        %4068 = vmatpush1.bf16.msra.mxu0 %v4008
        %4069 = vmatprep.subr.bf16.mxu0 0
        %4070 = vmatpush1.bf16.msra.mxu0 %v4009
        %4071 = vmatprep.subr.bf16.mxu0 0
        %4072 = vmatpush1.bf16.msra.mxu0 %v4010
        %4073 = vmatprep.subr.bf16.mxu0 0
        %4074 = vmatpush1.bf16.msra.mxu0 %v4011
        %4075 = vmatprep.subr.bf16.mxu0 0
        %4076 = vmatpush1.bf16.msra.mxu0 %v4012
        %4077 = vmatprep.mubr.bf16.mxu0 %v3823
        %4078 = vmatmul.mubr.bf16.gmra.mrb[0].mxu0 %v3822
        %v4079 = vpop.f32.mrb[0].mxu0
        %v4080 = vadd.f32 %v3899, %v4079
        %v4081 = vpop.f32.mrb[0].mxu0
        %v4082 = vpop.f32.mrb[0].mxu0
        %v4083 = vadd.f32 %v3899, %v4082
        %v4084 = vpop.f32.mrb[0].mxu0
        %4085 = vmatprep.mubr.bf16.mxu0 %v3826
        %4086 = vmatmul.mubr.bf16.gmra.mrb[0].mxu0 %v3825
        %v4087 = vpop.f32.mrb[0].mxu0
        %v4088 = vadd.f32 %v3899, %v4087
        %v4089 = vpop.f32.mrb[0].mxu0
        %v4090 = vpop.f32.mrb[0].mxu0
        %v4091 = vadd.f32 %v3899, %v4090
        %v4092 = vpop.f32.mrb[0].mxu0
        %4093 = vmatprep.mubr.bf16.mxu0 %v3829
        %4094 = vmatmul.mubr.bf16.gmra.mrb[0].mxu0 %v3828
        %v4095 = vpop.f32.mrb[0].mxu0
        %v4096 = vadd.f32 %v3899, %v4095
        %v4097 = vpop.f32.mrb[0].mxu0
        %v4098 = vpop.f32.mrb[0].mxu0
        %v4099 = vadd.f32 %v3899, %v4098
        %v4100 = vpop.f32.mrb[0].mxu0
        %4101 = vmatprep.mubr.bf16.mxu0 %v3832
        %4102 = vmatmul.mubr.bf16.gmra.mrb[0].mxu0 %v3831
        %v4103 = vpop.f32.mrb[0].mxu0
        %v4104 = vadd.f32 %v3899, %v4103
        %v4105 = vpop.f32.mrb[0].mxu0
        %v4106 = vpop.f32.mrb[0].mxu0
        %v4107 = vadd.f32 %v3899, %v4106
        %v4108 = vpop.f32.mrb[0].mxu0
        %4109 = vmatprep.mubr.bf16.mxu0 %v3835
        %4110 = vmatmul.mubr.bf16.gmra.mrb[0].mxu0 %v3834
        %v4111 = vpop.f32.mrb[0].mxu0
        %v4112 = vadd.f32 %v3899, %v4111
        %v4113 = vpop.f32.mrb[0].mxu0
        %v4114 = vpop.f32.mrb[0].mxu0
        %v4115 = vadd.f32 %v3899, %v4114
        %v4116 = vpop.f32.mrb[0].mxu0
        %4117 = vmatprep.mubr.bf16.mxu0 %v3838
        %4118 = vmatmul.mubr.bf16.gmra.mrb[0].mxu0 %v3837
        %v4119 = vpop.f32.mrb[0].mxu0
        %v4120 = vadd.f32 %v3899, %v4119
        %v4121 = vpop.f32.mrb[0].mxu0
        %v4122 = vpop.f32.mrb[0].mxu0
        %v4123 = vadd.f32 %v3899, %v4122
        %v4124 = vpop.f32.mrb[0].mxu0
        %4125 = vmatprep.mubr.bf16.mxu0 %v3841
        %4126 = vmatmul.mubr.bf16.gmra.mrb[0].mxu0 %v3840
        %v4127 = vpop.f32.mrb[0].mxu0
        %v4128 = vadd.f32 %v3899, %v4127
        %v4129 = vpop.f32.mrb[0].mxu0
        %v4130 = vpop.f32.mrb[0].mxu0
        %v4131 = vadd.f32 %v3899, %v4130
        %v4132 = vpop.f32.mrb[0].mxu0
        %4133 = vmatprep.mubr.bf16.mxu0 %v3844
        %4134 = vmatmul.mubr.bf16.gmra.mrb[0].mxu0 %v3843
        %v4135 = vpop.f32.mrb[0].mxu0
        %v4136 = vadd.f32 %v3899, %v4135
        %v4137 = vpop.f32.mrb[0].mxu0
        %v4138 = vpop.f32.mrb[0].mxu0
        %v4139 = vadd.f32 %v3899, %v4138
        %v4140 = vpop.f32.mrb[0].mxu0
        %4141 = vdwg.mxu0
        %4142 = vmatprep.subr.bf16.mxu0 0
        %4143 = vmatpush1.bf16.msra.mxu0 %v4013
        %4144 = vmatprep.subr.bf16.mxu0 0
        %4145 = vmatpush1.bf16.msra.mxu0 %v4014
        %4146 = vmatprep.subr.bf16.mxu0 0
        %4147 = vmatpush1.bf16.msra.mxu0 %v4015
        %4148 = vmatprep.subr.bf16.mxu0 0
        %4149 = vmatpush1.bf16.msra.mxu0 %v4016
        %4150 = vmatprep.subr.bf16.mxu0 0
        %4151 = vmatpush1.bf16.msra.mxu0 %v4017
        %4152 = vmatprep.subr.bf16.mxu0 0
        %4153 = vmatpush1.bf16.msra.mxu0 %v4018
        %4154 = vmatprep.subr.bf16.mxu0 0
        %4155 = vmatpush1.bf16.msra.mxu0 %v4019
        %4156 = vmatprep.subr.bf16.mxu0 0
        %4157 = vmatpush1.bf16.msra.mxu0 %v4020
        %4158 = vmatprep.subr.bf16.mxu0 0
        %4159 = vmatpush1.bf16.msra.mxu0 0
        %4160 = vmatprep.subr.bf16.mxu0 0
        %4161 = vmatpush1.bf16.msra.mxu0 0
        %4162 = vmatprep.subr.bf16.mxu0 0
        %4163 = vmatpush1.bf16.msra.mxu0 0
        %4164 = vmatprep.subr.bf16.mxu0 0
        %4165 = vmatpush1.bf16.msra.mxu0 0
        %4166 = vmatprep.subr.bf16.mxu0 0
        %4167 = vmatpush1.bf16.msra.mxu0 0
        %4168 = vmatprep.subr.bf16.mxu0 0
        %4169 = vmatpush1.bf16.msra.mxu0 0
        %4170 = vmatprep.subr.bf16.mxu0 0
        %4171 = vmatpush1.bf16.msra.mxu0 0
        %4172 = vmatprep.subr.bf16.mxu0 0
        %4173 = vmatpush1.bf16.msra.mxu0 0
        %4174 = vmatprep.mubr.bf16.mxu0 0
        %4175 = vmatmul.mubr.bf16.gmra.mrb[0].mxu0 %v3824
        %v4176 = vpop.f32.mrb[0].mxu0
        %v4177 = vadd.f32 %v4080, %v4176
        %v4178 = vpop.f32.mrb[0].mxu0
        %v4179 = vpop.f32.mrb[0].mxu0
        %v4180 = vadd.f32 %v4083, %v4179
        %v4181 = vpop.f32.mrb[0].mxu0
        %4182 = vmatprep.mubr.bf16.mxu0 0
        %4183 = vmatmul.mubr.bf16.gmra.mrb[0].mxu0 %v3827
        %v4184 = vpop.f32.mrb[0].mxu0
        %v4185 = vadd.f32 %v4088, %v4184
        %v4186 = vpop.f32.mrb[0].mxu0
        %v4187 = vpop.f32.mrb[0].mxu0
        %v4188 = vadd.f32 %v4091, %v4187
        %v4189 = vpop.f32.mrb[0].mxu0
        %4190 = vmatprep.mubr.bf16.mxu0 0
        %4191 = vmatmul.mubr.bf16.gmra.mrb[0].mxu0 %v3830
        %v4192 = vpop.f32.mrb[0].mxu0
        %v4193 = vadd.f32 %v4096, %v4192
        %v4194 = vpop.f32.mrb[0].mxu0
        %v4195 = vpop.f32.mrb[0].mxu0
        %v4196 = vadd.f32 %v4099, %v4195
        %v4197 = vpop.f32.mrb[0].mxu0
        %4198 = vmatprep.mubr.bf16.mxu0 0
        %4199 = vmatmul.mubr.bf16.gmra.mrb[0].mxu0 %v3833
        %v4200 = vpop.f32.mrb[0].mxu0
        %v4201 = vadd.f32 %v4104, %v4200
        %v4202 = vpop.f32.mrb[0].mxu0
        %v4203 = vpop.f32.mrb[0].mxu0
        %v4204 = vadd.f32 %v4107, %v4203
        %v4205 = vpop.f32.mrb[0].mxu0
        %4206 = vmatprep.mubr.bf16.mxu0 0
        %4207 = vmatmul.mubr.bf16.gmra.mrb[0].mxu0 %v3836
        %v4208 = vpop.f32.mrb[0].mxu0
        %v4209 = vadd.f32 %v4112, %v4208
        %v4210 = vpop.f32.mrb[0].mxu0
        %v4211 = vpop.f32.mrb[0].mxu0
        %v4212 = vadd.f32 %v4115, %v4211
        %v4213 = vpop.f32.mrb[0].mxu0
        %4214 = vmatprep.mubr.bf16.mxu0 0
        %4215 = vmatmul.mubr.bf16.gmra.mrb[0].mxu0 %v3839
        %v4216 = vpop.f32.mrb[0].mxu0
        %v4217 = vadd.f32 %v4120, %v4216
        %v4218 = vpop.f32.mrb[0].mxu0
        %v4219 = vpop.f32.mrb[0].mxu0
        %v4220 = vadd.f32 %v4123, %v4219
        %v4221 = vpop.f32.mrb[0].mxu0
        %4222 = vmatprep.mubr.bf16.mxu0 0
        %4223 = vmatmul.mubr.bf16.gmra.mrb[0].mxu0 %v3842
        %v4224 = vpop.f32.mrb[0].mxu0
        %v4225 = vadd.f32 %v4128, %v4224
        %v4226 = vpop.f32.mrb[0].mxu0
        %v4227 = vpop.f32.mrb[0].mxu0
        %v4228 = vadd.f32 %v4131, %v4227
        %v4229 = vpop.f32.mrb[0].mxu0
        %4230 = vmatprep.mubr.bf16.mxu0 0
        %4231 = vmatmul.mubr.bf16.gmra.mrb[0].mxu0 %v3845
        %v4232 = vpop.f32.mrb[0].mxu0
        %v4233 = vadd.f32 %v4136, %v4232
        %v4234 = vpop.f32.mrb[0].mxu0
        %v4235 = vpop.f32.mrb[0].mxu0
        %v4236 = vadd.f32 %v4139, %v4235
        %v4237 = vpop.f32.mrb[0].mxu0
        %4238 = vdwg.mxu0
        %v4239 = vmul.f32 %v4177, 0.01
        %v4240 = vmul.f32 %v4180, 0.01
        %v4241 = vmul.f32 %v4185, 0.01
        %v4242 = vmul.f32 %v4188, 0.01
        %v4243 = vmul.f32 %v4193, 0.01
        %v4244 = vmul.f32 %v4196, 0.01
        %v4245 = vmul.f32 %v4201, 0.01
        %v4246 = vmul.f32 %v4204, 0.01
        %v4247 = vmul.f32 %v4209, 0.01
        %v4248 = vmul.f32 %v4212, 0.01
        %v4249 = vmul.f32 %v4217, 0.01
        %v4250 = vmul.f32 %v4220, 0.01
        %v4251 = vmul.f32 %v4225, 0.01
        %v4252 = vmul.f32 %v4228, 0.01
        %v4253 = vmul.f32 %v4233, 0.01
        %v4254 = vmul.f32 %v4236, 0.01
        %v4255 = vmax.f32 %v4177, %v4239
        %v4256 = vmax.f32 %v4180, %v4240
        %v4257 = vmax.f32 %v4185, %v4241
        %v4258 = vmax.f32 %v4188, %v4242
        %v4259 = vmax.f32 %v4193, %v4243
        %v4260 = vmax.f32 %v4196, %v4244
        %v4261 = vmax.f32 %v4201, %v4245
        %v4262 = vmax.f32 %v4204, %v4246
        %v4263 = vmax.f32 %v4209, %v4247
        %v4264 = vmax.f32 %v4212, %v4248
        %v4265 = vmax.f32 %v4217, %v4249
        %v4266 = vmax.f32 %v4220, %v4250
        %v4267 = vmax.f32 %v4225, %v4251
        %v4268 = vmax.f32 %v4228, %v4252
        %v4269 = vmax.f32 %v4233, %v4253
        %v4270 = vmax.f32 %v4236, %v4254
        %v4271 = vpack.c.bf16 %v4256, %v4255
        %v4272 = vpack.c.bf16 %v4258, %v4257
        %v4273 = vpack.c.bf16 %v4260, %v4259
        %v4274 = vpack.c.bf16 %v4262, %v4261
        %v4275 = vpack.c.bf16 %v4264, %v4263
        %v4276 = vpack.c.bf16 %v4266, %v4265
        %v4277 = vpack.c.bf16 %v4268, %v4267
        %v4278 = vpack.c.bf16 %v4270, %v4269
        %v4279 = vld [vmem:[%s27] sm:$0xff]
        %v4280 = vld [vmem:[%s27 + $0x8] sm:$0xf]
        %v4281 = vld [vmem:[%s27 + $0xc] sm:$0xff]
        %v4282 = vld [vmem:[%s27 + $0x14] sm:$0xf]
        %v4283 = vld [vmem:[%s27 + $0x18] sm:$0xff]
        %v4284 = vld [vmem:[%s27 + $0x20] sm:$0xf]
        %v4285 = vld [vmem:[%s27 + $0x24] sm:$0xff]
        %v4286 = vld [vmem:[%s27 + $0x2c] sm:$0xf]
        %v4287 = vld [vmem:[%s27 + $0x30] sm:$0xff]
        %v4288 = vld [vmem:[%s27 + $0x38] sm:$0xf]
        %v4289 = vld [vmem:[%s27 + $0x3c] sm:$0xff]
        %v4290 = vld [vmem:[%s27 + $0x44] sm:$0xf]
        %v4291 = vld [vmem:[%s27 + $0x48] sm:$0xff]
        %v4292 = vld [vmem:[%s27 + $0x50] sm:$0xf]
        %v4293 = vld [vmem:[%s27 + $0x54] sm:$0xff]
        %v4294 = vld [vmem:[%s27 + $0x5c] sm:$0xf]
        %v4295 = vld [vmem:[%s27 + $0x60] sm:$0xff]
        %v4296 = vld [vmem:[%s27 + $0x68] sm:$0xf]
        %v4297 = vld [vmem:[%s27 + $0x6c] sm:$0xff]
        %v4298 = vld [vmem:[%s27 + $0x74] sm:$0xf]
        %v4299 = vld [vmem:[%s27 + $0x78] sm:$0xff]
        %v4300 = vld [vmem:[%s27 + $0x80] sm:$0xf]
        %v4301 = vld [vmem:[%s27 + $0x84] sm:$0xff]
        %v4302 = vld [vmem:[%s27 + $0x8c] sm:$0xf]
        %v4303 = vld [vmem:[%s27 + $0x90] sm:$0xff]
        %v4304 = vld [vmem:[%s27 + $0x98] sm:$0xf]
        %v4305 = vld [vmem:[%s27 + $0x9c] sm:$0xff]
        %v4306 = vld [vmem:[%s27 + $0xa4] sm:$0xf]
        %v4307 = vld [vmem:[%s27 + $0xa8] sm:$0xff]
        %v4308 = vld [vmem:[%s27 + $0xb0] sm:$0xf]
        %v4309 = vld [vmem:[%s27 + $0xb4] sm:$0xff]
        %v4310 = vld [vmem:[%s27 + $0xbc] sm:$0xf]
        %v4311 = vld [vmem:[#allocation12] sm:$0x7]
        %v4313 = vlaneseq
        %v4314 = vshrl.u32 %v4313, 7
        %v4315 = vsub.s32 0, %v4314
        %v4316 = vrot.slane %v4311, %v4315
        %v4317 = vlaneseq
        %v4318 = vshrl.u32 %v4317, 7
        %v4319 = vsub.s32 1, %v4318
        %v4320 = vrot.slane %v4311, %v4319
        %v4321 = vlaneseq
        %v4322 = vshrl.u32 %v4321, 7
        %v4323 = vsub.s32 2, %v4322
        %v4324 = vrot.slane %v4311, %v4323
        %v4360 = vunpack.c.l.b16 %v4279
        %v4361 = vunpack.c.h.b16 %v4279
        %v4362 = vunpack.c.l.b16 %v4280
        %v4363 = vunpack.c.l.b16 %v4281
        %v4364 = vunpack.c.h.b16 %v4281
        %v4365 = vunpack.c.l.b16 %v4282
        %v4366 = vunpack.c.l.b16 %v4283
        %v4367 = vunpack.c.h.b16 %v4283
        %v4368 = vunpack.c.l.b16 %v4284
        %v4369 = vunpack.c.l.b16 %v4285
        %v4370 = vunpack.c.h.b16 %v4285
        %v4371 = vunpack.c.l.b16 %v4286
        %v4372 = vunpack.c.l.b16 %v4287
        %v4373 = vunpack.c.h.b16 %v4287
        %v4374 = vunpack.c.l.b16 %v4288
        %v4375 = vunpack.c.l.b16 %v4289
        %v4376 = vunpack.c.h.b16 %v4289
        %v4377 = vunpack.c.l.b16 %v4290
        %v4378 = vunpack.c.l.b16 %v4291
        %v4379 = vunpack.c.h.b16 %v4291
        %v4380 = vunpack.c.l.b16 %v4292
        %v4381 = vunpack.c.l.b16 %v4293
        %v4382 = vunpack.c.h.b16 %v4293
        %v4383 = vunpack.c.l.b16 %v4294
        %v4384 = vunpack.c.l.b16 %v4295
        %v4385 = vunpack.c.h.b16 %v4295
        %v4386 = vunpack.c.l.b16 %v4296
        %v4387 = vunpack.c.l.b16 %v4297
        %v4388 = vunpack.c.h.b16 %v4297
        %v4389 = vunpack.c.l.b16 %v4298
        %v4390 = vunpack.c.l.b16 %v4299
        %v4391 = vunpack.c.h.b16 %v4299
        %v4392 = vunpack.c.l.b16 %v4300
        %v4393 = vunpack.c.l.b16 %v4301
        %v4394 = vunpack.c.h.b16 %v4301
        %v4395 = vunpack.c.l.b16 %v4302
        %v4396 = vunpack.c.l.b16 %v4303
        %v4397 = vunpack.c.h.b16 %v4303
        %v4398 = vunpack.c.l.b16 %v4304
        %v4399 = vunpack.c.l.b16 %v4305
        %v4400 = vunpack.c.h.b16 %v4305
        %v4401 = vunpack.c.l.b16 %v4306
        %v4402 = vunpack.c.l.b16 %v4307
        %v4403 = vunpack.c.h.b16 %v4307
        %v4404 = vunpack.c.l.b16 %v4308
        %v4405 = vunpack.c.l.b16 %v4309
        %v4406 = vunpack.c.h.b16 %v4309
        %v4407 = vunpack.c.l.b16 %v4310
        %v4408 = vpack.c.b16 %v4363, %v4360
        %v4409 = vpack.c.b16 %v4364, %v4361
        %v4410 = vpack.c.b16 %v4365, %v4362
        %v4411 = vpack.c.b16 %v4369, %v4366
        %v4412 = vpack.c.b16 %v4370, %v4367
        %v4413 = vpack.c.b16 %v4371, %v4368
        %v4414 = vpack.c.b16 %v4375, %v4372
        %v4415 = vpack.c.b16 %v4376, %v4373
        %v4416 = vpack.c.b16 %v4377, %v4374
        %v4417 = vpack.c.b16 %v4381, %v4378
        %v4418 = vpack.c.b16 %v4382, %v4379
        %v4419 = vpack.c.b16 %v4383, %v4380
        %v4420 = vpack.c.b16 %v4387, %v4384
        %v4421 = vpack.c.b16 %v4388, %v4385
        %v4422 = vpack.c.b16 %v4389, %v4386
        %v4423 = vpack.c.b16 %v4393, %v4390
        %v4424 = vpack.c.b16 %v4394, %v4391
        %v4425 = vpack.c.b16 %v4395, %v4392
        %v4426 = vpack.c.b16 %v4399, %v4396
        %v4427 = vpack.c.b16 %v4400, %v4397
        %v4428 = vpack.c.b16 %v4401, %v4398
        %v4429 = vpack.c.b16 %v4405, %v4402
        %v4430 = vpack.c.b16 %v4406, %v4403
        %v4431 = vpack.c.b16 %v4407, %v4404
        %4456 = vmatprep.subr.bf16.mxu0 %v4409
        %4457 = vmatpush1.bf16.msra.mxu0 %v4408
        %4458 = vmatprep.subr.bf16.mxu0 %v4412
        %4459 = vmatpush1.bf16.msra.mxu0 %v4411
        %4460 = vmatprep.subr.bf16.mxu0 %v4415
        %4461 = vmatpush1.bf16.msra.mxu0 %v4414
        %4462 = vmatprep.subr.bf16.mxu0 %v4418
        %4463 = vmatpush1.bf16.msra.mxu0 %v4417
        %4464 = vmatprep.subr.bf16.mxu0 %v4421
        %4465 = vmatpush1.bf16.msra.mxu0 %v4420
        %4466 = vmatprep.subr.bf16.mxu0 %v4424
        %4467 = vmatpush1.bf16.msra.mxu0 %v4423
        %4468 = vmatprep.subr.bf16.mxu0 %v4427
        %4469 = vmatpush1.bf16.msra.mxu0 %v4426
        %4470 = vmatprep.subr.bf16.mxu0 %v4430
        %4471 = vmatpush1.bf16.msra.mxu0 %v4429
        %4472 = vmatprep.subr.bf16.mxu0 0
        %4473 = vmatpush1.bf16.msra.mxu0 0
        %4474 = vmatprep.subr.bf16.mxu0 0
        %4475 = vmatpush1.bf16.msra.mxu0 0
        %4476 = vmatprep.subr.bf16.mxu0 0
        %4477 = vmatpush1.bf16.msra.mxu0 0
        %4478 = vmatprep.subr.bf16.mxu0 0
        %4479 = vmatpush1.bf16.msra.mxu0 0
        %4480 = vmatprep.subr.bf16.mxu0 0
        %4481 = vmatpush1.bf16.msra.mxu0 0
        %4482 = vmatprep.subr.bf16.mxu0 0
        %4483 = vmatpush1.bf16.msra.mxu0 0
        %4484 = vmatprep.subr.bf16.mxu0 0
        %4485 = vmatpush1.bf16.msra.mxu0 0
        %4486 = vmatprep.subr.bf16.mxu0 0
        %4487 = vmatpush1.bf16.msra.mxu0 0
        %4488 = vmatprep.mubr.bf16.mxu0 0
        %4489 = vmatmul.mubr.bf16.gmra.mrb[0].mxu0 %v4271
        %v4490 = vpop.f32.mrb[0].mxu0
        %v4491 = vadd.f32 %v4316, %v4490
        %v4492 = vpop.f32.mrb[0].mxu0
        %v4493 = vadd.f32 %v4320, %v4492
        %v4494 = vpop.f32.mrb[0].mxu0
        %v4495 = vadd.f32 %v4316, %v4494
        %v4496 = vpop.f32.mrb[0].mxu0
        %v4497 = vadd.f32 %v4320, %v4496
        %4498 = vmatprep.mubr.bf16.mxu0 0
        %4499 = vmatmul.mubr.bf16.gmra.mrb[0].mxu0 %v4272
        %v4500 = vpop.f32.mrb[0].mxu0
        %v4501 = vadd.f32 %v4316, %v4500
        %v4502 = vpop.f32.mrb[0].mxu0
        %v4503 = vadd.f32 %v4320, %v4502
        %v4504 = vpop.f32.mrb[0].mxu0
        %v4505 = vadd.f32 %v4316, %v4504
        %v4506 = vpop.f32.mrb[0].mxu0
        %v4507 = vadd.f32 %v4320, %v4506
        %4508 = vmatprep.mubr.bf16.mxu0 0
        %4509 = vmatmul.mubr.bf16.gmra.mrb[0].mxu0 %v4273
        %v4510 = vpop.f32.mrb[0].mxu0
        %v4511 = vadd.f32 %v4316, %v4510
        %v4512 = vpop.f32.mrb[0].mxu0
        %v4513 = vadd.f32 %v4320, %v4512
        %v4514 = vpop.f32.mrb[0].mxu0
        %v4515 = vadd.f32 %v4316, %v4514
        %v4516 = vpop.f32.mrb[0].mxu0
        %v4517 = vadd.f32 %v4320, %v4516
        %4518 = vmatprep.mubr.bf16.mxu0 0
        %4519 = vmatmul.mubr.bf16.gmra.mrb[0].mxu0 %v4274
        %v4520 = vpop.f32.mrb[0].mxu0
        %v4521 = vadd.f32 %v4316, %v4520
        %v4522 = vpop.f32.mrb[0].mxu0
        %v4523 = vadd.f32 %v4320, %v4522
        %v4524 = vpop.f32.mrb[0].mxu0
        %v4525 = vadd.f32 %v4316, %v4524
        %v4526 = vpop.f32.mrb[0].mxu0
        %v4527 = vadd.f32 %v4320, %v4526
        %4528 = vmatprep.mubr.bf16.mxu0 0
        %4529 = vmatmul.mubr.bf16.gmra.mrb[0].mxu0 %v4275
        %v4530 = vpop.f32.mrb[0].mxu0
        %v4531 = vadd.f32 %v4316, %v4530
        %v4532 = vpop.f32.mrb[0].mxu0
        %v4533 = vadd.f32 %v4320, %v4532
        %v4534 = vpop.f32.mrb[0].mxu0
        %v4535 = vadd.f32 %v4316, %v4534
        %v4536 = vpop.f32.mrb[0].mxu0
        %v4537 = vadd.f32 %v4320, %v4536
        %4538 = vmatprep.mubr.bf16.mxu0 0
        %4539 = vmatmul.mubr.bf16.gmra.mrb[0].mxu0 %v4276
        %v4540 = vpop.f32.mrb[0].mxu0
        %v4541 = vadd.f32 %v4316, %v4540
        %v4542 = vpop.f32.mrb[0].mxu0
        %v4543 = vadd.f32 %v4320, %v4542
        %v4544 = vpop.f32.mrb[0].mxu0
        %v4545 = vadd.f32 %v4316, %v4544
        %v4546 = vpop.f32.mrb[0].mxu0
        %v4547 = vadd.f32 %v4320, %v4546
        %4548 = vmatprep.mubr.bf16.mxu0 0
        %4549 = vmatmul.mubr.bf16.gmra.mrb[0].mxu0 %v4277
        %v4550 = vpop.f32.mrb[0].mxu0
        %v4551 = vadd.f32 %v4316, %v4550
        %v4552 = vpop.f32.mrb[0].mxu0
        %v4553 = vadd.f32 %v4320, %v4552
        %v4554 = vpop.f32.mrb[0].mxu0
        %v4555 = vadd.f32 %v4316, %v4554
        %v4556 = vpop.f32.mrb[0].mxu0
        %v4557 = vadd.f32 %v4320, %v4556
        %4558 = vmatprep.mubr.bf16.mxu0 0
        %4559 = vmatmul.mubr.bf16.gmra.mrb[0].mxu0 %v4278
        %v4560 = vpop.f32.mrb[0].mxu0
        %v4561 = vadd.f32 %v4316, %v4560
        %v4562 = vpop.f32.mrb[0].mxu0
        %v4563 = vadd.f32 %v4320, %v4562
        %v4564 = vpop.f32.mrb[0].mxu0
        %v4565 = vadd.f32 %v4316, %v4564
        %v4566 = vpop.f32.mrb[0].mxu0
        %v4567 = vadd.f32 %v4320, %v4566
        %4568 = vdwg.mxu0
        %4569 = vmatprep.subr.bf16.mxu0 0
        %4570 = vmatpush1.bf16.msra.mxu0 %v4410
        %4571 = vmatprep.subr.bf16.mxu0 0
        %4572 = vmatpush1.bf16.msra.mxu0 %v4413
        %4573 = vmatprep.subr.bf16.mxu0 0
        %4574 = vmatpush1.bf16.msra.mxu0 %v4416
        %4575 = vmatprep.subr.bf16.mxu0 0
        %4576 = vmatpush1.bf16.msra.mxu0 %v4419
        %4577 = vmatprep.subr.bf16.mxu0 0
        %4578 = vmatpush1.bf16.msra.mxu0 %v4422
        %4579 = vmatprep.subr.bf16.mxu0 0
        %4580 = vmatpush1.bf16.msra.mxu0 %v4425
        %4581 = vmatprep.subr.bf16.mxu0 0
        %4582 = vmatpush1.bf16.msra.mxu0 %v4428
        %4583 = vmatprep.subr.bf16.mxu0 0
        %4584 = vmatpush1.bf16.msra.mxu0 %v4431
        %4585 = vmatprep.subr.bf16.mxu0 0
        %4586 = vmatpush1.bf16.msra.mxu0 0
        %4587 = vmatprep.subr.bf16.mxu0 0
        %4588 = vmatpush1.bf16.msra.mxu0 0
        %4589 = vmatprep.subr.bf16.mxu0 0
        %4590 = vmatpush1.bf16.msra.mxu0 0
        %4591 = vmatprep.subr.bf16.mxu0 0
        %4592 = vmatpush1.bf16.msra.mxu0 0
        %4593 = vmatprep.subr.bf16.mxu0 0
        %4594 = vmatpush1.bf16.msra.mxu0 0
        %4595 = vmatprep.subr.bf16.mxu0 0
        %4596 = vmatpush1.bf16.msra.mxu0 0
        %4597 = vmatprep.subr.bf16.mxu0 0
        %4598 = vmatpush1.bf16.msra.mxu0 0
        %4599 = vmatprep.subr.bf16.mxu0 0
        %4600 = vmatpush1.bf16.msra.mxu0 0
        %4601 = vmatprep.mubr.bf16.mxu0 0
        %4602 = vmatmul.mubr.bf16.gmra.mrb[0].mxu0 %v4271
        %v4603 = vpop.f32.mrb[0].mxu0
        %v4604 = vadd.f32 %v4324, %v4603
        %v4605 = vpop.f32.mrb[0].mxu0
        %v4606 = vpop.f32.mrb[0].mxu0
        %v4607 = vadd.f32 %v4324, %v4606
        %v4608 = vpop.f32.mrb[0].mxu0
        %4609 = vmatprep.mubr.bf16.mxu0 0
        %4610 = vmatmul.mubr.bf16.gmra.mrb[0].mxu0 %v4272
        %v4611 = vpop.f32.mrb[0].mxu0
        %v4612 = vadd.f32 %v4324, %v4611
        %v4613 = vpop.f32.mrb[0].mxu0
        %v4614 = vpop.f32.mrb[0].mxu0
        %v4615 = vadd.f32 %v4324, %v4614
        %v4616 = vpop.f32.mrb[0].mxu0
        %4617 = vmatprep.mubr.bf16.mxu0 0
        %4618 = vmatmul.mubr.bf16.gmra.mrb[0].mxu0 %v4273
        %v4619 = vpop.f32.mrb[0].mxu0
        %v4620 = vadd.f32 %v4324, %v4619
        %v4621 = vpop.f32.mrb[0].mxu0
        %v4622 = vpop.f32.mrb[0].mxu0
        %v4623 = vadd.f32 %v4324, %v4622
        %v4624 = vpop.f32.mrb[0].mxu0
        %4625 = vmatprep.mubr.bf16.mxu0 0
        %4626 = vmatmul.mubr.bf16.gmra.mrb[0].mxu0 %v4274
        %v4627 = vpop.f32.mrb[0].mxu0
        %v4628 = vadd.f32 %v4324, %v4627
        %v4629 = vpop.f32.mrb[0].mxu0
        %v4630 = vpop.f32.mrb[0].mxu0
        %v4631 = vadd.f32 %v4324, %v4630
        %v4632 = vpop.f32.mrb[0].mxu0
        %4633 = vmatprep.mubr.bf16.mxu0 0
        %4634 = vmatmul.mubr.bf16.gmra.mrb[0].mxu0 %v4275
        %v4635 = vpop.f32.mrb[0].mxu0
        %v4636 = vadd.f32 %v4324, %v4635
        %v4637 = vpop.f32.mrb[0].mxu0
        %v4638 = vpop.f32.mrb[0].mxu0
        %v4639 = vadd.f32 %v4324, %v4638
        %v4640 = vpop.f32.mrb[0].mxu0
        %4641 = vmatprep.mubr.bf16.mxu0 0
        %4642 = vmatmul.mubr.bf16.gmra.mrb[0].mxu0 %v4276
        %v4643 = vpop.f32.mrb[0].mxu0
        %v4644 = vadd.f32 %v4324, %v4643
        %v4645 = vpop.f32.mrb[0].mxu0
        %v4646 = vpop.f32.mrb[0].mxu0
        %v4647 = vadd.f32 %v4324, %v4646
        %v4648 = vpop.f32.mrb[0].mxu0
        %4649 = vmatprep.mubr.bf16.mxu0 0
        %4650 = vmatmul.mubr.bf16.gmra.mrb[0].mxu0 %v4277
        %v4651 = vpop.f32.mrb[0].mxu0
        %v4652 = vadd.f32 %v4324, %v4651
        %v4653 = vpop.f32.mrb[0].mxu0
        %v4654 = vpop.f32.mrb[0].mxu0
        %v4655 = vadd.f32 %v4324, %v4654
        %v4656 = vpop.f32.mrb[0].mxu0
        %4657 = vmatprep.mubr.bf16.mxu0 0
        %4658 = vmatmul.mubr.bf16.gmra.mrb[0].mxu0 %v4278
        %v4659 = vpop.f32.mrb[0].mxu0
        %v4660 = vadd.f32 %v4324, %v4659
        %v4661 = vpop.f32.mrb[0].mxu0
        %v4662 = vpop.f32.mrb[0].mxu0
        %v4663 = vadd.f32 %v4324, %v4662
        %v4664 = vpop.f32.mrb[0].mxu0
        %4665 = vdwg.mxu0
        %v4666 = vmul.f32 %v4491, 0.01
        %v4667 = vmul.f32 %v4493, 0.01
        %v4668 = vmul.f32 %v4604, 0.01
        %v4669 = vmul.f32 %v4495, 0.01
        %v4670 = vmul.f32 %v4497, 0.01
        %v4671 = vmul.f32 %v4607, 0.01
        %v4672 = vmul.f32 %v4501, 0.01
        %v4673 = vmul.f32 %v4503, 0.01
        %v4674 = vmul.f32 %v4612, 0.01
        %v4675 = vmul.f32 %v4505, 0.01
        %v4676 = vmul.f32 %v4507, 0.01
        %v4677 = vmul.f32 %v4615, 0.01
        %v4678 = vmul.f32 %v4511, 0.01
        %v4679 = vmul.f32 %v4513, 0.01
        %v4680 = vmul.f32 %v4620, 0.01
        %v4681 = vmul.f32 %v4515, 0.01
        %v4682 = vmul.f32 %v4517, 0.01
        %v4683 = vmul.f32 %v4623, 0.01
        %v4684 = vmul.f32 %v4521, 0.01
        %v4685 = vmul.f32 %v4523, 0.01
        %v4686 = vmul.f32 %v4628, 0.01
        %v4687 = vmul.f32 %v4525, 0.01
        %v4688 = vmul.f32 %v4527, 0.01
        %v4689 = vmul.f32 %v4631, 0.01
        %v4690 = vmul.f32 %v4531, 0.01
        %v4691 = vmul.f32 %v4533, 0.01
        %v4692 = vmul.f32 %v4636, 0.01
        %v4693 = vmul.f32 %v4535, 0.01
        %v4694 = vmul.f32 %v4537, 0.01
        %v4695 = vmul.f32 %v4639, 0.01
        %v4696 = vmul.f32 %v4541, 0.01
        %v4697 = vmul.f32 %v4543, 0.01
        %v4698 = vmul.f32 %v4644, 0.01
        %v4699 = vmul.f32 %v4545, 0.01
        %v4700 = vmul.f32 %v4547, 0.01
        %v4701 = vmul.f32 %v4647, 0.01
        %v4702 = vmul.f32 %v4551, 0.01
        %v4703 = vmul.f32 %v4553, 0.01
        %v4704 = vmul.f32 %v4652, 0.01
        %v4705 = vmul.f32 %v4555, 0.01
        %v4706 = vmul.f32 %v4557, 0.01
        %v4707 = vmul.f32 %v4655, 0.01
        %v4708 = vmul.f32 %v4561, 0.01
        %v4709 = vmul.f32 %v4563, 0.01
        %v4710 = vmul.f32 %v4660, 0.01
        %v4711 = vmul.f32 %v4565, 0.01
        %v4712 = vmul.f32 %v4567, 0.01
        %v4713 = vmul.f32 %v4663, 0.01
        %v4714 = vmax.f32 %v4491, %v4666
        %v4715 = vmax.f32 %v4493, %v4667
        %v4716 = vmax.f32 %v4604, %v4668
        %v4717 = vmax.f32 %v4495, %v4669
        %v4718 = vmax.f32 %v4497, %v4670
        %v4719 = vmax.f32 %v4607, %v4671
        %v4720 = vmax.f32 %v4501, %v4672
        %v4721 = vmax.f32 %v4503, %v4673
        %v4722 = vmax.f32 %v4612, %v4674
        %v4723 = vmax.f32 %v4505, %v4675
        %v4724 = vmax.f32 %v4507, %v4676
        %v4725 = vmax.f32 %v4615, %v4677
        %v4726 = vmax.f32 %v4511, %v4678
        %v4727 = vmax.f32 %v4513, %v4679
        %v4728 = vmax.f32 %v4620, %v4680
        %v4729 = vmax.f32 %v4515, %v4681
        %v4730 = vmax.f32 %v4517, %v4682
        %v4731 = vmax.f32 %v4623, %v4683
        %v4732 = vmax.f32 %v4521, %v4684
        %v4733 = vmax.f32 %v4523, %v4685
        %v4734 = vmax.f32 %v4628, %v4686
        %v4735 = vmax.f32 %v4525, %v4687
        %v4736 = vmax.f32 %v4527, %v4688
        %v4737 = vmax.f32 %v4631, %v4689
        %v4738 = vmax.f32 %v4531, %v4690
        %v4739 = vmax.f32 %v4533, %v4691
        %v4740 = vmax.f32 %v4636, %v4692
        %v4741 = vmax.f32 %v4535, %v4693
        %v4742 = vmax.f32 %v4537, %v4694
        %v4743 = vmax.f32 %v4639, %v4695
        %v4744 = vmax.f32 %v4541, %v4696
        %v4745 = vmax.f32 %v4543, %v4697
        %v4746 = vmax.f32 %v4644, %v4698
        %v4747 = vmax.f32 %v4545, %v4699
        %v4748 = vmax.f32 %v4547, %v4700
        %v4749 = vmax.f32 %v4647, %v4701
        %v4750 = vmax.f32 %v4551, %v4702
        %v4751 = vmax.f32 %v4553, %v4703
        %v4752 = vmax.f32 %v4652, %v4704
        %v4753 = vmax.f32 %v4555, %v4705
        %v4754 = vmax.f32 %v4557, %v4706
        %v4755 = vmax.f32 %v4655, %v4707
        %v4756 = vmax.f32 %v4561, %v4708
        %v4757 = vmax.f32 %v4563, %v4709
        %v4758 = vmax.f32 %v4660, %v4710
        %v4759 = vmax.f32 %v4565, %v4711
        %v4760 = vmax.f32 %v4567, %v4712
        %v4761 = vmax.f32 %v4663, %v4713
        %v4762 = vpack.c.bf16 %v4717, %v4714
        %v4763 = vpack.c.bf16 %v4718, %v4715
        %v4764 = vpack.c.bf16 %v4719, %v4716
        %v4765 = vpack.c.bf16 %v4723, %v4720
        %v4766 = vpack.c.bf16 %v4724, %v4721
        %v4767 = vpack.c.bf16 %v4725, %v4722
        %v4768 = vpack.c.bf16 %v4729, %v4726
        %v4769 = vpack.c.bf16 %v4730, %v4727
        %v4770 = vpack.c.bf16 %v4731, %v4728
        %v4771 = vpack.c.bf16 %v4735, %v4732
        %v4772 = vpack.c.bf16 %v4736, %v4733
        %v4773 = vpack.c.bf16 %v4737, %v4734
        %v4774 = vpack.c.bf16 %v4741, %v4738
        %v4775 = vpack.c.bf16 %v4742, %v4739
        %v4776 = vpack.c.bf16 %v4743, %v4740
        %v4777 = vpack.c.bf16 %v4747, %v4744
        %v4778 = vpack.c.bf16 %v4748, %v4745
        %v4779 = vpack.c.bf16 %v4749, %v4746
        %v4780 = vpack.c.bf16 %v4753, %v4750
        %v4781 = vpack.c.bf16 %v4754, %v4751
        %v4782 = vpack.c.bf16 %v4755, %v4752
        %v4783 = vpack.c.bf16 %v4759, %v4756
        %v4784 = vpack.c.bf16 %v4760, %v4757
        %v4785 = vpack.c.bf16 %v4761, %v4758
        %v4786 = vld [vmem:[%s31] sm:$0xf]
        %v4787 = vld [vmem:[%s31 + $0x4] sm:$0xf]
        %v4788 = vld [vmem:[%s31 + $0x8] sm:$0xf]
        %v4789 = vld [vmem:[%s31 + $0xc] sm:$0xf]
        %v4790 = vld [vmem:[%s31 + $0x10] sm:$0xf]
        %v4791 = vld [vmem:[%s31 + $0x14] sm:$0xf]
        %v4792 = vld [vmem:[%s31 + $0x18] sm:$0xf]
        %v4793 = vld [vmem:[%s31 + $0x1c] sm:$0xf]
        %v4794 = vld [vmem:[%s31 + $0x20] sm:$0xf]
        %v4795 = vld [vmem:[%s31 + $0x24] sm:$0xf]
        %v4796 = vld [vmem:[%s31 + $0x28] sm:$0xf]
        %v4797 = vld [vmem:[%s31 + $0x2c] sm:$0xf]
        %v4798 = vld [vmem:[%s31 + $0x30] sm:$0xf]
        %v4799 = vld [vmem:[%s31 + $0x34] sm:$0xf]
        %v4800 = vld [vmem:[%s31 + $0x38] sm:$0xf]
        %v4801 = vld [vmem:[%s31 + $0x3c] sm:$0xf]
        %v4802 = vld [vmem:[%s31 + $0x40] sm:$0xf]
        %v4803 = vld [vmem:[%s31 + $0x44] sm:$0xf]
        %v4804 = vld [vmem:[%s31 + $0x48] sm:$0xf]
        %v4805 = vld [vmem:[%s31 + $0x4c] sm:$0xf]
        %v4806 = vld [vmem:[%s31 + $0x50] sm:$0xf]
        %v4807 = vld [vmem:[%s31 + $0x54] sm:$0xf]
        %v4808 = vld [vmem:[%s31 + $0x58] sm:$0xf]
        %v4809 = vld [vmem:[%s31 + $0x5c] sm:$0xf]
        %v4810 = vld [vmem:[%s31 + $0x60] sm:$0xf]
        %v4811 = vld [vmem:[%s31 + $0x64] sm:$0xf]
        %v4812 = vld [vmem:[%s31 + $0x68] sm:$0xf]
        %v4813 = vld [vmem:[%s31 + $0x6c] sm:$0xf]
        %v4814 = vld [vmem:[%s31 + $0x70] sm:$0xf]
        %v4815 = vld [vmem:[%s31 + $0x74] sm:$0xf]
        %v4816 = vld [vmem:[%s31 + $0x78] sm:$0xf]
        %v4817 = vld [vmem:[%s31 + $0x7c] sm:$0xf]
        %v4818 = vld [vmem:[%s31 + $0x80] sm:$0xf]
        %v4819 = vld [vmem:[%s31 + $0x84] sm:$0xf]
        %v4820 = vld [vmem:[%s31 + $0x88] sm:$0xf]
        %v4821 = vld [vmem:[%s31 + $0x8c] sm:$0xf]
        %v4822 = vld [vmem:[%s31 + $0x90] sm:$0xf]
        %v4823 = vld [vmem:[%s31 + $0x94] sm:$0xf]
        %v4824 = vld [vmem:[%s31 + $0x98] sm:$0xf]
        %v4825 = vld [vmem:[%s31 + $0x9c] sm:$0xf]
        %v4826 = vld [vmem:[%s31 + $0xa0] sm:$0xf]
        %v4827 = vld [vmem:[%s31 + $0xa4] sm:$0xf]
        %v4828 = vld [vmem:[%s31 + $0xa8] sm:$0xf]
        %v4829 = vld [vmem:[%s31 + $0xac] sm:$0xf]
        %v4830 = vld [vmem:[%s31 + $0xb0] sm:$0xf]
        %v4831 = vld [vmem:[%s31 + $0xb4] sm:$0xf]
        %v4832 = vld [vmem:[%s31 + $0xb8] sm:$0xf]
        %v4833 = vld [vmem:[%s31 + $0xbc] sm:$0xf]
        %v4834 = vld [vmem:[#allocation13] sm:$0x1]
        %v4836 = vlaneseq
        %v4837 = vshrl.u32 %v4836, 7
        %v4838 = vsub.s32 0, %v4837
        %v4839 = vrot.slane %v4834, %v4838
        %v4889 = vunpack.c.l.b16 %v4786
        %v4890 = vunpack.c.l.b16 %v4787
        %v4891 = vunpack.c.l.b16 %v4788
        %v4892 = vunpack.c.l.b16 %v4789
        %v4893 = vunpack.c.l.b16 %v4790
        %v4894 = vunpack.c.l.b16 %v4791
        %v4895 = vunpack.c.l.b16 %v4792
        %v4896 = vunpack.c.l.b16 %v4793
        %v4897 = vunpack.c.l.b16 %v4794
        %v4898 = vunpack.c.l.b16 %v4795
        %v4899 = vunpack.c.l.b16 %v4796
        %v4900 = vunpack.c.l.b16 %v4797
        %v4901 = vunpack.c.l.b16 %v4798
        %v4902 = vunpack.c.l.b16 %v4799
        %v4903 = vunpack.c.l.b16 %v4800
        %v4904 = vunpack.c.l.b16 %v4801
        %v4905 = vunpack.c.l.b16 %v4802
        %v4906 = vunpack.c.l.b16 %v4803
        %v4907 = vunpack.c.l.b16 %v4804
        %v4908 = vunpack.c.l.b16 %v4805
        %v4909 = vunpack.c.l.b16 %v4806
        %v4910 = vunpack.c.l.b16 %v4807
        %v4911 = vunpack.c.l.b16 %v4808
        %v4912 = vunpack.c.l.b16 %v4809
        %v4913 = vunpack.c.l.b16 %v4810
        %v4914 = vunpack.c.l.b16 %v4811
        %v4915 = vunpack.c.l.b16 %v4812
        %v4916 = vunpack.c.l.b16 %v4813
        %v4917 = vunpack.c.l.b16 %v4814
        %v4918 = vunpack.c.l.b16 %v4815
        %v4919 = vunpack.c.l.b16 %v4816
        %v4920 = vunpack.c.l.b16 %v4817
        %v4921 = vunpack.c.l.b16 %v4818
        %v4922 = vunpack.c.l.b16 %v4819
        %v4923 = vunpack.c.l.b16 %v4820
        %v4924 = vunpack.c.l.b16 %v4821
        %v4925 = vunpack.c.l.b16 %v4822
        %v4926 = vunpack.c.l.b16 %v4823
        %v4927 = vunpack.c.l.b16 %v4824
        %v4928 = vunpack.c.l.b16 %v4825
        %v4929 = vunpack.c.l.b16 %v4826
        %v4930 = vunpack.c.l.b16 %v4827
        %v4931 = vunpack.c.l.b16 %v4828
        %v4932 = vunpack.c.l.b16 %v4829
        %v4933 = vunpack.c.l.b16 %v4830
        %v4934 = vunpack.c.l.b16 %v4831
        %v4935 = vunpack.c.l.b16 %v4832
        %v4936 = vunpack.c.l.b16 %v4833
        %v4937 = vpack.c.b16 %v4890, %v4889
        %v4938 = vpack.c.b16 %v4892, %v4891
        %v4939 = vpack.c.b16 %v4894, %v4893
        %v4940 = vpack.c.b16 %v4896, %v4895
        %v4941 = vpack.c.b16 %v4898, %v4897
        %v4942 = vpack.c.b16 %v4900, %v4899
        %v4943 = vpack.c.b16 %v4902, %v4901
        %v4944 = vpack.c.b16 %v4904, %v4903
        %v4945 = vpack.c.b16 %v4906, %v4905
        %v4946 = vpack.c.b16 %v4908, %v4907
        %v4947 = vpack.c.b16 %v4910, %v4909
        %v4948 = vpack.c.b16 %v4912, %v4911
        %v4949 = vpack.c.b16 %v4914, %v4913
        %v4950 = vpack.c.b16 %v4916, %v4915
        %v4951 = vpack.c.b16 %v4918, %v4917
        %v4952 = vpack.c.b16 %v4920, %v4919
        %v4953 = vpack.c.b16 %v4922, %v4921
        %v4954 = vpack.c.b16 %v4924, %v4923
        %v4955 = vpack.c.b16 %v4926, %v4925
        %v4956 = vpack.c.b16 %v4928, %v4927
        %v4957 = vpack.c.b16 %v4930, %v4929
        %v4958 = vpack.c.b16 %v4932, %v4931
        %v4959 = vpack.c.b16 %v4934, %v4933
        %v4960 = vpack.c.b16 %v4936, %v4935
        %4985 = vmatprep.subr.bf16.mxu0 0
        %4986 = vmatpush1.bf16.msra.mxu0 %v4937
        %4987 = vmatprep.subr.bf16.mxu0 0
        %4988 = vmatpush1.bf16.msra.mxu0 %v4938
        %4989 = vmatprep.subr.bf16.mxu0 0
        %4990 = vmatpush1.bf16.msra.mxu0 %v4939
        %4991 = vmatprep.subr.bf16.mxu0 0
        %4992 = vmatpush1.bf16.msra.mxu0 %v4940
        %4993 = vmatprep.subr.bf16.mxu0 0
        %4994 = vmatpush1.bf16.msra.mxu0 %v4941
        %4995 = vmatprep.subr.bf16.mxu0 0
        %4996 = vmatpush1.bf16.msra.mxu0 %v4942
        %4997 = vmatprep.subr.bf16.mxu0 0
        %4998 = vmatpush1.bf16.msra.mxu0 %v4943
        %4999 = vmatprep.subr.bf16.mxu0 0
        %5000 = vmatpush1.bf16.msra.mxu0 %v4944
        %5001 = vmatprep.subr.bf16.mxu0 0
        %5002 = vmatpush1.bf16.msra.mxu0 %v4945
        %5003 = vmatprep.subr.bf16.mxu0 0
        %5004 = vmatpush1.bf16.msra.mxu0 %v4946
        %5005 = vmatprep.subr.bf16.mxu0 0
        %5006 = vmatpush1.bf16.msra.mxu0 %v4947
        %5007 = vmatprep.subr.bf16.mxu0 0
        %5008 = vmatpush1.bf16.msra.mxu0 %v4948
        %5009 = vmatprep.subr.bf16.mxu0 0
        %5010 = vmatpush1.bf16.msra.mxu0 %v4949
        %5011 = vmatprep.subr.bf16.mxu0 0
        %5012 = vmatpush1.bf16.msra.mxu0 %v4950
        %5013 = vmatprep.subr.bf16.mxu0 0
        %5014 = vmatpush1.bf16.msra.mxu0 %v4951
        %5015 = vmatprep.subr.bf16.mxu0 0
        %5016 = vmatpush1.bf16.msra.mxu0 %v4952
        %5017 = vmatprep.mubr.bf16.mxu0 %v4763
        %5018 = vmatmul.mubr.bf16.gmra.mrb[0].mxu0 %v4762
        %v5019 = vpop.f32.mrb[0].mxu0
        %v5020 = vadd.f32 %v4839, %v5019
        %v5021 = vpop.f32.mrb[0].mxu0
        %v5022 = vpop.f32.mrb[0].mxu0
        %v5023 = vadd.f32 %v4839, %v5022
        %v5024 = vpop.f32.mrb[0].mxu0
        %5025 = vmatprep.mubr.bf16.mxu0 %v4766
        %5026 = vmatmul.mubr.bf16.gmra.mrb[0].mxu0 %v4765
        %v5027 = vpop.f32.mrb[0].mxu0
        %v5028 = vadd.f32 %v4839, %v5027
        %v5029 = vpop.f32.mrb[0].mxu0
        %v5030 = vpop.f32.mrb[0].mxu0
        %v5031 = vadd.f32 %v4839, %v5030
        %v5032 = vpop.f32.mrb[0].mxu0
        %5033 = vmatprep.mubr.bf16.mxu0 %v4769
        %5034 = vmatmul.mubr.bf16.gmra.mrb[0].mxu0 %v4768
        %v5035 = vpop.f32.mrb[0].mxu0
        %v5036 = vadd.f32 %v4839, %v5035
        %v5037 = vpop.f32.mrb[0].mxu0
        %v5038 = vpop.f32.mrb[0].mxu0
        %v5039 = vadd.f32 %v4839, %v5038
        %v5040 = vpop.f32.mrb[0].mxu0
        %5041 = vmatprep.mubr.bf16.mxu0 %v4772
        %5042 = vmatmul.mubr.bf16.gmra.mrb[0].mxu0 %v4771
        %v5043 = vpop.f32.mrb[0].mxu0
        %v5044 = vadd.f32 %v4839, %v5043
        %v5045 = vpop.f32.mrb[0].mxu0
        %v5046 = vpop.f32.mrb[0].mxu0
        %v5047 = vadd.f32 %v4839, %v5046
        %v5048 = vpop.f32.mrb[0].mxu0
        %5049 = vmatprep.mubr.bf16.mxu0 %v4775
        %5050 = vmatmul.mubr.bf16.gmra.mrb[0].mxu0 %v4774
        %v5051 = vpop.f32.mrb[0].mxu0
        %v5052 = vadd.f32 %v4839, %v5051
        %v5053 = vpop.f32.mrb[0].mxu0
        %v5054 = vpop.f32.mrb[0].mxu0
        %v5055 = vadd.f32 %v4839, %v5054
        %v5056 = vpop.f32.mrb[0].mxu0
        %5057 = vmatprep.mubr.bf16.mxu0 %v4778
        %5058 = vmatmul.mubr.bf16.gmra.mrb[0].mxu0 %v4777
        %v5059 = vpop.f32.mrb[0].mxu0
        %v5060 = vadd.f32 %v4839, %v5059
        %v5061 = vpop.f32.mrb[0].mxu0
        %v5062 = vpop.f32.mrb[0].mxu0
        %v5063 = vadd.f32 %v4839, %v5062
        %v5064 = vpop.f32.mrb[0].mxu0
        %5065 = vmatprep.mubr.bf16.mxu0 %v4781
        %5066 = vmatmul.mubr.bf16.gmra.mrb[0].mxu0 %v4780
        %v5067 = vpop.f32.mrb[0].mxu0
        %v5068 = vadd.f32 %v4839, %v5067
        %v5069 = vpop.f32.mrb[0].mxu0
        %v5070 = vpop.f32.mrb[0].mxu0
        %v5071 = vadd.f32 %v4839, %v5070
        %v5072 = vpop.f32.mrb[0].mxu0
        %5073 = vmatprep.mubr.bf16.mxu0 %v4784
        %5074 = vmatmul.mubr.bf16.gmra.mrb[0].mxu0 %v4783
        %v5075 = vpop.f32.mrb[0].mxu0
        %v5076 = vadd.f32 %v4839, %v5075
        %v5077 = vpop.f32.mrb[0].mxu0
        %v5078 = vpop.f32.mrb[0].mxu0
        %v5079 = vadd.f32 %v4839, %v5078
        %v5080 = vpop.f32.mrb[0].mxu0
        %5081 = vdwg.mxu0
        %5082 = vmatprep.subr.bf16.mxu0 0
        %5083 = vmatpush1.bf16.msra.mxu0 %v4953
        %5084 = vmatprep.subr.bf16.mxu0 0
        %5085 = vmatpush1.bf16.msra.mxu0 %v4954
        %5086 = vmatprep.subr.bf16.mxu0 0
        %5087 = vmatpush1.bf16.msra.mxu0 %v4955
        %5088 = vmatprep.subr.bf16.mxu0 0
        %5089 = vmatpush1.bf16.msra.mxu0 %v4956
        %5090 = vmatprep.subr.bf16.mxu0 0
        %5091 = vmatpush1.bf16.msra.mxu0 %v4957
        %5092 = vmatprep.subr.bf16.mxu0 0
        %5093 = vmatpush1.bf16.msra.mxu0 %v4958
        %5094 = vmatprep.subr.bf16.mxu0 0
        %5095 = vmatpush1.bf16.msra.mxu0 %v4959
        %5096 = vmatprep.subr.bf16.mxu0 0
        %5097 = vmatpush1.bf16.msra.mxu0 %v4960
        %5098 = vmatprep.subr.bf16.mxu0 0
        %5099 = vmatpush1.bf16.msra.mxu0 0
        %5100 = vmatprep.subr.bf16.mxu0 0
        %5101 = vmatpush1.bf16.msra.mxu0 0
        %5102 = vmatprep.subr.bf16.mxu0 0
        %5103 = vmatpush1.bf16.msra.mxu0 0
        %5104 = vmatprep.subr.bf16.mxu0 0
        %5105 = vmatpush1.bf16.msra.mxu0 0
        %5106 = vmatprep.subr.bf16.mxu0 0
        %5107 = vmatpush1.bf16.msra.mxu0 0
        %5108 = vmatprep.subr.bf16.mxu0 0
        %5109 = vmatpush1.bf16.msra.mxu0 0
        %5110 = vmatprep.subr.bf16.mxu0 0
        %5111 = vmatpush1.bf16.msra.mxu0 0
        %5112 = vmatprep.subr.bf16.mxu0 0
        %5113 = vmatpush1.bf16.msra.mxu0 0
        %5114 = vmatprep.mubr.bf16.mxu0 0
        %5115 = vmatmul.mubr.bf16.gmra.mrb[0].mxu0 %v4764
        %v5116 = vpop.f32.mrb[0].mxu0
        %v5117 = vadd.f32 %v5020, %v5116
        %v5118 = vpop.f32.mrb[0].mxu0
        %v5119 = vpop.f32.mrb[0].mxu0
        %v5120 = vadd.f32 %v5023, %v5119
        %v5121 = vpop.f32.mrb[0].mxu0
        %5122 = vmatprep.mubr.bf16.mxu0 0
        %5123 = vmatmul.mubr.bf16.gmra.mrb[0].mxu0 %v4767
        %v5124 = vpop.f32.mrb[0].mxu0
        %v5125 = vadd.f32 %v5028, %v5124
        %v5126 = vpop.f32.mrb[0].mxu0
        %v5127 = vpop.f32.mrb[0].mxu0
        %v5128 = vadd.f32 %v5031, %v5127
        %v5129 = vpop.f32.mrb[0].mxu0
        %5130 = vmatprep.mubr.bf16.mxu0 0
        %5131 = vmatmul.mubr.bf16.gmra.mrb[0].mxu0 %v4770
        %v5132 = vpop.f32.mrb[0].mxu0
        %v5133 = vadd.f32 %v5036, %v5132
        %v5134 = vpop.f32.mrb[0].mxu0
        %v5135 = vpop.f32.mrb[0].mxu0
        %v5136 = vadd.f32 %v5039, %v5135
        %v5137 = vpop.f32.mrb[0].mxu0
        %5138 = vmatprep.mubr.bf16.mxu0 0
        %5139 = vmatmul.mubr.bf16.gmra.mrb[0].mxu0 %v4773
        %v5140 = vpop.f32.mrb[0].mxu0
        %v5141 = vadd.f32 %v5044, %v5140
        %v5142 = vpop.f32.mrb[0].mxu0
        %v5143 = vpop.f32.mrb[0].mxu0
        %v5144 = vadd.f32 %v5047, %v5143
        %v5145 = vpop.f32.mrb[0].mxu0
        %5146 = vmatprep.mubr.bf16.mxu0 0
        %5147 = vmatmul.mubr.bf16.gmra.mrb[0].mxu0 %v4776
        %v5148 = vpop.f32.mrb[0].mxu0
        %v5149 = vadd.f32 %v5052, %v5148
        %v5150 = vpop.f32.mrb[0].mxu0
        %v5151 = vpop.f32.mrb[0].mxu0
        %v5152 = vadd.f32 %v5055, %v5151
        %v5153 = vpop.f32.mrb[0].mxu0
        %5154 = vmatprep.mubr.bf16.mxu0 0
        %5155 = vmatmul.mubr.bf16.gmra.mrb[0].mxu0 %v4779
        %v5156 = vpop.f32.mrb[0].mxu0
        %v5157 = vadd.f32 %v5060, %v5156
        %v5158 = vpop.f32.mrb[0].mxu0
        %v5159 = vpop.f32.mrb[0].mxu0
        %v5160 = vadd.f32 %v5063, %v5159
        %v5161 = vpop.f32.mrb[0].mxu0
        %5162 = vmatprep.mubr.bf16.mxu0 0
        %5163 = vmatmul.mubr.bf16.gmra.mrb[0].mxu0 %v4782
        %v5164 = vpop.f32.mrb[0].mxu0
        %v5165 = vadd.f32 %v5068, %v5164
        %v5166 = vpop.f32.mrb[0].mxu0
        %v5167 = vpop.f32.mrb[0].mxu0
        %v5168 = vadd.f32 %v5071, %v5167
        %v5169 = vpop.f32.mrb[0].mxu0
        %5170 = vmatprep.mubr.bf16.mxu0 0
        %5171 = vmatmul.mubr.bf16.gmra.mrb[0].mxu0 %v4785
        %v5172 = vpop.f32.mrb[0].mxu0
        %v5173 = vadd.f32 %v5076, %v5172
        %v5174 = vpop.f32.mrb[0].mxu0
        %v5175 = vpop.f32.mrb[0].mxu0
        %v5176 = vadd.f32 %v5079, %v5175
        %v5177 = vpop.f32.mrb[0].mxu0
        %5178 = vdwg.mxu0
        %v5179 = vmul.f32 %v5117, 0.01
        %v5180 = vmul.f32 %v5120, 0.01
        %v5181 = vmul.f32 %v5125, 0.01
        %v5182 = vmul.f32 %v5128, 0.01
        %v5183 = vmul.f32 %v5133, 0.01
        %v5184 = vmul.f32 %v5136, 0.01
        %v5185 = vmul.f32 %v5141, 0.01
        %v5186 = vmul.f32 %v5144, 0.01
        %v5187 = vmul.f32 %v5149, 0.01
        %v5188 = vmul.f32 %v5152, 0.01
        %v5189 = vmul.f32 %v5157, 0.01
        %v5190 = vmul.f32 %v5160, 0.01
        %v5191 = vmul.f32 %v5165, 0.01
        %v5192 = vmul.f32 %v5168, 0.01
        %v5193 = vmul.f32 %v5173, 0.01
        %v5194 = vmul.f32 %v5176, 0.01
        %v5195 = vmax.f32 %v5117, %v5179
        %v5196 = vmax.f32 %v5120, %v5180
        %v5197 = vmax.f32 %v5125, %v5181
        %v5198 = vmax.f32 %v5128, %v5182
        %v5199 = vmax.f32 %v5133, %v5183
        %v5200 = vmax.f32 %v5136, %v5184
        %v5201 = vmax.f32 %v5141, %v5185
        %v5202 = vmax.f32 %v5144, %v5186
        %v5203 = vmax.f32 %v5149, %v5187
        %v5204 = vmax.f32 %v5152, %v5188
        %v5205 = vmax.f32 %v5157, %v5189
        %v5206 = vmax.f32 %v5160, %v5190
        %v5207 = vmax.f32 %v5165, %v5191
        %v5208 = vmax.f32 %v5168, %v5192
        %v5209 = vmax.f32 %v5173, %v5193
        %v5210 = vmax.f32 %v5176, %v5194
        %v5211 = vadd.f32 %v5195, %v3315
        %v5212 = vadd.f32 %v5196, %v3316
        %v5213 = vadd.f32 %v5197, %v3317
        %v5214 = vadd.f32 %v5198, %v3318
        %v5215 = vadd.f32 %v5199, %v3319
        %v5216 = vadd.f32 %v5200, %v3320
        %v5217 = vadd.f32 %v5201, %v3321
        %v5218 = vadd.f32 %v5202, %v3322
        %v5219 = vadd.f32 %v5203, %v3323
        %v5220 = vadd.f32 %v5204, %v3324
        %v5221 = vadd.f32 %v5205, %v3325
        %v5222 = vadd.f32 %v5206, %v3326
        %v5223 = vadd.f32 %v5207, %v3327
        %v5224 = vadd.f32 %v5208, %v3328
        %v5225 = vadd.f32 %v5209, %v3329
        %v5226 = vadd.f32 %v5210, %v3330
        %v5227 = vpack.c.bf16 %v5212, %v5211
        %v5228 = vpack.c.bf16 %v5214, %v5213
        %v5229 = vpack.c.bf16 %v5216, %v5215
        %v5230 = vpack.c.bf16 %v5218, %v5217
        %v5231 = vpack.c.bf16 %v5220, %v5219
        %v5232 = vpack.c.bf16 %v5222, %v5221
        %v5233 = vpack.c.bf16 %v5224, %v5223
        %v5234 = vpack.c.bf16 %v5226, %v5225
        %v5235 = vld [vmem:[#allocation15] sm:$0xf]
        %v5236 = vld [vmem:[#allocation15 + $0x4] sm:$0xf]
        %v5237 = vld [vmem:[#allocation15 + $0x8] sm:$0xf]
        %v5238 = vld [vmem:[#allocation15 + $0xc] sm:$0xf]
        %v5239 = vld [vmem:[#allocation15 + $0x10] sm:$0xf]
        %v5240 = vld [vmem:[#allocation15 + $0x14] sm:$0xf]
        %v5241 = vld [vmem:[#allocation15 + $0x18] sm:$0xf]
        %v5242 = vld [vmem:[#allocation15 + $0x1c] sm:$0xf]
        %v5243 = vld [vmem:[#allocation15 + $0x20] sm:$0xf]
        %v5244 = vld [vmem:[#allocation15 + $0x24] sm:$0xf]
        %v5245 = vld [vmem:[#allocation15 + $0x28] sm:$0xf]
        %v5246 = vld [vmem:[#allocation15 + $0x2c] sm:$0xf]
        %v5247 = vld [vmem:[#allocation15 + $0x30] sm:$0xf]
        %v5248 = vld [vmem:[#allocation15 + $0x34] sm:$0xf]
        %v5249 = vld [vmem:[#allocation15 + $0x38] sm:$0xf]
        %v5250 = vld [vmem:[#allocation15 + $0x3c] sm:$0xf]
        %v5251 = vld [vmem:[#allocation16] sm:$0x1]
        %v5253 = vlaneseq
        %v5254 = vshrl.u32 %v5253, 7
        %v5255 = vsub.s32 0, %v5254
        %v5256 = vrot.slane %v5251, %v5255
        %v5274 = vunpack.c.l.b16 %v5235
        %v5275 = vunpack.c.l.b16 %v5236
        %v5276 = vunpack.c.l.b16 %v5237
        %v5277 = vunpack.c.l.b16 %v5238
        %v5278 = vunpack.c.l.b16 %v5239
        %v5279 = vunpack.c.l.b16 %v5240
        %v5280 = vunpack.c.l.b16 %v5241
        %v5281 = vunpack.c.l.b16 %v5242
        %v5282 = vunpack.c.l.b16 %v5243
        %v5283 = vunpack.c.l.b16 %v5244
        %v5284 = vunpack.c.l.b16 %v5245
        %v5285 = vunpack.c.l.b16 %v5246
        %v5286 = vunpack.c.l.b16 %v5247
        %v5287 = vunpack.c.l.b16 %v5248
        %v5288 = vunpack.c.l.b16 %v5249
        %v5289 = vunpack.c.l.b16 %v5250
        %v5290 = vpack.c.b16 %v5275, %v5274
        %v5291 = vpack.c.b16 %v5277, %v5276
        %v5292 = vpack.c.b16 %v5279, %v5278
        %v5293 = vpack.c.b16 %v5281, %v5280
        %v5294 = vpack.c.b16 %v5283, %v5282
        %v5295 = vpack.c.b16 %v5285, %v5284
        %v5296 = vpack.c.b16 %v5287, %v5286
        %v5297 = vpack.c.b16 %v5289, %v5288
        %5306 = vmatprep.subr.bf16.mxu0 0
        %5307 = vmatpush1.bf16.msra.mxu0 %v5290
        %5308 = vmatprep.subr.bf16.mxu0 0
        %5309 = vmatpush1.bf16.msra.mxu0 %v5291
        %5310 = vmatprep.subr.bf16.mxu0 0
        %5311 = vmatpush1.bf16.msra.mxu0 %v5292
        %5312 = vmatprep.subr.bf16.mxu0 0
        %5313 = vmatpush1.bf16.msra.mxu0 %v5293
        %5314 = vmatprep.subr.bf16.mxu0 0
        %5315 = vmatpush1.bf16.msra.mxu0 %v5294
        %5316 = vmatprep.subr.bf16.mxu0 0
        %5317 = vmatpush1.bf16.msra.mxu0 %v5295
        %5318 = vmatprep.subr.bf16.mxu0 0
        %5319 = vmatpush1.bf16.msra.mxu0 %v5296
        %5320 = vmatprep.subr.bf16.mxu0 0
        %5321 = vmatpush1.bf16.msra.mxu0 %v5297
        %5322 = vmatprep.subr.bf16.mxu0 0
        %5323 = vmatpush1.bf16.msra.mxu0 0
        %5324 = vmatprep.subr.bf16.mxu0 0
        %5325 = vmatpush1.bf16.msra.mxu0 0
        %5326 = vmatprep.subr.bf16.mxu0 0
        %5327 = vmatpush1.bf16.msra.mxu0 0
        %5328 = vmatprep.subr.bf16.mxu0 0
        %5329 = vmatpush1.bf16.msra.mxu0 0
        %5330 = vmatprep.subr.bf16.mxu0 0
        %5331 = vmatpush1.bf16.msra.mxu0 0
        %5332 = vmatprep.subr.bf16.mxu0 0
        %5333 = vmatpush1.bf16.msra.mxu0 0
        %5334 = vmatprep.subr.bf16.mxu0 0
        %5335 = vmatpush1.bf16.msra.mxu0 0
        %5336 = vmatprep.subr.bf16.mxu0 0
        %5337 = vmatpush1.bf16.msra.mxu0 0
        %5338 = vmatprep.mubr.bf16.mxu0 0
        %5339 = vmatmul.mubr.bf16.gmra.mrb[0].mxu0 %v5227
        %v5340 = vpop.f32.mrb[0].mxu0
        %v5341 = vadd.f32 %v5256, %v5340
        %v5342 = vpop.f32.mrb[0].mxu0
        %v5343 = vpop.f32.mrb[0].mxu0
        %v5344 = vadd.f32 %v5256, %v5343
        %v5345 = vpop.f32.mrb[0].mxu0
        %5346 = vmatprep.mubr.bf16.mxu0 0
        %5347 = vmatmul.mubr.bf16.gmra.mrb[0].mxu0 %v5228
        %v5348 = vpop.f32.mrb[0].mxu0
        %v5349 = vadd.f32 %v5256, %v5348
        %v5350 = vpop.f32.mrb[0].mxu0
        %v5351 = vpop.f32.mrb[0].mxu0
        %v5352 = vadd.f32 %v5256, %v5351
        %v5353 = vpop.f32.mrb[0].mxu0
        %5354 = vmatprep.mubr.bf16.mxu0 0
        %5355 = vmatmul.mubr.bf16.gmra.mrb[0].mxu0 %v5229
        %v5356 = vpop.f32.mrb[0].mxu0
        %v5357 = vadd.f32 %v5256, %v5356
        %v5358 = vpop.f32.mrb[0].mxu0
        %v5359 = vpop.f32.mrb[0].mxu0
        %v5360 = vadd.f32 %v5256, %v5359
        %v5361 = vpop.f32.mrb[0].mxu0
        %5362 = vmatprep.mubr.bf16.mxu0 0
        %5363 = vmatmul.mubr.bf16.gmra.mrb[0].mxu0 %v5230
        %v5364 = vpop.f32.mrb[0].mxu0
        %v5365 = vadd.f32 %v5256, %v5364
        %v5366 = vpop.f32.mrb[0].mxu0
        %v5367 = vpop.f32.mrb[0].mxu0
        %v5368 = vadd.f32 %v5256, %v5367
        %v5369 = vpop.f32.mrb[0].mxu0
        %5370 = vmatprep.mubr.bf16.mxu0 0
        %5371 = vmatmul.mubr.bf16.gmra.mrb[0].mxu0 %v5231
        %v5372 = vpop.f32.mrb[0].mxu0
        %v5373 = vadd.f32 %v5256, %v5372
        %v5374 = vpop.f32.mrb[0].mxu0
        %v5375 = vpop.f32.mrb[0].mxu0
        %v5376 = vadd.f32 %v5256, %v5375
        %v5377 = vpop.f32.mrb[0].mxu0
        %5378 = vmatprep.mubr.bf16.mxu0 0
        %5379 = vmatmul.mubr.bf16.gmra.mrb[0].mxu0 %v5232
        %v5380 = vpop.f32.mrb[0].mxu0
        %v5381 = vadd.f32 %v5256, %v5380
        %v5382 = vpop.f32.mrb[0].mxu0
        %v5383 = vpop.f32.mrb[0].mxu0
        %v5384 = vadd.f32 %v5256, %v5383
        %v5385 = vpop.f32.mrb[0].mxu0
        %5386 = vmatprep.mubr.bf16.mxu0 0
        %5387 = vmatmul.mubr.bf16.gmra.mrb[0].mxu0 %v5233
        %v5388 = vpop.f32.mrb[0].mxu0
        %v5389 = vadd.f32 %v5256, %v5388
        %v5390 = vpop.f32.mrb[0].mxu0
        %v5391 = vpop.f32.mrb[0].mxu0
        %v5392 = vadd.f32 %v5256, %v5391
        %v5393 = vpop.f32.mrb[0].mxu0
        %5394 = vmatprep.mubr.bf16.mxu0 0
        %5395 = vmatmul.mubr.bf16.gmra.mrb[0].mxu0 %v5234
        %v5396 = vpop.f32.mrb[0].mxu0
        %v5397 = vadd.f32 %v5256, %v5396
        %v5398 = vpop.f32.mrb[0].mxu0
        %v5399 = vpop.f32.mrb[0].mxu0
        %v5400 = vadd.f32 %v5256, %v5399
        %v5401 = vpop.f32.mrb[0].mxu0
        %5402 = vdwg.mxu0
        %v5403 = vpack.c.bf16 %v5344, %v5341
        %v5404 = vpack.c.bf16 %v5352, %v5349
        %v5405 = vpack.c.bf16 %v5360, %v5357
        %v5406 = vpack.c.bf16 %v5368, %v5365
        %v5407 = vpack.c.bf16 %v5376, %v5373
        %v5408 = vpack.c.bf16 %v5384, %v5381
        %v5409 = vpack.c.bf16 %v5392, %v5389
        %v5410 = vpack.c.bf16 %v5400, %v5397
        %v5411 = vld [vmem:[#allocation18] sm:$0xff]
        %v5412 = vld [vmem:[#allocation18 + $0x8] sm:$0xff]
        %v5413 = vld [vmem:[#allocation18 + $0x10] sm:$0xff]
        %v5414 = vld [vmem:[#allocation18 + $0x18] sm:$0xff]
        %v5415 = vld [vmem:[#allocation18 + $0x20] sm:$0xff]
        %v5416 = vld [vmem:[#allocation18 + $0x28] sm:$0xff]
        %v5417 = vld [vmem:[#allocation18 + $0x30] sm:$0xff]
        %v5418 = vld [vmem:[#allocation18 + $0x38] sm:$0xff]
        %v5419 = vld [vmem:[#allocation18 + $0x40] sm:$0xff]
        %v5420 = vld [vmem:[#allocation18 + $0x48] sm:$0xff]
        %v5421 = vld [vmem:[#allocation18 + $0x50] sm:$0xff]
        %v5422 = vld [vmem:[#allocation18 + $0x58] sm:$0xff]
        %v5423 = vld [vmem:[#allocation18 + $0x60] sm:$0xff]
        %v5424 = vld [vmem:[#allocation18 + $0x68] sm:$0xff]
        %v5425 = vld [vmem:[#allocation18 + $0x70] sm:$0xff]
        %v5426 = vld [vmem:[#allocation18 + $0x78] sm:$0xff]
        %v5427 = vld [vmem:[#allocation19] sm:$0x3]
        %v5429 = vlaneseq
        %v5430 = vshrl.u32 %v5429, 7
        %v5431 = vsub.s32 0, %v5430
        %v5432 = vrot.slane %v5427, %v5431
        %v5433 = vlaneseq
        %v5434 = vshrl.u32 %v5433, 7
        %v5435 = vsub.s32 1, %v5434
        %v5436 = vrot.slane %v5427, %v5435
        %v5455 = vunpack.c.l.b16 %v5411
        %v5456 = vunpack.c.h.b16 %v5411
        %v5457 = vunpack.c.l.b16 %v5412
        %v5458 = vunpack.c.h.b16 %v5412
        %v5459 = vunpack.c.l.b16 %v5413
        %v5460 = vunpack.c.h.b16 %v5413
        %v5461 = vunpack.c.l.b16 %v5414
        %v5462 = vunpack.c.h.b16 %v5414
        %v5463 = vunpack.c.l.b16 %v5415
        %v5464 = vunpack.c.h.b16 %v5415
        %v5465 = vunpack.c.l.b16 %v5416
        %v5466 = vunpack.c.h.b16 %v5416
        %v5467 = vunpack.c.l.b16 %v5417
        %v5468 = vunpack.c.h.b16 %v5417
        %v5469 = vunpack.c.l.b16 %v5418
        %v5470 = vunpack.c.h.b16 %v5418
        %v5471 = vunpack.c.l.b16 %v5419
        %v5472 = vunpack.c.h.b16 %v5419
        %v5473 = vunpack.c.l.b16 %v5420
        %v5474 = vunpack.c.h.b16 %v5420
        %v5475 = vunpack.c.l.b16 %v5421
        %v5476 = vunpack.c.h.b16 %v5421
        %v5477 = vunpack.c.l.b16 %v5422
        %v5478 = vunpack.c.h.b16 %v5422
        %v5479 = vunpack.c.l.b16 %v5423
        %v5480 = vunpack.c.h.b16 %v5423
        %v5481 = vunpack.c.l.b16 %v5424
        %v5482 = vunpack.c.h.b16 %v5424
        %v5483 = vunpack.c.l.b16 %v5425
        %v5484 = vunpack.c.h.b16 %v5425
        %v5485 = vunpack.c.l.b16 %v5426
        %v5486 = vunpack.c.h.b16 %v5426
        %v5487 = vpack.c.b16 %v5457, %v5455
        %v5488 = vpack.c.b16 %v5458, %v5456
        %v5489 = vpack.c.b16 %v5461, %v5459
        %v5490 = vpack.c.b16 %v5462, %v5460
        %v5491 = vpack.c.b16 %v5465, %v5463
        %v5492 = vpack.c.b16 %v5466, %v5464
        %v5493 = vpack.c.b16 %v5469, %v5467
        %v5494 = vpack.c.b16 %v5470, %v5468
        %v5495 = vpack.c.b16 %v5473, %v5471
        %v5496 = vpack.c.b16 %v5474, %v5472
        %v5497 = vpack.c.b16 %v5477, %v5475
        %v5498 = vpack.c.b16 %v5478, %v5476
        %v5499 = vpack.c.b16 %v5481, %v5479
        %v5500 = vpack.c.b16 %v5482, %v5480
        %v5501 = vpack.c.b16 %v5485, %v5483
        %v5502 = vpack.c.b16 %v5486, %v5484
        %5519 = vmatprep.subr.bf16.mxu0 %v5488
        %5520 = vmatpush1.bf16.msra.mxu0 %v5487
        %5521 = vmatprep.subr.bf16.mxu0 %v5490
        %5522 = vmatpush1.bf16.msra.mxu0 %v5489
        %5523 = vmatprep.subr.bf16.mxu0 %v5492
        %5524 = vmatpush1.bf16.msra.mxu0 %v5491
        %5525 = vmatprep.subr.bf16.mxu0 %v5494
        %5526 = vmatpush1.bf16.msra.mxu0 %v5493
        %5527 = vmatprep.subr.bf16.mxu0 %v5496
        %5528 = vmatpush1.bf16.msra.mxu0 %v5495
        %5529 = vmatprep.subr.bf16.mxu0 %v5498
        %5530 = vmatpush1.bf16.msra.mxu0 %v5497
        %5531 = vmatprep.subr.bf16.mxu0 %v5500
        %5532 = vmatpush1.bf16.msra.mxu0 %v5499
        %5533 = vmatprep.subr.bf16.mxu0 %v5502
        %5534 = vmatpush1.bf16.msra.mxu0 %v5501
        %5535 = vmatprep.subr.bf16.mxu0 0
        %5536 = vmatpush1.bf16.msra.mxu0 0
        %5537 = vmatprep.subr.bf16.mxu0 0
        %5538 = vmatpush1.bf16.msra.mxu0 0
        %5539 = vmatprep.subr.bf16.mxu0 0
        %5540 = vmatpush1.bf16.msra.mxu0 0
        %5541 = vmatprep.subr.bf16.mxu0 0
        %5542 = vmatpush1.bf16.msra.mxu0 0
        %5543 = vmatprep.subr.bf16.mxu0 0
        %5544 = vmatpush1.bf16.msra.mxu0 0
        %5545 = vmatprep.subr.bf16.mxu0 0
        %5546 = vmatpush1.bf16.msra.mxu0 0
        %5547 = vmatprep.subr.bf16.mxu0 0
        %5548 = vmatpush1.bf16.msra.mxu0 0
        %5549 = vmatprep.subr.bf16.mxu0 0
        %5550 = vmatpush1.bf16.msra.mxu0 0
        %5551 = vmatprep.mubr.bf16.mxu0 0
        %5552 = vmatmul.mubr.bf16.gmra.mrb[0].mxu0 %v5403
        %v5553 = vpop.f32.mrb[0].mxu0
        %v5554 = vadd.f32 %v5432, %v5553
        %v5555 = vpop.f32.mrb[0].mxu0
        %v5556 = vadd.f32 %v5436, %v5555
        %v5557 = vpop.f32.mrb[0].mxu0
        %v5558 = vadd.f32 %v5432, %v5557
        %v5559 = vpop.f32.mrb[0].mxu0
        %v5560 = vadd.f32 %v5436, %v5559
        %5561 = vmatprep.mubr.bf16.mxu0 0
        %5562 = vmatmul.mubr.bf16.gmra.mrb[0].mxu0 %v5404
        %v5563 = vpop.f32.mrb[0].mxu0
        %v5564 = vadd.f32 %v5432, %v5563
        %v5565 = vpop.f32.mrb[0].mxu0
        %v5566 = vadd.f32 %v5436, %v5565
        %v5567 = vpop.f32.mrb[0].mxu0
        %v5568 = vadd.f32 %v5432, %v5567
        %v5569 = vpop.f32.mrb[0].mxu0
        %v5570 = vadd.f32 %v5436, %v5569
        %5571 = vmatprep.mubr.bf16.mxu0 0
        %5572 = vmatmul.mubr.bf16.gmra.mrb[0].mxu0 %v5405
        %v5573 = vpop.f32.mrb[0].mxu0
        %v5574 = vadd.f32 %v5432, %v5573
        %v5575 = vpop.f32.mrb[0].mxu0
        %v5576 = vadd.f32 %v5436, %v5575
        %v5577 = vpop.f32.mrb[0].mxu0
        %v5578 = vadd.f32 %v5432, %v5577
        %v5579 = vpop.f32.mrb[0].mxu0
        %v5580 = vadd.f32 %v5436, %v5579
        %5581 = vmatprep.mubr.bf16.mxu0 0
        %5582 = vmatmul.mubr.bf16.gmra.mrb[0].mxu0 %v5406
        %v5583 = vpop.f32.mrb[0].mxu0
        %v5584 = vadd.f32 %v5432, %v5583
        %v5585 = vpop.f32.mrb[0].mxu0
        %v5586 = vadd.f32 %v5436, %v5585
        %v5587 = vpop.f32.mrb[0].mxu0
        %v5588 = vadd.f32 %v5432, %v5587
        %v5589 = vpop.f32.mrb[0].mxu0
        %v5590 = vadd.f32 %v5436, %v5589
        %5591 = vmatprep.mubr.bf16.mxu0 0
        %5592 = vmatmul.mubr.bf16.gmra.mrb[0].mxu0 %v5407
        %v5593 = vpop.f32.mrb[0].mxu0
        %v5594 = vadd.f32 %v5432, %v5593
        %v5595 = vpop.f32.mrb[0].mxu0
        %v5596 = vadd.f32 %v5436, %v5595
        %v5597 = vpop.f32.mrb[0].mxu0
        %v5598 = vadd.f32 %v5432, %v5597
        %v5599 = vpop.f32.mrb[0].mxu0
        %v5600 = vadd.f32 %v5436, %v5599
        %5601 = vmatprep.mubr.bf16.mxu0 0
        %5602 = vmatmul.mubr.bf16.gmra.mrb[0].mxu0 %v5408
        %v5603 = vpop.f32.mrb[0].mxu0
        %v5604 = vadd.f32 %v5432, %v5603
        %v5605 = vpop.f32.mrb[0].mxu0
        %v5606 = vadd.f32 %v5436, %v5605
        %v5607 = vpop.f32.mrb[0].mxu0
        %v5608 = vadd.f32 %v5432, %v5607
        %v5609 = vpop.f32.mrb[0].mxu0
        %v5610 = vadd.f32 %v5436, %v5609
        %5611 = vmatprep.mubr.bf16.mxu0 0
        %5612 = vmatmul.mubr.bf16.gmra.mrb[0].mxu0 %v5409
        %v5613 = vpop.f32.mrb[0].mxu0
        %v5614 = vadd.f32 %v5432, %v5613
        %v5615 = vpop.f32.mrb[0].mxu0
        %v5616 = vadd.f32 %v5436, %v5615
        %v5617 = vpop.f32.mrb[0].mxu0
        %v5618 = vadd.f32 %v5432, %v5617
        %v5619 = vpop.f32.mrb[0].mxu0
        %v5620 = vadd.f32 %v5436, %v5619
        %5621 = vmatprep.mubr.bf16.mxu0 0
        %5622 = vmatmul.mubr.bf16.gmra.mrb[0].mxu0 %v5410
        %v5623 = vpop.f32.mrb[0].mxu0
        %v5624 = vadd.f32 %v5432, %v5623
        %v5625 = vpop.f32.mrb[0].mxu0
        %v5626 = vadd.f32 %v5436, %v5625
        %v5627 = vpop.f32.mrb[0].mxu0
        %v5628 = vadd.f32 %v5432, %v5627
        %v5629 = vpop.f32.mrb[0].mxu0
        %v5630 = vadd.f32 %v5436, %v5629
        %5631 = vdwg.mxu0
        %v5632 = vmul.f32 %v5554, 0.01
        %v5633 = vmul.f32 %v5556, 0.01
        %v5634 = vmul.f32 %v5558, 0.01
        %v5635 = vmul.f32 %v5560, 0.01
        %v5636 = vmul.f32 %v5564, 0.01
        %v5637 = vmul.f32 %v5566, 0.01
        %v5638 = vmul.f32 %v5568, 0.01
        %v5639 = vmul.f32 %v5570, 0.01
        %v5640 = vmul.f32 %v5574, 0.01
        %v5641 = vmul.f32 %v5576, 0.01
        %v5642 = vmul.f32 %v5578, 0.01
        %v5643 = vmul.f32 %v5580, 0.01
        %v5644 = vmul.f32 %v5584, 0.01
        %v5645 = vmul.f32 %v5586, 0.01
        %v5646 = vmul.f32 %v5588, 0.01
        %v5647 = vmul.f32 %v5590, 0.01
        %v5648 = vmul.f32 %v5594, 0.01
        %v5649 = vmul.f32 %v5596, 0.01
        %v5650 = vmul.f32 %v5598, 0.01
        %v5651 = vmul.f32 %v5600, 0.01
        %v5652 = vmul.f32 %v5604, 0.01
        %v5653 = vmul.f32 %v5606, 0.01
        %v5654 = vmul.f32 %v5608, 0.01
        %v5655 = vmul.f32 %v5610, 0.01
        %v5656 = vmul.f32 %v5614, 0.01
        %v5657 = vmul.f32 %v5616, 0.01
        %v5658 = vmul.f32 %v5618, 0.01
        %v5659 = vmul.f32 %v5620, 0.01
        %v5660 = vmul.f32 %v5624, 0.01
        %v5661 = vmul.f32 %v5626, 0.01
        %v5662 = vmul.f32 %v5628, 0.01
        %v5663 = vmul.f32 %v5630, 0.01
        %v5664 = vmax.f32 %v5554, %v5632
        %v5665 = vmax.f32 %v5556, %v5633
        %v5666 = vmax.f32 %v5558, %v5634
        %v5667 = vmax.f32 %v5560, %v5635
        %v5668 = vmax.f32 %v5564, %v5636
        %v5669 = vmax.f32 %v5566, %v5637
        %v5670 = vmax.f32 %v5568, %v5638
        %v5671 = vmax.f32 %v5570, %v5639
        %v5672 = vmax.f32 %v5574, %v5640
        %v5673 = vmax.f32 %v5576, %v5641
        %v5674 = vmax.f32 %v5578, %v5642
        %v5675 = vmax.f32 %v5580, %v5643
        %v5676 = vmax.f32 %v5584, %v5644
        %v5677 = vmax.f32 %v5586, %v5645
        %v5678 = vmax.f32 %v5588, %v5646
        %v5679 = vmax.f32 %v5590, %v5647
        %v5680 = vmax.f32 %v5594, %v5648
        %v5681 = vmax.f32 %v5596, %v5649
        %v5682 = vmax.f32 %v5598, %v5650
        %v5683 = vmax.f32 %v5600, %v5651
        %v5684 = vmax.f32 %v5604, %v5652
        %v5685 = vmax.f32 %v5606, %v5653
        %v5686 = vmax.f32 %v5608, %v5654
        %v5687 = vmax.f32 %v5610, %v5655
        %v5688 = vmax.f32 %v5614, %v5656
        %v5689 = vmax.f32 %v5616, %v5657
        %v5690 = vmax.f32 %v5618, %v5658
        %v5691 = vmax.f32 %v5620, %v5659
        %v5692 = vmax.f32 %v5624, %v5660
        %v5693 = vmax.f32 %v5626, %v5661
        %v5694 = vmax.f32 %v5628, %v5662
        %v5695 = vmax.f32 %v5630, %v5663
        %v5696 = vpack.c.bf16 %v5666, %v5664
        %v5697 = vpack.c.bf16 %v5667, %v5665
        %v5698 = vpack.c.bf16 %v5670, %v5668
        %v5699 = vpack.c.bf16 %v5671, %v5669
        %v5700 = vpack.c.bf16 %v5674, %v5672
        %v5701 = vpack.c.bf16 %v5675, %v5673
        %v5702 = vpack.c.bf16 %v5678, %v5676
        %v5703 = vpack.c.bf16 %v5679, %v5677
        %v5704 = vpack.c.bf16 %v5682, %v5680
        %v5705 = vpack.c.bf16 %v5683, %v5681
        %v5706 = vpack.c.bf16 %v5686, %v5684
        %v5707 = vpack.c.bf16 %v5687, %v5685
        %v5708 = vpack.c.bf16 %v5690, %v5688
        %v5709 = vpack.c.bf16 %v5691, %v5689
        %v5710 = vpack.c.bf16 %v5694, %v5692
        %v5711 = vpack.c.bf16 %v5695, %v5693
        %v5712 = vld [vmem:[#allocation21] sm:$0xf]
        %v5713 = vld [vmem:[#allocation21 + $0x4] sm:$0xf]
        %v5714 = vld [vmem:[#allocation21 + $0x8] sm:$0xf]
        %v5715 = vld [vmem:[#allocation21 + $0xc] sm:$0xf]
        %v5716 = vld [vmem:[#allocation21 + $0x10] sm:$0xf]
        %v5717 = vld [vmem:[#allocation21 + $0x14] sm:$0xf]
        %v5718 = vld [vmem:[#allocation21 + $0x18] sm:$0xf]
        %v5719 = vld [vmem:[#allocation21 + $0x1c] sm:$0xf]
        %v5720 = vld [vmem:[#allocation21 + $0x20] sm:$0xf]
        %v5721 = vld [vmem:[#allocation21 + $0x24] sm:$0xf]
        %v5722 = vld [vmem:[#allocation21 + $0x28] sm:$0xf]
        %v5723 = vld [vmem:[#allocation21 + $0x2c] sm:$0xf]
        %v5724 = vld [vmem:[#allocation21 + $0x30] sm:$0xf]
        %v5725 = vld [vmem:[#allocation21 + $0x34] sm:$0xf]
        %v5726 = vld [vmem:[#allocation21 + $0x38] sm:$0xf]
        %v5727 = vld [vmem:[#allocation21 + $0x3c] sm:$0xf]
        %v5728 = vld [vmem:[#allocation21 + $0x40] sm:$0xf]
        %v5729 = vld [vmem:[#allocation21 + $0x44] sm:$0xf]
        %v5730 = vld [vmem:[#allocation21 + $0x48] sm:$0xf]
        %v5731 = vld [vmem:[#allocation21 + $0x4c] sm:$0xf]
        %v5732 = vld [vmem:[#allocation21 + $0x50] sm:$0xf]
        %v5733 = vld [vmem:[#allocation21 + $0x54] sm:$0xf]
        %v5734 = vld [vmem:[#allocation21 + $0x58] sm:$0xf]
        %v5735 = vld [vmem:[#allocation21 + $0x5c] sm:$0xf]
        %v5736 = vld [vmem:[#allocation21 + $0x60] sm:$0xf]
        %v5737 = vld [vmem:[#allocation21 + $0x64] sm:$0xf]
        %v5738 = vld [vmem:[#allocation21 + $0x68] sm:$0xf]
        %v5739 = vld [vmem:[#allocation21 + $0x6c] sm:$0xf]
        %v5740 = vld [vmem:[#allocation21 + $0x70] sm:$0xf]
        %v5741 = vld [vmem:[#allocation21 + $0x74] sm:$0xf]
        %v5742 = vld [vmem:[#allocation21 + $0x78] sm:$0xf]
        %v5743 = vld [vmem:[#allocation21 + $0x7c] sm:$0xf]
        %v5744 = vld [vmem:[#allocation22] sm:$0x1]
        %v5746 = vlaneseq
        %v5747 = vshrl.u32 %v5746, 7
        %v5748 = vsub.s32 0, %v5747
        %v5749 = vrot.slane %v5744, %v5748
        %v5783 = vunpack.c.l.b16 %v5712
        %v5784 = vunpack.c.l.b16 %v5713
        %v5785 = vunpack.c.l.b16 %v5714
        %v5786 = vunpack.c.l.b16 %v5715
        %v5787 = vunpack.c.l.b16 %v5716
        %v5788 = vunpack.c.l.b16 %v5717
        %v5789 = vunpack.c.l.b16 %v5718
        %v5790 = vunpack.c.l.b16 %v5719
        %v5791 = vunpack.c.l.b16 %v5720
        %v5792 = vunpack.c.l.b16 %v5721
        %v5793 = vunpack.c.l.b16 %v5722
        %v5794 = vunpack.c.l.b16 %v5723
        %v5795 = vunpack.c.l.b16 %v5724
        %v5796 = vunpack.c.l.b16 %v5725
        %v5797 = vunpack.c.l.b16 %v5726
        %v5798 = vunpack.c.l.b16 %v5727
        %v5799 = vunpack.c.l.b16 %v5728
        %v5800 = vunpack.c.l.b16 %v5729
        %v5801 = vunpack.c.l.b16 %v5730
        %v5802 = vunpack.c.l.b16 %v5731
        %v5803 = vunpack.c.l.b16 %v5732
        %v5804 = vunpack.c.l.b16 %v5733
        %v5805 = vunpack.c.l.b16 %v5734
        %v5806 = vunpack.c.l.b16 %v5735
        %v5807 = vunpack.c.l.b16 %v5736
        %v5808 = vunpack.c.l.b16 %v5737
        %v5809 = vunpack.c.l.b16 %v5738
        %v5810 = vunpack.c.l.b16 %v5739
        %v5811 = vunpack.c.l.b16 %v5740
        %v5812 = vunpack.c.l.b16 %v5741
        %v5813 = vunpack.c.l.b16 %v5742
        %v5814 = vunpack.c.l.b16 %v5743
        %v5815 = vpack.c.b16 %v5784, %v5783
        %v5816 = vpack.c.b16 %v5786, %v5785
        %v5817 = vpack.c.b16 %v5788, %v5787
        %v5818 = vpack.c.b16 %v5790, %v5789
        %v5819 = vpack.c.b16 %v5792, %v5791
        %v5820 = vpack.c.b16 %v5794, %v5793
        %v5821 = vpack.c.b16 %v5796, %v5795
        %v5822 = vpack.c.b16 %v5798, %v5797
        %v5823 = vpack.c.b16 %v5800, %v5799
        %v5824 = vpack.c.b16 %v5802, %v5801
        %v5825 = vpack.c.b16 %v5804, %v5803
        %v5826 = vpack.c.b16 %v5806, %v5805
        %v5827 = vpack.c.b16 %v5808, %v5807
        %v5828 = vpack.c.b16 %v5810, %v5809
        %v5829 = vpack.c.b16 %v5812, %v5811
        %v5830 = vpack.c.b16 %v5814, %v5813
        %5847 = vmatprep.subr.bf16.mxu0 0
        %5848 = vmatpush1.bf16.msra.mxu0 %v5815
        %5849 = vmatprep.subr.bf16.mxu0 0
        %5850 = vmatpush1.bf16.msra.mxu0 %v5816
        %5851 = vmatprep.subr.bf16.mxu0 0
        %5852 = vmatpush1.bf16.msra.mxu0 %v5817
        %5853 = vmatprep.subr.bf16.mxu0 0
        %5854 = vmatpush1.bf16.msra.mxu0 %v5818
        %5855 = vmatprep.subr.bf16.mxu0 0
        %5856 = vmatpush1.bf16.msra.mxu0 %v5819
        %5857 = vmatprep.subr.bf16.mxu0 0
        %5858 = vmatpush1.bf16.msra.mxu0 %v5820
        %5859 = vmatprep.subr.bf16.mxu0 0
        %5860 = vmatpush1.bf16.msra.mxu0 %v5821
        %5861 = vmatprep.subr.bf16.mxu0 0
        %5862 = vmatpush1.bf16.msra.mxu0 %v5822
        %5863 = vmatprep.subr.bf16.mxu0 0
        %5864 = vmatpush1.bf16.msra.mxu0 %v5823
        %5865 = vmatprep.subr.bf16.mxu0 0
        %5866 = vmatpush1.bf16.msra.mxu0 %v5824
        %5867 = vmatprep.subr.bf16.mxu0 0
        %5868 = vmatpush1.bf16.msra.mxu0 %v5825
        %5869 = vmatprep.subr.bf16.mxu0 0
        %5870 = vmatpush1.bf16.msra.mxu0 %v5826
        %5871 = vmatprep.subr.bf16.mxu0 0
        %5872 = vmatpush1.bf16.msra.mxu0 %v5827
        %5873 = vmatprep.subr.bf16.mxu0 0
        %5874 = vmatpush1.bf16.msra.mxu0 %v5828
        %5875 = vmatprep.subr.bf16.mxu0 0
        %5876 = vmatpush1.bf16.msra.mxu0 %v5829
        %5877 = vmatprep.subr.bf16.mxu0 0
        %5878 = vmatpush1.bf16.msra.mxu0 %v5830
        %5879 = vmatprep.mubr.bf16.mxu0 %v5697
        %5880 = vmatmul.mubr.bf16.gmra.mrb[0].mxu0 %v5696
        %v5881 = vpop.f32.mrb[0].mxu0
        %v5882 = vadd.f32 %v5749, %v5881
        %v5883 = vpop.f32.mrb[0].mxu0
        %v5884 = vpop.f32.mrb[0].mxu0
        %v5885 = vadd.f32 %v5749, %v5884
        %v5886 = vpop.f32.mrb[0].mxu0
        %5887 = vmatprep.mubr.bf16.mxu0 %v5699
        %5888 = vmatmul.mubr.bf16.gmra.mrb[0].mxu0 %v5698
        %v5889 = vpop.f32.mrb[0].mxu0
        %v5890 = vadd.f32 %v5749, %v5889
        %v5891 = vpop.f32.mrb[0].mxu0
        %v5892 = vpop.f32.mrb[0].mxu0
        %v5893 = vadd.f32 %v5749, %v5892
        %v5894 = vpop.f32.mrb[0].mxu0
        %5895 = vmatprep.mubr.bf16.mxu0 %v5701
        %5896 = vmatmul.mubr.bf16.gmra.mrb[0].mxu0 %v5700
        %v5897 = vpop.f32.mrb[0].mxu0
        %v5898 = vadd.f32 %v5749, %v5897
        %v5899 = vpop.f32.mrb[0].mxu0
        %v5900 = vpop.f32.mrb[0].mxu0
        %v5901 = vadd.f32 %v5749, %v5900
        %v5902 = vpop.f32.mrb[0].mxu0
        %5903 = vmatprep.mubr.bf16.mxu0 %v5703
        %5904 = vmatmul.mubr.bf16.gmra.mrb[0].mxu0 %v5702
        %v5905 = vpop.f32.mrb[0].mxu0
        %v5906 = vadd.f32 %v5749, %v5905
        %v5907 = vpop.f32.mrb[0].mxu0
        %v5908 = vpop.f32.mrb[0].mxu0
        %v5909 = vadd.f32 %v5749, %v5908
        %v5910 = vpop.f32.mrb[0].mxu0
        %5911 = vmatprep.mubr.bf16.mxu0 %v5705
        %5912 = vmatmul.mubr.bf16.gmra.mrb[0].mxu0 %v5704
        %v5913 = vpop.f32.mrb[0].mxu0
        %v5914 = vadd.f32 %v5749, %v5913
        %v5915 = vpop.f32.mrb[0].mxu0
        %v5916 = vpop.f32.mrb[0].mxu0
        %v5917 = vadd.f32 %v5749, %v5916
        %v5918 = vpop.f32.mrb[0].mxu0
        %5919 = vmatprep.mubr.bf16.mxu0 %v5707
        %5920 = vmatmul.mubr.bf16.gmra.mrb[0].mxu0 %v5706
        %v5921 = vpop.f32.mrb[0].mxu0
        %v5922 = vadd.f32 %v5749, %v5921
        %v5923 = vpop.f32.mrb[0].mxu0
        %v5924 = vpop.f32.mrb[0].mxu0
        %v5925 = vadd.f32 %v5749, %v5924
        %v5926 = vpop.f32.mrb[0].mxu0
        %5927 = vmatprep.mubr.bf16.mxu0 %v5709
        %5928 = vmatmul.mubr.bf16.gmra.mrb[0].mxu0 %v5708
        %v5929 = vpop.f32.mrb[0].mxu0
        %v5930 = vadd.f32 %v5749, %v5929
        %v5931 = vpop.f32.mrb[0].mxu0
        %v5932 = vpop.f32.mrb[0].mxu0
        %v5933 = vadd.f32 %v5749, %v5932
        %v5934 = vpop.f32.mrb[0].mxu0
        %5935 = vmatprep.mubr.bf16.mxu0 %v5711
        %5936 = vmatmul.mubr.bf16.gmra.mrb[0].mxu0 %v5710
        %v5937 = vpop.f32.mrb[0].mxu0
        %v5938 = vadd.f32 %v5749, %v5937
        %v5939 = vpop.f32.mrb[0].mxu0
        %v5940 = vpop.f32.mrb[0].mxu0
        %v5941 = vadd.f32 %v5749, %v5940
        %v5942 = vpop.f32.mrb[0].mxu0
        %5943 = vdwg.mxu0
        %v5944 = vmul.f32 %v5882, 0.01
        %v5945 = vmul.f32 %v5885, 0.01
        %v5946 = vmul.f32 %v5890, 0.01
        %v5947 = vmul.f32 %v5893, 0.01
        %v5948 = vmul.f32 %v5898, 0.01
        %v5949 = vmul.f32 %v5901, 0.01
        %v5950 = vmul.f32 %v5906, 0.01
        %v5951 = vmul.f32 %v5909, 0.01
        %v5952 = vmul.f32 %v5914, 0.01
        %v5953 = vmul.f32 %v5917, 0.01
        %v5954 = vmul.f32 %v5922, 0.01
        %v5955 = vmul.f32 %v5925, 0.01
        %v5956 = vmul.f32 %v5930, 0.01
        %v5957 = vmul.f32 %v5933, 0.01
        %v5958 = vmul.f32 %v5938, 0.01
        %v5959 = vmul.f32 %v5941, 0.01
        %v5960 = vmax.f32 %v5882, %v5944
        %v5961 = vmax.f32 %v5885, %v5945
        %v5962 = vmax.f32 %v5890, %v5946
        %v5963 = vmax.f32 %v5893, %v5947
        %v5964 = vmax.f32 %v5898, %v5948
        %v5965 = vmax.f32 %v5901, %v5949
        %v5966 = vmax.f32 %v5906, %v5950
        %v5967 = vmax.f32 %v5909, %v5951
        %v5968 = vmax.f32 %v5914, %v5952
        %v5969 = vmax.f32 %v5917, %v5953
        %v5970 = vmax.f32 %v5922, %v5954
        %v5971 = vmax.f32 %v5925, %v5955
        %v5972 = vmax.f32 %v5930, %v5956
        %v5973 = vmax.f32 %v5933, %v5957
        %v5974 = vmax.f32 %v5938, %v5958
        %v5975 = vmax.f32 %v5941, %v5959
        %v5976 = vpack.c.bf16 %v5961, %v5960
        %v5977 = vpack.c.bf16 %v5963, %v5962
        %v5978 = vpack.c.bf16 %v5965, %v5964
        %v5979 = vpack.c.bf16 %v5967, %v5966
        %v5980 = vpack.c.bf16 %v5969, %v5968
        %v5981 = vpack.c.bf16 %v5971, %v5970
        %v5982 = vpack.c.bf16 %v5973, %v5972
        %v5983 = vpack.c.bf16 %v5975, %v5974
        %v5984 = vld [vmem:[#allocation24] sm:$0xff]
        %v5985 = vld [vmem:[#allocation24 + $0x8] sm:$0xff]
        %v5986 = vld [vmem:[#allocation24 + $0x10] sm:$0xff]
        %v5987 = vld [vmem:[#allocation24 + $0x18] sm:$0xff]
        %v5988 = vld [vmem:[#allocation24 + $0x20] sm:$0xff]
        %v5989 = vld [vmem:[#allocation24 + $0x28] sm:$0xff]
        %v5990 = vld [vmem:[#allocation24 + $0x30] sm:$0xff]
        %v5991 = vld [vmem:[#allocation24 + $0x38] sm:$0xff]
        %v5992 = vld [vmem:[#allocation24 + $0x40] sm:$0xff]
        %v5993 = vld [vmem:[#allocation24 + $0x48] sm:$0xff]
        %v5994 = vld [vmem:[#allocation24 + $0x50] sm:$0xff]
        %v5995 = vld [vmem:[#allocation24 + $0x58] sm:$0xff]
        %v5996 = vld [vmem:[#allocation24 + $0x60] sm:$0xff]
        %v5997 = vld [vmem:[#allocation24 + $0x68] sm:$0xff]
        %v5998 = vld [vmem:[#allocation24 + $0x70] sm:$0xff]
        %v5999 = vld [vmem:[#allocation24 + $0x78] sm:$0xff]
        %v6000 = vld [vmem:[#allocation25] sm:$0x3]
        %v6002 = vlaneseq
        %v6003 = vshrl.u32 %v6002, 7
        %v6004 = vsub.s32 0, %v6003
        %v6005 = vrot.slane %v6000, %v6004
        %v6006 = vlaneseq
        %v6007 = vshrl.u32 %v6006, 7
        %v6008 = vsub.s32 1, %v6007
        %v6009 = vrot.slane %v6000, %v6008
        %v6028 = vunpack.c.l.b16 %v5984
        %v6029 = vunpack.c.h.b16 %v5984
        %v6030 = vunpack.c.l.b16 %v5985
        %v6031 = vunpack.c.h.b16 %v5985
        %v6032 = vunpack.c.l.b16 %v5986
        %v6033 = vunpack.c.h.b16 %v5986
        %v6034 = vunpack.c.l.b16 %v5987
        %v6035 = vunpack.c.h.b16 %v5987
        %v6036 = vunpack.c.l.b16 %v5988
        %v6037 = vunpack.c.h.b16 %v5988
        %v6038 = vunpack.c.l.b16 %v5989
        %v6039 = vunpack.c.h.b16 %v5989
        %v6040 = vunpack.c.l.b16 %v5990
        %v6041 = vunpack.c.h.b16 %v5990
        %v6042 = vunpack.c.l.b16 %v5991
        %v6043 = vunpack.c.h.b16 %v5991
        %v6044 = vunpack.c.l.b16 %v5992
        %v6045 = vunpack.c.h.b16 %v5992
        %v6046 = vunpack.c.l.b16 %v5993
        %v6047 = vunpack.c.h.b16 %v5993
        %v6048 = vunpack.c.l.b16 %v5994
        %v6049 = vunpack.c.h.b16 %v5994
        %v6050 = vunpack.c.l.b16 %v5995
        %v6051 = vunpack.c.h.b16 %v5995
        %v6052 = vunpack.c.l.b16 %v5996
        %v6053 = vunpack.c.h.b16 %v5996
        %v6054 = vunpack.c.l.b16 %v5997
        %v6055 = vunpack.c.h.b16 %v5997
        %v6056 = vunpack.c.l.b16 %v5998
        %v6057 = vunpack.c.h.b16 %v5998
        %v6058 = vunpack.c.l.b16 %v5999
        %v6059 = vunpack.c.h.b16 %v5999
        %v6060 = vpack.c.b16 %v6030, %v6028
        %v6061 = vpack.c.b16 %v6031, %v6029
        %v6062 = vpack.c.b16 %v6034, %v6032
        %v6063 = vpack.c.b16 %v6035, %v6033
        %v6064 = vpack.c.b16 %v6038, %v6036
        %v6065 = vpack.c.b16 %v6039, %v6037
        %v6066 = vpack.c.b16 %v6042, %v6040
        %v6067 = vpack.c.b16 %v6043, %v6041
        %v6068 = vpack.c.b16 %v6046, %v6044
        %v6069 = vpack.c.b16 %v6047, %v6045
        %v6070 = vpack.c.b16 %v6050, %v6048
        %v6071 = vpack.c.b16 %v6051, %v6049
        %v6072 = vpack.c.b16 %v6054, %v6052
        %v6073 = vpack.c.b16 %v6055, %v6053
        %v6074 = vpack.c.b16 %v6058, %v6056
        %v6075 = vpack.c.b16 %v6059, %v6057
        %6092 = vmatprep.subr.bf16.mxu0 %v6061
        %6093 = vmatpush1.bf16.msra.mxu0 %v6060
        %6094 = vmatprep.subr.bf16.mxu0 %v6063
        %6095 = vmatpush1.bf16.msra.mxu0 %v6062
        %6096 = vmatprep.subr.bf16.mxu0 %v6065
        %6097 = vmatpush1.bf16.msra.mxu0 %v6064
        %6098 = vmatprep.subr.bf16.mxu0 %v6067
        %6099 = vmatpush1.bf16.msra.mxu0 %v6066
        %6100 = vmatprep.subr.bf16.mxu0 %v6069
        %6101 = vmatpush1.bf16.msra.mxu0 %v6068
        %6102 = vmatprep.subr.bf16.mxu0 %v6071
        %6103 = vmatpush1.bf16.msra.mxu0 %v6070
        %6104 = vmatprep.subr.bf16.mxu0 %v6073
        %6105 = vmatpush1.bf16.msra.mxu0 %v6072
        %6106 = vmatprep.subr.bf16.mxu0 %v6075
        %6107 = vmatpush1.bf16.msra.mxu0 %v6074
        %6108 = vmatprep.subr.bf16.mxu0 0
        %6109 = vmatpush1.bf16.msra.mxu0 0
        %6110 = vmatprep.subr.bf16.mxu0 0
        %6111 = vmatpush1.bf16.msra.mxu0 0
        %6112 = vmatprep.subr.bf16.mxu0 0
        %6113 = vmatpush1.bf16.msra.mxu0 0
        %6114 = vmatprep.subr.bf16.mxu0 0
        %6115 = vmatpush1.bf16.msra.mxu0 0
        %6116 = vmatprep.subr.bf16.mxu0 0
        %6117 = vmatpush1.bf16.msra.mxu0 0
        %6118 = vmatprep.subr.bf16.mxu0 0
        %6119 = vmatpush1.bf16.msra.mxu0 0
        %6120 = vmatprep.subr.bf16.mxu0 0
        %6121 = vmatpush1.bf16.msra.mxu0 0
        %6122 = vmatprep.subr.bf16.mxu0 0
        %6123 = vmatpush1.bf16.msra.mxu0 0
        %6124 = vmatprep.mubr.bf16.mxu0 0
        %6125 = vmatmul.mubr.bf16.gmra.mrb[0].mxu0 %v5976
        %v6126 = vpop.f32.mrb[0].mxu0
        %v6127 = vadd.f32 %v6005, %v6126
        %v6128 = vpop.f32.mrb[0].mxu0
        %v6129 = vadd.f32 %v6009, %v6128
        %v6130 = vpop.f32.mrb[0].mxu0
        %v6131 = vadd.f32 %v6005, %v6130
        %v6132 = vpop.f32.mrb[0].mxu0
        %v6133 = vadd.f32 %v6009, %v6132
        %6134 = vmatprep.mubr.bf16.mxu0 0
        %6135 = vmatmul.mubr.bf16.gmra.mrb[0].mxu0 %v5977
        %v6136 = vpop.f32.mrb[0].mxu0
        %v6137 = vadd.f32 %v6005, %v6136
        %v6138 = vpop.f32.mrb[0].mxu0
        %v6139 = vadd.f32 %v6009, %v6138
        %v6140 = vpop.f32.mrb[0].mxu0
        %v6141 = vadd.f32 %v6005, %v6140
        %v6142 = vpop.f32.mrb[0].mxu0
        %v6143 = vadd.f32 %v6009, %v6142
        %6144 = vmatprep.mubr.bf16.mxu0 0
        %6145 = vmatmul.mubr.bf16.gmra.mrb[0].mxu0 %v5978
        %v6146 = vpop.f32.mrb[0].mxu0
        %v6147 = vadd.f32 %v6005, %v6146
        %v6148 = vpop.f32.mrb[0].mxu0
        %v6149 = vadd.f32 %v6009, %v6148
        %v6150 = vpop.f32.mrb[0].mxu0
        %v6151 = vadd.f32 %v6005, %v6150
        %v6152 = vpop.f32.mrb[0].mxu0
        %v6153 = vadd.f32 %v6009, %v6152
        %6154 = vmatprep.mubr.bf16.mxu0 0
        %6155 = vmatmul.mubr.bf16.gmra.mrb[0].mxu0 %v5979
        %v6156 = vpop.f32.mrb[0].mxu0
        %v6157 = vadd.f32 %v6005, %v6156
        %v6158 = vpop.f32.mrb[0].mxu0
        %v6159 = vadd.f32 %v6009, %v6158
        %v6160 = vpop.f32.mrb[0].mxu0
        %v6161 = vadd.f32 %v6005, %v6160
        %v6162 = vpop.f32.mrb[0].mxu0
        %v6163 = vadd.f32 %v6009, %v6162
        %6164 = vmatprep.mubr.bf16.mxu0 0
        %6165 = vmatmul.mubr.bf16.gmra.mrb[0].mxu0 %v5980
        %v6166 = vpop.f32.mrb[0].mxu0
        %v6167 = vadd.f32 %v6005, %v6166
        %v6168 = vpop.f32.mrb[0].mxu0
        %v6169 = vadd.f32 %v6009, %v6168
        %v6170 = vpop.f32.mrb[0].mxu0
        %v6171 = vadd.f32 %v6005, %v6170
        %v6172 = vpop.f32.mrb[0].mxu0
        %v6173 = vadd.f32 %v6009, %v6172
        %6174 = vmatprep.mubr.bf16.mxu0 0
        %6175 = vmatmul.mubr.bf16.gmra.mrb[0].mxu0 %v5981
        %v6176 = vpop.f32.mrb[0].mxu0
        %v6177 = vadd.f32 %v6005, %v6176
        %v6178 = vpop.f32.mrb[0].mxu0
        %v6179 = vadd.f32 %v6009, %v6178
        %v6180 = vpop.f32.mrb[0].mxu0
        %v6181 = vadd.f32 %v6005, %v6180
        %v6182 = vpop.f32.mrb[0].mxu0
        %v6183 = vadd.f32 %v6009, %v6182
        %6184 = vmatprep.mubr.bf16.mxu0 0
        %6185 = vmatmul.mubr.bf16.gmra.mrb[0].mxu0 %v5982
        %v6186 = vpop.f32.mrb[0].mxu0
        %v6187 = vadd.f32 %v6005, %v6186
        %v6188 = vpop.f32.mrb[0].mxu0
        %v6189 = vadd.f32 %v6009, %v6188
        %v6190 = vpop.f32.mrb[0].mxu0
        %v6191 = vadd.f32 %v6005, %v6190
        %v6192 = vpop.f32.mrb[0].mxu0
        %v6193 = vadd.f32 %v6009, %v6192
        %6194 = vmatprep.mubr.bf16.mxu0 0
        %6195 = vmatmul.mubr.bf16.gmra.mrb[0].mxu0 %v5983
        %v6196 = vpop.f32.mrb[0].mxu0
        %v6197 = vadd.f32 %v6005, %v6196
        %v6198 = vpop.f32.mrb[0].mxu0
        %v6199 = vadd.f32 %v6009, %v6198
        %v6200 = vpop.f32.mrb[0].mxu0
        %v6201 = vadd.f32 %v6005, %v6200
        %v6202 = vpop.f32.mrb[0].mxu0
        %v6203 = vadd.f32 %v6009, %v6202
        %6204 = vdwg.mxu0
        %v6205 = vmul.f32 %v6127, 0.01
        %v6206 = vmul.f32 %v6129, 0.01
        %v6207 = vmul.f32 %v6131, 0.01
        %v6208 = vmul.f32 %v6133, 0.01
        %v6209 = vmul.f32 %v6137, 0.01
        %v6210 = vmul.f32 %v6139, 0.01
        %v6211 = vmul.f32 %v6141, 0.01
        %v6212 = vmul.f32 %v6143, 0.01
        %v6213 = vmul.f32 %v6147, 0.01
        %v6214 = vmul.f32 %v6149, 0.01
        %v6215 = vmul.f32 %v6151, 0.01
        %v6216 = vmul.f32 %v6153, 0.01
        %v6217 = vmul.f32 %v6157, 0.01
        %v6218 = vmul.f32 %v6159, 0.01
        %v6219 = vmul.f32 %v6161, 0.01
        %v6220 = vmul.f32 %v6163, 0.01
        %v6221 = vmul.f32 %v6167, 0.01
        %v6222 = vmul.f32 %v6169, 0.01
        %v6223 = vmul.f32 %v6171, 0.01
        %v6224 = vmul.f32 %v6173, 0.01
        %v6225 = vmul.f32 %v6177, 0.01
        %v6226 = vmul.f32 %v6179, 0.01
        %v6227 = vmul.f32 %v6181, 0.01
        %v6228 = vmul.f32 %v6183, 0.01
        %v6229 = vmul.f32 %v6187, 0.01
        %v6230 = vmul.f32 %v6189, 0.01
        %v6231 = vmul.f32 %v6191, 0.01
        %v6232 = vmul.f32 %v6193, 0.01
        %v6233 = vmul.f32 %v6197, 0.01
        %v6234 = vmul.f32 %v6199, 0.01
        %v6235 = vmul.f32 %v6201, 0.01
        %v6236 = vmul.f32 %v6203, 0.01
        %v6237 = vmax.f32 %v6127, %v6205
        %v6238 = vmax.f32 %v6129, %v6206
        %v6239 = vmax.f32 %v6131, %v6207
        %v6240 = vmax.f32 %v6133, %v6208
        %v6241 = vmax.f32 %v6137, %v6209
        %v6242 = vmax.f32 %v6139, %v6210
        %v6243 = vmax.f32 %v6141, %v6211
        %v6244 = vmax.f32 %v6143, %v6212
        %v6245 = vmax.f32 %v6147, %v6213
        %v6246 = vmax.f32 %v6149, %v6214
        %v6247 = vmax.f32 %v6151, %v6215
        %v6248 = vmax.f32 %v6153, %v6216
        %v6249 = vmax.f32 %v6157, %v6217
        %v6250 = vmax.f32 %v6159, %v6218
        %v6251 = vmax.f32 %v6161, %v6219
        %v6252 = vmax.f32 %v6163, %v6220
        %v6253 = vmax.f32 %v6167, %v6221
        %v6254 = vmax.f32 %v6169, %v6222
        %v6255 = vmax.f32 %v6171, %v6223
        %v6256 = vmax.f32 %v6173, %v6224
        %v6257 = vmax.f32 %v6177, %v6225
        %v6258 = vmax.f32 %v6179, %v6226
        %v6259 = vmax.f32 %v6181, %v6227
        %v6260 = vmax.f32 %v6183, %v6228
        %v6261 = vmax.f32 %v6187, %v6229
        %v6262 = vmax.f32 %v6189, %v6230
        %v6263 = vmax.f32 %v6191, %v6231
        %v6264 = vmax.f32 %v6193, %v6232
        %v6265 = vmax.f32 %v6197, %v6233
        %v6266 = vmax.f32 %v6199, %v6234
        %v6267 = vmax.f32 %v6201, %v6235
        %v6268 = vmax.f32 %v6203, %v6236
        %v6269 = vpack.c.bf16 %v6239, %v6237
        %v6270 = vpack.c.bf16 %v6240, %v6238
        %v6271 = vpack.c.bf16 %v6243, %v6241
        %v6272 = vpack.c.bf16 %v6244, %v6242
        %v6273 = vpack.c.bf16 %v6247, %v6245
        %v6274 = vpack.c.bf16 %v6248, %v6246
        %v6275 = vpack.c.bf16 %v6251, %v6249
        %v6276 = vpack.c.bf16 %v6252, %v6250
        %v6277 = vpack.c.bf16 %v6255, %v6253
        %v6278 = vpack.c.bf16 %v6256, %v6254
        %v6279 = vpack.c.bf16 %v6259, %v6257
        %v6280 = vpack.c.bf16 %v6260, %v6258
        %v6281 = vpack.c.bf16 %v6263, %v6261
        %v6282 = vpack.c.bf16 %v6264, %v6262
        %v6283 = vpack.c.bf16 %v6267, %v6265
        %v6284 = vpack.c.bf16 %v6268, %v6266
        %v6285 = vld [vmem:[#allocation27] sm:$0xf]
        %v6286 = vld [vmem:[#allocation27 + $0x4] sm:$0xf]
        %v6287 = vld [vmem:[#allocation27 + $0x8] sm:$0xf]
        %v6288 = vld [vmem:[#allocation27 + $0xc] sm:$0xf]
        %v6289 = vld [vmem:[#allocation27 + $0x10] sm:$0xf]
        %v6290 = vld [vmem:[#allocation27 + $0x14] sm:$0xf]
        %v6291 = vld [vmem:[#allocation27 + $0x18] sm:$0xf]
        %v6292 = vld [vmem:[#allocation27 + $0x1c] sm:$0xf]
        %v6293 = vld [vmem:[#allocation27 + $0x20] sm:$0xf]
        %v6294 = vld [vmem:[#allocation27 + $0x24] sm:$0xf]
        %v6295 = vld [vmem:[#allocation27 + $0x28] sm:$0xf]
        %v6296 = vld [vmem:[#allocation27 + $0x2c] sm:$0xf]
        %v6297 = vld [vmem:[#allocation27 + $0x30] sm:$0xf]
        %v6298 = vld [vmem:[#allocation27 + $0x34] sm:$0xf]
        %v6299 = vld [vmem:[#allocation27 + $0x38] sm:$0xf]
        %v6300 = vld [vmem:[#allocation27 + $0x3c] sm:$0xf]
        %v6301 = vld [vmem:[#allocation27 + $0x40] sm:$0xf]
        %v6302 = vld [vmem:[#allocation27 + $0x44] sm:$0xf]
        %v6303 = vld [vmem:[#allocation27 + $0x48] sm:$0xf]
        %v6304 = vld [vmem:[#allocation27 + $0x4c] sm:$0xf]
        %v6305 = vld [vmem:[#allocation27 + $0x50] sm:$0xf]
        %v6306 = vld [vmem:[#allocation27 + $0x54] sm:$0xf]
        %v6307 = vld [vmem:[#allocation27 + $0x58] sm:$0xf]
        %v6308 = vld [vmem:[#allocation27 + $0x5c] sm:$0xf]
        %v6309 = vld [vmem:[#allocation27 + $0x60] sm:$0xf]
        %v6310 = vld [vmem:[#allocation27 + $0x64] sm:$0xf]
        %v6311 = vld [vmem:[#allocation27 + $0x68] sm:$0xf]
        %v6312 = vld [vmem:[#allocation27 + $0x6c] sm:$0xf]
        %v6313 = vld [vmem:[#allocation27 + $0x70] sm:$0xf]
        %v6314 = vld [vmem:[#allocation27 + $0x74] sm:$0xf]
        %v6315 = vld [vmem:[#allocation27 + $0x78] sm:$0xf]
        %v6316 = vld [vmem:[#allocation27 + $0x7c] sm:$0xf]
        %v6317 = vld [vmem:[#allocation28] sm:$0x1]
        %v6319 = vlaneseq
        %v6320 = vshrl.u32 %v6319, 7
        %v6321 = vsub.s32 0, %v6320
        %v6322 = vrot.slane %v6317, %v6321
        %v6356 = vunpack.c.l.b16 %v6285
        %v6357 = vunpack.c.l.b16 %v6286
        %v6358 = vunpack.c.l.b16 %v6287
        %v6359 = vunpack.c.l.b16 %v6288
        %v6360 = vunpack.c.l.b16 %v6289
        %v6361 = vunpack.c.l.b16 %v6290
        %v6362 = vunpack.c.l.b16 %v6291
        %v6363 = vunpack.c.l.b16 %v6292
        %v6364 = vunpack.c.l.b16 %v6293
        %v6365 = vunpack.c.l.b16 %v6294
        %v6366 = vunpack.c.l.b16 %v6295
        %v6367 = vunpack.c.l.b16 %v6296
        %v6368 = vunpack.c.l.b16 %v6297
        %v6369 = vunpack.c.l.b16 %v6298
        %v6370 = vunpack.c.l.b16 %v6299
        %v6371 = vunpack.c.l.b16 %v6300
        %v6372 = vunpack.c.l.b16 %v6301
        %v6373 = vunpack.c.l.b16 %v6302
        %v6374 = vunpack.c.l.b16 %v6303
        %v6375 = vunpack.c.l.b16 %v6304
        %v6376 = vunpack.c.l.b16 %v6305
        %v6377 = vunpack.c.l.b16 %v6306
        %v6378 = vunpack.c.l.b16 %v6307
        %v6379 = vunpack.c.l.b16 %v6308
        %v6380 = vunpack.c.l.b16 %v6309
        %v6381 = vunpack.c.l.b16 %v6310
        %v6382 = vunpack.c.l.b16 %v6311
        %v6383 = vunpack.c.l.b16 %v6312
        %v6384 = vunpack.c.l.b16 %v6313
        %v6385 = vunpack.c.l.b16 %v6314
        %v6386 = vunpack.c.l.b16 %v6315
        %v6387 = vunpack.c.l.b16 %v6316
        %v6388 = vpack.c.b16 %v6357, %v6356
        %v6389 = vpack.c.b16 %v6359, %v6358
        %v6390 = vpack.c.b16 %v6361, %v6360
        %v6391 = vpack.c.b16 %v6363, %v6362
        %v6392 = vpack.c.b16 %v6365, %v6364
        %v6393 = vpack.c.b16 %v6367, %v6366
        %v6394 = vpack.c.b16 %v6369, %v6368
        %v6395 = vpack.c.b16 %v6371, %v6370
        %v6396 = vpack.c.b16 %v6373, %v6372
        %v6397 = vpack.c.b16 %v6375, %v6374
        %v6398 = vpack.c.b16 %v6377, %v6376
        %v6399 = vpack.c.b16 %v6379, %v6378
        %v6400 = vpack.c.b16 %v6381, %v6380
        %v6401 = vpack.c.b16 %v6383, %v6382
        %v6402 = vpack.c.b16 %v6385, %v6384
        %v6403 = vpack.c.b16 %v6387, %v6386
        %6420 = vmatprep.subr.bf16.mxu0 0
        %6421 = vmatpush1.bf16.msra.mxu0 %v6388
        %6422 = vmatprep.subr.bf16.mxu0 0
        %6423 = vmatpush1.bf16.msra.mxu0 %v6389
        %6424 = vmatprep.subr.bf16.mxu0 0
        %6425 = vmatpush1.bf16.msra.mxu0 %v6390
        %6426 = vmatprep.subr.bf16.mxu0 0
        %6427 = vmatpush1.bf16.msra.mxu0 %v6391
        %6428 = vmatprep.subr.bf16.mxu0 0
        %6429 = vmatpush1.bf16.msra.mxu0 %v6392
        %6430 = vmatprep.subr.bf16.mxu0 0
        %6431 = vmatpush1.bf16.msra.mxu0 %v6393
        %6432 = vmatprep.subr.bf16.mxu0 0
        %6433 = vmatpush1.bf16.msra.mxu0 %v6394
        %6434 = vmatprep.subr.bf16.mxu0 0
        %6435 = vmatpush1.bf16.msra.mxu0 %v6395
        %6436 = vmatprep.subr.bf16.mxu0 0
        %6437 = vmatpush1.bf16.msra.mxu0 %v6396
        %6438 = vmatprep.subr.bf16.mxu0 0
        %6439 = vmatpush1.bf16.msra.mxu0 %v6397
        %6440 = vmatprep.subr.bf16.mxu0 0
        %6441 = vmatpush1.bf16.msra.mxu0 %v6398
        %6442 = vmatprep.subr.bf16.mxu0 0
        %6443 = vmatpush1.bf16.msra.mxu0 %v6399
        %6444 = vmatprep.subr.bf16.mxu0 0
        %6445 = vmatpush1.bf16.msra.mxu0 %v6400
        %6446 = vmatprep.subr.bf16.mxu0 0
        %6447 = vmatpush1.bf16.msra.mxu0 %v6401
        %6448 = vmatprep.subr.bf16.mxu0 0
        %6449 = vmatpush1.bf16.msra.mxu0 %v6402
        %6450 = vmatprep.subr.bf16.mxu0 0
        %6451 = vmatpush1.bf16.msra.mxu0 %v6403
        %6452 = vmatprep.mubr.bf16.mxu0 %v6270
        %6453 = vmatmul.mubr.bf16.gmra.mrb[0].mxu0 %v6269
        %v6454 = vpop.f32.mrb[0].mxu0
        %v6455 = vadd.f32 %v6322, %v6454
        %v6456 = vpop.f32.mrb[0].mxu0
        %v6457 = vpop.f32.mrb[0].mxu0
        %v6458 = vadd.f32 %v6322, %v6457
        %v6459 = vpop.f32.mrb[0].mxu0
        %6460 = vmatprep.mubr.bf16.mxu0 %v6272
        %6461 = vmatmul.mubr.bf16.gmra.mrb[0].mxu0 %v6271
        %v6462 = vpop.f32.mrb[0].mxu0
        %v6463 = vadd.f32 %v6322, %v6462
        %v6464 = vpop.f32.mrb[0].mxu0
        %v6465 = vpop.f32.mrb[0].mxu0
        %v6466 = vadd.f32 %v6322, %v6465
        %v6467 = vpop.f32.mrb[0].mxu0
        %6468 = vmatprep.mubr.bf16.mxu0 %v6274
        %6469 = vmatmul.mubr.bf16.gmra.mrb[0].mxu0 %v6273
        %v6470 = vpop.f32.mrb[0].mxu0
        %v6471 = vadd.f32 %v6322, %v6470
        %v6472 = vpop.f32.mrb[0].mxu0
        %v6473 = vpop.f32.mrb[0].mxu0
        %v6474 = vadd.f32 %v6322, %v6473
        %v6475 = vpop.f32.mrb[0].mxu0
        %6476 = vmatprep.mubr.bf16.mxu0 %v6276
        %6477 = vmatmul.mubr.bf16.gmra.mrb[0].mxu0 %v6275
        %v6478 = vpop.f32.mrb[0].mxu0
        %v6479 = vadd.f32 %v6322, %v6478
        %v6480 = vpop.f32.mrb[0].mxu0
        %v6481 = vpop.f32.mrb[0].mxu0
        %v6482 = vadd.f32 %v6322, %v6481
        %v6483 = vpop.f32.mrb[0].mxu0
        %6484 = vmatprep.mubr.bf16.mxu0 %v6278
        %6485 = vmatmul.mubr.bf16.gmra.mrb[0].mxu0 %v6277
        %v6486 = vpop.f32.mrb[0].mxu0
        %v6487 = vadd.f32 %v6322, %v6486
        %v6488 = vpop.f32.mrb[0].mxu0
        %v6489 = vpop.f32.mrb[0].mxu0
        %v6490 = vadd.f32 %v6322, %v6489
        %v6491 = vpop.f32.mrb[0].mxu0
        %6492 = vmatprep.mubr.bf16.mxu0 %v6280
        %6493 = vmatmul.mubr.bf16.gmra.mrb[0].mxu0 %v6279
        %v6494 = vpop.f32.mrb[0].mxu0
        %v6495 = vadd.f32 %v6322, %v6494
        %v6496 = vpop.f32.mrb[0].mxu0
        %v6497 = vpop.f32.mrb[0].mxu0
        %v6498 = vadd.f32 %v6322, %v6497
        %v6499 = vpop.f32.mrb[0].mxu0
        %6500 = vmatprep.mubr.bf16.mxu0 %v6282
        %6501 = vmatmul.mubr.bf16.gmra.mrb[0].mxu0 %v6281
        %v6502 = vpop.f32.mrb[0].mxu0
        %v6503 = vadd.f32 %v6322, %v6502
        %v6504 = vpop.f32.mrb[0].mxu0
        %v6505 = vpop.f32.mrb[0].mxu0
        %v6506 = vadd.f32 %v6322, %v6505
        %v6507 = vpop.f32.mrb[0].mxu0
        %6508 = vmatprep.mubr.bf16.mxu0 %v6284
        %6509 = vmatmul.mubr.bf16.gmra.mrb[0].mxu0 %v6283
        %v6510 = vpop.f32.mrb[0].mxu0
        %v6511 = vadd.f32 %v6322, %v6510
        %v6512 = vpop.f32.mrb[0].mxu0
        %v6513 = vpop.f32.mrb[0].mxu0
        %v6514 = vadd.f32 %v6322, %v6513
        %v6515 = vpop.f32.mrb[0].mxu0
        %6516 = vdwg.mxu0
        %v6517 = vmul.f32 %v6455, 0.01
        %v6518 = vmul.f32 %v6458, 0.01
        %v6519 = vmul.f32 %v6463, 0.01
        %v6520 = vmul.f32 %v6466, 0.01
        %v6521 = vmul.f32 %v6471, 0.01
        %v6522 = vmul.f32 %v6474, 0.01
        %v6523 = vmul.f32 %v6479, 0.01
        %v6524 = vmul.f32 %v6482, 0.01
        %v6525 = vmul.f32 %v6487, 0.01
        %v6526 = vmul.f32 %v6490, 0.01
        %v6527 = vmul.f32 %v6495, 0.01
        %v6528 = vmul.f32 %v6498, 0.01
        %v6529 = vmul.f32 %v6503, 0.01
        %v6530 = vmul.f32 %v6506, 0.01
        %v6531 = vmul.f32 %v6511, 0.01
        %v6532 = vmul.f32 %v6514, 0.01
        %v6533 = vmax.f32 %v6455, %v6517
        %v6534 = vmax.f32 %v6458, %v6518
        %v6535 = vmax.f32 %v6463, %v6519
        %v6536 = vmax.f32 %v6466, %v6520
        %v6537 = vmax.f32 %v6471, %v6521
        %v6538 = vmax.f32 %v6474, %v6522
        %v6539 = vmax.f32 %v6479, %v6523
        %v6540 = vmax.f32 %v6482, %v6524
        %v6541 = vmax.f32 %v6487, %v6525
        %v6542 = vmax.f32 %v6490, %v6526
        %v6543 = vmax.f32 %v6495, %v6527
        %v6544 = vmax.f32 %v6498, %v6528
        %v6545 = vmax.f32 %v6503, %v6529
        %v6546 = vmax.f32 %v6506, %v6530
        %v6547 = vmax.f32 %v6511, %v6531
        %v6548 = vmax.f32 %v6514, %v6532
        %v6549 = vadd.f32 %v6533, %v5341
        %v6550 = vadd.f32 %v6534, %v5344
        %v6551 = vadd.f32 %v6535, %v5349
        %v6552 = vadd.f32 %v6536, %v5352
        %v6553 = vadd.f32 %v6537, %v5357
        %v6554 = vadd.f32 %v6538, %v5360
        %v6555 = vadd.f32 %v6539, %v5365
        %v6556 = vadd.f32 %v6540, %v5368
        %v6557 = vadd.f32 %v6541, %v5373
        %v6558 = vadd.f32 %v6542, %v5376
        %v6559 = vadd.f32 %v6543, %v5381
        %v6560 = vadd.f32 %v6544, %v5384
        %v6561 = vadd.f32 %v6545, %v5389
        %v6562 = vadd.f32 %v6546, %v5392
        %v6563 = vadd.f32 %v6547, %v5397
        %v6564 = vadd.f32 %v6548, %v5400
        %v6565 = vpack.c.bf16 %v6550, %v6549
        %v6566 = vpack.c.bf16 %v6552, %v6551
        %v6567 = vpack.c.bf16 %v6554, %v6553
        %v6568 = vpack.c.bf16 %v6556, %v6555
        %v6569 = vpack.c.bf16 %v6558, %v6557
        %v6570 = vpack.c.bf16 %v6560, %v6559
        %v6571 = vpack.c.bf16 %v6562, %v6561
        %v6572 = vpack.c.bf16 %v6564, %v6563
        %v6573 = vld [vmem:[#allocation30] sm:$0xff]
        %v6574 = vld [vmem:[#allocation30 + $0x8] sm:$0xff]
        %v6575 = vld [vmem:[#allocation30 + $0x10] sm:$0xff]
        %v6576 = vld [vmem:[#allocation30 + $0x18] sm:$0xff]
        %v6577 = vld [vmem:[#allocation30 + $0x20] sm:$0xff]
        %v6578 = vld [vmem:[#allocation30 + $0x28] sm:$0xff]
        %v6579 = vld [vmem:[#allocation30 + $0x30] sm:$0xff]
        %v6580 = vld [vmem:[#allocation30 + $0x38] sm:$0xff]
        %v6581 = vld [vmem:[#allocation30 + $0x40] sm:$0xff]
        %v6582 = vld [vmem:[#allocation30 + $0x48] sm:$0xff]
        %v6583 = vld [vmem:[#allocation30 + $0x50] sm:$0xff]
        %v6584 = vld [vmem:[#allocation30 + $0x58] sm:$0xff]
        %v6585 = vld [vmem:[#allocation30 + $0x60] sm:$0xff]
        %v6586 = vld [vmem:[#allocation30 + $0x68] sm:$0xff]
        %v6587 = vld [vmem:[#allocation30 + $0x70] sm:$0xff]
        %v6588 = vld [vmem:[#allocation30 + $0x78] sm:$0xff]
        %v6589 = vld [vmem:[#allocation31] sm:$0x3]
        %v6591 = vlaneseq
        %v6592 = vshrl.u32 %v6591, 7
        %v6593 = vsub.s32 0, %v6592
        %v6594 = vrot.slane %v6589, %v6593
        %v6595 = vlaneseq
        %v6596 = vshrl.u32 %v6595, 7
        %v6597 = vsub.s32 1, %v6596
        %v6598 = vrot.slane %v6589, %v6597
        %v6617 = vunpack.c.l.b16 %v6573
        %v6618 = vunpack.c.h.b16 %v6573
        %v6619 = vunpack.c.l.b16 %v6574
        %v6620 = vunpack.c.h.b16 %v6574
        %v6621 = vunpack.c.l.b16 %v6575
        %v6622 = vunpack.c.h.b16 %v6575
        %v6623 = vunpack.c.l.b16 %v6576
        %v6624 = vunpack.c.h.b16 %v6576
        %v6625 = vunpack.c.l.b16 %v6577
        %v6626 = vunpack.c.h.b16 %v6577
        %v6627 = vunpack.c.l.b16 %v6578
        %v6628 = vunpack.c.h.b16 %v6578
        %v6629 = vunpack.c.l.b16 %v6579
        %v6630 = vunpack.c.h.b16 %v6579
        %v6631 = vunpack.c.l.b16 %v6580
        %v6632 = vunpack.c.h.b16 %v6580
        %v6633 = vunpack.c.l.b16 %v6581
        %v6634 = vunpack.c.h.b16 %v6581
        %v6635 = vunpack.c.l.b16 %v6582
        %v6636 = vunpack.c.h.b16 %v6582
        %v6637 = vunpack.c.l.b16 %v6583
        %v6638 = vunpack.c.h.b16 %v6583
        %v6639 = vunpack.c.l.b16 %v6584
        %v6640 = vunpack.c.h.b16 %v6584
        %v6641 = vunpack.c.l.b16 %v6585
        %v6642 = vunpack.c.h.b16 %v6585
        %v6643 = vunpack.c.l.b16 %v6586
        %v6644 = vunpack.c.h.b16 %v6586
        %v6645 = vunpack.c.l.b16 %v6587
        %v6646 = vunpack.c.h.b16 %v6587
        %v6647 = vunpack.c.l.b16 %v6588
        %v6648 = vunpack.c.h.b16 %v6588
        %v6649 = vpack.c.b16 %v6619, %v6617
        %v6650 = vpack.c.b16 %v6620, %v6618
        %v6651 = vpack.c.b16 %v6623, %v6621
        %v6652 = vpack.c.b16 %v6624, %v6622
        %v6653 = vpack.c.b16 %v6627, %v6625
        %v6654 = vpack.c.b16 %v6628, %v6626
        %v6655 = vpack.c.b16 %v6631, %v6629
        %v6656 = vpack.c.b16 %v6632, %v6630
        %v6657 = vpack.c.b16 %v6635, %v6633
        %v6658 = vpack.c.b16 %v6636, %v6634
        %v6659 = vpack.c.b16 %v6639, %v6637
        %v6660 = vpack.c.b16 %v6640, %v6638
        %v6661 = vpack.c.b16 %v6643, %v6641
        %v6662 = vpack.c.b16 %v6644, %v6642
        %v6663 = vpack.c.b16 %v6647, %v6645
        %v6664 = vpack.c.b16 %v6648, %v6646
        %6681 = vmatprep.subr.bf16.mxu0 %v6650
        %6682 = vmatpush1.bf16.msra.mxu0 %v6649
        %6683 = vmatprep.subr.bf16.mxu0 %v6652
        %6684 = vmatpush1.bf16.msra.mxu0 %v6651
        %6685 = vmatprep.subr.bf16.mxu0 %v6654
        %6686 = vmatpush1.bf16.msra.mxu0 %v6653
        %6687 = vmatprep.subr.bf16.mxu0 %v6656
        %6688 = vmatpush1.bf16.msra.mxu0 %v6655
        %6689 = vmatprep.subr.bf16.mxu0 %v6658
        %6690 = vmatpush1.bf16.msra.mxu0 %v6657
        %6691 = vmatprep.subr.bf16.mxu0 %v6660
        %6692 = vmatpush1.bf16.msra.mxu0 %v6659
        %6693 = vmatprep.subr.bf16.mxu0 %v6662
        %6694 = vmatpush1.bf16.msra.mxu0 %v6661
        %6695 = vmatprep.subr.bf16.mxu0 %v6664
        %6696 = vmatpush1.bf16.msra.mxu0 %v6663
        %6697 = vmatprep.subr.bf16.mxu0 0
        %6698 = vmatpush1.bf16.msra.mxu0 0
        %6699 = vmatprep.subr.bf16.mxu0 0
        %6700 = vmatpush1.bf16.msra.mxu0 0
        %6701 = vmatprep.subr.bf16.mxu0 0
        %6702 = vmatpush1.bf16.msra.mxu0 0
        %6703 = vmatprep.subr.bf16.mxu0 0
        %6704 = vmatpush1.bf16.msra.mxu0 0
        %6705 = vmatprep.subr.bf16.mxu0 0
        %6706 = vmatpush1.bf16.msra.mxu0 0
        %6707 = vmatprep.subr.bf16.mxu0 0
        %6708 = vmatpush1.bf16.msra.mxu0 0
        %6709 = vmatprep.subr.bf16.mxu0 0
        %6710 = vmatpush1.bf16.msra.mxu0 0
        %6711 = vmatprep.subr.bf16.mxu0 0
        %6712 = vmatpush1.bf16.msra.mxu0 0
        %6713 = vmatprep.mubr.bf16.mxu0 0
        %6714 = vmatmul.mubr.bf16.gmra.mrb[0].mxu0 %v6565
        %v6715 = vpop.f32.mrb[0].mxu0
        %v6716 = vadd.f32 %v6594, %v6715
        %v6717 = vpop.f32.mrb[0].mxu0
        %v6718 = vadd.f32 %v6598, %v6717
        %v6719 = vpop.f32.mrb[0].mxu0
        %v6720 = vadd.f32 %v6594, %v6719
        %v6721 = vpop.f32.mrb[0].mxu0
        %v6722 = vadd.f32 %v6598, %v6721
        %6723 = vmatprep.mubr.bf16.mxu0 0
        %6724 = vmatmul.mubr.bf16.gmra.mrb[0].mxu0 %v6566
        %v6725 = vpop.f32.mrb[0].mxu0
        %v6726 = vadd.f32 %v6594, %v6725
        %v6727 = vpop.f32.mrb[0].mxu0
        %v6728 = vadd.f32 %v6598, %v6727
        %v6729 = vpop.f32.mrb[0].mxu0
        %v6730 = vadd.f32 %v6594, %v6729
        %v6731 = vpop.f32.mrb[0].mxu0
        %v6732 = vadd.f32 %v6598, %v6731
        %6733 = vmatprep.mubr.bf16.mxu0 0
        %6734 = vmatmul.mubr.bf16.gmra.mrb[0].mxu0 %v6567
        %v6735 = vpop.f32.mrb[0].mxu0
        %v6736 = vadd.f32 %v6594, %v6735
        %v6737 = vpop.f32.mrb[0].mxu0
        %v6738 = vadd.f32 %v6598, %v6737
        %v6739 = vpop.f32.mrb[0].mxu0
        %v6740 = vadd.f32 %v6594, %v6739
        %v6741 = vpop.f32.mrb[0].mxu0
        %v6742 = vadd.f32 %v6598, %v6741
        %6743 = vmatprep.mubr.bf16.mxu0 0
        %6744 = vmatmul.mubr.bf16.gmra.mrb[0].mxu0 %v6568
        %v6745 = vpop.f32.mrb[0].mxu0
        %v6746 = vadd.f32 %v6594, %v6745
        %v6747 = vpop.f32.mrb[0].mxu0
        %v6748 = vadd.f32 %v6598, %v6747
        %v6749 = vpop.f32.mrb[0].mxu0
        %v6750 = vadd.f32 %v6594, %v6749
        %v6751 = vpop.f32.mrb[0].mxu0
        %v6752 = vadd.f32 %v6598, %v6751
        %6753 = vmatprep.mubr.bf16.mxu0 0
        %6754 = vmatmul.mubr.bf16.gmra.mrb[0].mxu0 %v6569
        %v6755 = vpop.f32.mrb[0].mxu0
        %v6756 = vadd.f32 %v6594, %v6755
        %v6757 = vpop.f32.mrb[0].mxu0
        %v6758 = vadd.f32 %v6598, %v6757
        %v6759 = vpop.f32.mrb[0].mxu0
        %v6760 = vadd.f32 %v6594, %v6759
        %v6761 = vpop.f32.mrb[0].mxu0
        %v6762 = vadd.f32 %v6598, %v6761
        %6763 = vmatprep.mubr.bf16.mxu0 0
        %6764 = vmatmul.mubr.bf16.gmra.mrb[0].mxu0 %v6570
        %v6765 = vpop.f32.mrb[0].mxu0
        %v6766 = vadd.f32 %v6594, %v6765
        %v6767 = vpop.f32.mrb[0].mxu0
        %v6768 = vadd.f32 %v6598, %v6767
        %v6769 = vpop.f32.mrb[0].mxu0
        %v6770 = vadd.f32 %v6594, %v6769
        %v6771 = vpop.f32.mrb[0].mxu0
        %v6772 = vadd.f32 %v6598, %v6771
        %6773 = vmatprep.mubr.bf16.mxu0 0
        %6774 = vmatmul.mubr.bf16.gmra.mrb[0].mxu0 %v6571
        %v6775 = vpop.f32.mrb[0].mxu0
        %v6776 = vadd.f32 %v6594, %v6775
        %v6777 = vpop.f32.mrb[0].mxu0
        %v6778 = vadd.f32 %v6598, %v6777
        %v6779 = vpop.f32.mrb[0].mxu0
        %v6780 = vadd.f32 %v6594, %v6779
        %v6781 = vpop.f32.mrb[0].mxu0
        %v6782 = vadd.f32 %v6598, %v6781
        %6783 = vmatprep.mubr.bf16.mxu0 0
        %6784 = vmatmul.mubr.bf16.gmra.mrb[0].mxu0 %v6572
        %v6785 = vpop.f32.mrb[0].mxu0
        %v6786 = vadd.f32 %v6594, %v6785
        %v6787 = vpop.f32.mrb[0].mxu0
        %v6788 = vadd.f32 %v6598, %v6787
        %v6789 = vpop.f32.mrb[0].mxu0
        %v6790 = vadd.f32 %v6594, %v6789
        %v6791 = vpop.f32.mrb[0].mxu0
        %v6792 = vadd.f32 %v6598, %v6791
        %6793 = vdwg.mxu0
        %v6794 = vmul.f32 %v6716, 0.01
        %v6795 = vmul.f32 %v6718, 0.01
        %v6796 = vmul.f32 %v6720, 0.01
        %v6797 = vmul.f32 %v6722, 0.01
        %v6798 = vmul.f32 %v6726, 0.01
        %v6799 = vmul.f32 %v6728, 0.01
        %v6800 = vmul.f32 %v6730, 0.01
        %v6801 = vmul.f32 %v6732, 0.01
        %v6802 = vmul.f32 %v6736, 0.01
        %v6803 = vmul.f32 %v6738, 0.01
        %v6804 = vmul.f32 %v6740, 0.01
        %v6805 = vmul.f32 %v6742, 0.01
        %v6806 = vmul.f32 %v6746, 0.01
        %v6807 = vmul.f32 %v6748, 0.01
        %v6808 = vmul.f32 %v6750, 0.01
        %v6809 = vmul.f32 %v6752, 0.01
        %v6810 = vmul.f32 %v6756, 0.01
        %v6811 = vmul.f32 %v6758, 0.01
        %v6812 = vmul.f32 %v6760, 0.01
        %v6813 = vmul.f32 %v6762, 0.01
        %v6814 = vmul.f32 %v6766, 0.01
        %v6815 = vmul.f32 %v6768, 0.01
        %v6816 = vmul.f32 %v6770, 0.01
        %v6817 = vmul.f32 %v6772, 0.01
        %v6818 = vmul.f32 %v6776, 0.01
        %v6819 = vmul.f32 %v6778, 0.01
        %v6820 = vmul.f32 %v6780, 0.01
        %v6821 = vmul.f32 %v6782, 0.01
        %v6822 = vmul.f32 %v6786, 0.01
        %v6823 = vmul.f32 %v6788, 0.01
        %v6824 = vmul.f32 %v6790, 0.01
        %v6825 = vmul.f32 %v6792, 0.01
        %v6826 = vmax.f32 %v6716, %v6794
        %v6827 = vmax.f32 %v6718, %v6795
        %v6828 = vmax.f32 %v6720, %v6796
        %v6829 = vmax.f32 %v6722, %v6797
        %v6830 = vmax.f32 %v6726, %v6798
        %v6831 = vmax.f32 %v6728, %v6799
        %v6832 = vmax.f32 %v6730, %v6800
        %v6833 = vmax.f32 %v6732, %v6801
        %v6834 = vmax.f32 %v6736, %v6802
        %v6835 = vmax.f32 %v6738, %v6803
        %v6836 = vmax.f32 %v6740, %v6804
        %v6837 = vmax.f32 %v6742, %v6805
        %v6838 = vmax.f32 %v6746, %v6806
        %v6839 = vmax.f32 %v6748, %v6807
        %v6840 = vmax.f32 %v6750, %v6808
        %v6841 = vmax.f32 %v6752, %v6809
        %v6842 = vmax.f32 %v6756, %v6810
        %v6843 = vmax.f32 %v6758, %v6811
        %v6844 = vmax.f32 %v6760, %v6812
        %v6845 = vmax.f32 %v6762, %v6813
        %v6846 = vmax.f32 %v6766, %v6814
        %v6847 = vmax.f32 %v6768, %v6815
        %v6848 = vmax.f32 %v6770, %v6816
        %v6849 = vmax.f32 %v6772, %v6817
        %v6850 = vmax.f32 %v6776, %v6818
        %v6851 = vmax.f32 %v6778, %v6819
        %v6852 = vmax.f32 %v6780, %v6820
        %v6853 = vmax.f32 %v6782, %v6821
        %v6854 = vmax.f32 %v6786, %v6822
        %v6855 = vmax.f32 %v6788, %v6823
        %v6856 = vmax.f32 %v6790, %v6824
        %v6857 = vmax.f32 %v6792, %v6825
        %v6858 = vpack.c.bf16 %v6828, %v6826
        %v6859 = vpack.c.bf16 %v6829, %v6827
        %v6860 = vpack.c.bf16 %v6832, %v6830
        %v6861 = vpack.c.bf16 %v6833, %v6831
        %v6862 = vpack.c.bf16 %v6836, %v6834
        %v6863 = vpack.c.bf16 %v6837, %v6835
        %v6864 = vpack.c.bf16 %v6840, %v6838
        %v6865 = vpack.c.bf16 %v6841, %v6839
        %v6866 = vpack.c.bf16 %v6844, %v6842
        %v6867 = vpack.c.bf16 %v6845, %v6843
        %v6868 = vpack.c.bf16 %v6848, %v6846
        %v6869 = vpack.c.bf16 %v6849, %v6847
        %v6870 = vpack.c.bf16 %v6852, %v6850
        %v6871 = vpack.c.bf16 %v6853, %v6851
        %v6872 = vpack.c.bf16 %v6856, %v6854
        %v6873 = vpack.c.bf16 %v6857, %v6855
        %v6874 = vld [vmem:[#allocation33] sm:$0xf]
        %v6875 = vld [vmem:[#allocation33 + $0x4] sm:$0xf]
        %v6876 = vld [vmem:[#allocation33 + $0x8] sm:$0xf]
        %v6877 = vld [vmem:[#allocation33 + $0xc] sm:$0xf]
        %v6878 = vld [vmem:[#allocation33 + $0x10] sm:$0xf]
        %v6879 = vld [vmem:[#allocation33 + $0x14] sm:$0xf]
        %v6880 = vld [vmem:[#allocation33 + $0x18] sm:$0xf]
        %v6881 = vld [vmem:[#allocation33 + $0x1c] sm:$0xf]
        %v6882 = vld [vmem:[#allocation33 + $0x20] sm:$0xf]
        %v6883 = vld [vmem:[#allocation33 + $0x24] sm:$0xf]
        %v6884 = vld [vmem:[#allocation33 + $0x28] sm:$0xf]
        %v6885 = vld [vmem:[#allocation33 + $0x2c] sm:$0xf]
        %v6886 = vld [vmem:[#allocation33 + $0x30] sm:$0xf]
        %v6887 = vld [vmem:[#allocation33 + $0x34] sm:$0xf]
        %v6888 = vld [vmem:[#allocation33 + $0x38] sm:$0xf]
        %v6889 = vld [vmem:[#allocation33 + $0x3c] sm:$0xf]
        %v6890 = vld [vmem:[#allocation33 + $0x40] sm:$0xf]
        %v6891 = vld [vmem:[#allocation33 + $0x44] sm:$0xf]
        %v6892 = vld [vmem:[#allocation33 + $0x48] sm:$0xf]
        %v6893 = vld [vmem:[#allocation33 + $0x4c] sm:$0xf]
        %v6894 = vld [vmem:[#allocation33 + $0x50] sm:$0xf]
        %v6895 = vld [vmem:[#allocation33 + $0x54] sm:$0xf]
        %v6896 = vld [vmem:[#allocation33 + $0x58] sm:$0xf]
        %v6897 = vld [vmem:[#allocation33 + $0x5c] sm:$0xf]
        %v6898 = vld [vmem:[#allocation33 + $0x60] sm:$0xf]
        %v6899 = vld [vmem:[#allocation33 + $0x64] sm:$0xf]
        %v6900 = vld [vmem:[#allocation33 + $0x68] sm:$0xf]
        %v6901 = vld [vmem:[#allocation33 + $0x6c] sm:$0xf]
        %v6902 = vld [vmem:[#allocation33 + $0x70] sm:$0xf]
        %v6903 = vld [vmem:[#allocation33 + $0x74] sm:$0xf]
        %v6904 = vld [vmem:[#allocation33 + $0x78] sm:$0xf]
        %v6905 = vld [vmem:[#allocation33 + $0x7c] sm:$0xf]
        %v6906 = vld [vmem:[#allocation34] sm:$0x1]
        %v6908 = vlaneseq
        %v6909 = vshrl.u32 %v6908, 7
        %v6910 = vsub.s32 0, %v6909
        %v6911 = vrot.slane %v6906, %v6910
        %v6945 = vunpack.c.l.b16 %v6874
        %v6946 = vunpack.c.l.b16 %v6875
        %v6947 = vunpack.c.l.b16 %v6876
        %v6948 = vunpack.c.l.b16 %v6877
        %v6949 = vunpack.c.l.b16 %v6878
        %v6950 = vunpack.c.l.b16 %v6879
        %v6951 = vunpack.c.l.b16 %v6880
        %v6952 = vunpack.c.l.b16 %v6881
        %v6953 = vunpack.c.l.b16 %v6882
        %v6954 = vunpack.c.l.b16 %v6883
        %v6955 = vunpack.c.l.b16 %v6884
        %v6956 = vunpack.c.l.b16 %v6885
        %v6957 = vunpack.c.l.b16 %v6886
        %v6958 = vunpack.c.l.b16 %v6887
        %v6959 = vunpack.c.l.b16 %v6888
        %v6960 = vunpack.c.l.b16 %v6889
        %v6961 = vunpack.c.l.b16 %v6890
        %v6962 = vunpack.c.l.b16 %v6891
        %v6963 = vunpack.c.l.b16 %v6892
        %v6964 = vunpack.c.l.b16 %v6893
        %v6965 = vunpack.c.l.b16 %v6894
        %v6966 = vunpack.c.l.b16 %v6895
        %v6967 = vunpack.c.l.b16 %v6896
        %v6968 = vunpack.c.l.b16 %v6897
        %v6969 = vunpack.c.l.b16 %v6898
        %v6970 = vunpack.c.l.b16 %v6899
        %v6971 = vunpack.c.l.b16 %v6900
        %v6972 = vunpack.c.l.b16 %v6901
        %v6973 = vunpack.c.l.b16 %v6902
        %v6974 = vunpack.c.l.b16 %v6903
        %v6975 = vunpack.c.l.b16 %v6904
        %v6976 = vunpack.c.l.b16 %v6905
        %v6977 = vpack.c.b16 %v6946, %v6945
        %v6978 = vpack.c.b16 %v6948, %v6947
        %v6979 = vpack.c.b16 %v6950, %v6949
        %v6980 = vpack.c.b16 %v6952, %v6951
        %v6981 = vpack.c.b16 %v6954, %v6953
        %v6982 = vpack.c.b16 %v6956, %v6955
        %v6983 = vpack.c.b16 %v6958, %v6957
        %v6984 = vpack.c.b16 %v6960, %v6959
        %v6985 = vpack.c.b16 %v6962, %v6961
        %v6986 = vpack.c.b16 %v6964, %v6963
        %v6987 = vpack.c.b16 %v6966, %v6965
        %v6988 = vpack.c.b16 %v6968, %v6967
        %v6989 = vpack.c.b16 %v6970, %v6969
        %v6990 = vpack.c.b16 %v6972, %v6971
        %v6991 = vpack.c.b16 %v6974, %v6973
        %v6992 = vpack.c.b16 %v6976, %v6975
        %7009 = vmatprep.subr.bf16.mxu0 0
        %7010 = vmatpush1.bf16.msra.mxu0 %v6977
        %7011 = vmatprep.subr.bf16.mxu0 0
        %7012 = vmatpush1.bf16.msra.mxu0 %v6978
        %7013 = vmatprep.subr.bf16.mxu0 0
        %7014 = vmatpush1.bf16.msra.mxu0 %v6979
        %7015 = vmatprep.subr.bf16.mxu0 0
        %7016 = vmatpush1.bf16.msra.mxu0 %v6980
        %7017 = vmatprep.subr.bf16.mxu0 0
        %7018 = vmatpush1.bf16.msra.mxu0 %v6981
        %7019 = vmatprep.subr.bf16.mxu0 0
        %7020 = vmatpush1.bf16.msra.mxu0 %v6982
        %7021 = vmatprep.subr.bf16.mxu0 0
        %7022 = vmatpush1.bf16.msra.mxu0 %v6983
        %7023 = vmatprep.subr.bf16.mxu0 0
        %7024 = vmatpush1.bf16.msra.mxu0 %v6984
        %7025 = vmatprep.subr.bf16.mxu0 0
        %7026 = vmatpush1.bf16.msra.mxu0 %v6985
        %7027 = vmatprep.subr.bf16.mxu0 0
        %7028 = vmatpush1.bf16.msra.mxu0 %v6986
        %7029 = vmatprep.subr.bf16.mxu0 0
        %7030 = vmatpush1.bf16.msra.mxu0 %v6987
        %7031 = vmatprep.subr.bf16.mxu0 0
        %7032 = vmatpush1.bf16.msra.mxu0 %v6988
        %7033 = vmatprep.subr.bf16.mxu0 0
        %7034 = vmatpush1.bf16.msra.mxu0 %v6989
        %7035 = vmatprep.subr.bf16.mxu0 0
        %7036 = vmatpush1.bf16.msra.mxu0 %v6990
        %7037 = vmatprep.subr.bf16.mxu0 0
        %7038 = vmatpush1.bf16.msra.mxu0 %v6991
        %7039 = vmatprep.subr.bf16.mxu0 0
        %7040 = vmatpush1.bf16.msra.mxu0 %v6992
        %7041 = vmatprep.mubr.bf16.mxu0 %v6859
        %7042 = vmatmul.mubr.bf16.gmra.mrb[0].mxu0 %v6858
        %v7043 = vpop.f32.mrb[0].mxu0
        %v7044 = vadd.f32 %v6911, %v7043
        %v7045 = vpop.f32.mrb[0].mxu0
        %v7046 = vpop.f32.mrb[0].mxu0
        %v7047 = vadd.f32 %v6911, %v7046
        %v7048 = vpop.f32.mrb[0].mxu0
        %7049 = vmatprep.mubr.bf16.mxu0 %v6861
        %7050 = vmatmul.mubr.bf16.gmra.mrb[0].mxu0 %v6860
        %v7051 = vpop.f32.mrb[0].mxu0
        %v7052 = vadd.f32 %v6911, %v7051
        %v7053 = vpop.f32.mrb[0].mxu0
        %v7054 = vpop.f32.mrb[0].mxu0
        %v7055 = vadd.f32 %v6911, %v7054
        %v7056 = vpop.f32.mrb[0].mxu0
        %7057 = vmatprep.mubr.bf16.mxu0 %v6863
        %7058 = vmatmul.mubr.bf16.gmra.mrb[0].mxu0 %v6862
        %v7059 = vpop.f32.mrb[0].mxu0
        %v7060 = vadd.f32 %v6911, %v7059
        %v7061 = vpop.f32.mrb[0].mxu0
        %v7062 = vpop.f32.mrb[0].mxu0
        %v7063 = vadd.f32 %v6911, %v7062
        %v7064 = vpop.f32.mrb[0].mxu0
        %7065 = vmatprep.mubr.bf16.mxu0 %v6865
        %7066 = vmatmul.mubr.bf16.gmra.mrb[0].mxu0 %v6864
        %v7067 = vpop.f32.mrb[0].mxu0
        %v7068 = vadd.f32 %v6911, %v7067
        %v7069 = vpop.f32.mrb[0].mxu0
        %v7070 = vpop.f32.mrb[0].mxu0
        %v7071 = vadd.f32 %v6911, %v7070
        %v7072 = vpop.f32.mrb[0].mxu0
        %7073 = vmatprep.mubr.bf16.mxu0 %v6867
        %7074 = vmatmul.mubr.bf16.gmra.mrb[0].mxu0 %v6866
        %v7075 = vpop.f32.mrb[0].mxu0
        %v7076 = vadd.f32 %v6911, %v7075
        %v7077 = vpop.f32.mrb[0].mxu0
        %v7078 = vpop.f32.mrb[0].mxu0
        %v7079 = vadd.f32 %v6911, %v7078
        %v7080 = vpop.f32.mrb[0].mxu0
        %7081 = vmatprep.mubr.bf16.mxu0 %v6869
        %7082 = vmatmul.mubr.bf16.gmra.mrb[0].mxu0 %v6868
        %v7083 = vpop.f32.mrb[0].mxu0
        %v7084 = vadd.f32 %v6911, %v7083
        %v7085 = vpop.f32.mrb[0].mxu0
        %v7086 = vpop.f32.mrb[0].mxu0
        %v7087 = vadd.f32 %v6911, %v7086
        %v7088 = vpop.f32.mrb[0].mxu0
        %7089 = vmatprep.mubr.bf16.mxu0 %v6871
        %7090 = vmatmul.mubr.bf16.gmra.mrb[0].mxu0 %v6870
        %v7091 = vpop.f32.mrb[0].mxu0
        %v7092 = vadd.f32 %v6911, %v7091
        %v7093 = vpop.f32.mrb[0].mxu0
        %v7094 = vpop.f32.mrb[0].mxu0
        %v7095 = vadd.f32 %v6911, %v7094
        %v7096 = vpop.f32.mrb[0].mxu0
        %7097 = vmatprep.mubr.bf16.mxu0 %v6873
        %7098 = vmatmul.mubr.bf16.gmra.mrb[0].mxu0 %v6872
        %v7099 = vpop.f32.mrb[0].mxu0
        %v7100 = vadd.f32 %v6911, %v7099
        %v7101 = vpop.f32.mrb[0].mxu0
        %v7102 = vpop.f32.mrb[0].mxu0
        %v7103 = vadd.f32 %v6911, %v7102
        %v7104 = vpop.f32.mrb[0].mxu0
        %7105 = vdwg.mxu0
        %v7106 = vmul.f32 %v7044, 0.01
        %v7107 = vmul.f32 %v7047, 0.01
        %v7108 = vmul.f32 %v7052, 0.01
        %v7109 = vmul.f32 %v7055, 0.01
        %v7110 = vmul.f32 %v7060, 0.01
        %v7111 = vmul.f32 %v7063, 0.01
        %v7112 = vmul.f32 %v7068, 0.01
        %v7113 = vmul.f32 %v7071, 0.01
        %v7114 = vmul.f32 %v7076, 0.01
        %v7115 = vmul.f32 %v7079, 0.01
        %v7116 = vmul.f32 %v7084, 0.01
        %v7117 = vmul.f32 %v7087, 0.01
        %v7118 = vmul.f32 %v7092, 0.01
        %v7119 = vmul.f32 %v7095, 0.01
        %v7120 = vmul.f32 %v7100, 0.01
        %v7121 = vmul.f32 %v7103, 0.01
        %v7122 = vmax.f32 %v7044, %v7106
        %v7123 = vmax.f32 %v7047, %v7107
        %v7124 = vmax.f32 %v7052, %v7108
        %v7125 = vmax.f32 %v7055, %v7109
        %v7126 = vmax.f32 %v7060, %v7110
        %v7127 = vmax.f32 %v7063, %v7111
        %v7128 = vmax.f32 %v7068, %v7112
        %v7129 = vmax.f32 %v7071, %v7113
        %v7130 = vmax.f32 %v7076, %v7114
        %v7131 = vmax.f32 %v7079, %v7115
        %v7132 = vmax.f32 %v7084, %v7116
        %v7133 = vmax.f32 %v7087, %v7117
        %v7134 = vmax.f32 %v7092, %v7118
        %v7135 = vmax.f32 %v7095, %v7119
        %v7136 = vmax.f32 %v7100, %v7120
        %v7137 = vmax.f32 %v7103, %v7121
        %v7138 = vpack.c.bf16 %v7123, %v7122
        %v7139 = vpack.c.bf16 %v7125, %v7124
        %v7140 = vpack.c.bf16 %v7127, %v7126
        %v7141 = vpack.c.bf16 %v7129, %v7128
        %v7142 = vpack.c.bf16 %v7131, %v7130
        %v7143 = vpack.c.bf16 %v7133, %v7132
        %v7144 = vpack.c.bf16 %v7135, %v7134
        %v7145 = vpack.c.bf16 %v7137, %v7136
        %v7146 = vld [vmem:[#allocation36] sm:$0xff]
        %v7147 = vld [vmem:[#allocation36 + $0x8] sm:$0xff]
        %v7148 = vld [vmem:[#allocation36 + $0x10] sm:$0xff]
        %v7149 = vld [vmem:[#allocation36 + $0x18] sm:$0xff]
        %v7150 = vld [vmem:[#allocation36 + $0x20] sm:$0xff]
        %v7151 = vld [vmem:[#allocation36 + $0x28] sm:$0xff]
        %v7152 = vld [vmem:[#allocation36 + $0x30] sm:$0xff]
        %v7153 = vld [vmem:[#allocation36 + $0x38] sm:$0xff]
        %v7154 = vld [vmem:[#allocation36 + $0x40] sm:$0xff]
        %v7155 = vld [vmem:[#allocation36 + $0x48] sm:$0xff]
        %v7156 = vld [vmem:[#allocation36 + $0x50] sm:$0xff]
        %v7157 = vld [vmem:[#allocation36 + $0x58] sm:$0xff]
        %v7158 = vld [vmem:[#allocation36 + $0x60] sm:$0xff]
        %v7159 = vld [vmem:[#allocation36 + $0x68] sm:$0xff]
        %v7160 = vld [vmem:[#allocation36 + $0x70] sm:$0xff]
        %v7161 = vld [vmem:[#allocation36 + $0x78] sm:$0xff]
        %v7162 = vld [vmem:[#allocation37] sm:$0x3]
        %v7164 = vlaneseq
        %v7165 = vshrl.u32 %v7164, 7
        %v7166 = vsub.s32 0, %v7165
        %v7167 = vrot.slane %v7162, %v7166
        %v7168 = vlaneseq
        %v7169 = vshrl.u32 %v7168, 7
        %v7170 = vsub.s32 1, %v7169
        %v7171 = vrot.slane %v7162, %v7170
        %v7190 = vunpack.c.l.b16 %v7146
        %v7191 = vunpack.c.h.b16 %v7146
        %v7192 = vunpack.c.l.b16 %v7147
        %v7193 = vunpack.c.h.b16 %v7147
        %v7194 = vunpack.c.l.b16 %v7148
        %v7195 = vunpack.c.h.b16 %v7148
        %v7196 = vunpack.c.l.b16 %v7149
        %v7197 = vunpack.c.h.b16 %v7149
        %v7198 = vunpack.c.l.b16 %v7150
        %v7199 = vunpack.c.h.b16 %v7150
        %v7200 = vunpack.c.l.b16 %v7151
        %v7201 = vunpack.c.h.b16 %v7151
        %v7202 = vunpack.c.l.b16 %v7152
        %v7203 = vunpack.c.h.b16 %v7152
        %v7204 = vunpack.c.l.b16 %v7153
        %v7205 = vunpack.c.h.b16 %v7153
        %v7206 = vunpack.c.l.b16 %v7154
        %v7207 = vunpack.c.h.b16 %v7154
        %v7208 = vunpack.c.l.b16 %v7155
        %v7209 = vunpack.c.h.b16 %v7155
        %v7210 = vunpack.c.l.b16 %v7156
        %v7211 = vunpack.c.h.b16 %v7156
        %v7212 = vunpack.c.l.b16 %v7157
        %v7213 = vunpack.c.h.b16 %v7157
        %v7214 = vunpack.c.l.b16 %v7158
        %v7215 = vunpack.c.h.b16 %v7158
        %v7216 = vunpack.c.l.b16 %v7159
        %v7217 = vunpack.c.h.b16 %v7159
        %v7218 = vunpack.c.l.b16 %v7160
        %v7219 = vunpack.c.h.b16 %v7160
        %v7220 = vunpack.c.l.b16 %v7161
        %v7221 = vunpack.c.h.b16 %v7161
        %v7222 = vpack.c.b16 %v7192, %v7190
        %v7223 = vpack.c.b16 %v7193, %v7191
        %v7224 = vpack.c.b16 %v7196, %v7194
        %v7225 = vpack.c.b16 %v7197, %v7195
        %v7226 = vpack.c.b16 %v7200, %v7198
        %v7227 = vpack.c.b16 %v7201, %v7199
        %v7228 = vpack.c.b16 %v7204, %v7202
        %v7229 = vpack.c.b16 %v7205, %v7203
        %v7230 = vpack.c.b16 %v7208, %v7206
        %v7231 = vpack.c.b16 %v7209, %v7207
        %v7232 = vpack.c.b16 %v7212, %v7210
        %v7233 = vpack.c.b16 %v7213, %v7211
        %v7234 = vpack.c.b16 %v7216, %v7214
        %v7235 = vpack.c.b16 %v7217, %v7215
        %v7236 = vpack.c.b16 %v7220, %v7218
        %v7237 = vpack.c.b16 %v7221, %v7219
        %7254 = vmatprep.subr.bf16.mxu0 %v7223
        %7255 = vmatpush1.bf16.msra.mxu0 %v7222
        %7256 = vmatprep.subr.bf16.mxu0 %v7225
        %7257 = vmatpush1.bf16.msra.mxu0 %v7224
        %7258 = vmatprep.subr.bf16.mxu0 %v7227
        %7259 = vmatpush1.bf16.msra.mxu0 %v7226
        %7260 = vmatprep.subr.bf16.mxu0 %v7229
        %7261 = vmatpush1.bf16.msra.mxu0 %v7228
        %7262 = vmatprep.subr.bf16.mxu0 %v7231
        %7263 = vmatpush1.bf16.msra.mxu0 %v7230
        %7264 = vmatprep.subr.bf16.mxu0 %v7233
        %7265 = vmatpush1.bf16.msra.mxu0 %v7232
        %7266 = vmatprep.subr.bf16.mxu0 %v7235
        %7267 = vmatpush1.bf16.msra.mxu0 %v7234
        %7268 = vmatprep.subr.bf16.mxu0 %v7237
        %7269 = vmatpush1.bf16.msra.mxu0 %v7236
        %7270 = vmatprep.subr.bf16.mxu0 0
        %7271 = vmatpush1.bf16.msra.mxu0 0
        %7272 = vmatprep.subr.bf16.mxu0 0
        %7273 = vmatpush1.bf16.msra.mxu0 0
        %7274 = vmatprep.subr.bf16.mxu0 0
        %7275 = vmatpush1.bf16.msra.mxu0 0
        %7276 = vmatprep.subr.bf16.mxu0 0
        %7277 = vmatpush1.bf16.msra.mxu0 0
        %7278 = vmatprep.subr.bf16.mxu0 0
        %7279 = vmatpush1.bf16.msra.mxu0 0
        %7280 = vmatprep.subr.bf16.mxu0 0
        %7281 = vmatpush1.bf16.msra.mxu0 0
        %7282 = vmatprep.subr.bf16.mxu0 0
        %7283 = vmatpush1.bf16.msra.mxu0 0
        %7284 = vmatprep.subr.bf16.mxu0 0
        %7285 = vmatpush1.bf16.msra.mxu0 0
        %7286 = vmatprep.mubr.bf16.mxu0 0
        %7287 = vmatmul.mubr.bf16.gmra.mrb[0].mxu0 %v7138
        %v7288 = vpop.f32.mrb[0].mxu0
        %v7289 = vadd.f32 %v7167, %v7288
        %v7290 = vpop.f32.mrb[0].mxu0
        %v7291 = vadd.f32 %v7171, %v7290
        %v7292 = vpop.f32.mrb[0].mxu0
        %v7293 = vadd.f32 %v7167, %v7292
        %v7294 = vpop.f32.mrb[0].mxu0
        %v7295 = vadd.f32 %v7171, %v7294
        %7296 = vmatprep.mubr.bf16.mxu0 0
        %7297 = vmatmul.mubr.bf16.gmra.mrb[0].mxu0 %v7139
        %v7298 = vpop.f32.mrb[0].mxu0
        %v7299 = vadd.f32 %v7167, %v7298
        %v7300 = vpop.f32.mrb[0].mxu0
        %v7301 = vadd.f32 %v7171, %v7300
        %v7302 = vpop.f32.mrb[0].mxu0
        %v7303 = vadd.f32 %v7167, %v7302
        %v7304 = vpop.f32.mrb[0].mxu0
        %v7305 = vadd.f32 %v7171, %v7304
        %7306 = vmatprep.mubr.bf16.mxu0 0
        %7307 = vmatmul.mubr.bf16.gmra.mrb[0].mxu0 %v7140
        %v7308 = vpop.f32.mrb[0].mxu0
        %v7309 = vadd.f32 %v7167, %v7308
        %v7310 = vpop.f32.mrb[0].mxu0
        %v7311 = vadd.f32 %v7171, %v7310
        %v7312 = vpop.f32.mrb[0].mxu0
        %v7313 = vadd.f32 %v7167, %v7312
        %v7314 = vpop.f32.mrb[0].mxu0
        %v7315 = vadd.f32 %v7171, %v7314
        %7316 = vmatprep.mubr.bf16.mxu0 0
        %7317 = vmatmul.mubr.bf16.gmra.mrb[0].mxu0 %v7141
        %v7318 = vpop.f32.mrb[0].mxu0
        %v7319 = vadd.f32 %v7167, %v7318
        %v7320 = vpop.f32.mrb[0].mxu0
        %v7321 = vadd.f32 %v7171, %v7320
        %v7322 = vpop.f32.mrb[0].mxu0
        %v7323 = vadd.f32 %v7167, %v7322
        %v7324 = vpop.f32.mrb[0].mxu0
        %v7325 = vadd.f32 %v7171, %v7324
        %7326 = vmatprep.mubr.bf16.mxu0 0
        %7327 = vmatmul.mubr.bf16.gmra.mrb[0].mxu0 %v7142
        %v7328 = vpop.f32.mrb[0].mxu0
        %v7329 = vadd.f32 %v7167, %v7328
        %v7330 = vpop.f32.mrb[0].mxu0
        %v7331 = vadd.f32 %v7171, %v7330
        %v7332 = vpop.f32.mrb[0].mxu0
        %v7333 = vadd.f32 %v7167, %v7332
        %v7334 = vpop.f32.mrb[0].mxu0
        %v7335 = vadd.f32 %v7171, %v7334
        %7336 = vmatprep.mubr.bf16.mxu0 0
        %7337 = vmatmul.mubr.bf16.gmra.mrb[0].mxu0 %v7143
        %v7338 = vpop.f32.mrb[0].mxu0
        %v7339 = vadd.f32 %v7167, %v7338
        %v7340 = vpop.f32.mrb[0].mxu0
        %v7341 = vadd.f32 %v7171, %v7340
        %v7342 = vpop.f32.mrb[0].mxu0
        %v7343 = vadd.f32 %v7167, %v7342
        %v7344 = vpop.f32.mrb[0].mxu0
        %v7345 = vadd.f32 %v7171, %v7344
        %7346 = vmatprep.mubr.bf16.mxu0 0
        %7347 = vmatmul.mubr.bf16.gmra.mrb[0].mxu0 %v7144
        %v7348 = vpop.f32.mrb[0].mxu0
        %v7349 = vadd.f32 %v7167, %v7348
        %v7350 = vpop.f32.mrb[0].mxu0
        %v7351 = vadd.f32 %v7171, %v7350
        %v7352 = vpop.f32.mrb[0].mxu0
        %v7353 = vadd.f32 %v7167, %v7352
        %v7354 = vpop.f32.mrb[0].mxu0
        %v7355 = vadd.f32 %v7171, %v7354
        %7356 = vmatprep.mubr.bf16.mxu0 0
        %7357 = vmatmul.mubr.bf16.gmra.mrb[0].mxu0 %v7145
        %v7358 = vpop.f32.mrb[0].mxu0
        %v7359 = vadd.f32 %v7167, %v7358
        %v7360 = vpop.f32.mrb[0].mxu0
        %v7361 = vadd.f32 %v7171, %v7360
        %v7362 = vpop.f32.mrb[0].mxu0
        %v7363 = vadd.f32 %v7167, %v7362
        %v7364 = vpop.f32.mrb[0].mxu0
        %v7365 = vadd.f32 %v7171, %v7364
        %7366 = vdwg.mxu0
        %v7367 = vmul.f32 %v7289, 0.01
        %v7368 = vmul.f32 %v7291, 0.01
        %v7369 = vmul.f32 %v7293, 0.01
        %v7370 = vmul.f32 %v7295, 0.01
        %v7371 = vmul.f32 %v7299, 0.01
        %v7372 = vmul.f32 %v7301, 0.01
        %v7373 = vmul.f32 %v7303, 0.01
        %v7374 = vmul.f32 %v7305, 0.01
        %v7375 = vmul.f32 %v7309, 0.01
        %v7376 = vmul.f32 %v7311, 0.01
        %v7377 = vmul.f32 %v7313, 0.01
        %v7378 = vmul.f32 %v7315, 0.01
        %v7379 = vmul.f32 %v7319, 0.01
        %v7380 = vmul.f32 %v7321, 0.01
        %v7381 = vmul.f32 %v7323, 0.01
        %v7382 = vmul.f32 %v7325, 0.01
        %v7383 = vmul.f32 %v7329, 0.01
        %v7384 = vmul.f32 %v7331, 0.01
        %v7385 = vmul.f32 %v7333, 0.01
        %v7386 = vmul.f32 %v7335, 0.01
        %v7387 = vmul.f32 %v7339, 0.01
        %v7388 = vmul.f32 %v7341, 0.01
        %v7389 = vmul.f32 %v7343, 0.01
        %v7390 = vmul.f32 %v7345, 0.01
        %v7391 = vmul.f32 %v7349, 0.01
        %v7392 = vmul.f32 %v7351, 0.01
        %v7393 = vmul.f32 %v7353, 0.01
        %v7394 = vmul.f32 %v7355, 0.01
        %v7395 = vmul.f32 %v7359, 0.01
        %v7396 = vmul.f32 %v7361, 0.01
        %v7397 = vmul.f32 %v7363, 0.01
        %v7398 = vmul.f32 %v7365, 0.01
        %v7399 = vmax.f32 %v7289, %v7367
        %v7400 = vmax.f32 %v7291, %v7368
        %v7401 = vmax.f32 %v7293, %v7369
        %v7402 = vmax.f32 %v7295, %v7370
        %v7403 = vmax.f32 %v7299, %v7371
        %v7404 = vmax.f32 %v7301, %v7372
        %v7405 = vmax.f32 %v7303, %v7373
        %v7406 = vmax.f32 %v7305, %v7374
        %v7407 = vmax.f32 %v7309, %v7375
        %v7408 = vmax.f32 %v7311, %v7376
        %v7409 = vmax.f32 %v7313, %v7377
        %v7410 = vmax.f32 %v7315, %v7378
        %v7411 = vmax.f32 %v7319, %v7379
        %v7412 = vmax.f32 %v7321, %v7380
        %v7413 = vmax.f32 %v7323, %v7381
        %v7414 = vmax.f32 %v7325, %v7382
        %v7415 = vmax.f32 %v7329, %v7383
        %v7416 = vmax.f32 %v7331, %v7384
        %v7417 = vmax.f32 %v7333, %v7385
        %v7418 = vmax.f32 %v7335, %v7386
        %v7419 = vmax.f32 %v7339, %v7387
        %v7420 = vmax.f32 %v7341, %v7388
        %v7421 = vmax.f32 %v7343, %v7389
        %v7422 = vmax.f32 %v7345, %v7390
        %v7423 = vmax.f32 %v7349, %v7391
        %v7424 = vmax.f32 %v7351, %v7392
        %v7425 = vmax.f32 %v7353, %v7393
        %v7426 = vmax.f32 %v7355, %v7394
        %v7427 = vmax.f32 %v7359, %v7395
        %v7428 = vmax.f32 %v7361, %v7396
        %v7429 = vmax.f32 %v7363, %v7397
        %v7430 = vmax.f32 %v7365, %v7398
        %v7431 = vpack.c.bf16 %v7401, %v7399
        %v7432 = vpack.c.bf16 %v7402, %v7400
        %v7433 = vpack.c.bf16 %v7405, %v7403
        %v7434 = vpack.c.bf16 %v7406, %v7404
        %v7435 = vpack.c.bf16 %v7409, %v7407
        %v7436 = vpack.c.bf16 %v7410, %v7408
        %v7437 = vpack.c.bf16 %v7413, %v7411
        %v7438 = vpack.c.bf16 %v7414, %v7412
        %v7439 = vpack.c.bf16 %v7417, %v7415
        %v7440 = vpack.c.bf16 %v7418, %v7416
        %v7441 = vpack.c.bf16 %v7421, %v7419
        %v7442 = vpack.c.bf16 %v7422, %v7420
        %v7443 = vpack.c.bf16 %v7425, %v7423
        %v7444 = vpack.c.bf16 %v7426, %v7424
        %v7445 = vpack.c.bf16 %v7429, %v7427
        %v7446 = vpack.c.bf16 %v7430, %v7428
        %v7447 = vld [vmem:[#allocation39] sm:$0xf]
        %v7448 = vld [vmem:[#allocation39 + $0x4] sm:$0xf]
        %v7449 = vld [vmem:[#allocation39 + $0x8] sm:$0xf]
        %v7450 = vld [vmem:[#allocation39 + $0xc] sm:$0xf]
        %v7451 = vld [vmem:[#allocation39 + $0x10] sm:$0xf]
        %v7452 = vld [vmem:[#allocation39 + $0x14] sm:$0xf]
        %v7453 = vld [vmem:[#allocation39 + $0x18] sm:$0xf]
        %v7454 = vld [vmem:[#allocation39 + $0x1c] sm:$0xf]
        %v7455 = vld [vmem:[#allocation39 + $0x20] sm:$0xf]
        %v7456 = vld [vmem:[#allocation39 + $0x24] sm:$0xf]
        %v7457 = vld [vmem:[#allocation39 + $0x28] sm:$0xf]
        %v7458 = vld [vmem:[#allocation39 + $0x2c] sm:$0xf]
        %v7459 = vld [vmem:[#allocation39 + $0x30] sm:$0xf]
        %v7460 = vld [vmem:[#allocation39 + $0x34] sm:$0xf]
        %v7461 = vld [vmem:[#allocation39 + $0x38] sm:$0xf]
        %v7462 = vld [vmem:[#allocation39 + $0x3c] sm:$0xf]
        %v7463 = vld [vmem:[#allocation39 + $0x40] sm:$0xf]
        %v7464 = vld [vmem:[#allocation39 + $0x44] sm:$0xf]
        %v7465 = vld [vmem:[#allocation39 + $0x48] sm:$0xf]
        %v7466 = vld [vmem:[#allocation39 + $0x4c] sm:$0xf]
        %v7467 = vld [vmem:[#allocation39 + $0x50] sm:$0xf]
        %v7468 = vld [vmem:[#allocation39 + $0x54] sm:$0xf]
        %v7469 = vld [vmem:[#allocation39 + $0x58] sm:$0xf]
        %v7470 = vld [vmem:[#allocation39 + $0x5c] sm:$0xf]
        %v7471 = vld [vmem:[#allocation39 + $0x60] sm:$0xf]
        %v7472 = vld [vmem:[#allocation39 + $0x64] sm:$0xf]
        %v7473 = vld [vmem:[#allocation39 + $0x68] sm:$0xf]
        %v7474 = vld [vmem:[#allocation39 + $0x6c] sm:$0xf]
        %v7475 = vld [vmem:[#allocation39 + $0x70] sm:$0xf]
        %v7476 = vld [vmem:[#allocation39 + $0x74] sm:$0xf]
        %v7477 = vld [vmem:[#allocation39 + $0x78] sm:$0xf]
        %v7478 = vld [vmem:[#allocation39 + $0x7c] sm:$0xf]
        %v7479 = vld [vmem:[#allocation40] sm:$0x1]
        %v7481 = vlaneseq
        %v7482 = vshrl.u32 %v7481, 7
        %v7483 = vsub.s32 0, %v7482
        %v7484 = vrot.slane %v7479, %v7483
        %v7518 = vunpack.c.l.b16 %v7447
        %v7519 = vunpack.c.l.b16 %v7448
        %v7520 = vunpack.c.l.b16 %v7449
        %v7521 = vunpack.c.l.b16 %v7450
        %v7522 = vunpack.c.l.b16 %v7451
        %v7523 = vunpack.c.l.b16 %v7452
        %v7524 = vunpack.c.l.b16 %v7453
        %v7525 = vunpack.c.l.b16 %v7454
        %v7526 = vunpack.c.l.b16 %v7455
        %v7527 = vunpack.c.l.b16 %v7456
        %v7528 = vunpack.c.l.b16 %v7457
        %v7529 = vunpack.c.l.b16 %v7458
        %v7530 = vunpack.c.l.b16 %v7459
        %v7531 = vunpack.c.l.b16 %v7460
        %v7532 = vunpack.c.l.b16 %v7461
        %v7533 = vunpack.c.l.b16 %v7462
        %v7534 = vunpack.c.l.b16 %v7463
        %v7535 = vunpack.c.l.b16 %v7464
        %v7536 = vunpack.c.l.b16 %v7465
        %v7537 = vunpack.c.l.b16 %v7466
        %v7538 = vunpack.c.l.b16 %v7467
        %v7539 = vunpack.c.l.b16 %v7468
        %v7540 = vunpack.c.l.b16 %v7469
        %v7541 = vunpack.c.l.b16 %v7470
        %v7542 = vunpack.c.l.b16 %v7471
        %v7543 = vunpack.c.l.b16 %v7472
        %v7544 = vunpack.c.l.b16 %v7473
        %v7545 = vunpack.c.l.b16 %v7474
        %v7546 = vunpack.c.l.b16 %v7475
        %v7547 = vunpack.c.l.b16 %v7476
        %v7548 = vunpack.c.l.b16 %v7477
        %v7549 = vunpack.c.l.b16 %v7478
        %v7550 = vpack.c.b16 %v7519, %v7518
        %v7551 = vpack.c.b16 %v7521, %v7520
        %v7552 = vpack.c.b16 %v7523, %v7522
        %v7553 = vpack.c.b16 %v7525, %v7524
        %v7554 = vpack.c.b16 %v7527, %v7526
        %v7555 = vpack.c.b16 %v7529, %v7528
        %v7556 = vpack.c.b16 %v7531, %v7530
        %v7557 = vpack.c.b16 %v7533, %v7532
        %v7558 = vpack.c.b16 %v7535, %v7534
        %v7559 = vpack.c.b16 %v7537, %v7536
        %v7560 = vpack.c.b16 %v7539, %v7538
        %v7561 = vpack.c.b16 %v7541, %v7540
        %v7562 = vpack.c.b16 %v7543, %v7542
        %v7563 = vpack.c.b16 %v7545, %v7544
        %v7564 = vpack.c.b16 %v7547, %v7546
        %v7565 = vpack.c.b16 %v7549, %v7548
        %7582 = vmatprep.subr.bf16.mxu0 0
        %7583 = vmatpush1.bf16.msra.mxu0 %v7550
        %7584 = vmatprep.subr.bf16.mxu0 0
        %7585 = vmatpush1.bf16.msra.mxu0 %v7551
        %7586 = vmatprep.subr.bf16.mxu0 0
        %7587 = vmatpush1.bf16.msra.mxu0 %v7552
        %7588 = vmatprep.subr.bf16.mxu0 0
        %7589 = vmatpush1.bf16.msra.mxu0 %v7553
        %7590 = vmatprep.subr.bf16.mxu0 0
        %7591 = vmatpush1.bf16.msra.mxu0 %v7554
        %7592 = vmatprep.subr.bf16.mxu0 0
        %7593 = vmatpush1.bf16.msra.mxu0 %v7555
        %7594 = vmatprep.subr.bf16.mxu0 0
        %7595 = vmatpush1.bf16.msra.mxu0 %v7556
        %7596 = vmatprep.subr.bf16.mxu0 0
        %7597 = vmatpush1.bf16.msra.mxu0 %v7557
        %7598 = vmatprep.subr.bf16.mxu0 0
        %7599 = vmatpush1.bf16.msra.mxu0 %v7558
        %7600 = vmatprep.subr.bf16.mxu0 0
        %7601 = vmatpush1.bf16.msra.mxu0 %v7559
        %7602 = vmatprep.subr.bf16.mxu0 0
        %7603 = vmatpush1.bf16.msra.mxu0 %v7560
        %7604 = vmatprep.subr.bf16.mxu0 0
        %7605 = vmatpush1.bf16.msra.mxu0 %v7561
        %7606 = vmatprep.subr.bf16.mxu0 0
        %7607 = vmatpush1.bf16.msra.mxu0 %v7562
        %7608 = vmatprep.subr.bf16.mxu0 0
        %7609 = vmatpush1.bf16.msra.mxu0 %v7563
        %7610 = vmatprep.subr.bf16.mxu0 0
        %7611 = vmatpush1.bf16.msra.mxu0 %v7564
        %7612 = vmatprep.subr.bf16.mxu0 0
        %7613 = vmatpush1.bf16.msra.mxu0 %v7565
        %7614 = vmatprep.mubr.bf16.mxu0 %v7432
        %7615 = vmatmul.mubr.bf16.gmra.mrb[0].mxu0 %v7431
        %v7616 = vpop.f32.mrb[0].mxu0
        %v7617 = vadd.f32 %v7484, %v7616
        %v7618 = vpop.f32.mrb[0].mxu0
        %v7619 = vpop.f32.mrb[0].mxu0
        %v7620 = vadd.f32 %v7484, %v7619
        %v7621 = vpop.f32.mrb[0].mxu0
        %7622 = vmatprep.mubr.bf16.mxu0 %v7434
        %7623 = vmatmul.mubr.bf16.gmra.mrb[0].mxu0 %v7433
        %v7624 = vpop.f32.mrb[0].mxu0
        %v7625 = vadd.f32 %v7484, %v7624
        %v7626 = vpop.f32.mrb[0].mxu0
        %v7627 = vpop.f32.mrb[0].mxu0
        %v7628 = vadd.f32 %v7484, %v7627
        %v7629 = vpop.f32.mrb[0].mxu0
        %7630 = vmatprep.mubr.bf16.mxu0 %v7436
        %7631 = vmatmul.mubr.bf16.gmra.mrb[0].mxu0 %v7435
        %v7632 = vpop.f32.mrb[0].mxu0
        %v7633 = vadd.f32 %v7484, %v7632
        %v7634 = vpop.f32.mrb[0].mxu0
        %v7635 = vpop.f32.mrb[0].mxu0
        %v7636 = vadd.f32 %v7484, %v7635
        %v7637 = vpop.f32.mrb[0].mxu0
        %7638 = vmatprep.mubr.bf16.mxu0 %v7438
        %7639 = vmatmul.mubr.bf16.gmra.mrb[0].mxu0 %v7437
        %v7640 = vpop.f32.mrb[0].mxu0
        %v7641 = vadd.f32 %v7484, %v7640
        %v7642 = vpop.f32.mrb[0].mxu0
        %v7643 = vpop.f32.mrb[0].mxu0
        %v7644 = vadd.f32 %v7484, %v7643
        %v7645 = vpop.f32.mrb[0].mxu0
        %7646 = vmatprep.mubr.bf16.mxu0 %v7440
        %7647 = vmatmul.mubr.bf16.gmra.mrb[0].mxu0 %v7439
        %v7648 = vpop.f32.mrb[0].mxu0
        %v7649 = vadd.f32 %v7484, %v7648
        %v7650 = vpop.f32.mrb[0].mxu0
        %v7651 = vpop.f32.mrb[0].mxu0
        %v7652 = vadd.f32 %v7484, %v7651
        %v7653 = vpop.f32.mrb[0].mxu0
        %7654 = vmatprep.mubr.bf16.mxu0 %v7442
        %7655 = vmatmul.mubr.bf16.gmra.mrb[0].mxu0 %v7441
        %v7656 = vpop.f32.mrb[0].mxu0
        %v7657 = vadd.f32 %v7484, %v7656
        %v7658 = vpop.f32.mrb[0].mxu0
        %v7659 = vpop.f32.mrb[0].mxu0
        %v7660 = vadd.f32 %v7484, %v7659
        %v7661 = vpop.f32.mrb[0].mxu0
        %7662 = vmatprep.mubr.bf16.mxu0 %v7444
        %7663 = vmatmul.mubr.bf16.gmra.mrb[0].mxu0 %v7443
        %v7664 = vpop.f32.mrb[0].mxu0
        %v7665 = vadd.f32 %v7484, %v7664
        %v7666 = vpop.f32.mrb[0].mxu0
        %v7667 = vpop.f32.mrb[0].mxu0
        %v7668 = vadd.f32 %v7484, %v7667
        %v7669 = vpop.f32.mrb[0].mxu0
        %7670 = vmatprep.mubr.bf16.mxu0 %v7446
        %7671 = vmatmul.mubr.bf16.gmra.mrb[0].mxu0 %v7445
        %v7672 = vpop.f32.mrb[0].mxu0
        %v7673 = vadd.f32 %v7484, %v7672
        %v7674 = vpop.f32.mrb[0].mxu0
        %v7675 = vpop.f32.mrb[0].mxu0
        %v7676 = vadd.f32 %v7484, %v7675
        %v7677 = vpop.f32.mrb[0].mxu0
        %7678 = vdwg.mxu0
        %v7679 = vmul.f32 %v7617, 0.01
        %v7680 = vmul.f32 %v7620, 0.01
        %v7681 = vmul.f32 %v7625, 0.01
        %v7682 = vmul.f32 %v7628, 0.01
        %v7683 = vmul.f32 %v7633, 0.01
        %v7684 = vmul.f32 %v7636, 0.01
        %v7685 = vmul.f32 %v7641, 0.01
        %v7686 = vmul.f32 %v7644, 0.01
        %v7687 = vmul.f32 %v7649, 0.01
        %v7688 = vmul.f32 %v7652, 0.01
        %v7689 = vmul.f32 %v7657, 0.01
        %v7690 = vmul.f32 %v7660, 0.01
        %v7691 = vmul.f32 %v7665, 0.01
        %v7692 = vmul.f32 %v7668, 0.01
        %v7693 = vmul.f32 %v7673, 0.01
        %v7694 = vmul.f32 %v7676, 0.01
        %v7695 = vmax.f32 %v7617, %v7679
        %v7696 = vmax.f32 %v7620, %v7680
        %v7697 = vmax.f32 %v7625, %v7681
        %v7698 = vmax.f32 %v7628, %v7682
        %v7699 = vmax.f32 %v7633, %v7683
        %v7700 = vmax.f32 %v7636, %v7684
        %v7701 = vmax.f32 %v7641, %v7685
        %v7702 = vmax.f32 %v7644, %v7686
        %v7703 = vmax.f32 %v7649, %v7687
        %v7704 = vmax.f32 %v7652, %v7688
        %v7705 = vmax.f32 %v7657, %v7689
        %v7706 = vmax.f32 %v7660, %v7690
        %v7707 = vmax.f32 %v7665, %v7691
        %v7708 = vmax.f32 %v7668, %v7692
        %v7709 = vmax.f32 %v7673, %v7693
        %v7710 = vmax.f32 %v7676, %v7694
        %v7711 = vadd.f32 %v7695, %v6549
        %v7712 = vadd.f32 %v7696, %v6550
        %v7713 = vadd.f32 %v7697, %v6551
        %v7714 = vadd.f32 %v7698, %v6552
        %v7715 = vadd.f32 %v7699, %v6553
        %v7716 = vadd.f32 %v7700, %v6554
        %v7717 = vadd.f32 %v7701, %v6555
        %v7718 = vadd.f32 %v7702, %v6556
        %v7719 = vadd.f32 %v7703, %v6557
        %v7720 = vadd.f32 %v7704, %v6558
        %v7721 = vadd.f32 %v7705, %v6559
        %v7722 = vadd.f32 %v7706, %v6560
        %v7723 = vadd.f32 %v7707, %v6561
        %v7724 = vadd.f32 %v7708, %v6562
        %v7725 = vadd.f32 %v7709, %v6563
        %v7726 = vadd.f32 %v7710, %v6564
        %7727 = vst [vmem:[%s1416] sm:$0xff] %v7711
        %7728 = vst [vmem:[%s1416 + $0x8] sm:$0xff] %v7712
        %7729 = vst [vmem:[%s1416 + $0x10] sm:$0xff] %v7713
        %7730 = vst [vmem:[%s1416 + $0x18] sm:$0xff] %v7714
        %7731 = vst [vmem:[%s1416 + $0x20] sm:$0xff] %v7715
        %7732 = vst [vmem:[%s1416 + $0x28] sm:$0xff] %v7716
        %7733 = vst [vmem:[%s1416 + $0x30] sm:$0xff] %v7717
        %7734 = vst [vmem:[%s1416 + $0x38] sm:$0xff] %v7718
        %7735 = vst [vmem:[%s1416 + $0x40] sm:$0xff] %v7719
        %7736 = vst [vmem:[%s1416 + $0x48] sm:$0xff] %v7720
        %7737 = vst [vmem:[%s1416 + $0x50] sm:$0xff] %v7721
        %7738 = vst [vmem:[%s1416 + $0x58] sm:$0xff] %v7722
        %7739 = vst [vmem:[%s1416 + $0x60] sm:$0xff] %v7723
        %7740 = vst [vmem:[%s1416 + $0x68] sm:$0xff] %v7724
        %7741 = vst [vmem:[%s1416 + $0x70] sm:$0xff] %v7725
        %7742 = vst [vmem:[%s1416 + $0x78] sm:$0xff] %v7726
        %s7743 = smul.u32 16, %s96
        %p7744 = scmp.lt.s32.totalorder %s7743, 31
        %s7745 = scalar_select %p7744, %s7743, 31
        %s7746 = smul.addr %s7745, 8
        %s7747 = scalar_lea.vmem %s71, %s7746
        // Predicated region
        $region265: #{prule_forward_batched.1} parent=159 // pred_check
          %p7748 = pneg %p854
        $region266: #{prule_forward_batched.1} parent=159 // pred_check_branch
          %7750 = sbr.rel (%p7748) target = $region268
        $region267: #{prule_forward_batched.1} parent=159 // pred_region
          %s7751 = smul.u32 16, %s96
        $region268: #{prule_forward_batched.1} parent=159 // pred_fallthru
          _
      $region160: #{prule_forward_batched.1} parent=5 // pred_fallthru
        _
      %p7752 = scmp.le.s32.totalorder 2, %s91
      // Predicated region
      $region269: #{prule_forward_batched.1} parent=5 // pred_check
        %p7753 = pneg %p7752
      $region270: #{prule_forward_batched.1} parent=5 // pred_check_branch
        %7755 = sbr.rel (%p7753) target = $region272
      $region271: #{prule_forward_batched.1} parent=5 // pred_region
        %s7756 = ssub.s32 %s91, 2
        // Predicated region
        $region273: #{prule_forward_batched.1} parent=271 // pred_check
          %p7757 = pneg %p860
        $region274: #{prule_forward_batched.1} parent=271 // pred_check_branch
          %7759 = sbr.rel (%p7757) target = $region276
        $region275: #{prule_forward_batched.1} parent=271 // pred_region
          %s7760 = smul.u32 16, %s97
          %p7761 = scmp.lt.s32.totalorder %s7760, 31
          %s7762 = scalar_select %p7761, %s7760, 31
          %s7763 = smul.addr %s7762, 8
          %s7764 = scalar_lea.vmem %s71, %s7763
        $region276: #{prule_forward_batched.1} parent=271 // pred_fallthru
          _
      $region272: #{prule_forward_batched.1} parent=5 // pred_fallthru
        _
    $region6: #{prule_forward_batched.1} parent=1 // loop_footer
      %s95 = sadd.s32 1, %s91
    $region7: #{prule_forward_batched.1} parent=1 // loop_footer_branch
      %90 = sbr.rel target = $region3
    $region8: #{prule_forward_batched.1} parent=1 // loop_exit
      _
    %7765 = vsyncpa [#allocation3], 1
    %s7766 = scalar_lea.sflag [#allocation3], 1
    %7767 = vsyncpa %s7766, 1
    %7768 = vsyncpa [#allocation5], 1
    %7769 = vsyncpa [#allocation8], 1
    %7770 = vsyncpa [#allocation11], 1
    %7771 = vsyncpa [#allocation14], 1
    %7772 = vsyncpa [#allocation17], 1
    %7773 = vsyncpa [#allocation20], 1
    %7774 = vsyncpa [#allocation23], 1
    %7775 = vsyncpa [#allocation26], 1
    %7776 = vsyncpa [#allocation29], 1
    %7777 = vsyncpa [#allocation32], 1
    %7778 = vsyncpa [#allocation35], 1
    %7779 = vsyncpa [#allocation38], 1
    %7780 = vsyncpa [#allocation41], 1

</llo_original>
